<compile_context>
chip_gen: v5e
topology: v5e:2x2
jax: 0.10.0
libtpu: 0.0.40
codegen_flags: <defaults>
</compile_context>

<pallas_src>
import math

import numpy as np
import jax
import jax.numpy as jnp
from jax import lax
from jax.experimental import pallas as pl
from jax.experimental.pallas import tpu as pltpu

# ----------------------------------------------------------------------------
# LeNet geometry (fixed by the PyTorch module).
# ----------------------------------------------------------------------------
IMG = 28                   # input H = W
K = 5                      # conv kernel size
C1 = 20                    # conv1 out channels
C2 = 50                    # conv2 out channels
OH1 = IMG - K + 1          # 24  (conv1 output H/W)
PH1 = OH1 // 2             # 12  (pool1 output H/W)
OH2 = PH1 - K + 1          # 8   (conv2 output H/W)
PH2 = OH2 // 2             # 4   (pool2 output H/W)
F_IN = PH2 * PH2 * C2      # 800
F_HID = 500
F_HID_PAD = 512            # lane-padded fc1 width (zeros beyond 500)
N_CLASSES = 10
N_OUT_PAD = 128            # lane-dense logits (zeros beyond 10)


# ----------------------------------------------------------------------------
# Fused Pallas kernel: whole LeNet forward for one batch tile.
#
# Internal layouts (TB = batch tile, multiple of 8):
#   conv1 LHS : (24*TB, 140)   rows = (h, b) h-major, lanes = (kernel_row, w')
#   p1        : (12, TB, 240)  rows = (h2, b),        lanes = (w2, c1)
#   p2        : (4,  TB, 200)  rows = (h4, b),        lanes = (w4, c2)
#   f1/logits : (TB, 512)/(TB, 128)
# The 2x2 max-pool over W is folded into the conv weights (two column-parity
# band matrices, elementwise max of the two matmul outputs); the pool over H
# is a leading-dim reshape + max, so no strided/sub-lane selection is needed.
# ----------------------------------------------------------------------------
def _lenet_kernel(x_ref, a1_ref, b1_ref, w2_ref, b2_ref,
                  w3_ref, b3_ref, w4_ref, b4_ref, out_ref):
    tb = x_ref.shape[0]                         # batch tile (multiple of 8)
    bf = jnp.bfloat16

    # ---- one in-VMEM relayout: (TB,28,28) -> (28,TB,28), h-major rows -------
    xt = pltpu.einshape("bhw->hbw", x_ref[...])                   # (28, TB, 28)

    # ---- conv1 im2col: 5 kernel-row slices concatenated along lanes ---------
    # lhs1[h*TB+b, i*28+w'] = x[b, h+i, w']  (leading-dim slices, fused K=140)
    lhs1 = jnp.concatenate(
        [xt[i:i + OH1].reshape(OH1 * tb, IMG) for i in range(K)],
        axis=1).astype(bf)                                        # (24*TB, 140)

    # ---- conv1 + bias + ReLU + 2x2 max-pool (all on MXU + cheap VPU) --------
    z0 = jnp.dot(lhs1, a1_ref[0], preferred_element_type=jnp.float32)
    z1 = jnp.dot(lhs1, a1_ref[1], preferred_element_type=jnp.float32)
    r1 = jnp.maximum(jnp.maximum(z0, z1) + b1_ref[...], 0.0)      # (24*TB, 240)
    r1 = r1.reshape(PH1, 2, tb, PH1 * C1)
    p1 = jnp.maximum(r1[:, 0], r1[:, 1]).astype(bf)               # (12, TB, 240)

    # ---- conv2 + bias + ReLU + 2x2 max-pool ----------------------------------
    # One K=240 matmul per kernel row and per output-column parity; rows stay
    # h-major so the H pool is again a leading-dim reshape + max.
    acc0 = acc1 = None
    for i in range(K):
        piece = p1[i:i + OH2].reshape(OH2 * tb, PH1 * C1)         # (8*TB, 240)
        d0 = jnp.dot(piece, w2_ref[0, i], preferred_element_type=jnp.float32)
        d1 = jnp.dot(piece, w2_ref[1, i], preferred_element_type=jnp.float32)
        acc0 = d0 if acc0 is None else acc0 + d0
        acc1 = d1 if acc1 is None else acc1 + d1
    r2 = jnp.maximum(jnp.maximum(acc0, acc1) + b2_ref[...], 0.0)  # (8*TB, 200)
    r2 = r2.reshape(PH2, 2, tb, PH2 * C2)
    p2 = jnp.maximum(r2[:, 0], r2[:, 1]).astype(bf)               # (4, TB, 200)

    # ---- fc1 + ReLU: 4 accumulating (TB,200)@(200,512) MXU matmuls ----------
    f1 = None
    for h in range(PH2):
        d = jnp.dot(p2[h], w3_ref[h], preferred_element_type=jnp.float32)
        f1 = d if f1 is None else f1 + d
    f1 = jnp.maximum(f1 + b3_ref[...], 0.0).astype(bf)            # (TB, 512)

    # ---- fc2: (TB,512)@(512,128) -> lane-dense logits store -----------------
    logits = jnp.dot(f1, w4_ref[...], preferred_element_type=jnp.float32)
    out_ref[...] = (logits + b4_ref[...]).astype(out_ref.dtype)


# ----------------------------------------------------------------------------
# Parameter preparation: torch-layout params -> kernel-layout (band) operands.
# ----------------------------------------------------------------------------
def _pool_band(w_row, cin, cout, win, wpool, parity):
    """Band matrix for one conv kernel row with the W max-pool folded in.

    w_row: (cout, cin, K) = conv weights for kernel row i.
    Returns (win*cin, wpool*cout) with
      band[w'*cin + ci, w4*cout + co] = w_row[co, ci, w' - (2*w4 + parity)]
    when 0 <= w' - (2*w4 + parity) < K, else 0.
    """
    kk = w_row.shape[-1]
    sel = np.zeros((kk, wpool, win), dtype=np.float32)
    for j in range(kk):
        for w4 in range(wpool):
            col = 2 * w4 + parity + j
            if col < win:
                sel[j, w4, col] = 1.0
    band = jnp.einsum("jpw,ocj->wcpo", jnp.asarray(sel), w_row)
    return band.reshape(win * cin, wpool * cout)


def _prepare_params(params):
    bf = jnp.bfloat16
    w1 = params["conv1_w"]                     # (20, 1, 5, 5)
    w2 = params["conv2_w"]                     # (50, 20, 5, 5)

    # conv1: fuse the 5 kernel rows along K (K=140), one band per w-parity.
    a1 = jnp.stack([
        jnp.concatenate([_pool_band(w1[:, :, i, :], 1, C1, IMG, PH1, p)
                         for i in range(K)], axis=0)
        for p in range(2)])                                        # (2, 140, 240)
    b1_l = jnp.tile(params["conv1_b"], PH1).reshape(1, PH1 * C1)   # (1, 240)

    # conv2: one (240, 200) band per (parity, kernel row).
    w2b = jnp.stack([
        jnp.stack([_pool_band(w2[:, :, i, :], C1, C2, PH1, PH2, p)
                   for i in range(K)])
        for p in range(2)])                                        # (2, 5, 240, 200)
    b2_l = jnp.tile(params["conv2_b"], PH2).reshape(1, PH2 * C2)   # (1, 200)

    # fc1: torch flattens NCHW as c*16 + h*4 + w; kernel does one matmul per h
    # with lanes ordered (w, c) -> permute rows accordingly.  Pad N to 512.
    w3 = params["fc1_w"].reshape(F_HID, C2, PH2, PH2)              # [n, c, h, w]
    w3 = jnp.transpose(w3, (2, 3, 1, 0)).reshape(PH2, PH2 * C2, F_HID)
    w3 = jnp.pad(w3, ((0, 0), (0, 0), (0, F_HID_PAD - F_HID)))     # (4, 200, 512)
    b3 = jnp.pad(params["fc1_b"], (0, F_HID_PAD - F_HID)).reshape(1, F_HID_PAD)

    w4 = jnp.pad(params["fc2_w"].T,
                 ((0, F_HID_PAD - F_HID), (0, N_OUT_PAD - N_CLASSES)))
    b4 = jnp.pad(params["fc2_b"], (0, N_OUT_PAD - N_CLASSES)).reshape(1, N_OUT_PAD)

    # bf16 matmul operands (f32 accumulation in-kernel); biases stay f32.
    return (a1.astype(bf), b1_l, w2b.astype(bf), b2_l,
            w3.astype(bf), b3, w4.astype(bf), b4)


# ----------------------------------------------------------------------------
# Forward pass wrapper (single pallas_call, batch-tiled grid).
# ----------------------------------------------------------------------------
def _round_up(v, m):
    return (v + m - 1) // m * m


def lenet_forward(x, params, *, tile_b=128):
    """x: (B, 784) flat MNIST-shaped input, exactly as in LeNet.forward."""
    B = x.shape[0]
    width = math.isqrt(x.shape[1])              # static shape -> no tracer issue
    assert width * width == x.shape[1] and width == IMG

    # Batch tile: large enough to amortize per-step cost / fill the MXU, but
    # no larger than the (8-rounded) batch so small demo batches stay small.
    tb = _round_up(max(8, min(tile_b, _round_up(B, 8))), 8)
    b_pad = _round_up(B, tb)

    xs = x.reshape(B, IMG, IMG).astype(jnp.float32)   # free reshape, NO transpose
    if b_pad != B:
        xs = jnp.pad(xs, ((0, b_pad - B), (0, 0), (0, 0)))

    a1, b1_l, w2b, b2_l, w3, b3, w4, b4 = _prepare_params(params)

    out = pl.pallas_call(
        _lenet_kernel,
        out_shape=jax.ShapeDtypeStruct((b_pad, N_OUT_PAD), jnp.float32),
        grid=(b_pad // tb,),
        in_specs=[
            pl.BlockSpec((tb, IMG, IMG), lambda i: (i, 0, 0)),
            # Weights / biases: constant index_map -> resident, no per-tile DMA.
            pl.BlockSpec((2, K * IMG, PH1 * C1), lambda i: (0, 0, 0)),
            pl.BlockSpec((1, PH1 * C1), lambda i: (0, 0)),
            pl.BlockSpec((2, K, PH1 * C1, PH2 * C2), lambda i: (0, 0, 0, 0)),
            pl.BlockSpec((1, PH2 * C2), lambda i: (0, 0)),
            pl.BlockSpec((PH2, PH2 * C2, F_HID_PAD), lambda i: (0, 0, 0)),
            pl.BlockSpec((1, F_HID_PAD), lambda i: (0, 0)),
            pl.BlockSpec((F_HID_PAD, N_OUT_PAD), lambda i: (0, 0)),
            pl.BlockSpec((1, N_OUT_PAD), lambda i: (0, 0)),
        ],
        out_specs=pl.BlockSpec((tb, N_OUT_PAD), lambda i: (i, 0)),
        compiler_params=pltpu.CompilerParams(
            dimension_semantics=("parallel",),
            vmem_limit_bytes=48 * 1024 * 1024,  # ~20 MiB used @ TB=128; fits v7x
        ),
    )(xs, a1, b1_l, w2b, b2_l, w3, b3, w4, b4)

    return out[:B, :N_CLASSES]


# ----------------------------------------------------------------------------
# Pure-JAX reference (mirrors the PyTorch module) + synthetic params.
# ----------------------------------------------------------------------------
def lenet_reference(x, params):
    B = x.shape[0]
    y = x.reshape(B, 1, IMG, IMG)
    y = lax.conv_general_dilated(y, params["conv1_w"], (1, 1), "VALID",
                                 dimension_numbers=("NCHW", "OIHW", "NCHW"))
    y = jax.nn.relu(y + params["conv1_b"][None, :, None, None])
    y = lax.reduce_window(y, -jnp.inf, lax.max, (1, 1, 2, 2), (1, 1, 2, 2), "VALID")
    y = lax.conv_general_dilated(y, params["conv2_w"], (1, 1), "VALID",
                                 dimension_numbers=("NCHW", "OIHW", "NCHW"))
    y = jax.nn.relu(y + params["conv2_b"][None, :, None, None])
    y = lax.reduce_window(y, -jnp.inf, lax.max, (1, 1, 2, 2), (1, 1, 2, 2), "VALID")
    y = y.reshape(B, F_IN)
    y = jax.nn.relu(y @ params["fc1_w"].T + params["fc1_b"])
    return y @ params["fc2_w"].T + params["fc2_b"]


def init_params(key):
    """Deterministic synthetic params, same shapes/layout as the nn.Module."""
    ks = jax.random.split(key, 8)
    s = 0.05
    n = jax.random.normal
    return {
        "conv1_w": s * n(ks[0], (C1, 1, K, K), jnp.float32),
        "conv1_b": s * n(ks[1], (C1,), jnp.float32),
        "conv2_w": s * n(ks[2], (C2, C1, K, K), jnp.float32),
        "conv2_b": s * n(ks[3], (C2,), jnp.float32),
        "fc1_w": s * n(ks[4], (F_HID, F_IN), jnp.float32),
        "fc1_b": s * n(ks[5], (F_HID,), jnp.float32),
        "fc2_w": s * n(ks[6], (N_CLASSES, F_HID), jnp.float32),
        "fc2_b": s * n(ks[7], (N_CLASSES,), jnp.float32),
    }


if __name__ == "__main__":
    key = jax.random.PRNGKey(0)
    pkey, xkey = jax.random.split(key)
    params = init_params(pkey)

    batch = 2
    x = jax.random.normal(xkey, (batch, IMG * IMG), jnp.float32)

    out = jax.block_until_ready(jax.jit(lenet_forward)(x, params))
    assert out.shape == (batch, N_CLASSES), out.shape

    ref = jax.block_until_ready(jax.jit(lenet_reference)(x, params))
    max_err = float(jnp.max(jnp.abs(out - ref)))
    # bf16 matmul inputs with f32 accumulation -> slightly looser tolerance.
    assert jnp.allclose(out, ref, atol=3e-2, rtol=3e-2), max_err

    print("KERNEL_OK")
</pallas_src>

<mosaic_0001>
module attributes {stable_mosaic.version = 11 : i64} {
  func.func @_lenet_kernel(%arg0: i32, %arg1: memref<8x28x28xf32, #tpu.memory_space<vmem>>, %arg2: memref<2x140x240xbf16, #tpu.memory_space<vmem>>, %arg3: memref<1x240xf32, #tpu.memory_space<vmem>>, %arg4: memref<2x5x240x200xbf16, #tpu.memory_space<vmem>>, %arg5: memref<1x200xf32, #tpu.memory_space<vmem>>, %arg6: memref<4x200x512xbf16, #tpu.memory_space<vmem>>, %arg7: memref<1x512xf32, #tpu.memory_space<vmem>>, %arg8: memref<512x128xbf16, #tpu.memory_space<vmem>>, %arg9: memref<1x128xf32, #tpu.memory_space<vmem>>, %arg10: memref<8x128xf32, #tpu.memory_space<vmem>>) attributes {dimension_semantics = [#tpu.dimension_semantics<parallel>], iteration_bounds = array<i64: 1>, scalar_prefetch = 0 : i64, scratch_operands = 0 : i64, tpu.core_type = #tpu.core_type<tc>, window_params = [{transform_indices = @transform_0, window_bounds = array<i64: 8, 28, 28>}, {pipeline_mode = #tpu.pipeline_mode<synchronous>, transform_indices = @transform_1, window_bounds = array<i64: 2, 140, 240>}, {pipeline_mode = #tpu.pipeline_mode<synchronous>, transform_indices = @transform_2, window_bounds = array<i64: 1, 240>}, {pipeline_mode = #tpu.pipeline_mode<synchronous>, transform_indices = @transform_3, window_bounds = array<i64: 2, 5, 240, 200>}, {pipeline_mode = #tpu.pipeline_mode<synchronous>, transform_indices = @transform_4, window_bounds = array<i64: 1, 200>}, {pipeline_mode = #tpu.pipeline_mode<synchronous>, transform_indices = @transform_5, window_bounds = array<i64: 4, 200, 512>}, {pipeline_mode = #tpu.pipeline_mode<synchronous>, transform_indices = @transform_6, window_bounds = array<i64: 1, 512>}, {pipeline_mode = #tpu.pipeline_mode<synchronous>, transform_indices = @transform_7, window_bounds = array<i64: 512, 128>}, {pipeline_mode = #tpu.pipeline_mode<synchronous>, transform_indices = @transform_8, window_bounds = array<i64: 1, 128>}, {transform_indices = @transform_9, window_bounds = array<i64: 8, 128>}]} {
    %c0 = arith.constant 0 : index
    %c0_0 = arith.constant 0 : index
    %c0_1 = arith.constant 0 : index
    %0 = vector.load %arg1[%c0, %c0_0, %c0_1] : memref<8x28x28xf32, #tpu.memory_space<vmem>>, vector<8x28x28xf32>
    %1 = tpu.transpose %0, [1, 0, 2] : vector<8x28x28xf32> -> vector<28x8x28xf32>
    %2 = vector.extract_strided_slice %1 {offsets = [0, 0, 0], sizes = [24, 8, 28], strides = [1, 1, 1]} : vector<28x8x28xf32> to vector<24x8x28xf32>
    %3 = vector.shape_cast %2 : vector<24x8x28xf32> to vector<192x28xf32>
    %4 = vector.extract_strided_slice %1 {offsets = [1, 0, 0], sizes = [24, 8, 28], strides = [1, 1, 1]} : vector<28x8x28xf32> to vector<24x8x28xf32>
    %5 = vector.shape_cast %4 : vector<24x8x28xf32> to vector<192x28xf32>
    %6 = vector.extract_strided_slice %1 {offsets = [2, 0, 0], sizes = [24, 8, 28], strides = [1, 1, 1]} : vector<28x8x28xf32> to vector<24x8x28xf32>
    %7 = vector.shape_cast %6 : vector<24x8x28xf32> to vector<192x28xf32>
    %8 = vector.extract_strided_slice %1 {offsets = [3, 0, 0], sizes = [24, 8, 28], strides = [1, 1, 1]} : vector<28x8x28xf32> to vector<24x8x28xf32>
    %9 = vector.shape_cast %8 : vector<24x8x28xf32> to vector<192x28xf32>
    %10 = vector.extract_strided_slice %1 {offsets = [4, 0, 0], sizes = [24, 8, 28], strides = [1, 1, 1]} : vector<28x8x28xf32> to vector<24x8x28xf32>
    %11 = vector.shape_cast %10 : vector<24x8x28xf32> to vector<192x28xf32>
    %12 = tpu.concatenate %3, %5, %7, %9, %11 in 1 : vector<192x28xf32>, vector<192x28xf32>, vector<192x28xf32>, vector<192x28xf32>, vector<192x28xf32> -> vector<192x140xf32>
    %13 = arith.truncf %12 : vector<192x140xf32> to vector<192x140xbf16>
    %c0_2 = arith.constant 0 : index
    %c0_3 = arith.constant 0 : index
    %c0_4 = arith.constant 0 : index
    %14 = vector.load %arg2[%c0_2, %c0_3, %c0_4] : memref<2x140x240xbf16, #tpu.memory_space<vmem>>, vector<1x140x240xbf16>
    %15 = vector.shape_cast %14 : vector<1x140x240xbf16> to vector<140x240xbf16>
    %cst = arith.constant dense<0.000000e+00> : vector<192x240xf32>
    %16 = tpu.matmul %13, %15, %cst {dimension_numbers = #tpu.dot_dimension_numbers<[1], [0], [0], [1], [0, 0, 1, 1], [], []>} : vector<192x140xbf16>, vector<140x240xbf16>, vector<192x240xf32> -> vector<192x240xf32>
    %c1 = arith.constant 1 : index
    %c0_5 = arith.constant 0 : index
    %c0_6 = arith.constant 0 : index
    %17 = vector.load %arg2[%c1, %c0_5, %c0_6] : memref<2x140x240xbf16, #tpu.memory_space<vmem>>, vector<1x140x240xbf16>
    %18 = vector.shape_cast %17 : vector<1x140x240xbf16> to vector<140x240xbf16>
    %cst_7 = arith.constant dense<0.000000e+00> : vector<192x240xf32>
    %19 = tpu.matmul %13, %18, %cst_7 {dimension_numbers = #tpu.dot_dimension_numbers<[1], [0], [0], [1], [0, 0, 1, 1], [], []>} : vector<192x140xbf16>, vector<140x240xbf16>, vector<192x240xf32> -> vector<192x240xf32>
    %20 = arith.maximumf %16, %19 : vector<192x240xf32>
    %c0_8 = arith.constant 0 : index
    %c0_9 = arith.constant 0 : index
    %21 = vector.load %arg3[%c0_8, %c0_9] : memref<1x240xf32, #tpu.memory_space<vmem>>, vector<1x240xf32>
    %22 = vector.broadcast %21 : vector<1x240xf32> to vector<192x240xf32>
    %23 = arith.addf %20, %22 : vector<192x240xf32>
    %cst_10 = arith.constant 0.000000e+00 : f32
    %24 = vector.broadcast %cst_10 : f32 to vector<192x240xf32>
    %25 = arith.maximumf %23, %24 : vector<192x240xf32>
    %26 = vector.shape_cast %25 : vector<192x240xf32> to vector<12x2x8x240xf32>
    %27 = vector.extract_strided_slice %26 {offsets = [0, 0, 0, 0], sizes = [12, 1, 8, 240], strides = [1, 1, 1, 1]} : vector<12x2x8x240xf32> to vector<12x1x8x240xf32>
    %28 = vector.shape_cast %27 : vector<12x1x8x240xf32> to vector<12x8x240xf32>
    %29 = vector.extract_strided_slice %26 {offsets = [0, 1, 0, 0], sizes = [12, 1, 8, 240], strides = [1, 1, 1, 1]} : vector<12x2x8x240xf32> to vector<12x1x8x240xf32>
    %30 = vector.shape_cast %29 : vector<12x1x8x240xf32> to vector<12x8x240xf32>
    %31 = arith.maximumf %28, %30 : vector<12x8x240xf32>
    %32 = arith.truncf %31 : vector<12x8x240xf32> to vector<12x8x240xbf16>
    %33 = vector.extract_strided_slice %32 {offsets = [0, 0, 0], sizes = [8, 8, 240], strides = [1, 1, 1]} : vector<12x8x240xbf16> to vector<8x8x240xbf16>
    %34 = vector.shape_cast %33 : vector<8x8x240xbf16> to vector<64x240xbf16>
    %c0_11 = arith.constant 0 : index
    %c0_12 = arith.constant 0 : index
    %c0_13 = arith.constant 0 : index
    %c0_14 = arith.constant 0 : index
    %35 = vector.load %arg4[%c0_11, %c0_12, %c0_13, %c0_14] : memref<2x5x240x200xbf16, #tpu.memory_space<vmem>>, vector<1x1x240x200xbf16>
    %36 = vector.shape_cast %35 : vector<1x1x240x200xbf16> to vector<240x200xbf16>
    %cst_15 = arith.constant dense<0.000000e+00> : vector<64x200xf32>
    %37 = tpu.matmul %34, %36, %cst_15 {dimension_numbers = #tpu.dot_dimension_numbers<[1], [0], [0], [1], [0, 0, 1, 1], [], []>} : vector<64x240xbf16>, vector<240x200xbf16>, vector<64x200xf32> -> vector<64x200xf32>
    %c1_16 = arith.constant 1 : index
    %c0_17 = arith.constant 0 : index
    %c0_18 = arith.constant 0 : index
    %c0_19 = arith.constant 0 : index
    %38 = vector.load %arg4[%c1_16, %c0_17, %c0_18, %c0_19] : memref<2x5x240x200xbf16, #tpu.memory_space<vmem>>, vector<1x1x240x200xbf16>
    %39 = vector.shape_cast %38 : vector<1x1x240x200xbf16> to vector<240x200xbf16>
    %cst_20 = arith.constant dense<0.000000e+00> : vector<64x200xf32>
    %40 = tpu.matmul %34, %39, %cst_20 {dimension_numbers = #tpu.dot_dimension_numbers<[1], [0], [0], [1], [0, 0, 1, 1], [], []>} : vector<64x240xbf16>, vector<240x200xbf16>, vector<64x200xf32> -> vector<64x200xf32>
    %41 = vector.extract_strided_slice %32 {offsets = [1, 0, 0], sizes = [8, 8, 240], strides = [1, 1, 1]} : vector<12x8x240xbf16> to vector<8x8x240xbf16>
    %42 = vector.shape_cast %41 : vector<8x8x240xbf16> to vector<64x240xbf16>
    %c0_21 = arith.constant 0 : index
    %c1_22 = arith.constant 1 : index
    %c0_23 = arith.constant 0 : index
    %c0_24 = arith.constant 0 : index
    %43 = vector.load %arg4[%c0_21, %c1_22, %c0_23, %c0_24] : memref<2x5x240x200xbf16, #tpu.memory_space<vmem>>, vector<1x1x240x200xbf16>
    %44 = vector.shape_cast %43 : vector<1x1x240x200xbf16> to vector<240x200xbf16>
    %cst_25 = arith.constant dense<0.000000e+00> : vector<64x200xf32>
    %45 = tpu.matmul %42, %44, %cst_25 {dimension_numbers = #tpu.dot_dimension_numbers<[1], [0], [0], [1], [0, 0, 1, 1], [], []>} : vector<64x240xbf16>, vector<240x200xbf16>, vector<64x200xf32> -> vector<64x200xf32>
    %c1_26 = arith.constant 1 : index
    %c1_27 = arith.constant 1 : index
    %c0_28 = arith.constant 0 : index
    %c0_29 = arith.constant 0 : index
    %46 = vector.load %arg4[%c1_26, %c1_27, %c0_28, %c0_29] : memref<2x5x240x200xbf16, #tpu.memory_space<vmem>>, vector<1x1x240x200xbf16>
    %47 = vector.shape_cast %46 : vector<1x1x240x200xbf16> to vector<240x200xbf16>
    %cst_30 = arith.constant dense<0.000000e+00> : vector<64x200xf32>
    %48 = tpu.matmul %42, %47, %cst_30 {dimension_numbers = #tpu.dot_dimension_numbers<[1], [0], [0], [1], [0, 0, 1, 1], [], []>} : vector<64x240xbf16>, vector<240x200xbf16>, vector<64x200xf32> -> vector<64x200xf32>
    %49 = arith.addf %37, %45 : vector<64x200xf32>
    %50 = arith.addf %40, %48 : vector<64x200xf32>
    %51 = vector.extract_strided_slice %32 {offsets = [2, 0, 0], sizes = [8, 8, 240], strides = [1, 1, 1]} : vector<12x8x240xbf16> to vector<8x8x240xbf16>
    %52 = vector.shape_cast %51 : vector<8x8x240xbf16> to vector<64x240xbf16>
    %c0_31 = arith.constant 0 : index
    %c2 = arith.constant 2 : index
    %c0_32 = arith.constant 0 : index
    %c0_33 = arith.constant 0 : index
    %53 = vector.load %arg4[%c0_31, %c2, %c0_32, %c0_33] : memref<2x5x240x200xbf16, #tpu.memory_space<vmem>>, vector<1x1x240x200xbf16>
    %54 = vector.shape_cast %53 : vector<1x1x240x200xbf16> to vector<240x200xbf16>
    %cst_34 = arith.constant dense<0.000000e+00> : vector<64x200xf32>
    %55 = tpu.matmul %52, %54, %cst_34 {dimension_numbers = #tpu.dot_dimension_numbers<[1], [0], [0], [1], [0, 0, 1, 1], [], []>} : vector<64x240xbf16>, vector<240x200xbf16>, vector<64x200xf32> -> vector<64x200xf32>
    %c1_35 = arith.constant 1 : index
    %c2_36 = arith.constant 2 : index
    %c0_37 = arith.constant 0 : index
    %c0_38 = arith.constant 0 : index
    %56 = vector.load %arg4[%c1_35, %c2_36, %c0_37, %c0_38] : memref<2x5x240x200xbf16, #tpu.memory_space<vmem>>, vector<1x1x240x200xbf16>
    %57 = vector.shape_cast %56 : vector<1x1x240x200xbf16> to vector<240x200xbf16>
    %cst_39 = arith.constant dense<0.000000e+00> : vector<64x200xf32>
    %58 = tpu.matmul %52, %57, %cst_39 {dimension_numbers = #tpu.dot_dimension_numbers<[1], [0], [0], [1], [0, 0, 1, 1], [], []>} : vector<64x240xbf16>, vector<240x200xbf16>, vector<64x200xf32> -> vector<64x200xf32>
    %59 = arith.addf %49, %55 : vector<64x200xf32>
    %60 = arith.addf %50, %58 : vector<64x200xf32>
    %61 = vector.extract_strided_slice %32 {offsets = [3, 0, 0], sizes = [8, 8, 240], strides = [1, 1, 1]} : vector<12x8x240xbf16> to vector<8x8x240xbf16>
    %62 = vector.shape_cast %61 : vector<8x8x240xbf16> to vector<64x240xbf16>
    %c0_40 = arith.constant 0 : index
    %c3 = arith.constant 3 : index
    %c0_41 = arith.constant 0 : index
    %c0_42 = arith.constant 0 : index
    %63 = vector.load %arg4[%c0_40, %c3, %c0_41, %c0_42] : memref<2x5x240x200xbf16, #tpu.memory_space<vmem>>, vector<1x1x240x200xbf16>
    %64 = vector.shape_cast %63 : vector<1x1x240x200xbf16> to vector<240x200xbf16>
    %cst_43 = arith.constant dense<0.000000e+00> : vector<64x200xf32>
    %65 = tpu.matmul %62, %64, %cst_43 {dimension_numbers = #tpu.dot_dimension_numbers<[1], [0], [0], [1], [0, 0, 1, 1], [], []>} : vector<64x240xbf16>, vector<240x200xbf16>, vector<64x200xf32> -> vector<64x200xf32>
    %c1_44 = arith.constant 1 : index
    %c3_45 = arith.constant 3 : index
    %c0_46 = arith.constant 0 : index
    %c0_47 = arith.constant 0 : index
    %66 = vector.load %arg4[%c1_44, %c3_45, %c0_46, %c0_47] : memref<2x5x240x200xbf16, #tpu.memory_space<vmem>>, vector<1x1x240x200xbf16>
    %67 = vector.shape_cast %66 : vector<1x1x240x200xbf16> to vector<240x200xbf16>
    %cst_48 = arith.constant dense<0.000000e+00> : vector<64x200xf32>
    %68 = tpu.matmul %62, %67, %cst_48 {dimension_numbers = #tpu.dot_dimension_numbers<[1], [0], [0], [1], [0, 0, 1, 1], [], []>} : vector<64x240xbf16>, vector<240x200xbf16>, vector<64x200xf32> -> vector<64x200xf32>
    %69 = arith.addf %59, %65 : vector<64x200xf32>
    %70 = arith.addf %60, %68 : vector<64x200xf32>
    %71 = vector.extract_strided_slice %32 {offsets = [4, 0, 0], sizes = [8, 8, 240], strides = [1, 1, 1]} : vector<12x8x240xbf16> to vector<8x8x240xbf16>
    %72 = vector.shape_cast %71 : vector<8x8x240xbf16> to vector<64x240xbf16>
    %c0_49 = arith.constant 0 : index
    %c4 = arith.constant 4 : index
    %c0_50 = arith.constant 0 : index
    %c0_51 = arith.constant 0 : index
    %73 = vector.load %arg4[%c0_49, %c4, %c0_50, %c0_51] : memref<2x5x240x200xbf16, #tpu.memory_space<vmem>>, vector<1x1x240x200xbf16>
    %74 = vector.shape_cast %73 : vector<1x1x240x200xbf16> to vector<240x200xbf16>
    %cst_52 = arith.constant dense<0.000000e+00> : vector<64x200xf32>
    %75 = tpu.matmul %72, %74, %cst_52 {dimension_numbers = #tpu.dot_dimension_numbers<[1], [0], [0], [1], [0, 0, 1, 1], [], []>} : vector<64x240xbf16>, vector<240x200xbf16>, vector<64x200xf32> -> vector<64x200xf32>
    %c1_53 = arith.constant 1 : index
    %c4_54 = arith.constant 4 : index
    %c0_55 = arith.constant 0 : index
    %c0_56 = arith.constant 0 : index
    %76 = vector.load %arg4[%c1_53, %c4_54, %c0_55, %c0_56] : memref<2x5x240x200xbf16, #tpu.memory_space<vmem>>, vector<1x1x240x200xbf16>
    %77 = vector.shape_cast %76 : vector<1x1x240x200xbf16> to vector<240x200xbf16>
    %cst_57 = arith.constant dense<0.000000e+00> : vector<64x200xf32>
    %78 = tpu.matmul %72, %77, %cst_57 {dimension_numbers = #tpu.dot_dimension_numbers<[1], [0], [0], [1], [0, 0, 1, 1], [], []>} : vector<64x240xbf16>, vector<240x200xbf16>, vector<64x200xf32> -> vector<64x200xf32>
    %79 = arith.addf %69, %75 : vector<64x200xf32>
    %80 = arith.addf %70, %78 : vector<64x200xf32>
    %81 = arith.maximumf %79, %80 : vector<64x200xf32>
    %c0_58 = arith.constant 0 : index
    %c0_59 = arith.constant 0 : index
    %82 = vector.load %arg5[%c0_58, %c0_59] : memref<1x200xf32, #tpu.memory_space<vmem>>, vector<1x200xf32>
    %83 = vector.broadcast %82 : vector<1x200xf32> to vector<64x200xf32>
    %84 = arith.addf %81, %83 : vector<64x200xf32>
    %cst_60 = arith.constant 0.000000e+00 : f32
    %85 = vector.broadcast %cst_60 : f32 to vector<64x200xf32>
    %86 = arith.maximumf %84, %85 : vector<64x200xf32>
    %87 = vector.shape_cast %86 : vector<64x200xf32> to vector<4x2x8x200xf32>
    %88 = vector.extract_strided_slice %87 {offsets = [0, 0, 0, 0], sizes = [4, 1, 8, 200], strides = [1, 1, 1, 1]} : vector<4x2x8x200xf32> to vector<4x1x8x200xf32>
    %89 = vector.shape_cast %88 : vector<4x1x8x200xf32> to vector<4x8x200xf32>
    %90 = vector.extract_strided_slice %87 {offsets = [0, 1, 0, 0], sizes = [4, 1, 8, 200], strides = [1, 1, 1, 1]} : vector<4x2x8x200xf32> to vector<4x1x8x200xf32>
    %91 = vector.shape_cast %90 : vector<4x1x8x200xf32> to vector<4x8x200xf32>
    %92 = arith.maximumf %89, %91 : vector<4x8x200xf32>
    %93 = arith.truncf %92 : vector<4x8x200xf32> to vector<4x8x200xbf16>
    %94 = vector.extract_strided_slice %93 {offsets = [0, 0, 0], sizes = [1, 8, 200], strides = [1, 1, 1]} : vector<4x8x200xbf16> to vector<1x8x200xbf16>
    %95 = vector.shape_cast %94 : vector<1x8x200xbf16> to vector<8x200xbf16>
    %c0_61 = arith.constant 0 : index
    %c0_62 = arith.constant 0 : index
    %c0_63 = arith.constant 0 : index
    %96 = vector.load %arg6[%c0_61, %c0_62, %c0_63] : memref<4x200x512xbf16, #tpu.memory_space<vmem>>, vector<1x200x512xbf16>
    %97 = vector.shape_cast %96 : vector<1x200x512xbf16> to vector<200x512xbf16>
    %cst_64 = arith.constant dense<0.000000e+00> : vector<8x512xf32>
    %98 = tpu.matmul %95, %97, %cst_64 {dimension_numbers = #tpu.dot_dimension_numbers<[1], [0], [0], [1], [0, 0, 1, 1], [], []>} : vector<8x200xbf16>, vector<200x512xbf16>, vector<8x512xf32> -> vector<8x512xf32>
    %99 = vector.extract_strided_slice %93 {offsets = [1, 0, 0], sizes = [1, 8, 200], strides = [1, 1, 1]} : vector<4x8x200xbf16> to vector<1x8x200xbf16>
    %100 = vector.shape_cast %99 : vector<1x8x200xbf16> to vector<8x200xbf16>
    %c1_65 = arith.constant 1 : index
    %c0_66 = arith.constant 0 : index
    %c0_67 = arith.constant 0 : index
    %101 = vector.load %arg6[%c1_65, %c0_66, %c0_67] : memref<4x200x512xbf16, #tpu.memory_space<vmem>>, vector<1x200x512xbf16>
    %102 = vector.shape_cast %101 : vector<1x200x512xbf16> to vector<200x512xbf16>
    %cst_68 = arith.constant dense<0.000000e+00> : vector<8x512xf32>
    %103 = tpu.matmul %100, %102, %cst_68 {dimension_numbers = #tpu.dot_dimension_numbers<[1], [0], [0], [1], [0, 0, 1, 1], [], []>} : vector<8x200xbf16>, vector<200x512xbf16>, vector<8x512xf32> -> vector<8x512xf32>
    %104 = arith.addf %98, %103 : vector<8x512xf32>
    %105 = vector.extract_strided_slice %93 {offsets = [2, 0, 0], sizes = [1, 8, 200], strides = [1, 1, 1]} : vector<4x8x200xbf16> to vector<1x8x200xbf16>
    %106 = vector.shape_cast %105 : vector<1x8x200xbf16> to vector<8x200xbf16>
    %c2_69 = arith.constant 2 : index
    %c0_70 = arith.constant 0 : index
    %c0_71 = arith.constant 0 : index
    %107 = vector.load %arg6[%c2_69, %c0_70, %c0_71] : memref<4x200x512xbf16, #tpu.memory_space<vmem>>, vector<1x200x512xbf16>
    %108 = vector.shape_cast %107 : vector<1x200x512xbf16> to vector<200x512xbf16>
    %cst_72 = arith.constant dense<0.000000e+00> : vector<8x512xf32>
    %109 = tpu.matmul %106, %108, %cst_72 {dimension_numbers = #tpu.dot_dimension_numbers<[1], [0], [0], [1], [0, 0, 1, 1], [], []>} : vector<8x200xbf16>, vector<200x512xbf16>, vector<8x512xf32> -> vector<8x512xf32>
    %110 = arith.addf %104, %109 : vector<8x512xf32>
    %111 = vector.extract_strided_slice %93 {offsets = [3, 0, 0], sizes = [1, 8, 200], strides = [1, 1, 1]} : vector<4x8x200xbf16> to vector<1x8x200xbf16>
    %112 = vector.shape_cast %111 : vector<1x8x200xbf16> to vector<8x200xbf16>
    %c3_73 = arith.constant 3 : index
    %c0_74 = arith.constant 0 : index
    %c0_75 = arith.constant 0 : index
    %113 = vector.load %arg6[%c3_73, %c0_74, %c0_75] : memref<4x200x512xbf16, #tpu.memory_space<vmem>>, vector<1x200x512xbf16>
    %114 = vector.shape_cast %113 : vector<1x200x512xbf16> to vector<200x512xbf16>
    %cst_76 = arith.constant dense<0.000000e+00> : vector<8x512xf32>
    %115 = tpu.matmul %112, %114, %cst_76 {dimension_numbers = #tpu.dot_dimension_numbers<[1], [0], [0], [1], [0, 0, 1, 1], [], []>} : vector<8x200xbf16>, vector<200x512xbf16>, vector<8x512xf32> -> vector<8x512xf32>
    %116 = arith.addf %110, %115 : vector<8x512xf32>
    %c0_77 = arith.constant 0 : index
    %c0_78 = arith.constant 0 : index
    %117 = vector.load %arg7[%c0_77, %c0_78] : memref<1x512xf32, #tpu.memory_space<vmem>>, vector<1x512xf32>
    %118 = vector.broadcast %117 : vector<1x512xf32> to vector<8x512xf32>
    %119 = arith.addf %116, %118 : vector<8x512xf32>
    %cst_79 = arith.constant 0.000000e+00 : f32
    %120 = vector.broadcast %cst_79 : f32 to vector<8x512xf32>
    %121 = arith.maximumf %119, %120 : vector<8x512xf32>
    %122 = arith.truncf %121 : vector<8x512xf32> to vector<8x512xbf16>
    %c0_80 = arith.constant 0 : index
    %c0_81 = arith.constant 0 : index
    %123 = vector.load %arg8[%c0_80, %c0_81] : memref<512x128xbf16, #tpu.memory_space<vmem>>, vector<512x128xbf16>
    %cst_82 = arith.constant dense<0.000000e+00> : vector<8x128xf32>
    %124 = tpu.matmul %122, %123, %cst_82 {dimension_numbers = #tpu.dot_dimension_numbers<[1], [0], [0], [1], [0, 0, 1, 1], [], []>} : vector<8x512xbf16>, vector<512x128xbf16>, vector<8x128xf32> -> vector<8x128xf32>
    %c0_83 = arith.constant 0 : index
    %c0_84 = arith.constant 0 : index
    %125 = vector.load %arg9[%c0_83, %c0_84] : memref<1x128xf32, #tpu.memory_space<vmem>>, vector<1x128xf32>
    %126 = vector.broadcast %125 : vector<1x128xf32> to vector<8x128xf32>
    %127 = arith.addf %124, %126 : vector<8x128xf32>
    %c0_85 = arith.constant 0 : index
    %c0_86 = arith.constant 0 : index
    %128 = vector.load %arg10[%c0_85, %c0_86] : memref<8x128xf32, #tpu.memory_space<vmem>>, vector<8x128xf32>
    tpu.vector_store %arg10[%c0_85, %c0_86], %127 {strides = array<i32>} : memref<8x128xf32, #tpu.memory_space<vmem>>, vector<8x128xf32>,
    return
  }
  func.func @transform_0(%arg0: i32) -> (i32, i32, i32) {
    %c0_i32 = arith.constant 0 : i32
    %c0_i32_0 = arith.constant 0 : i32
    %c0_i32_1 = arith.constant 0 : i32
    return %arg0, %c0_i32, %c0_i32_0 : i32, i32, i32
  }
  func.func @transform_1(%arg0: i32) -> (i32, i32, i32) {
    %c0_i32 = arith.constant 0 : i32
    %c0_i32_0 = arith.constant 0 : i32
    %c0_i32_1 = arith.constant 0 : i32
    %c0_i32_2 = arith.constant 0 : i32
    return %c0_i32, %c0_i32_0, %c0_i32_1 : i32, i32, i32
  }
  func.func @transform_2(%arg0: i32) -> (i32, i32) {
    %c0_i32 = arith.constant 0 : i32
    %c0_i32_0 = arith.constant 0 : i32
    %c0_i32_1 = arith.constant 0 : i32
    return %c0_i32, %c0_i32_0 : i32, i32
  }
  func.func @transform_3(%arg0: i32) -> (i32, i32, i32, i32) {
    %c0_i32 = arith.constant 0 : i32
    %c0_i32_0 = arith.constant 0 : i32
    %c0_i32_1 = arith.constant 0 : i32
    %c0_i32_2 = arith.constant 0 : i32
    %c0_i32_3 = arith.constant 0 : i32
    return %c0_i32, %c0_i32_0, %c0_i32_1, %c0_i32_2 : i32, i32, i32, i32
  }
  func.func @transform_4(%arg0: i32) -> (i32, i32) {
    %c0_i32 = arith.constant 0 : i32
    %c0_i32_0 = arith.constant 0 : i32
    %c0_i32_1 = arith.constant 0 : i32
    return %c0_i32, %c0_i32_0 : i32, i32
  }
  func.func @transform_5(%arg0: i32) -> (i32, i32, i32) {
    %c0_i32 = arith.constant 0 : i32
    %c0_i32_0 = arith.constant 0 : i32
    %c0_i32_1 = arith.constant 0 : i32
    %c0_i32_2 = arith.constant 0 : i32
    return %c0_i32, %c0_i32_0, %c0_i32_1 : i32, i32, i32
  }
  func.func @transform_6(%arg0: i32) -> (i32, i32) {
    %c0_i32 = arith.constant 0 : i32
    %c0_i32_0 = arith.constant 0 : i32
    %c0_i32_1 = arith.constant 0 : i32
    return %c0_i32, %c0_i32_0 : i32, i32
  }
  func.func @transform_7(%arg0: i32) -> (i32, i32) {
    %c0_i32 = arith.constant 0 : i32
    %c0_i32_0 = arith.constant 0 : i32
    %c0_i32_1 = arith.constant 0 : i32
    return %c0_i32, %c0_i32_0 : i32, i32
  }
  func.func @transform_8(%arg0: i32) -> (i32, i32) {
    %c0_i32 = arith.constant 0 : i32
    %c0_i32_0 = arith.constant 0 : i32
    %c0_i32_1 = arith.constant 0 : i32
    return %c0_i32, %c0_i32_0 : i32, i32
  }
  func.func @transform_9(%arg0: i32) -> (i32, i32) {
    %c0_i32 = arith.constant 0 : i32
    %c0_i32_0 = arith.constant 0 : i32
    return %arg0, %c0_i32 : i32, i32
  }
}

</mosaic_0001>

<llo_original>
// kernel: tile.13
$region0: #{tile.13}
  #allocation0 [shape = 's32[1]{0}', space=sflag, size = 0x4, scoped, tag = 'scoped memory for tile.13']
  %s0 = inlined_call_operand.vmem [shape: f32[20], index: 0, kind: input, shape index: {}]
  %s1 = inlined_call_operand.vmem [shape: f32[12,20], index: 1, kind: output, shape index: {}]
  // Predicated region
  $region2: #{tile.13} parent=0 // pred_check
    _
  $region3: #{tile.13} parent=0 // pred_check_branch
    %3 = sbr.rel (0) target = $region5
  $region4: #{tile.13} parent=0 // pred_region
    _
  $region5: #{tile.13} parent=0 // pred_fallthru
    _
  %v4 = vld [vmem:[%s0] ss:$0 sm:$0xff]
  %5 = vst [vmem:[%s1] sm:$0xff] %v4
  %s6 = scalar_lea.vmem %s1, 8
  %7 = vst [vmem:[%s6] sm:$0xff] %v4

// kernel: tile.14
$region0: #{tile.14}
  %s0 = inlined_call_operand.vmem [shape: f32[12,20], index: 0, kind: input, shape index: {}]
  %s1 = inlined_call_operand.vmem [shape: f32[1,240], index: 1, kind: output, shape index: {}]
  $region1: #{tile.14} parent=0
    #allocation0 [shape = 'u8[8192]{0}', space=vmem, size = 0x2000, scoped, tag = 'scoped mem for output reshape']
    %v2 = vld [vmem:[%s0] sm:$0x1]
    %vm3 = vcmask 162816
    %4 = vst.msk [vmem:[#allocation0] sm:$0x1] %vm3, %v2
    %s5 = scalar_lea.vmem %s0, 6
    %v6 = vld [vmem:[%s5] sm:$0x1]
    %s7 = scalar_lea.vmem %s0, 6
    %v8 = vld [vmem:[%s7] sm:$0x1]
    %vm9 = vcmask 64512
    %v10 = vsel %vm9, %v8, %v6
    %11 = vrot.lane.b32.xlu0 %v10, 120
    %v12 = vpop.permute.xlu0 %11
    %vm13 = vcmask 97280
    %s14 = scalar_lea.vmem [#allocation0], 8
    %15 = vst.msk [vmem:[%s14] sm:$0x1] %vm13, %v12
    %vm16 = vcmask 1048512
    %17 = vst.msk [vmem:[#allocation0] sm:$0x1] %vm16, %v12
    %s18 = scalar_lea.vmem %s0, 5
    %v19 = vld [vmem:[%s18] sm:$0x1]
    %20 = vrot.lane.b32.xlu0 %v19, 100
    %v21 = vpop.permute.xlu0 %20
    %vm22 = vcmask 982816
    %23 = vst.msk [vmem:[#allocation0] sm:$0x1] %vm22, %v21
    %s24 = scalar_lea.vmem %s0, 11
    %v25 = vld [vmem:[%s24] sm:$0x1]
    %26 = vrot.lane.b32.xlu0 %v25, 92
    %v27 = vpop.permute.xlu0 %26
    %vm28 = vcmask 917216
    %s29 = scalar_lea.vmem [#allocation0], 8
    %30 = vst.msk [vmem:[%s29] sm:$0x1] %vm28, %v27
    %s31 = scalar_lea.vmem %s0, 4
    %v32 = vld [vmem:[%s31] sm:$0x1]
    %33 = vrot.lane.b32.xlu0 %v32, 80
    %v34 = vpop.permute.xlu0 %33
    %vm35 = vcmask 818816
    %36 = vst.msk [vmem:[#allocation0] sm:$0x1] %vm35, %v34
    %s37 = scalar_lea.vmem %s0, 10
    %v38 = vld [vmem:[%s37] sm:$0x1]
    %39 = vrot.lane.b32.xlu0 %v38, 72
    %v40 = vpop.permute.xlu0 %39
    %vm41 = vcmask 753216
    %s42 = scalar_lea.vmem [#allocation0], 8
    %43 = vst.msk [vmem:[%s42] sm:$0x1] %vm41, %v40
    %s44 = scalar_lea.vmem %s0, 3
    %v45 = vld [vmem:[%s44] sm:$0x1]
    %46 = vrot.lane.b32.xlu0 %v45, 60
    %v47 = vpop.permute.xlu0 %46
    %vm48 = vcmask 654816
    %49 = vst.msk [vmem:[#allocation0] sm:$0x1] %vm48, %v47
    %s50 = scalar_lea.vmem %s0, 9
    %v51 = vld [vmem:[%s50] sm:$0x1]
    %52 = vrot.lane.b32.xlu0 %v51, 52
    %v53 = vpop.permute.xlu0 %52
    %vm54 = vcmask 589216
    %s55 = scalar_lea.vmem [#allocation0], 8
    %56 = vst.msk [vmem:[%s55] sm:$0x1] %vm54, %v53
    %s57 = scalar_lea.vmem %s0, 2
    %v58 = vld [vmem:[%s57] sm:$0x1]
    %59 = vrot.lane.b32.xlu0 %v58, 40
    %v60 = vpop.permute.xlu0 %59
    %vm61 = vcmask 490816
    %62 = vst.msk [vmem:[#allocation0] sm:$0x1] %vm61, %v60
    %s63 = scalar_lea.vmem %s0, 8
    %v64 = vld [vmem:[%s63] sm:$0x1]
    %65 = vrot.lane.b32.xlu0 %v64, 32
    %v66 = vpop.permute.xlu0 %65
    %vm67 = vcmask 425216
    %s68 = scalar_lea.vmem [#allocation0], 8
    %69 = vst.msk [vmem:[%s68] sm:$0x1] %vm67, %v66
    %s70 = scalar_lea.vmem %s0, 1
    %v71 = vld [vmem:[%s70] sm:$0x1]
    %72 = vrot.lane.b32.xlu0 %v71, 20
    %v73 = vpop.permute.xlu0 %72
    %vm74 = vcmask 326816
    %75 = vst.msk [vmem:[#allocation0] sm:$0x1] %vm74, %v73
    %s76 = scalar_lea.vmem %s0, 7
    %v77 = vld [vmem:[%s76] sm:$0x1]
    %78 = vrot.lane.b32.xlu0 %v77, 12
    %v79 = vpop.permute.xlu0 %78
    %vm80 = vcmask 261216
    %s81 = scalar_lea.vmem [#allocation0], 8
    %82 = vst.msk [vmem:[%s81] sm:$0x1] %vm80, %v79
    %s84 = ssub.s32 2, 1
    %v85 = vld [vmem:[#allocation0] sm:%s84]
    %s87 = ssub.s32 2, 1
    %88 = vst [vmem:[%s1] sm:%s87] %v85
    %s89 = scalar_lea.vmem [#allocation0], 8
    %v90 = vld [vmem:[%s89] sm:%s84]
    %s92 = ssub.s32 2, 1
    %s93 = scalar_lea.vmem %s1, 1
    %94 = vst [vmem:[%s93] sm:%s92] %v90

// kernel: tile.18
$region0: #{tile.18}
  #allocation0 [shape = 's32[1]{0}', space=sflag, size = 0x4, scoped, tag = 'scoped memory for tile.18']
  %s0 = inlined_call_operand.vmem [shape: f32[50], index: 0, kind: input, shape index: {}]
  %s1 = inlined_call_operand.vmem [shape: f32[4,50], index: 1, kind: output, shape index: {}]
  // Predicated region
  $region2: #{tile.18} parent=0 // pred_check
    _
  $region3: #{tile.18} parent=0 // pred_check_branch
    %3 = sbr.rel (0) target = $region5
  $region4: #{tile.18} parent=0 // pred_region
    _
  $region5: #{tile.18} parent=0 // pred_fallthru
    _
  %v4 = vld [vmem:[%s0] ss:$0 sm:$0xff]
  %5 = vst [vmem:[%s1] sm:$0xf] %v4

// kernel: tile.19
$region0: #{tile.19}
  %s0 = inlined_call_operand.vmem [shape: f32[4,50], index: 0, kind: input, shape index: {}]
  %s1 = inlined_call_operand.vmem [shape: f32[1,200], index: 1, kind: output, shape index: {}]
  $region1: #{tile.19} parent=0
    #allocation0 [shape = 'u8[8192]{0}', space=vmem, size = 0x2000, scoped, tag = 'scoped mem for output reshape']
    #allocation1 [shape = 'u8[4096]{0}', space=vmem, size = 0x1000, scoped, tag = 'scoped mem for input reshape']
    %s3 = ssub.s32 16, 1
    %v4 = vld [vmem:[%s0] sm:%s3]
    %5 = vst [vmem:[#allocation1] sm:%s3] %v4
    %v6 = vld [vmem:[#allocation1] sm:$0x1]
    %vm7 = vcmask 408576
    %8 = vst.msk [vmem:[#allocation0] sm:$0x1] %vm7, %v6
    %s9 = scalar_lea.vmem [#allocation1], 2
    %v10 = vld [vmem:[%s9] sm:$0x1]
    %s11 = scalar_lea.vmem [#allocation1], 2
    %v12 = vld [vmem:[%s11] sm:$0x1]
    %vm13 = vcmask 228352
    %v14 = vsel %vm13, %v12, %v10
    %15 = vrot.lane.b32.xlu0 %v14, 100
    %v16 = vpop.permute.xlu0 %15
    %vm17 = vcmask 179200
    %s18 = scalar_lea.vmem [#allocation0], 8
    %19 = vst.msk [vmem:[%s18] sm:$0x1] %vm17, %v16
    %vm20 = vcmask 1048352
    %21 = vst.msk [vmem:[#allocation0] sm:$0x1] %vm20, %v16
    %s22 = scalar_lea.vmem [#allocation1], 1
    %v23 = vld [vmem:[%s22] sm:$0x1]
    %24 = vrot.lane.b32.xlu0 %v23, 50
    %v25 = vpop.permute.xlu0 %24
    %vm26 = vcmask 818576
    %27 = vst.msk [vmem:[#allocation0] sm:$0x1] %vm26, %v25
    %s28 = scalar_lea.vmem [#allocation1], 3
    %v29 = vld [vmem:[%s28] sm:$0x1]
    %30 = vrot.lane.b32.xlu0 %v29, 22
    %v31 = vpop.permute.xlu0 %30
    %vm32 = vcmask 588976
    %s33 = scalar_lea.vmem [#allocation0], 8
    %34 = vst.msk [vmem:[%s33] sm:$0x1] %vm32, %v31
    %s36 = ssub.s32 2, 1
    %v37 = vld [vmem:[#allocation0] sm:%s36]
    %s39 = ssub.s32 2, 1
    %40 = vst [vmem:[%s1] sm:%s39] %v37
    %s41 = scalar_lea.vmem [#allocation0], 8
    %v42 = vld [vmem:[%s41] sm:%s36]
    %s44 = ssub.s32 2, 1
    %s45 = scalar_lea.vmem %s1, 1
    %46 = vst [vmem:[%s45] sm:%s44] %v42

// kernel: lenet_forward.1
$region0: #{lenet_forward.1}
  #allocation0 [shape = 'u32[]', space=smem, size = 0x4, offset = 0x4, fixed_abs, tag = 'smem constant byte address 0x4 - core index']
  #allocation1 [shape = 'u32[72,128]{1,0:T(1,128)}', space=vmem, size = 0x9000, scoped, tag = 'internal scratch']
  %s0 = inlined_call_operand.vmem [shape: f32[8,28,28], index: 0, kind: input, shape index: {}]
  %s1 = inlined_call_operand.vmem [shape: bf16[2,140,240], index: 1, kind: input, shape index: {}]
  %s2 = inlined_call_operand.vmem [shape: f32[1,240], index: 2, kind: input, shape index: {}]
  %s3 = inlined_call_operand.vmem [shape: bf16[2,5,240,200], index: 3, kind: input, shape index: {}]
  %s4 = inlined_call_operand.vmem [shape: f32[1,200], index: 4, kind: input, shape index: {}]
  %s5 = inlined_call_operand.vmem [shape: bf16[4,200,512], index: 5, kind: input, shape index: {}]
  %s6 = inlined_call_operand.vmem [shape: f32[1,512], index: 6, kind: input, shape index: {}]
  %s7 = inlined_call_operand.vmem [shape: bf16[512,128], index: 7, kind: input, shape index: {}]
  %s8 = inlined_call_operand.vmem [shape: f32[1,128], index: 8, kind: input, shape index: {}]
  %s9 = inlined_call_operand.vmem [shape: f32[8,128], index: 9, kind: output, shape index: {}]
  %s10 = sld [smem:[#allocation0]]
  $region46: #{lenet_forward.1} parent=0
    _
  %s12 = ssub.s32 1, %s10
  %s13 = scalar_select 0, %s12, %s10
  // Predicated region
  $region2: #{lenet_forward.1} parent=0 // pred_check
    _
  $region3: #{lenet_forward.1} parent=0 // pred_check_branch
    %15 = sbr.rel (0) target = $region5
  $region4: #{lenet_forward.1} parent=0 // pred_region
    _
  $region5: #{lenet_forward.1} parent=0 // pred_fallthru
    _
  // Predicated region
  $region6: #{lenet_forward.1} parent=0 // pred_check
    _
  $region7: #{lenet_forward.1} parent=0 // pred_check_branch
    %17 = sbr.rel (0) target = $region9
  $region8: #{lenet_forward.1} parent=0 // pred_region
    _
  $region9: #{lenet_forward.1} parent=0 // pred_fallthru
    _
  // Predicated region
  $region10: #{lenet_forward.1} parent=0 // pred_check
    _
  $region11: #{lenet_forward.1} parent=0 // pred_check_branch
    %19 = sbr.rel (0) target = $region13
  $region12: #{lenet_forward.1} parent=0 // pred_region
    _
  $region13: #{lenet_forward.1} parent=0 // pred_fallthru
    _
  // Predicated region
  $region14: #{lenet_forward.1} parent=0 // pred_check
    _
  $region15: #{lenet_forward.1} parent=0 // pred_check_branch
    %21 = sbr.rel (0) target = $region17
  $region16: #{lenet_forward.1} parent=0 // pred_region
    _
  $region17: #{lenet_forward.1} parent=0 // pred_fallthru
    _
  // Predicated region
  $region18: #{lenet_forward.1} parent=0 // pred_check
    _
  $region19: #{lenet_forward.1} parent=0 // pred_check_branch
    %23 = sbr.rel (0) target = $region21
  $region20: #{lenet_forward.1} parent=0 // pred_region
    _
  $region21: #{lenet_forward.1} parent=0 // pred_fallthru
    _
  // Predicated region
  $region22: #{lenet_forward.1} parent=0 // pred_check
    _
  $region23: #{lenet_forward.1} parent=0 // pred_check_branch
    %25 = sbr.rel (0) target = $region25
  $region24: #{lenet_forward.1} parent=0 // pred_region
    _
  $region25: #{lenet_forward.1} parent=0 // pred_fallthru
    _
  // Predicated region
  $region26: #{lenet_forward.1} parent=0 // pred_check
    _
  $region27: #{lenet_forward.1} parent=0 // pred_check_branch
    %27 = sbr.rel (0) target = $region29
  $region28: #{lenet_forward.1} parent=0 // pred_region
    _
  $region29: #{lenet_forward.1} parent=0 // pred_fallthru
    _
  // Predicated region
  $region30: #{lenet_forward.1} parent=0 // pred_check
    _
  $region31: #{lenet_forward.1} parent=0 // pred_check_branch
    %29 = sbr.rel (0) target = $region33
  $region32: #{lenet_forward.1} parent=0 // pred_region
    _
  $region33: #{lenet_forward.1} parent=0 // pred_fallthru
    _
  // Predicated region
  $region34: #{lenet_forward.1} parent=0 // pred_check
    _
  $region35: #{lenet_forward.1} parent=0 // pred_check_branch
    %31 = sbr.rel (0) target = $region37
  $region36: #{lenet_forward.1} parent=0 // pred_region
    _
  $region37: #{lenet_forward.1} parent=0 // pred_fallthru
    _
  %v33 = vld [vmem:[%s0] sm:$0xff]
  %v34 = vld [vmem:[%s0 + $0x8] sm:$0xff]
  %v35 = vld [vmem:[%s0 + $0x10] sm:$0xff]
  %v36 = vld [vmem:[%s0 + $0x18] sm:$0xf]
  %v37 = vld [vmem:[%s0 + $0x20] sm:$0xff]
  %v38 = vld [vmem:[%s0 + $0x28] sm:$0xff]
  %v39 = vld [vmem:[%s0 + $0x30] sm:$0xff]
  %v40 = vld [vmem:[%s0 + $0x38] sm:$0xf]
  %v41 = vld [vmem:[%s0 + $0x40] sm:$0xff]
  %v42 = vld [vmem:[%s0 + $0x48] sm:$0xff]
  %v43 = vld [vmem:[%s0 + $0x50] sm:$0xff]
  %v44 = vld [vmem:[%s0 + $0x58] sm:$0xf]
  %v45 = vld [vmem:[%s0 + $0x60] sm:$0xff]
  %v46 = vld [vmem:[%s0 + $0x68] sm:$0xff]
  %v47 = vld [vmem:[%s0 + $0x70] sm:$0xff]
  %v48 = vld [vmem:[%s0 + $0x78] sm:$0xf]
  %v49 = vld [vmem:[%s0 + $0x80] sm:$0xff]
  %v50 = vld [vmem:[%s0 + $0x88] sm:$0xff]
  %v51 = vld [vmem:[%s0 + $0x90] sm:$0xff]
  %v52 = vld [vmem:[%s0 + $0x98] sm:$0xf]
  %v53 = vld [vmem:[%s0 + $0xa0] sm:$0xff]
  %v54 = vld [vmem:[%s0 + $0xa8] sm:$0xff]
  %v55 = vld [vmem:[%s0 + $0xb0] sm:$0xff]
  %v56 = vld [vmem:[%s0 + $0xb8] sm:$0xf]
  %v57 = vld [vmem:[%s0 + $0xc0] sm:$0xff]
  %v58 = vld [vmem:[%s0 + $0xc8] sm:$0xff]
  %v59 = vld [vmem:[%s0 + $0xd0] sm:$0xff]
  %v60 = vld [vmem:[%s0 + $0xd8] sm:$0xf]
  %v61 = vld [vmem:[%s0 + $0xe0] sm:$0xff]
  %v62 = vld [vmem:[%s0 + $0xe8] sm:$0xff]
  %v63 = vld [vmem:[%s0 + $0xf0] sm:$0xff]
  %v64 = vld [vmem:[%s0 + $0xf8] sm:$0xf]
  %v65 = vrot.slane %v41, 4
  %vm66 = vcmask 1047556
  %v67 = vsel %vm66, %v65, %v33
  %v68 = vrot.slane %v33, 4
  %v69 = vsel %vm66, %v41, %v68
  %v71 = vunpack.c.l.s4 1983009808
  %v72 = vunpack.c.0.s8 %v71
  %v73 = vperm.slane %v67, %v72
  %v75 = vunpack.c.l.s4 1983009808
  %v76 = vunpack.c.0.s8 %v75
  %v77 = vperm.slane %v69, %v76
  %v78 = vrot.slane %v45, 4
  %v79 = vsel %vm66, %v78, %v37
  %v80 = vrot.slane %v37, 4
  %v81 = vsel %vm66, %v45, %v80
  %v83 = vunpack.c.l.s4 1983009808
  %v84 = vunpack.c.0.s8 %v83
  %v85 = vperm.slane %v79, %v84
  %v87 = vunpack.c.l.s4 1983009808
  %v88 = vunpack.c.0.s8 %v87
  %v89 = vperm.slane %v81, %v88
  %v90 = vrot.slane %v57, 4
  %v91 = vsel %vm66, %v90, %v49
  %v92 = vrot.slane %v49, 4
  %v93 = vsel %vm66, %v57, %v92
  %v95 = vunpack.c.l.s4 1983009808
  %v96 = vunpack.c.0.s8 %v95
  %v97 = vperm.slane %v91, %v96
  %v99 = vunpack.c.l.s4 1983009808
  %v100 = vunpack.c.0.s8 %v99
  %v101 = vperm.slane %v93, %v100
  %v102 = vrot.slane %v61, 4
  %v103 = vsel %vm66, %v102, %v53
  %v104 = vrot.slane %v53, 4
  %v105 = vsel %vm66, %v61, %v104
  %v107 = vunpack.c.l.s4 1983009808
  %v108 = vunpack.c.0.s8 %v107
  %v109 = vperm.slane %v103, %v108
  %v111 = vunpack.c.l.s4 1983009808
  %v112 = vunpack.c.0.s8 %v111
  %v113 = vperm.slane %v105, %v112
  %v114 = vrot.slane %v85, 4
  %v115 = vsel %vm66, %v114, %v73
  %v116 = vrot.slane %v73, 4
  %v117 = vsel %vm66, %v85, %v116
  %v119 = vunpack.c.l.s4 1934713408
  %v120 = vunpack.c.0.s8 %v119
  %v121 = vperm.slane %v115, %v120
  %v123 = vunpack.c.l.s4 1934713408
  %v124 = vunpack.c.0.s8 %v123
  %v125 = vperm.slane %v117, %v124
  %v126 = vrot.slane %v89, 4
  %v127 = vsel %vm66, %v126, %v77
  %v128 = vrot.slane %v77, 4
  %v129 = vsel %vm66, %v89, %v128
  %v131 = vunpack.c.l.s4 1934713408
  %v132 = vunpack.c.0.s8 %v131
  %v133 = vperm.slane %v127, %v132
  %v135 = vunpack.c.l.s4 1934713408
  %v136 = vunpack.c.0.s8 %v135
  %v137 = vperm.slane %v129, %v136
  %v138 = vrot.slane %v109, 4
  %v139 = vsel %vm66, %v138, %v97
  %v140 = vrot.slane %v97, 4
  %v141 = vsel %vm66, %v109, %v140
  %v143 = vunpack.c.l.s4 1934713408
  %v144 = vunpack.c.0.s8 %v143
  %v145 = vperm.slane %v139, %v144
  %v147 = vunpack.c.l.s4 1934713408
  %v148 = vunpack.c.0.s8 %v147
  %v149 = vperm.slane %v141, %v148
  %v150 = vrot.slane %v113, 4
  %v151 = vsel %vm66, %v150, %v101
  %v152 = vrot.slane %v101, 4
  %v153 = vsel %vm66, %v113, %v152
  %v155 = vunpack.c.l.s4 1934713408
  %v156 = vunpack.c.0.s8 %v155
  %v157 = vperm.slane %v151, %v156
  %v159 = vunpack.c.l.s4 1934713408
  %v160 = vunpack.c.0.s8 %v159
  %v161 = vperm.slane %v153, %v160
  %v162 = vrot.slane %v145, 4
  %v163 = vsel %vm66, %v162, %v121
  %v164 = vrot.slane %v121, 4
  %v165 = vsel %vm66, %v145, %v164
  %v166 = vrot.slane %v149, 4
  %v167 = vsel %vm66, %v166, %v125
  %v168 = vrot.slane %v125, 4
  %v169 = vsel %vm66, %v149, %v168
  %v170 = vrot.slane %v157, 4
  %v171 = vsel %vm66, %v170, %v133
  %v172 = vrot.slane %v133, 4
  %v173 = vsel %vm66, %v157, %v172
  %v174 = vrot.slane %v161, 4
  %v175 = vsel %vm66, %v174, %v137
  %v176 = vrot.slane %v137, 4
  %v177 = vsel %vm66, %v161, %v176
  %v178 = vrot.slane %v42, 4
  %v179 = vsel %vm66, %v178, %v34
  %v180 = vrot.slane %v34, 4
  %v181 = vsel %vm66, %v42, %v180
  %v183 = vunpack.c.l.s4 1983009808
  %v184 = vunpack.c.0.s8 %v183
  %v185 = vperm.slane %v179, %v184
  %v187 = vunpack.c.l.s4 1983009808
  %v188 = vunpack.c.0.s8 %v187
  %v189 = vperm.slane %v181, %v188
  %v190 = vrot.slane %v46, 4
  %v191 = vsel %vm66, %v190, %v38
  %v192 = vrot.slane %v38, 4
  %v193 = vsel %vm66, %v46, %v192
  %v195 = vunpack.c.l.s4 1983009808
  %v196 = vunpack.c.0.s8 %v195
  %v197 = vperm.slane %v191, %v196
  %v199 = vunpack.c.l.s4 1983009808
  %v200 = vunpack.c.0.s8 %v199
  %v201 = vperm.slane %v193, %v200
  %v202 = vrot.slane %v58, 4
  %v203 = vsel %vm66, %v202, %v50
  %v204 = vrot.slane %v50, 4
  %v205 = vsel %vm66, %v58, %v204
  %v207 = vunpack.c.l.s4 1983009808
  %v208 = vunpack.c.0.s8 %v207
  %v209 = vperm.slane %v203, %v208
  %v211 = vunpack.c.l.s4 1983009808
  %v212 = vunpack.c.0.s8 %v211
  %v213 = vperm.slane %v205, %v212
  %v214 = vrot.slane %v62, 4
  %v215 = vsel %vm66, %v214, %v54
  %v216 = vrot.slane %v54, 4
  %v217 = vsel %vm66, %v62, %v216
  %v219 = vunpack.c.l.s4 1983009808
  %v220 = vunpack.c.0.s8 %v219
  %v221 = vperm.slane %v215, %v220
  %v223 = vunpack.c.l.s4 1983009808
  %v224 = vunpack.c.0.s8 %v223
  %v225 = vperm.slane %v217, %v224
  %v226 = vrot.slane %v197, 4
  %v227 = vsel %vm66, %v226, %v185
  %v228 = vrot.slane %v185, 4
  %v229 = vsel %vm66, %v197, %v228
  %v231 = vunpack.c.l.s4 1934713408
  %v232 = vunpack.c.0.s8 %v231
  %v233 = vperm.slane %v227, %v232
  %v235 = vunpack.c.l.s4 1934713408
  %v236 = vunpack.c.0.s8 %v235
  %v237 = vperm.slane %v229, %v236
  %v238 = vrot.slane %v201, 4
  %v239 = vsel %vm66, %v238, %v189
  %v240 = vrot.slane %v189, 4
  %v241 = vsel %vm66, %v201, %v240
  %v243 = vunpack.c.l.s4 1934713408
  %v244 = vunpack.c.0.s8 %v243
  %v245 = vperm.slane %v239, %v244
  %v247 = vunpack.c.l.s4 1934713408
  %v248 = vunpack.c.0.s8 %v247
  %v249 = vperm.slane %v241, %v248
  %v250 = vrot.slane %v221, 4
  %v251 = vsel %vm66, %v250, %v209
  %v252 = vrot.slane %v209, 4
  %v253 = vsel %vm66, %v221, %v252
  %v255 = vunpack.c.l.s4 1934713408
  %v256 = vunpack.c.0.s8 %v255
  %v257 = vperm.slane %v251, %v256
  %v259 = vunpack.c.l.s4 1934713408
  %v260 = vunpack.c.0.s8 %v259
  %v261 = vperm.slane %v253, %v260
  %v262 = vrot.slane %v225, 4
  %v263 = vsel %vm66, %v262, %v213
  %v264 = vrot.slane %v213, 4
  %v265 = vsel %vm66, %v225, %v264
  %v267 = vunpack.c.l.s4 1934713408
  %v268 = vunpack.c.0.s8 %v267
  %v269 = vperm.slane %v263, %v268
  %v271 = vunpack.c.l.s4 1934713408
  %v272 = vunpack.c.0.s8 %v271
  %v273 = vperm.slane %v265, %v272
  %v274 = vrot.slane %v257, 4
  %v275 = vsel %vm66, %v274, %v233
  %v276 = vrot.slane %v233, 4
  %v277 = vsel %vm66, %v257, %v276
  %v278 = vrot.slane %v261, 4
  %v279 = vsel %vm66, %v278, %v237
  %v280 = vrot.slane %v237, 4
  %v281 = vsel %vm66, %v261, %v280
  %v282 = vrot.slane %v269, 4
  %v283 = vsel %vm66, %v282, %v245
  %v284 = vrot.slane %v245, 4
  %v285 = vsel %vm66, %v269, %v284
  %v286 = vrot.slane %v273, 4
  %v287 = vsel %vm66, %v286, %v249
  %v288 = vrot.slane %v249, 4
  %v289 = vsel %vm66, %v273, %v288
  %v290 = vrot.slane %v43, 4
  %v291 = vsel %vm66, %v290, %v35
  %v292 = vrot.slane %v35, 4
  %v293 = vsel %vm66, %v43, %v292
  %v295 = vunpack.c.l.s4 1983009808
  %v296 = vunpack.c.0.s8 %v295
  %v297 = vperm.slane %v291, %v296
  %v299 = vunpack.c.l.s4 1983009808
  %v300 = vunpack.c.0.s8 %v299
  %v301 = vperm.slane %v293, %v300
  %v302 = vrot.slane %v47, 4
  %v303 = vsel %vm66, %v302, %v39
  %v304 = vrot.slane %v39, 4
  %v305 = vsel %vm66, %v47, %v304
  %v307 = vunpack.c.l.s4 1983009808
  %v308 = vunpack.c.0.s8 %v307
  %v309 = vperm.slane %v303, %v308
  %v311 = vunpack.c.l.s4 1983009808
  %v312 = vunpack.c.0.s8 %v311
  %v313 = vperm.slane %v305, %v312
  %v314 = vrot.slane %v59, 4
  %v315 = vsel %vm66, %v314, %v51
  %v316 = vrot.slane %v51, 4
  %v317 = vsel %vm66, %v59, %v316
  %v319 = vunpack.c.l.s4 1983009808
  %v320 = vunpack.c.0.s8 %v319
  %v321 = vperm.slane %v315, %v320
  %v323 = vunpack.c.l.s4 1983009808
  %v324 = vunpack.c.0.s8 %v323
  %v325 = vperm.slane %v317, %v324
  %v326 = vrot.slane %v63, 4
  %v327 = vsel %vm66, %v326, %v55
  %v328 = vrot.slane %v55, 4
  %v329 = vsel %vm66, %v63, %v328
  %v331 = vunpack.c.l.s4 1983009808
  %v332 = vunpack.c.0.s8 %v331
  %v333 = vperm.slane %v327, %v332
  %v335 = vunpack.c.l.s4 1983009808
  %v336 = vunpack.c.0.s8 %v335
  %v337 = vperm.slane %v329, %v336
  %v338 = vrot.slane %v309, 4
  %v339 = vsel %vm66, %v338, %v297
  %v340 = vrot.slane %v297, 4
  %v341 = vsel %vm66, %v309, %v340
  %v343 = vunpack.c.l.s4 1934713408
  %v344 = vunpack.c.0.s8 %v343
  %v345 = vperm.slane %v339, %v344
  %v347 = vunpack.c.l.s4 1934713408
  %v348 = vunpack.c.0.s8 %v347
  %v349 = vperm.slane %v341, %v348
  %v350 = vrot.slane %v313, 4
  %v351 = vsel %vm66, %v350, %v301
  %v352 = vrot.slane %v301, 4
  %v353 = vsel %vm66, %v313, %v352
  %v355 = vunpack.c.l.s4 1934713408
  %v356 = vunpack.c.0.s8 %v355
  %v357 = vperm.slane %v351, %v356
  %v359 = vunpack.c.l.s4 1934713408
  %v360 = vunpack.c.0.s8 %v359
  %v361 = vperm.slane %v353, %v360
  %v362 = vrot.slane %v333, 4
  %v363 = vsel %vm66, %v362, %v321
  %v364 = vrot.slane %v321, 4
  %v365 = vsel %vm66, %v333, %v364
  %v367 = vunpack.c.l.s4 1934713408
  %v368 = vunpack.c.0.s8 %v367
  %v369 = vperm.slane %v363, %v368
  %v371 = vunpack.c.l.s4 1934713408
  %v372 = vunpack.c.0.s8 %v371
  %v373 = vperm.slane %v365, %v372
  %v374 = vrot.slane %v337, 4
  %v375 = vsel %vm66, %v374, %v325
  %v376 = vrot.slane %v325, 4
  %v377 = vsel %vm66, %v337, %v376
  %v379 = vunpack.c.l.s4 1934713408
  %v380 = vunpack.c.0.s8 %v379
  %v381 = vperm.slane %v375, %v380
  %v383 = vunpack.c.l.s4 1934713408
  %v384 = vunpack.c.0.s8 %v383
  %v385 = vperm.slane %v377, %v384
  %v386 = vrot.slane %v369, 4
  %v387 = vsel %vm66, %v386, %v345
  %v388 = vrot.slane %v345, 4
  %v389 = vsel %vm66, %v369, %v388
  %v390 = vrot.slane %v373, 4
  %v391 = vsel %vm66, %v390, %v349
  %v392 = vrot.slane %v349, 4
  %v393 = vsel %vm66, %v373, %v392
  %v394 = vrot.slane %v381, 4
  %v395 = vsel %vm66, %v394, %v357
  %v396 = vrot.slane %v357, 4
  %v397 = vsel %vm66, %v381, %v396
  %v398 = vrot.slane %v385, 4
  %v399 = vsel %vm66, %v398, %v361
  %v400 = vrot.slane %v361, 4
  %v401 = vsel %vm66, %v385, %v400
  %v402 = vrot.slane %v44, 4
  %v403 = vsel %vm66, %v402, %v36
  %v405 = vunpack.c.l.s4 1983009808
  %v406 = vunpack.c.0.s8 %v405
  %v407 = vperm.slane %v403, %v406
  %v408 = vrot.slane %v48, 4
  %v409 = vsel %vm66, %v408, %v40
  %v411 = vunpack.c.l.s4 1983009808
  %v412 = vunpack.c.0.s8 %v411
  %v413 = vperm.slane %v409, %v412
  %v414 = vrot.slane %v60, 4
  %v415 = vsel %vm66, %v414, %v52
  %v417 = vunpack.c.l.s4 1983009808
  %v418 = vunpack.c.0.s8 %v417
  %v419 = vperm.slane %v415, %v418
  %v420 = vrot.slane %v64, 4
  %v421 = vsel %vm66, %v420, %v56
  %v423 = vunpack.c.l.s4 1983009808
  %v424 = vunpack.c.0.s8 %v423
  %v425 = vperm.slane %v421, %v424
  %v426 = vrot.slane %v413, 4
  %v427 = vsel %vm66, %v426, %v407
  %v428 = vrot.slane %v407, 4
  %v429 = vsel %vm66, %v413, %v428
  %v431 = vunpack.c.l.s4 1934713408
  %v432 = vunpack.c.0.s8 %v431
  %v433 = vperm.slane %v427, %v432
  %v435 = vunpack.c.l.s4 1934713408
  %v436 = vunpack.c.0.s8 %v435
  %v437 = vperm.slane %v429, %v436
  %v438 = vrot.slane %v425, 4
  %v439 = vsel %vm66, %v438, %v419
  %v440 = vrot.slane %v419, 4
  %v441 = vsel %vm66, %v425, %v440
  %v443 = vunpack.c.l.s4 1934713408
  %v444 = vunpack.c.0.s8 %v443
  %v445 = vperm.slane %v439, %v444
  %v447 = vunpack.c.l.s4 1934713408
  %v448 = vunpack.c.0.s8 %v447
  %v449 = vperm.slane %v441, %v448
  %v450 = vrot.slane %v445, 4
  %v451 = vsel %vm66, %v450, %v433
  %v452 = vrot.slane %v433, 4
  %v453 = vsel %vm66, %v445, %v452
  %v454 = vrot.slane %v449, 4
  %v455 = vsel %vm66, %v454, %v437
  %v456 = vrot.slane %v437, 4
  %v457 = vsel %vm66, %v449, %v456
  %482 = vrot.lane.b32.xlu0 %v165, 28
  %v483 = vpop.permute.xlu0 %482
  %484 = vrot.lane.b32.xlu0 %v167, 28
  %v485 = vpop.permute.xlu0 %484
  %486 = vrot.lane.b32.xlu0 %v169, 28
  %v487 = vpop.permute.xlu0 %486
  %488 = vrot.lane.b32.xlu0 %v171, 28
  %v489 = vpop.permute.xlu0 %488
  %490 = vrot.lane.b32.xlu0 %v173, 28
  %v491 = vpop.permute.xlu0 %490
  %492 = vrot.lane.b32.xlu0 %v175, 28
  %v493 = vpop.permute.xlu0 %492
  %494 = vrot.lane.b32.xlu0 %v177, 28
  %v495 = vpop.permute.xlu0 %494
  %496 = vrot.lane.b32.xlu0 %v275, 28
  %v497 = vpop.permute.xlu0 %496
  %498 = vrot.lane.b32.xlu0 %v277, 28
  %v499 = vpop.permute.xlu0 %498
  %500 = vrot.lane.b32.xlu0 %v279, 28
  %v501 = vpop.permute.xlu0 %500
  %502 = vrot.lane.b32.xlu0 %v281, 28
  %v503 = vpop.permute.xlu0 %502
  %504 = vrot.lane.b32.xlu0 %v283, 28
  %v505 = vpop.permute.xlu0 %504
  %506 = vrot.lane.b32.xlu0 %v285, 28
  %v507 = vpop.permute.xlu0 %506
  %508 = vrot.lane.b32.xlu0 %v287, 28
  %v509 = vpop.permute.xlu0 %508
  %510 = vrot.lane.b32.xlu0 %v289, 28
  %v511 = vpop.permute.xlu0 %510
  %512 = vrot.lane.b32.xlu0 %v387, 28
  %v513 = vpop.permute.xlu0 %512
  %514 = vrot.lane.b32.xlu0 %v389, 28
  %v515 = vpop.permute.xlu0 %514
  %516 = vrot.lane.b32.xlu0 %v391, 28
  %v517 = vpop.permute.xlu0 %516
  %518 = vrot.lane.b32.xlu0 %v393, 28
  %v519 = vpop.permute.xlu0 %518
  %520 = vrot.lane.b32.xlu0 %v395, 28
  %v521 = vpop.permute.xlu0 %520
  %522 = vrot.lane.b32.xlu0 %v397, 28
  %v523 = vpop.permute.xlu0 %522
  %524 = vrot.lane.b32.xlu0 %v399, 28
  %v525 = vpop.permute.xlu0 %524
  %526 = vrot.lane.b32.xlu0 %v401, 28
  %v527 = vpop.permute.xlu0 %526
  %528 = vrot.lane.b32.xlu0 %v451, 28
  %v529 = vpop.permute.xlu0 %528
  %555 = vrot.lane.b32.xlu0 %v167, 56
  %v556 = vpop.permute.xlu0 %555
  %557 = vrot.lane.b32.xlu0 %v169, 56
  %v558 = vpop.permute.xlu0 %557
  %559 = vrot.lane.b32.xlu0 %v171, 56
  %v560 = vpop.permute.xlu0 %559
  %561 = vrot.lane.b32.xlu0 %v173, 56
  %v562 = vpop.permute.xlu0 %561
  %563 = vrot.lane.b32.xlu0 %v175, 56
  %v564 = vpop.permute.xlu0 %563
  %565 = vrot.lane.b32.xlu0 %v177, 56
  %v566 = vpop.permute.xlu0 %565
  %567 = vrot.lane.b32.xlu0 %v275, 56
  %v568 = vpop.permute.xlu0 %567
  %569 = vrot.lane.b32.xlu0 %v277, 56
  %v570 = vpop.permute.xlu0 %569
  %571 = vrot.lane.b32.xlu0 %v279, 56
  %v572 = vpop.permute.xlu0 %571
  %573 = vrot.lane.b32.xlu0 %v281, 56
  %v574 = vpop.permute.xlu0 %573
  %575 = vrot.lane.b32.xlu0 %v283, 56
  %v576 = vpop.permute.xlu0 %575
  %577 = vrot.lane.b32.xlu0 %v285, 56
  %v578 = vpop.permute.xlu0 %577
  %579 = vrot.lane.b32.xlu0 %v287, 56
  %v580 = vpop.permute.xlu0 %579
  %581 = vrot.lane.b32.xlu0 %v289, 56
  %v582 = vpop.permute.xlu0 %581
  %583 = vrot.lane.b32.xlu0 %v387, 56
  %v584 = vpop.permute.xlu0 %583
  %585 = vrot.lane.b32.xlu0 %v389, 56
  %v586 = vpop.permute.xlu0 %585
  %587 = vrot.lane.b32.xlu0 %v391, 56
  %v588 = vpop.permute.xlu0 %587
  %589 = vrot.lane.b32.xlu0 %v393, 56
  %v590 = vpop.permute.xlu0 %589
  %591 = vrot.lane.b32.xlu0 %v395, 56
  %v592 = vpop.permute.xlu0 %591
  %593 = vrot.lane.b32.xlu0 %v397, 56
  %v594 = vpop.permute.xlu0 %593
  %595 = vrot.lane.b32.xlu0 %v399, 56
  %v596 = vpop.permute.xlu0 %595
  %597 = vrot.lane.b32.xlu0 %v401, 56
  %v598 = vpop.permute.xlu0 %597
  %599 = vrot.lane.b32.xlu0 %v451, 56
  %v600 = vpop.permute.xlu0 %599
  %601 = vrot.lane.b32.xlu0 %v453, 56
  %v602 = vpop.permute.xlu0 %601
  %628 = vrot.lane.b32.xlu0 %v169, 84
  %v629 = vpop.permute.xlu0 %628
  %630 = vrot.lane.b32.xlu0 %v171, 84
  %v631 = vpop.permute.xlu0 %630
  %632 = vrot.lane.b32.xlu0 %v173, 84
  %v633 = vpop.permute.xlu0 %632
  %634 = vrot.lane.b32.xlu0 %v175, 84
  %v635 = vpop.permute.xlu0 %634
  %636 = vrot.lane.b32.xlu0 %v177, 84
  %v637 = vpop.permute.xlu0 %636
  %638 = vrot.lane.b32.xlu0 %v275, 84
  %v639 = vpop.permute.xlu0 %638
  %640 = vrot.lane.b32.xlu0 %v277, 84
  %v641 = vpop.permute.xlu0 %640
  %642 = vrot.lane.b32.xlu0 %v279, 84
  %v643 = vpop.permute.xlu0 %642
  %644 = vrot.lane.b32.xlu0 %v281, 84
  %v645 = vpop.permute.xlu0 %644
  %646 = vrot.lane.b32.xlu0 %v283, 84
  %v647 = vpop.permute.xlu0 %646
  %648 = vrot.lane.b32.xlu0 %v285, 84
  %v649 = vpop.permute.xlu0 %648
  %650 = vrot.lane.b32.xlu0 %v287, 84
  %v651 = vpop.permute.xlu0 %650
  %652 = vrot.lane.b32.xlu0 %v289, 84
  %v653 = vpop.permute.xlu0 %652
  %654 = vrot.lane.b32.xlu0 %v387, 84
  %v655 = vpop.permute.xlu0 %654
  %656 = vrot.lane.b32.xlu0 %v389, 84
  %v657 = vpop.permute.xlu0 %656
  %658 = vrot.lane.b32.xlu0 %v391, 84
  %v659 = vpop.permute.xlu0 %658
  %660 = vrot.lane.b32.xlu0 %v393, 84
  %v661 = vpop.permute.xlu0 %660
  %662 = vrot.lane.b32.xlu0 %v395, 84
  %v663 = vpop.permute.xlu0 %662
  %664 = vrot.lane.b32.xlu0 %v397, 84
  %v665 = vpop.permute.xlu0 %664
  %666 = vrot.lane.b32.xlu0 %v399, 84
  %v667 = vpop.permute.xlu0 %666
  %668 = vrot.lane.b32.xlu0 %v401, 84
  %v669 = vpop.permute.xlu0 %668
  %670 = vrot.lane.b32.xlu0 %v451, 84
  %v671 = vpop.permute.xlu0 %670
  %672 = vrot.lane.b32.xlu0 %v453, 84
  %v673 = vpop.permute.xlu0 %672
  %674 = vrot.lane.b32.xlu0 %v455, 84
  %v675 = vpop.permute.xlu0 %674
  %701 = vrot.lane.b32.xlu0 %v171, 112
  %v702 = vpop.permute.xlu0 %701
  %703 = vrot.lane.b32.xlu0 %v173, 112
  %v704 = vpop.permute.xlu0 %703
  %705 = vrot.lane.b32.xlu0 %v175, 112
  %v706 = vpop.permute.xlu0 %705
  %707 = vrot.lane.b32.xlu0 %v177, 112
  %v708 = vpop.permute.xlu0 %707
  %709 = vrot.lane.b32.xlu0 %v275, 112
  %v710 = vpop.permute.xlu0 %709
  %711 = vrot.lane.b32.xlu0 %v277, 112
  %v712 = vpop.permute.xlu0 %711
  %713 = vrot.lane.b32.xlu0 %v279, 112
  %v714 = vpop.permute.xlu0 %713
  %715 = vrot.lane.b32.xlu0 %v281, 112
  %v716 = vpop.permute.xlu0 %715
  %717 = vrot.lane.b32.xlu0 %v283, 112
  %v718 = vpop.permute.xlu0 %717
  %719 = vrot.lane.b32.xlu0 %v285, 112
  %v720 = vpop.permute.xlu0 %719
  %721 = vrot.lane.b32.xlu0 %v287, 112
  %v722 = vpop.permute.xlu0 %721
  %723 = vrot.lane.b32.xlu0 %v289, 112
  %v724 = vpop.permute.xlu0 %723
  %725 = vrot.lane.b32.xlu0 %v387, 112
  %v726 = vpop.permute.xlu0 %725
  %727 = vrot.lane.b32.xlu0 %v389, 112
  %v728 = vpop.permute.xlu0 %727
  %729 = vrot.lane.b32.xlu0 %v391, 112
  %v730 = vpop.permute.xlu0 %729
  %731 = vrot.lane.b32.xlu0 %v393, 112
  %v732 = vpop.permute.xlu0 %731
  %733 = vrot.lane.b32.xlu0 %v395, 112
  %v734 = vpop.permute.xlu0 %733
  %735 = vrot.lane.b32.xlu0 %v397, 112
  %v736 = vpop.permute.xlu0 %735
  %737 = vrot.lane.b32.xlu0 %v399, 112
  %v738 = vpop.permute.xlu0 %737
  %739 = vrot.lane.b32.xlu0 %v401, 112
  %v740 = vpop.permute.xlu0 %739
  %741 = vrot.lane.b32.xlu0 %v451, 112
  %v742 = vpop.permute.xlu0 %741
  %743 = vrot.lane.b32.xlu0 %v453, 112
  %v744 = vpop.permute.xlu0 %743
  %745 = vrot.lane.b32.xlu0 %v455, 112
  %v746 = vpop.permute.xlu0 %745
  %747 = vrot.lane.b32.xlu0 %v457, 112
  %v748 = vpop.permute.xlu0 %747
  %vm773 = vcmask 228352
  %v774 = vsel %vm773, %v163, %v483
  %v775 = vsel %vm773, %v165, %v485
  %v776 = vsel %vm773, %v167, %v487
  %v777 = vsel %vm773, %v169, %v489
  %v778 = vsel %vm773, %v171, %v491
  %v779 = vsel %vm773, %v173, %v493
  %v780 = vsel %vm773, %v175, %v495
  %v781 = vsel %vm773, %v177, %v497
  %v782 = vsel %vm773, %v275, %v499
  %v783 = vsel %vm773, %v277, %v501
  %v784 = vsel %vm773, %v279, %v503
  %v785 = vsel %vm773, %v281, %v505
  %v786 = vsel %vm773, %v283, %v507
  %v787 = vsel %vm773, %v285, %v509
  %v788 = vsel %vm773, %v287, %v511
  %v789 = vsel %vm773, %v289, %v513
  %v790 = vsel %vm773, %v387, %v515
  %v791 = vsel %vm773, %v389, %v517
  %v792 = vsel %vm773, %v391, %v519
  %v793 = vsel %vm773, %v393, %v521
  %v794 = vsel %vm773, %v395, %v523
  %v795 = vsel %vm773, %v397, %v525
  %v796 = vsel %vm773, %v399, %v527
  %v797 = vsel %vm773, %v401, %v529
  %vm798 = vcmask 457728
  %v799 = vsel %vm798, %v774, %v556
  %v800 = vsel %vm798, %v775, %v558
  %v801 = vsel %vm798, %v776, %v560
  %v802 = vsel %vm798, %v777, %v562
  %v803 = vsel %vm798, %v778, %v564
  %v804 = vsel %vm798, %v779, %v566
  %v805 = vsel %vm798, %v780, %v568
  %v806 = vsel %vm798, %v781, %v570
  %v807 = vsel %vm798, %v782, %v572
  %v808 = vsel %vm798, %v783, %v574
  %v809 = vsel %vm798, %v784, %v576
  %v810 = vsel %vm798, %v785, %v578
  %v811 = vsel %vm798, %v786, %v580
  %v812 = vsel %vm798, %v787, %v582
  %v813 = vsel %vm798, %v788, %v584
  %v814 = vsel %vm798, %v789, %v586
  %v815 = vsel %vm798, %v790, %v588
  %v816 = vsel %vm798, %v791, %v590
  %v817 = vsel %vm798, %v792, %v592
  %v818 = vsel %vm798, %v793, %v594
  %v819 = vsel %vm798, %v794, %v596
  %v820 = vsel %vm798, %v795, %v598
  %v821 = vsel %vm798, %v796, %v600
  %v822 = vsel %vm798, %v797, %v602
  %vm823 = vcmask 687104
  %v824 = vsel %vm823, %v799, %v629
  %v825 = vsel %vm823, %v800, %v631
  %v826 = vsel %vm823, %v801, %v633
  %v827 = vsel %vm823, %v802, %v635
  %v828 = vsel %vm823, %v803, %v637
  %v829 = vsel %vm823, %v804, %v639
  %v830 = vsel %vm823, %v805, %v641
  %v831 = vsel %vm823, %v806, %v643
  %v832 = vsel %vm823, %v807, %v645
  %v833 = vsel %vm823, %v808, %v647
  %v834 = vsel %vm823, %v809, %v649
  %v835 = vsel %vm823, %v810, %v651
  %v836 = vsel %vm823, %v811, %v653
  %v837 = vsel %vm823, %v812, %v655
  %v838 = vsel %vm823, %v813, %v657
  %v839 = vsel %vm823, %v814, %v659
  %v840 = vsel %vm823, %v815, %v661
  %v841 = vsel %vm823, %v816, %v663
  %v842 = vsel %vm823, %v817, %v665
  %v843 = vsel %vm823, %v818, %v667
  %v844 = vsel %vm823, %v819, %v669
  %v845 = vsel %vm823, %v820, %v671
  %v846 = vsel %vm823, %v821, %v673
  %v847 = vsel %vm823, %v822, %v675
  %vm848 = vcmask 916480
  %v849 = vsel %vm848, %v824, %v702
  %v850 = vsel %vm848, %v825, %v704
  %v851 = vsel %vm848, %v826, %v706
  %v852 = vsel %vm848, %v827, %v708
  %v853 = vsel %vm848, %v828, %v710
  %v854 = vsel %vm848, %v829, %v712
  %v855 = vsel %vm848, %v830, %v714
  %v856 = vsel %vm848, %v831, %v716
  %v857 = vsel %vm848, %v832, %v718
  %v858 = vsel %vm848, %v833, %v720
  %v859 = vsel %vm848, %v834, %v722
  %v860 = vsel %vm848, %v835, %v724
  %v861 = vsel %vm848, %v836, %v726
  %v862 = vsel %vm848, %v837, %v728
  %v863 = vsel %vm848, %v838, %v730
  %v864 = vsel %vm848, %v839, %v732
  %v865 = vsel %vm848, %v840, %v734
  %v866 = vsel %vm848, %v841, %v736
  %v867 = vsel %vm848, %v842, %v738
  %v868 = vsel %vm848, %v843, %v740
  %v869 = vsel %vm848, %v844, %v742
  %v870 = vsel %vm848, %v845, %v744
  %v871 = vsel %vm848, %v846, %v746
  %v872 = vsel %vm848, %v847, %v748
  %v873 = vpack.c.bf16 %v850, %v849
  %v874 = vpack.c.bf16 %v704, %v702
  %v875 = vpack.c.bf16 %v852, %v851
  %v876 = vpack.c.bf16 %v708, %v706
  %v877 = vpack.c.bf16 %v854, %v853
  %v878 = vpack.c.bf16 %v712, %v710
  %v879 = vpack.c.bf16 %v856, %v855
  %v880 = vpack.c.bf16 %v716, %v714
  %v881 = vpack.c.bf16 %v858, %v857
  %v882 = vpack.c.bf16 %v720, %v718
  %v883 = vpack.c.bf16 %v860, %v859
  %v884 = vpack.c.bf16 %v724, %v722
  %v885 = vpack.c.bf16 %v862, %v861
  %v886 = vpack.c.bf16 %v728, %v726
  %v887 = vpack.c.bf16 %v864, %v863
  %v888 = vpack.c.bf16 %v732, %v730
  %v889 = vpack.c.bf16 %v866, %v865
  %v890 = vpack.c.bf16 %v736, %v734
  %v891 = vpack.c.bf16 %v868, %v867
  %v892 = vpack.c.bf16 %v740, %v738
  %v893 = vpack.c.bf16 %v870, %v869
  %v894 = vpack.c.bf16 %v744, %v742
  %v895 = vpack.c.bf16 %v872, %v871
  %v896 = vpack.c.bf16 %v748, %v746
  %v897 = vld [vmem:[%s1] sm:$0xff]
  %v898 = vld [vmem:[%s1 + $0x8] sm:$0xff]
  %v899 = vld [vmem:[%s1 + $0x10] sm:$0xff]
  %v900 = vld [vmem:[%s1 + $0x18] sm:$0xff]
  %v901 = vld [vmem:[%s1 + $0x20] sm:$0xff]
  %v902 = vld [vmem:[%s1 + $0x28] sm:$0xff]
  %v903 = vld [vmem:[%s1 + $0x30] sm:$0xff]
  %v904 = vld [vmem:[%s1 + $0x38] sm:$0xff]
  %v905 = vld [vmem:[%s1 + $0x40] sm:$0xff]
  %v906 = vld [vmem:[%s1 + $0x48] sm:$0xff]
  %v907 = vld [vmem:[%s1 + $0x50] sm:$0xff]
  %v908 = vld [vmem:[%s1 + $0x58] sm:$0xff]
  %v909 = vld [vmem:[%s1 + $0x60] sm:$0xff]
  %v910 = vld [vmem:[%s1 + $0x68] sm:$0xff]
  %v911 = vld [vmem:[%s1 + $0x70] sm:$0xff]
  %v912 = vld [vmem:[%s1 + $0x78] sm:$0xff]
  %v913 = vld [vmem:[%s1 + $0x80] sm:$0xff]
  %v914 = vld [vmem:[%s1 + $0x88] sm:$0x33]
  %v933 = vunpack.c.l.b16 %v897
  %v934 = vunpack.c.h.b16 %v897
  %v935 = vunpack.c.l.b16 %v898
  %v936 = vunpack.c.h.b16 %v898
  %v937 = vunpack.c.l.b16 %v899
  %v938 = vunpack.c.h.b16 %v899
  %v939 = vunpack.c.l.b16 %v900
  %v940 = vunpack.c.h.b16 %v900
  %v941 = vunpack.c.l.b16 %v901
  %v942 = vunpack.c.h.b16 %v901
  %v943 = vunpack.c.l.b16 %v902
  %v944 = vunpack.c.h.b16 %v902
  %v945 = vunpack.c.l.b16 %v903
  %v946 = vunpack.c.h.b16 %v903
  %v947 = vunpack.c.l.b16 %v904
  %v948 = vunpack.c.h.b16 %v904
  %v949 = vunpack.c.l.b16 %v905
  %v950 = vunpack.c.h.b16 %v905
  %v951 = vunpack.c.l.b16 %v906
  %v952 = vunpack.c.h.b16 %v906
  %v953 = vunpack.c.l.b16 %v907
  %v954 = vunpack.c.h.b16 %v907
  %v955 = vunpack.c.l.b16 %v908
  %v956 = vunpack.c.h.b16 %v908
  %v957 = vunpack.c.l.b16 %v909
  %v958 = vunpack.c.h.b16 %v909
  %v959 = vunpack.c.l.b16 %v910
  %v960 = vunpack.c.h.b16 %v910
  %v961 = vunpack.c.l.b16 %v911
  %v962 = vunpack.c.h.b16 %v911
  %v963 = vunpack.c.l.b16 %v912
  %v964 = vunpack.c.h.b16 %v912
  %v965 = vunpack.c.l.b16 %v913
  %v966 = vunpack.c.h.b16 %v913
  %v967 = vunpack.c.l.b16 %v914
  %v968 = vunpack.c.h.b16 %v914
  %v969 = vpack.c.b16 %v935, %v933
  %v970 = vpack.c.b16 %v936, %v934
  %v971 = vpack.c.b16 %v939, %v937
  %v972 = vpack.c.b16 %v940, %v938
  %v973 = vpack.c.b16 %v943, %v941
  %v974 = vpack.c.b16 %v944, %v942
  %v975 = vpack.c.b16 %v947, %v945
  %v976 = vpack.c.b16 %v948, %v946
  %v977 = vpack.c.b16 %v951, %v949
  %v978 = vpack.c.b16 %v952, %v950
  %v979 = vpack.c.b16 %v955, %v953
  %v980 = vpack.c.b16 %v956, %v954
  %v981 = vpack.c.b16 %v959, %v957
  %v982 = vpack.c.b16 %v960, %v958
  %v983 = vpack.c.b16 %v963, %v961
  %v984 = vpack.c.b16 %v964, %v962
  %v985 = vpack.c.b16 %v967, %v965
  %v986 = vpack.c.b16 %v968, %v966
  %vm1003 = vcmask 97280
  %v1005 = vsel %vm1003, %v874, 0
  %v1008 = vsel %vm1003, %v876, 0
  %v1011 = vsel %vm1003, %v878, 0
  %v1014 = vsel %vm1003, %v880, 0
  %v1017 = vsel %vm1003, %v882, 0
  %v1020 = vsel %vm1003, %v884, 0
  %v1023 = vsel %vm1003, %v886, 0
  %v1026 = vsel %vm1003, %v888, 0
  %v1029 = vsel %vm1003, %v890, 0
  %v1032 = vsel %vm1003, %v892, 0
  %v1035 = vsel %vm1003, %v894, 0
  %v1038 = vsel %vm1003, %v896, 0
  %vm1040 = vcmask 1045504
  %v1042 = vsel %vm1040, %v985, 0
  %v1045 = vsel %vm1040, %v986, 0
  %1047 = vmatpush.bf16.msra.mxu0 %v983
  %1048 = vmatpush.bf16.msra.mxu0 %v981
  %1049 = vmatpush.bf16.msra.mxu0 %v979
  %1050 = vmatpush.bf16.msra.mxu0 %v977
  %1051 = vmatpush.bf16.msra.mxu0 %v975
  %1052 = vmatpush.bf16.msra.mxu0 %v973
  %1053 = vmatpush.bf16.msra.mxu0 %v971
  %1054 = vmatpush.bf16.msra.mxu0 %v969
  %1055 = vmatmul.bf16.gmra.mxu0 %v873
  %v1056 = vpop.f32.mrf.mxu0
  %v1057 = vadd.f32 0.0, %v1056
  %v1058 = vpop.f32.mrf.mxu0
  %v1059 = vadd.f32 0.0, %v1058
  %1060 = vmatmul.bf16.gmra.mxu0 %v875
  %v1061 = vpop.f32.mrf.mxu0
  %v1062 = vadd.f32 0.0, %v1061
  %v1063 = vpop.f32.mrf.mxu0
  %v1064 = vadd.f32 0.0, %v1063
  %1065 = vmatmul.bf16.gmra.mxu0 %v877
  %v1066 = vpop.f32.mrf.mxu0
  %v1067 = vadd.f32 0.0, %v1066
  %v1068 = vpop.f32.mrf.mxu0
  %v1069 = vadd.f32 0.0, %v1068
  %1070 = vmatmul.bf16.gmra.mxu0 %v879
  %v1071 = vpop.f32.mrf.mxu0
  %v1072 = vadd.f32 0.0, %v1071
  %v1073 = vpop.f32.mrf.mxu0
  %v1074 = vadd.f32 0.0, %v1073
  %1075 = vmatmul.bf16.gmra.mxu0 %v881
  %v1076 = vpop.f32.mrf.mxu0
  %v1077 = vadd.f32 0.0, %v1076
  %v1078 = vpop.f32.mrf.mxu0
  %v1079 = vadd.f32 0.0, %v1078
  %1080 = vmatmul.bf16.gmra.mxu0 %v883
  %v1081 = vpop.f32.mrf.mxu0
  %v1082 = vadd.f32 0.0, %v1081
  %v1083 = vpop.f32.mrf.mxu0
  %v1084 = vadd.f32 0.0, %v1083
  %1085 = vmatmul.bf16.gmra.mxu0 %v885
  %v1086 = vpop.f32.mrf.mxu0
  %v1087 = vadd.f32 0.0, %v1086
  %v1088 = vpop.f32.mrf.mxu0
  %v1089 = vadd.f32 0.0, %v1088
  %1090 = vmatmul.bf16.gmra.mxu0 %v887
  %v1091 = vpop.f32.mrf.mxu0
  %v1092 = vadd.f32 0.0, %v1091
  %v1093 = vpop.f32.mrf.mxu0
  %v1094 = vadd.f32 0.0, %v1093
  %1095 = vmatmul.bf16.gmra.mxu0 %v889
  %v1096 = vpop.f32.mrf.mxu0
  %v1097 = vadd.f32 0.0, %v1096
  %v1098 = vpop.f32.mrf.mxu0
  %v1099 = vadd.f32 0.0, %v1098
  %1100 = vmatmul.bf16.gmra.mxu0 %v891
  %v1101 = vpop.f32.mrf.mxu0
  %v1102 = vadd.f32 0.0, %v1101
  %v1103 = vpop.f32.mrf.mxu0
  %v1104 = vadd.f32 0.0, %v1103
  %1105 = vmatmul.bf16.gmra.mxu0 %v893
  %v1106 = vpop.f32.mrf.mxu0
  %v1107 = vadd.f32 0.0, %v1106
  %v1108 = vpop.f32.mrf.mxu0
  %v1109 = vadd.f32 0.0, %v1108
  %1110 = vmatmul.bf16.gmra.mxu0 %v895
  %v1111 = vpop.f32.mrf.mxu0
  %v1112 = vadd.f32 0.0, %v1111
  %v1113 = vpop.f32.mrf.mxu0
  %v1114 = vadd.f32 0.0, %v1113
  %1115 = vdwg.mxu0
  %1116 = vmatpush.bf16.msra.mxu0 0
  %1117 = vmatpush.bf16.msra.mxu0 0
  %1118 = vmatpush.bf16.msra.mxu0 0
  %1119 = vmatpush.bf16.msra.mxu0 0
  %1120 = vmatpush.bf16.msra.mxu0 0
  %1121 = vmatpush.bf16.msra.mxu0 0
  %1122 = vmatpush.bf16.msra.mxu0 0
  %1123 = vmatpush.bf16.msra.mxu0 %v1042
  %1124 = vmatmul.bf16.gmra.mxu0 %v1005
  %v1125 = vpop.f32.mrf.mxu0
  %v1126 = vadd.f32 %v1057, %v1125
  %v1127 = vpop.f32.mrf.mxu0
  %v1128 = vadd.f32 %v1059, %v1127
  %1129 = vmatmul.bf16.gmra.mxu0 %v1008
  %v1130 = vpop.f32.mrf.mxu0
  %v1131 = vadd.f32 %v1062, %v1130
  %v1132 = vpop.f32.mrf.mxu0
  %v1133 = vadd.f32 %v1064, %v1132
  %1134 = vmatmul.bf16.gmra.mxu0 %v1011
  %v1135 = vpop.f32.mrf.mxu0
  %v1136 = vadd.f32 %v1067, %v1135
  %v1137 = vpop.f32.mrf.mxu0
  %v1138 = vadd.f32 %v1069, %v1137
  %1139 = vmatmul.bf16.gmra.mxu0 %v1014
  %v1140 = vpop.f32.mrf.mxu0
  %v1141 = vadd.f32 %v1072, %v1140
  %v1142 = vpop.f32.mrf.mxu0
  %v1143 = vadd.f32 %v1074, %v1142
  %1144 = vmatmul.bf16.gmra.mxu0 %v1017
  %v1145 = vpop.f32.mrf.mxu0
  %v1146 = vadd.f32 %v1077, %v1145
  %v1147 = vpop.f32.mrf.mxu0
  %v1148 = vadd.f32 %v1079, %v1147
  %1149 = vmatmul.bf16.gmra.mxu0 %v1020
  %v1150 = vpop.f32.mrf.mxu0
  %v1151 = vadd.f32 %v1082, %v1150
  %v1152 = vpop.f32.mrf.mxu0
  %v1153 = vadd.f32 %v1084, %v1152
  %1154 = vmatmul.bf16.gmra.mxu0 %v1023
  %v1155 = vpop.f32.mrf.mxu0
  %v1156 = vadd.f32 %v1087, %v1155
  %v1157 = vpop.f32.mrf.mxu0
  %v1158 = vadd.f32 %v1089, %v1157
  %1159 = vmatmul.bf16.gmra.mxu0 %v1026
  %v1160 = vpop.f32.mrf.mxu0
  %v1161 = vadd.f32 %v1092, %v1160
  %v1162 = vpop.f32.mrf.mxu0
  %v1163 = vadd.f32 %v1094, %v1162
  %1164 = vmatmul.bf16.gmra.mxu0 %v1029
  %v1165 = vpop.f32.mrf.mxu0
  %v1166 = vadd.f32 %v1097, %v1165
  %v1167 = vpop.f32.mrf.mxu0
  %v1168 = vadd.f32 %v1099, %v1167
  %1169 = vmatmul.bf16.gmra.mxu0 %v1032
  %v1170 = vpop.f32.mrf.mxu0
  %v1171 = vadd.f32 %v1102, %v1170
  %v1172 = vpop.f32.mrf.mxu0
  %v1173 = vadd.f32 %v1104, %v1172
  %1174 = vmatmul.bf16.gmra.mxu0 %v1035
  %v1175 = vpop.f32.mrf.mxu0
  %v1176 = vadd.f32 %v1107, %v1175
  %v1177 = vpop.f32.mrf.mxu0
  %v1178 = vadd.f32 %v1109, %v1177
  %1179 = vmatmul.bf16.gmra.mxu0 %v1038
  %v1180 = vpop.f32.mrf.mxu0
  %v1181 = vadd.f32 %v1112, %v1180
  %v1182 = vpop.f32.mrf.mxu0
  %v1183 = vadd.f32 %v1114, %v1182
  %1184 = vdwg.mxu0
  %1185 = vmatpush.bf16.msra.mxu0 %v984
  %1186 = vmatpush.bf16.msra.mxu0 %v982
  %1187 = vmatpush.bf16.msra.mxu0 %v980
  %1188 = vmatpush.bf16.msra.mxu0 %v978
  %1189 = vmatpush.bf16.msra.mxu0 %v976
  %1190 = vmatpush.bf16.msra.mxu0 %v974
  %1191 = vmatpush.bf16.msra.mxu0 %v972
  %1192 = vmatpush.bf16.msra.mxu0 %v970
  %1193 = vmatmul.bf16.gmra.mxu0 %v873
  %v1194 = vpop.f32.mrf.mxu0
  %v1195 = vadd.f32 0.0, %v1194
  %v1196 = vpop.f32.mrf.mxu0
  %v1197 = vadd.f32 0.0, %v1196
  %1198 = vmatmul.bf16.gmra.mxu0 %v875
  %v1199 = vpop.f32.mrf.mxu0
  %v1200 = vadd.f32 0.0, %v1199
  %v1201 = vpop.f32.mrf.mxu0
  %v1202 = vadd.f32 0.0, %v1201
  %1203 = vmatmul.bf16.gmra.mxu0 %v877
  %v1204 = vpop.f32.mrf.mxu0
  %v1205 = vadd.f32 0.0, %v1204
  %v1206 = vpop.f32.mrf.mxu0
  %v1207 = vadd.f32 0.0, %v1206
  %1208 = vmatmul.bf16.gmra.mxu0 %v879
  %v1209 = vpop.f32.mrf.mxu0
  %v1210 = vadd.f32 0.0, %v1209
  %v1211 = vpop.f32.mrf.mxu0
  %v1212 = vadd.f32 0.0, %v1211
  %1213 = vmatmul.bf16.gmra.mxu0 %v881
  %v1214 = vpop.f32.mrf.mxu0
  %v1215 = vadd.f32 0.0, %v1214
  %v1216 = vpop.f32.mrf.mxu0
  %v1217 = vadd.f32 0.0, %v1216
  %1218 = vmatmul.bf16.gmra.mxu0 %v883
  %v1219 = vpop.f32.mrf.mxu0
  %v1220 = vadd.f32 0.0, %v1219
  %v1221 = vpop.f32.mrf.mxu0
  %v1222 = vadd.f32 0.0, %v1221
  %1223 = vmatmul.bf16.gmra.mxu0 %v885
  %v1224 = vpop.f32.mrf.mxu0
  %v1225 = vadd.f32 0.0, %v1224
  %v1226 = vpop.f32.mrf.mxu0
  %v1227 = vadd.f32 0.0, %v1226
  %1228 = vmatmul.bf16.gmra.mxu0 %v887
  %v1229 = vpop.f32.mrf.mxu0
  %v1230 = vadd.f32 0.0, %v1229
  %v1231 = vpop.f32.mrf.mxu0
  %v1232 = vadd.f32 0.0, %v1231
  %1233 = vmatmul.bf16.gmra.mxu0 %v889
  %v1234 = vpop.f32.mrf.mxu0
  %v1235 = vadd.f32 0.0, %v1234
  %v1236 = vpop.f32.mrf.mxu0
  %v1237 = vadd.f32 0.0, %v1236
  %1238 = vmatmul.bf16.gmra.mxu0 %v891
  %v1239 = vpop.f32.mrf.mxu0
  %v1240 = vadd.f32 0.0, %v1239
  %v1241 = vpop.f32.mrf.mxu0
  %v1242 = vadd.f32 0.0, %v1241
  %1243 = vmatmul.bf16.gmra.mxu0 %v893
  %v1244 = vpop.f32.mrf.mxu0
  %v1245 = vadd.f32 0.0, %v1244
  %v1246 = vpop.f32.mrf.mxu0
  %v1247 = vadd.f32 0.0, %v1246
  %1248 = vmatmul.bf16.gmra.mxu0 %v895
  %v1249 = vpop.f32.mrf.mxu0
  %v1250 = vadd.f32 0.0, %v1249
  %v1251 = vpop.f32.mrf.mxu0
  %v1252 = vadd.f32 0.0, %v1251
  %1253 = vdwg.mxu0
  %1254 = vmatpush.bf16.msra.mxu0 0
  %1255 = vmatpush.bf16.msra.mxu0 0
  %1256 = vmatpush.bf16.msra.mxu0 0
  %1257 = vmatpush.bf16.msra.mxu0 0
  %1258 = vmatpush.bf16.msra.mxu0 0
  %1259 = vmatpush.bf16.msra.mxu0 0
  %1260 = vmatpush.bf16.msra.mxu0 0
  %1261 = vmatpush.bf16.msra.mxu0 %v1045
  %1262 = vmatmul.bf16.gmra.mxu0 %v1005
  %v1263 = vpop.f32.mrf.mxu0
  %v1264 = vadd.f32 %v1195, %v1263
  %v1265 = vpop.f32.mrf.mxu0
  %v1266 = vadd.f32 %v1197, %v1265
  %1267 = vmatmul.bf16.gmra.mxu0 %v1008
  %v1268 = vpop.f32.mrf.mxu0
  %v1269 = vadd.f32 %v1200, %v1268
  %v1270 = vpop.f32.mrf.mxu0
  %v1271 = vadd.f32 %v1202, %v1270
  %1272 = vmatmul.bf16.gmra.mxu0 %v1011
  %v1273 = vpop.f32.mrf.mxu0
  %v1274 = vadd.f32 %v1205, %v1273
  %v1275 = vpop.f32.mrf.mxu0
  %v1276 = vadd.f32 %v1207, %v1275
  %1277 = vmatmul.bf16.gmra.mxu0 %v1014
  %v1278 = vpop.f32.mrf.mxu0
  %v1279 = vadd.f32 %v1210, %v1278
  %v1280 = vpop.f32.mrf.mxu0
  %v1281 = vadd.f32 %v1212, %v1280
  %1282 = vmatmul.bf16.gmra.mxu0 %v1017
  %v1283 = vpop.f32.mrf.mxu0
  %v1284 = vadd.f32 %v1215, %v1283
  %v1285 = vpop.f32.mrf.mxu0
  %v1286 = vadd.f32 %v1217, %v1285
  %1287 = vmatmul.bf16.gmra.mxu0 %v1020
  %v1288 = vpop.f32.mrf.mxu0
  %v1289 = vadd.f32 %v1220, %v1288
  %v1290 = vpop.f32.mrf.mxu0
  %v1291 = vadd.f32 %v1222, %v1290
  %1292 = vmatmul.bf16.gmra.mxu0 %v1023
  %v1293 = vpop.f32.mrf.mxu0
  %v1294 = vadd.f32 %v1225, %v1293
  %v1295 = vpop.f32.mrf.mxu0
  %v1296 = vadd.f32 %v1227, %v1295
  %1297 = vmatmul.bf16.gmra.mxu0 %v1026
  %v1298 = vpop.f32.mrf.mxu0
  %v1299 = vadd.f32 %v1230, %v1298
  %v1300 = vpop.f32.mrf.mxu0
  %v1301 = vadd.f32 %v1232, %v1300
  %1302 = vmatmul.bf16.gmra.mxu0 %v1029
  %v1303 = vpop.f32.mrf.mxu0
  %v1304 = vadd.f32 %v1235, %v1303
  %v1305 = vpop.f32.mrf.mxu0
  %v1306 = vadd.f32 %v1237, %v1305
  %1307 = vmatmul.bf16.gmra.mxu0 %v1032
  %v1308 = vpop.f32.mrf.mxu0
  %v1309 = vadd.f32 %v1240, %v1308
  %v1310 = vpop.f32.mrf.mxu0
  %v1311 = vadd.f32 %v1242, %v1310
  %1312 = vmatmul.bf16.gmra.mxu0 %v1035
  %v1313 = vpop.f32.mrf.mxu0
  %v1314 = vadd.f32 %v1245, %v1313
  %v1315 = vpop.f32.mrf.mxu0
  %v1316 = vadd.f32 %v1247, %v1315
  %1317 = vmatmul.bf16.gmra.mxu0 %v1038
  %v1318 = vpop.f32.mrf.mxu0
  %v1319 = vadd.f32 %v1250, %v1318
  %v1320 = vpop.f32.mrf.mxu0
  %v1321 = vadd.f32 %v1252, %v1320
  %1322 = vdwg.mxu0
  %s1323 = scalar_lea.vmem %s1, 144
  %v1324 = vld [vmem:[%s1323] sm:$0xff]
  %v1325 = vld [vmem:[%s1323 + $0x8] sm:$0xff]
  %v1326 = vld [vmem:[%s1323 + $0x10] sm:$0xff]
  %v1327 = vld [vmem:[%s1323 + $0x18] sm:$0xff]
  %v1328 = vld [vmem:[%s1323 + $0x20] sm:$0xff]
  %v1329 = vld [vmem:[%s1323 + $0x28] sm:$0xff]
  %v1330 = vld [vmem:[%s1323 + $0x30] sm:$0xff]
  %v1331 = vld [vmem:[%s1323 + $0x38] sm:$0xff]
  %v1332 = vld [vmem:[%s1323 + $0x40] sm:$0xff]
  %v1333 = vld [vmem:[%s1323 + $0x48] sm:$0xff]
  %v1334 = vld [vmem:[%s1323 + $0x50] sm:$0xff]
  %v1335 = vld [vmem:[%s1323 + $0x58] sm:$0xff]
  %v1336 = vld [vmem:[%s1323 + $0x60] sm:$0xff]
  %v1337 = vld [vmem:[%s1323 + $0x68] sm:$0xff]
  %v1338 = vld [vmem:[%s1323 + $0x70] sm:$0xff]
  %v1339 = vld [vmem:[%s1323 + $0x78] sm:$0xff]
  %v1340 = vld [vmem:[%s1323 + $0x80] sm:$0xff]
  %v1341 = vld [vmem:[%s1323 + $0x88] sm:$0x33]
  %v1360 = vunpack.c.l.b16 %v1324
  %v1361 = vunpack.c.h.b16 %v1324
  %v1362 = vunpack.c.l.b16 %v1325
  %v1363 = vunpack.c.h.b16 %v1325
  %v1364 = vunpack.c.l.b16 %v1326
  %v1365 = vunpack.c.h.b16 %v1326
  %v1366 = vunpack.c.l.b16 %v1327
  %v1367 = vunpack.c.h.b16 %v1327
  %v1368 = vunpack.c.l.b16 %v1328
  %v1369 = vunpack.c.h.b16 %v1328
  %v1370 = vunpack.c.l.b16 %v1329
  %v1371 = vunpack.c.h.b16 %v1329
  %v1372 = vunpack.c.l.b16 %v1330
  %v1373 = vunpack.c.h.b16 %v1330
  %v1374 = vunpack.c.l.b16 %v1331
  %v1375 = vunpack.c.h.b16 %v1331
  %v1376 = vunpack.c.l.b16 %v1332
  %v1377 = vunpack.c.h.b16 %v1332
  %v1378 = vunpack.c.l.b16 %v1333
  %v1379 = vunpack.c.h.b16 %v1333
  %v1380 = vunpack.c.l.b16 %v1334
  %v1381 = vunpack.c.h.b16 %v1334
  %v1382 = vunpack.c.l.b16 %v1335
  %v1383 = vunpack.c.h.b16 %v1335
  %v1384 = vunpack.c.l.b16 %v1336
  %v1385 = vunpack.c.h.b16 %v1336
  %v1386 = vunpack.c.l.b16 %v1337
  %v1387 = vunpack.c.h.b16 %v1337
  %v1388 = vunpack.c.l.b16 %v1338
  %v1389 = vunpack.c.h.b16 %v1338
  %v1390 = vunpack.c.l.b16 %v1339
  %v1391 = vunpack.c.h.b16 %v1339
  %v1392 = vunpack.c.l.b16 %v1340
  %v1393 = vunpack.c.h.b16 %v1340
  %v1394 = vunpack.c.l.b16 %v1341
  %v1395 = vunpack.c.h.b16 %v1341
  %v1396 = vpack.c.b16 %v1362, %v1360
  %v1397 = vpack.c.b16 %v1363, %v1361
  %v1398 = vpack.c.b16 %v1366, %v1364
  %v1399 = vpack.c.b16 %v1367, %v1365
  %v1400 = vpack.c.b16 %v1370, %v1368
  %v1401 = vpack.c.b16 %v1371, %v1369
  %v1402 = vpack.c.b16 %v1374, %v1372
  %v1403 = vpack.c.b16 %v1375, %v1373
  %v1404 = vpack.c.b16 %v1378, %v1376
  %v1405 = vpack.c.b16 %v1379, %v1377
  %v1406 = vpack.c.b16 %v1382, %v1380
  %v1407 = vpack.c.b16 %v1383, %v1381
  %v1408 = vpack.c.b16 %v1386, %v1384
  %v1409 = vpack.c.b16 %v1387, %v1385
  %v1410 = vpack.c.b16 %v1390, %v1388
  %v1411 = vpack.c.b16 %v1391, %v1389
  %v1412 = vpack.c.b16 %v1394, %v1392
  %v1413 = vpack.c.b16 %v1395, %v1393
  %v1431 = vsel %vm1040, %v1412, 0
  %v1434 = vsel %vm1040, %v1413, 0
  %1436 = vmatpush.bf16.msra.mxu0 %v1410
  %1437 = vmatpush.bf16.msra.mxu0 %v1408
  %1438 = vmatpush.bf16.msra.mxu0 %v1406
  %1439 = vmatpush.bf16.msra.mxu0 %v1404
  %1440 = vmatpush.bf16.msra.mxu0 %v1402
  %1441 = vmatpush.bf16.msra.mxu0 %v1400
  %1442 = vmatpush.bf16.msra.mxu0 %v1398
  %1443 = vmatpush.bf16.msra.mxu0 %v1396
  %1444 = vmatmul.bf16.gmra.mxu0 %v873
  %v1445 = vpop.f32.mrf.mxu0
  %v1446 = vadd.f32 0.0, %v1445
  %v1447 = vpop.f32.mrf.mxu0
  %v1448 = vadd.f32 0.0, %v1447
  %1449 = vmatmul.bf16.gmra.mxu0 %v875
  %v1450 = vpop.f32.mrf.mxu0
  %v1451 = vadd.f32 0.0, %v1450
  %v1452 = vpop.f32.mrf.mxu0
  %v1453 = vadd.f32 0.0, %v1452
  %1454 = vmatmul.bf16.gmra.mxu0 %v877
  %v1455 = vpop.f32.mrf.mxu0
  %v1456 = vadd.f32 0.0, %v1455
  %v1457 = vpop.f32.mrf.mxu0
  %v1458 = vadd.f32 0.0, %v1457
  %1459 = vmatmul.bf16.gmra.mxu0 %v879
  %v1460 = vpop.f32.mrf.mxu0
  %v1461 = vadd.f32 0.0, %v1460
  %v1462 = vpop.f32.mrf.mxu0
  %v1463 = vadd.f32 0.0, %v1462
  %1464 = vmatmul.bf16.gmra.mxu0 %v881
  %v1465 = vpop.f32.mrf.mxu0
  %v1466 = vadd.f32 0.0, %v1465
  %v1467 = vpop.f32.mrf.mxu0
  %v1468 = vadd.f32 0.0, %v1467
  %1469 = vmatmul.bf16.gmra.mxu0 %v883
  %v1470 = vpop.f32.mrf.mxu0
  %v1471 = vadd.f32 0.0, %v1470
  %v1472 = vpop.f32.mrf.mxu0
  %v1473 = vadd.f32 0.0, %v1472
  %1474 = vmatmul.bf16.gmra.mxu0 %v885
  %v1475 = vpop.f32.mrf.mxu0
  %v1476 = vadd.f32 0.0, %v1475
  %v1477 = vpop.f32.mrf.mxu0
  %v1478 = vadd.f32 0.0, %v1477
  %1479 = vmatmul.bf16.gmra.mxu0 %v887
  %v1480 = vpop.f32.mrf.mxu0
  %v1481 = vadd.f32 0.0, %v1480
  %v1482 = vpop.f32.mrf.mxu0
  %v1483 = vadd.f32 0.0, %v1482
  %1484 = vmatmul.bf16.gmra.mxu0 %v889
  %v1485 = vpop.f32.mrf.mxu0
  %v1486 = vadd.f32 0.0, %v1485
  %v1487 = vpop.f32.mrf.mxu0
  %v1488 = vadd.f32 0.0, %v1487
  %1489 = vmatmul.bf16.gmra.mxu0 %v891
  %v1490 = vpop.f32.mrf.mxu0
  %v1491 = vadd.f32 0.0, %v1490
  %v1492 = vpop.f32.mrf.mxu0
  %v1493 = vadd.f32 0.0, %v1492
  %1494 = vmatmul.bf16.gmra.mxu0 %v893
  %v1495 = vpop.f32.mrf.mxu0
  %v1496 = vadd.f32 0.0, %v1495
  %v1497 = vpop.f32.mrf.mxu0
  %v1498 = vadd.f32 0.0, %v1497
  %1499 = vmatmul.bf16.gmra.mxu0 %v895
  %v1500 = vpop.f32.mrf.mxu0
  %v1501 = vadd.f32 0.0, %v1500
  %v1502 = vpop.f32.mrf.mxu0
  %v1503 = vadd.f32 0.0, %v1502
  %1504 = vdwg.mxu0
  %1505 = vmatpush.bf16.msra.mxu0 0
  %1506 = vmatpush.bf16.msra.mxu0 0
  %1507 = vmatpush.bf16.msra.mxu0 0
  %1508 = vmatpush.bf16.msra.mxu0 0
  %1509 = vmatpush.bf16.msra.mxu0 0
  %1510 = vmatpush.bf16.msra.mxu0 0
  %1511 = vmatpush.bf16.msra.mxu0 0
  %1512 = vmatpush.bf16.msra.mxu0 %v1431
  %1513 = vmatmul.bf16.gmra.mxu0 %v1005
  %v1514 = vpop.f32.mrf.mxu0
  %v1515 = vadd.f32 %v1446, %v1514
  %v1516 = vpop.f32.mrf.mxu0
  %v1517 = vadd.f32 %v1448, %v1516
  %1518 = vmatmul.bf16.gmra.mxu0 %v1008
  %v1519 = vpop.f32.mrf.mxu0
  %v1520 = vadd.f32 %v1451, %v1519
  %v1521 = vpop.f32.mrf.mxu0
  %v1522 = vadd.f32 %v1453, %v1521
  %1523 = vmatmul.bf16.gmra.mxu0 %v1011
  %v1524 = vpop.f32.mrf.mxu0
  %v1525 = vadd.f32 %v1456, %v1524
  %v1526 = vpop.f32.mrf.mxu0
  %v1527 = vadd.f32 %v1458, %v1526
  %1528 = vmatmul.bf16.gmra.mxu0 %v1014
  %v1529 = vpop.f32.mrf.mxu0
  %v1530 = vadd.f32 %v1461, %v1529
  %v1531 = vpop.f32.mrf.mxu0
  %v1532 = vadd.f32 %v1463, %v1531
  %1533 = vmatmul.bf16.gmra.mxu0 %v1017
  %v1534 = vpop.f32.mrf.mxu0
  %v1535 = vadd.f32 %v1466, %v1534
  %v1536 = vpop.f32.mrf.mxu0
  %v1537 = vadd.f32 %v1468, %v1536
  %1538 = vmatmul.bf16.gmra.mxu0 %v1020
  %v1539 = vpop.f32.mrf.mxu0
  %v1540 = vadd.f32 %v1471, %v1539
  %v1541 = vpop.f32.mrf.mxu0
  %v1542 = vadd.f32 %v1473, %v1541
  %1543 = vmatmul.bf16.gmra.mxu0 %v1023
  %v1544 = vpop.f32.mrf.mxu0
  %v1545 = vadd.f32 %v1476, %v1544
  %v1546 = vpop.f32.mrf.mxu0
  %v1547 = vadd.f32 %v1478, %v1546
  %1548 = vmatmul.bf16.gmra.mxu0 %v1026
  %v1549 = vpop.f32.mrf.mxu0
  %v1550 = vadd.f32 %v1481, %v1549
  %v1551 = vpop.f32.mrf.mxu0
  %v1552 = vadd.f32 %v1483, %v1551
  %1553 = vmatmul.bf16.gmra.mxu0 %v1029
  %v1554 = vpop.f32.mrf.mxu0
  %v1555 = vadd.f32 %v1486, %v1554
  %v1556 = vpop.f32.mrf.mxu0
  %v1557 = vadd.f32 %v1488, %v1556
  %1558 = vmatmul.bf16.gmra.mxu0 %v1032
  %v1559 = vpop.f32.mrf.mxu0
  %v1560 = vadd.f32 %v1491, %v1559
  %v1561 = vpop.f32.mrf.mxu0
  %v1562 = vadd.f32 %v1493, %v1561
  %1563 = vmatmul.bf16.gmra.mxu0 %v1035
  %v1564 = vpop.f32.mrf.mxu0
  %v1565 = vadd.f32 %v1496, %v1564
  %v1566 = vpop.f32.mrf.mxu0
  %v1567 = vadd.f32 %v1498, %v1566
  %1568 = vmatmul.bf16.gmra.mxu0 %v1038
  %v1569 = vpop.f32.mrf.mxu0
  %v1570 = vadd.f32 %v1501, %v1569
  %v1571 = vpop.f32.mrf.mxu0
  %v1572 = vadd.f32 %v1503, %v1571
  %1573 = vdwg.mxu0
  %1574 = vmatpush.bf16.msra.mxu0 %v1411
  %1575 = vmatpush.bf16.msra.mxu0 %v1409
  %1576 = vmatpush.bf16.msra.mxu0 %v1407
  %1577 = vmatpush.bf16.msra.mxu0 %v1405
  %1578 = vmatpush.bf16.msra.mxu0 %v1403
  %1579 = vmatpush.bf16.msra.mxu0 %v1401
  %1580 = vmatpush.bf16.msra.mxu0 %v1399
  %1581 = vmatpush.bf16.msra.mxu0 %v1397
  %1582 = vmatmul.bf16.gmra.mxu0 %v873
  %v1583 = vpop.f32.mrf.mxu0
  %v1584 = vadd.f32 0.0, %v1583
  %v1585 = vpop.f32.mrf.mxu0
  %v1586 = vadd.f32 0.0, %v1585
  %1587 = vmatmul.bf16.gmra.mxu0 %v875
  %v1588 = vpop.f32.mrf.mxu0
  %v1589 = vadd.f32 0.0, %v1588
  %v1590 = vpop.f32.mrf.mxu0
  %v1591 = vadd.f32 0.0, %v1590
  %1592 = vmatmul.bf16.gmra.mxu0 %v877
  %v1593 = vpop.f32.mrf.mxu0
  %v1594 = vadd.f32 0.0, %v1593
  %v1595 = vpop.f32.mrf.mxu0
  %v1596 = vadd.f32 0.0, %v1595
  %1597 = vmatmul.bf16.gmra.mxu0 %v879
  %v1598 = vpop.f32.mrf.mxu0
  %v1599 = vadd.f32 0.0, %v1598
  %v1600 = vpop.f32.mrf.mxu0
  %v1601 = vadd.f32 0.0, %v1600
  %1602 = vmatmul.bf16.gmra.mxu0 %v881
  %v1603 = vpop.f32.mrf.mxu0
  %v1604 = vadd.f32 0.0, %v1603
  %v1605 = vpop.f32.mrf.mxu0
  %v1606 = vadd.f32 0.0, %v1605
  %1607 = vmatmul.bf16.gmra.mxu0 %v883
  %v1608 = vpop.f32.mrf.mxu0
  %v1609 = vadd.f32 0.0, %v1608
  %v1610 = vpop.f32.mrf.mxu0
  %v1611 = vadd.f32 0.0, %v1610
  %1612 = vmatmul.bf16.gmra.mxu0 %v885
  %v1613 = vpop.f32.mrf.mxu0
  %v1614 = vadd.f32 0.0, %v1613
  %v1615 = vpop.f32.mrf.mxu0
  %v1616 = vadd.f32 0.0, %v1615
  %1617 = vmatmul.bf16.gmra.mxu0 %v887
  %v1618 = vpop.f32.mrf.mxu0
  %v1619 = vadd.f32 0.0, %v1618
  %v1620 = vpop.f32.mrf.mxu0
  %v1621 = vadd.f32 0.0, %v1620
  %1622 = vmatmul.bf16.gmra.mxu0 %v889
  %v1623 = vpop.f32.mrf.mxu0
  %v1624 = vadd.f32 0.0, %v1623
  %v1625 = vpop.f32.mrf.mxu0
  %v1626 = vadd.f32 0.0, %v1625
  %1627 = vmatmul.bf16.gmra.mxu0 %v891
  %v1628 = vpop.f32.mrf.mxu0
  %v1629 = vadd.f32 0.0, %v1628
  %v1630 = vpop.f32.mrf.mxu0
  %v1631 = vadd.f32 0.0, %v1630
  %1632 = vmatmul.bf16.gmra.mxu0 %v893
  %v1633 = vpop.f32.mrf.mxu0
  %v1634 = vadd.f32 0.0, %v1633
  %v1635 = vpop.f32.mrf.mxu0
  %v1636 = vadd.f32 0.0, %v1635
  %1637 = vmatmul.bf16.gmra.mxu0 %v895
  %v1638 = vpop.f32.mrf.mxu0
  %v1639 = vadd.f32 0.0, %v1638
  %v1640 = vpop.f32.mrf.mxu0
  %v1641 = vadd.f32 0.0, %v1640
  %1642 = vdwg.mxu0
  %1643 = vmatpush.bf16.msra.mxu0 0
  %1644 = vmatpush.bf16.msra.mxu0 0
  %1645 = vmatpush.bf16.msra.mxu0 0
  %1646 = vmatpush.bf16.msra.mxu0 0
  %1647 = vmatpush.bf16.msra.mxu0 0
  %1648 = vmatpush.bf16.msra.mxu0 0
  %1649 = vmatpush.bf16.msra.mxu0 0
  %1650 = vmatpush.bf16.msra.mxu0 %v1434
  %1651 = vmatmul.bf16.gmra.mxu0 %v1005
  %v1652 = vpop.f32.mrf.mxu0
  %v1653 = vadd.f32 %v1584, %v1652
  %v1654 = vpop.f32.mrf.mxu0
  %v1655 = vadd.f32 %v1586, %v1654
  %1656 = vmatmul.bf16.gmra.mxu0 %v1008
  %v1657 = vpop.f32.mrf.mxu0
  %v1658 = vadd.f32 %v1589, %v1657
  %v1659 = vpop.f32.mrf.mxu0
  %v1660 = vadd.f32 %v1591, %v1659
  %1661 = vmatmul.bf16.gmra.mxu0 %v1011
  %v1662 = vpop.f32.mrf.mxu0
  %v1663 = vadd.f32 %v1594, %v1662
  %v1664 = vpop.f32.mrf.mxu0
  %v1665 = vadd.f32 %v1596, %v1664
  %1666 = vmatmul.bf16.gmra.mxu0 %v1014
  %v1667 = vpop.f32.mrf.mxu0
  %v1668 = vadd.f32 %v1599, %v1667
  %v1669 = vpop.f32.mrf.mxu0
  %v1670 = vadd.f32 %v1601, %v1669
  %1671 = vmatmul.bf16.gmra.mxu0 %v1017
  %v1672 = vpop.f32.mrf.mxu0
  %v1673 = vadd.f32 %v1604, %v1672
  %v1674 = vpop.f32.mrf.mxu0
  %v1675 = vadd.f32 %v1606, %v1674
  %1676 = vmatmul.bf16.gmra.mxu0 %v1020
  %v1677 = vpop.f32.mrf.mxu0
  %v1678 = vadd.f32 %v1609, %v1677
  %v1679 = vpop.f32.mrf.mxu0
  %v1680 = vadd.f32 %v1611, %v1679
  %1681 = vmatmul.bf16.gmra.mxu0 %v1023
  %v1682 = vpop.f32.mrf.mxu0
  %v1683 = vadd.f32 %v1614, %v1682
  %v1684 = vpop.f32.mrf.mxu0
  %v1685 = vadd.f32 %v1616, %v1684
  %1686 = vmatmul.bf16.gmra.mxu0 %v1026
  %v1687 = vpop.f32.mrf.mxu0
  %v1688 = vadd.f32 %v1619, %v1687
  %v1689 = vpop.f32.mrf.mxu0
  %v1690 = vadd.f32 %v1621, %v1689
  %1691 = vmatmul.bf16.gmra.mxu0 %v1029
  %v1692 = vpop.f32.mrf.mxu0
  %v1693 = vadd.f32 %v1624, %v1692
  %v1694 = vpop.f32.mrf.mxu0
  %v1695 = vadd.f32 %v1626, %v1694
  %1696 = vmatmul.bf16.gmra.mxu0 %v1032
  %v1697 = vpop.f32.mrf.mxu0
  %v1698 = vadd.f32 %v1629, %v1697
  %v1699 = vpop.f32.mrf.mxu0
  %v1700 = vadd.f32 %v1631, %v1699
  %1701 = vmatmul.bf16.gmra.mxu0 %v1035
  %v1702 = vpop.f32.mrf.mxu0
  %v1703 = vadd.f32 %v1634, %v1702
  %v1704 = vpop.f32.mrf.mxu0
  %v1705 = vadd.f32 %v1636, %v1704
  %1706 = vmatmul.bf16.gmra.mxu0 %v1038
  %v1707 = vpop.f32.mrf.mxu0
  %v1708 = vadd.f32 %v1639, %v1707
  %v1709 = vpop.f32.mrf.mxu0
  %v1710 = vadd.f32 %v1641, %v1709
  %1711 = vdwg.mxu0
  %v1712 = vmax.f32 %v1126, %v1515
  %v1713 = vmax.f32 %v1264, %v1653
  %v1714 = vmax.f32 %v1128, %v1517
  %v1715 = vmax.f32 %v1266, %v1655
  %v1716 = vmax.f32 %v1131, %v1520
  %v1717 = vmax.f32 %v1269, %v1658
  %v1718 = vmax.f32 %v1133, %v1522
  %v1719 = vmax.f32 %v1271, %v1660
  %v1720 = vmax.f32 %v1136, %v1525
  %v1721 = vmax.f32 %v1274, %v1663
  %v1722 = vmax.f32 %v1138, %v1527
  %v1723 = vmax.f32 %v1276, %v1665
  %v1724 = vmax.f32 %v1141, %v1530
  %v1725 = vmax.f32 %v1279, %v1668
  %v1726 = vmax.f32 %v1143, %v1532
  %v1727 = vmax.f32 %v1281, %v1670
  %v1728 = vmax.f32 %v1146, %v1535
  %v1729 = vmax.f32 %v1284, %v1673
  %v1730 = vmax.f32 %v1148, %v1537
  %v1731 = vmax.f32 %v1286, %v1675
  %v1732 = vmax.f32 %v1151, %v1540
  %v1733 = vmax.f32 %v1289, %v1678
  %v1734 = vmax.f32 %v1153, %v1542
  %v1735 = vmax.f32 %v1291, %v1680
  %v1736 = vmax.f32 %v1156, %v1545
  %v1737 = vmax.f32 %v1294, %v1683
  %v1738 = vmax.f32 %v1158, %v1547
  %v1739 = vmax.f32 %v1296, %v1685
  %v1740 = vmax.f32 %v1161, %v1550
  %v1741 = vmax.f32 %v1299, %v1688
  %v1742 = vmax.f32 %v1163, %v1552
  %v1743 = vmax.f32 %v1301, %v1690
  %v1744 = vmax.f32 %v1166, %v1555
  %v1745 = vmax.f32 %v1304, %v1693
  %v1746 = vmax.f32 %v1168, %v1557
  %v1747 = vmax.f32 %v1306, %v1695
  %v1748 = vmax.f32 %v1171, %v1560
  %v1749 = vmax.f32 %v1309, %v1698
  %v1750 = vmax.f32 %v1173, %v1562
  %v1751 = vmax.f32 %v1311, %v1700
  %v1752 = vmax.f32 %v1176, %v1565
  %v1753 = vmax.f32 %v1314, %v1703
  %v1754 = vmax.f32 %v1178, %v1567
  %v1755 = vmax.f32 %v1316, %v1705
  %v1756 = vmax.f32 %v1181, %v1570
  %v1757 = vmax.f32 %v1319, %v1708
  %v1758 = vmax.f32 %v1183, %v1572
  %v1759 = vmax.f32 %v1321, %v1710
  %v1760 = vld [vmem:[%s2] sm:$0x3]
  %v1762 = vperm.slane %v1760, 0
  %v1763 = vperm.slane %v1760, 1
  %v1766 = vadd.f32 %v1712, %v1762
  %v1767 = vadd.f32 %v1713, %v1763
  %v1768 = vadd.f32 %v1714, %v1762
  %v1769 = vadd.f32 %v1715, %v1763
  %v1770 = vadd.f32 %v1716, %v1762
  %v1771 = vadd.f32 %v1717, %v1763
  %v1772 = vadd.f32 %v1718, %v1762
  %v1773 = vadd.f32 %v1719, %v1763
  %v1774 = vadd.f32 %v1720, %v1762
  %v1775 = vadd.f32 %v1721, %v1763
  %v1776 = vadd.f32 %v1722, %v1762
  %v1777 = vadd.f32 %v1723, %v1763
  %v1778 = vadd.f32 %v1724, %v1762
  %v1779 = vadd.f32 %v1725, %v1763
  %v1780 = vadd.f32 %v1726, %v1762
  %v1781 = vadd.f32 %v1727, %v1763
  %v1782 = vadd.f32 %v1728, %v1762
  %v1783 = vadd.f32 %v1729, %v1763
  %v1784 = vadd.f32 %v1730, %v1762
  %v1785 = vadd.f32 %v1731, %v1763
  %v1786 = vadd.f32 %v1732, %v1762
  %v1787 = vadd.f32 %v1733, %v1763
  %v1788 = vadd.f32 %v1734, %v1762
  %v1789 = vadd.f32 %v1735, %v1763
  %v1790 = vadd.f32 %v1736, %v1762
  %v1791 = vadd.f32 %v1737, %v1763
  %v1792 = vadd.f32 %v1738, %v1762
  %v1793 = vadd.f32 %v1739, %v1763
  %v1794 = vadd.f32 %v1740, %v1762
  %v1795 = vadd.f32 %v1741, %v1763
  %v1796 = vadd.f32 %v1742, %v1762
  %v1797 = vadd.f32 %v1743, %v1763
  %v1798 = vadd.f32 %v1744, %v1762
  %v1799 = vadd.f32 %v1745, %v1763
  %v1800 = vadd.f32 %v1746, %v1762
  %v1801 = vadd.f32 %v1747, %v1763
  %v1802 = vadd.f32 %v1748, %v1762
  %v1803 = vadd.f32 %v1749, %v1763
  %v1804 = vadd.f32 %v1750, %v1762
  %v1805 = vadd.f32 %v1751, %v1763
  %v1806 = vadd.f32 %v1752, %v1762
  %v1807 = vadd.f32 %v1753, %v1763
  %v1808 = vadd.f32 %v1754, %v1762
  %v1809 = vadd.f32 %v1755, %v1763
  %v1810 = vadd.f32 %v1756, %v1762
  %v1811 = vadd.f32 %v1757, %v1763
  %v1812 = vadd.f32 %v1758, %v1762
  %v1813 = vadd.f32 %v1759, %v1763
  %v1814 = vmax.f32 %v1766, 0.0
  %v1815 = vmax.f32 %v1767, 0.0
  %v1816 = vmax.f32 %v1768, 0.0
  %v1817 = vmax.f32 %v1769, 0.0
  %v1818 = vmax.f32 %v1770, 0.0
  %v1819 = vmax.f32 %v1771, 0.0
  %v1820 = vmax.f32 %v1772, 0.0
  %v1821 = vmax.f32 %v1773, 0.0
  %v1822 = vmax.f32 %v1774, 0.0
  %v1823 = vmax.f32 %v1775, 0.0
  %v1824 = vmax.f32 %v1776, 0.0
  %v1825 = vmax.f32 %v1777, 0.0
  %v1826 = vmax.f32 %v1778, 0.0
  %v1827 = vmax.f32 %v1779, 0.0
  %v1828 = vmax.f32 %v1780, 0.0
  %v1829 = vmax.f32 %v1781, 0.0
  %v1830 = vmax.f32 %v1782, 0.0
  %v1831 = vmax.f32 %v1783, 0.0
  %v1832 = vmax.f32 %v1784, 0.0
  %v1833 = vmax.f32 %v1785, 0.0
  %v1834 = vmax.f32 %v1786, 0.0
  %v1835 = vmax.f32 %v1787, 0.0
  %v1836 = vmax.f32 %v1788, 0.0
  %v1837 = vmax.f32 %v1789, 0.0
  %v1838 = vmax.f32 %v1790, 0.0
  %v1839 = vmax.f32 %v1791, 0.0
  %v1840 = vmax.f32 %v1792, 0.0
  %v1841 = vmax.f32 %v1793, 0.0
  %v1842 = vmax.f32 %v1794, 0.0
  %v1843 = vmax.f32 %v1795, 0.0
  %v1844 = vmax.f32 %v1796, 0.0
  %v1845 = vmax.f32 %v1797, 0.0
  %v1846 = vmax.f32 %v1798, 0.0
  %v1847 = vmax.f32 %v1799, 0.0
  %v1848 = vmax.f32 %v1800, 0.0
  %v1849 = vmax.f32 %v1801, 0.0
  %v1850 = vmax.f32 %v1802, 0.0
  %v1851 = vmax.f32 %v1803, 0.0
  %v1852 = vmax.f32 %v1804, 0.0
  %v1853 = vmax.f32 %v1805, 0.0
  %v1854 = vmax.f32 %v1806, 0.0
  %v1855 = vmax.f32 %v1807, 0.0
  %v1856 = vmax.f32 %v1808, 0.0
  %v1857 = vmax.f32 %v1809, 0.0
  %v1858 = vmax.f32 %v1810, 0.0
  %v1859 = vmax.f32 %v1811, 0.0
  %v1860 = vmax.f32 %v1812, 0.0
  %v1861 = vmax.f32 %v1813, 0.0
  %v1862 = vmax.f32 %v1814, %v1816
  %v1863 = vmax.f32 %v1815, %v1817
  %v1864 = vmax.f32 %v1818, %v1820
  %v1865 = vmax.f32 %v1819, %v1821
  %v1866 = vmax.f32 %v1822, %v1824
  %v1867 = vmax.f32 %v1823, %v1825
  %v1868 = vmax.f32 %v1826, %v1828
  %v1869 = vmax.f32 %v1827, %v1829
  %v1870 = vmax.f32 %v1830, %v1832
  %v1871 = vmax.f32 %v1831, %v1833
  %v1872 = vmax.f32 %v1834, %v1836
  %v1873 = vmax.f32 %v1835, %v1837
  %v1874 = vmax.f32 %v1838, %v1840
  %v1875 = vmax.f32 %v1839, %v1841
  %v1876 = vmax.f32 %v1842, %v1844
  %v1877 = vmax.f32 %v1843, %v1845
  %v1878 = vmax.f32 %v1846, %v1848
  %v1879 = vmax.f32 %v1847, %v1849
  %v1880 = vmax.f32 %v1850, %v1852
  %v1881 = vmax.f32 %v1851, %v1853
  %v1882 = vmax.f32 %v1854, %v1856
  %v1883 = vmax.f32 %v1855, %v1857
  %v1884 = vmax.f32 %v1858, %v1860
  %v1885 = vmax.f32 %v1859, %v1861
  %v1886 = vpack.c.bf16 %v1863, %v1862
  %v1887 = vpack.c.bf16 %v1865, %v1864
  %v1888 = vpack.c.bf16 %v1867, %v1866
  %v1889 = vpack.c.bf16 %v1869, %v1868
  %v1890 = vpack.c.bf16 %v1871, %v1870
  %v1891 = vpack.c.bf16 %v1873, %v1872
  %v1892 = vpack.c.bf16 %v1875, %v1874
  %v1893 = vpack.c.bf16 %v1877, %v1876
  %v1894 = vpack.c.bf16 %v1879, %v1878
  %v1895 = vpack.c.bf16 %v1881, %v1880
  %v1896 = vpack.c.bf16 %v1883, %v1882
  %v1897 = vpack.c.bf16 %v1885, %v1884
  %v1898 = vld [vmem:[%s3] sm:$0xff]
  %v1899 = vld [vmem:[%s3 + $0x8] sm:$0xff]
  %v1900 = vld [vmem:[%s3 + $0x10] sm:$0xff]
  %v1901 = vld [vmem:[%s3 + $0x18] sm:$0xff]
  %v1902 = vld [vmem:[%s3 + $0x20] sm:$0xff]
  %v1903 = vld [vmem:[%s3 + $0x28] sm:$0xff]
  %v1904 = vld [vmem:[%s3 + $0x30] sm:$0xff]
  %v1905 = vld [vmem:[%s3 + $0x38] sm:$0xff]
  %v1906 = vld [vmem:[%s3 + $0x40] sm:$0xff]
  %v1907 = vld [vmem:[%s3 + $0x48] sm:$0xff]
  %v1908 = vld [vmem:[%s3 + $0x50] sm:$0xff]
  %v1909 = vld [vmem:[%s3 + $0x58] sm:$0xff]
  %v1910 = vld [vmem:[%s3 + $0x60] sm:$0xff]
  %v1911 = vld [vmem:[%s3 + $0x68] sm:$0xff]
  %v1912 = vld [vmem:[%s3 + $0x70] sm:$0xff]
  %v1913 = vld [vmem:[%s3 + $0x78] sm:$0xff]
  %v1914 = vld [vmem:[%s3 + $0x80] sm:$0xff]
  %v1915 = vld [vmem:[%s3 + $0x88] sm:$0xff]
  %v1916 = vld [vmem:[%s3 + $0x90] sm:$0xff]
  %v1917 = vld [vmem:[%s3 + $0x98] sm:$0xff]
  %v1918 = vld [vmem:[%s3 + $0xa0] sm:$0xff]
  %v1919 = vld [vmem:[%s3 + $0xa8] sm:$0xff]
  %v1920 = vld [vmem:[%s3 + $0xb0] sm:$0xff]
  %v1921 = vld [vmem:[%s3 + $0xb8] sm:$0xff]
  %v1922 = vld [vmem:[%s3 + $0xc0] sm:$0xff]
  %v1923 = vld [vmem:[%s3 + $0xc8] sm:$0xff]
  %v1924 = vld [vmem:[%s3 + $0xd0] sm:$0xff]
  %v1925 = vld [vmem:[%s3 + $0xd8] sm:$0xff]
  %v1926 = vld [vmem:[%s3 + $0xe0] sm:$0xff]
  %v1927 = vld [vmem:[%s3 + $0xe8] sm:$0xff]
  %s1928 = scalar_lea.vmem %s3, 1200
  %v1929 = vld [vmem:[%s1928] sm:$0xff]
  %v1930 = vld [vmem:[%s1928 + $0x8] sm:$0xff]
  %v1931 = vld [vmem:[%s1928 + $0x10] sm:$0xff]
  %v1932 = vld [vmem:[%s1928 + $0x18] sm:$0xff]
  %v1933 = vld [vmem:[%s1928 + $0x20] sm:$0xff]
  %v1934 = vld [vmem:[%s1928 + $0x28] sm:$0xff]
  %v1935 = vld [vmem:[%s1928 + $0x30] sm:$0xff]
  %v1936 = vld [vmem:[%s1928 + $0x38] sm:$0xff]
  %v1937 = vld [vmem:[%s1928 + $0x40] sm:$0xff]
  %v1938 = vld [vmem:[%s1928 + $0x48] sm:$0xff]
  %v1939 = vld [vmem:[%s1928 + $0x50] sm:$0xff]
  %v1940 = vld [vmem:[%s1928 + $0x58] sm:$0xff]
  %v1941 = vld [vmem:[%s1928 + $0x60] sm:$0xff]
  %v1942 = vld [vmem:[%s1928 + $0x68] sm:$0xff]
  %v1943 = vld [vmem:[%s1928 + $0x70] sm:$0xff]
  %v1944 = vld [vmem:[%s1928 + $0x78] sm:$0xff]
  %v1945 = vld [vmem:[%s1928 + $0x80] sm:$0xff]
  %v1946 = vld [vmem:[%s1928 + $0x88] sm:$0xff]
  %v1947 = vld [vmem:[%s1928 + $0x90] sm:$0xff]
  %v1948 = vld [vmem:[%s1928 + $0x98] sm:$0xff]
  %v1949 = vld [vmem:[%s1928 + $0xa0] sm:$0xff]
  %v1950 = vld [vmem:[%s1928 + $0xa8] sm:$0xff]
  %v1951 = vld [vmem:[%s1928 + $0xb0] sm:$0xff]
  %v1952 = vld [vmem:[%s1928 + $0xb8] sm:$0xff]
  %v1953 = vld [vmem:[%s1928 + $0xc0] sm:$0xff]
  %v1954 = vld [vmem:[%s1928 + $0xc8] sm:$0xff]
  %v1955 = vld [vmem:[%s1928 + $0xd0] sm:$0xff]
  %v1956 = vld [vmem:[%s1928 + $0xd8] sm:$0xff]
  %v1957 = vld [vmem:[%s1928 + $0xe0] sm:$0xff]
  %v1958 = vld [vmem:[%s1928 + $0xe8] sm:$0xff]
  %s1959 = scalar_lea.vmem %s3, 240
  %v1960 = vld [vmem:[%s1959] sm:$0xff]
  %v1961 = vld [vmem:[%s1959 + $0x8] sm:$0xff]
  %v1962 = vld [vmem:[%s1959 + $0x10] sm:$0xff]
  %v1963 = vld [vmem:[%s1959 + $0x18] sm:$0xff]
  %v1964 = vld [vmem:[%s1959 + $0x20] sm:$0xff]
  %v1965 = vld [vmem:[%s1959 + $0x28] sm:$0xff]
  %v1966 = vld [vmem:[%s1959 + $0x30] sm:$0xff]
  %v1967 = vld [vmem:[%s1959 + $0x38] sm:$0xff]
  %v1968 = vld [vmem:[%s1959 + $0x40] sm:$0xff]
  %v1969 = vld [vmem:[%s1959 + $0x48] sm:$0xff]
  %v1970 = vld [vmem:[%s1959 + $0x50] sm:$0xff]
  %v1971 = vld [vmem:[%s1959 + $0x58] sm:$0xff]
  %v1972 = vld [vmem:[%s1959 + $0x60] sm:$0xff]
  %v1973 = vld [vmem:[%s1959 + $0x68] sm:$0xff]
  %v1974 = vld [vmem:[%s1959 + $0x70] sm:$0xff]
  %v1975 = vld [vmem:[%s1959 + $0x78] sm:$0xff]
  %v1976 = vld [vmem:[%s1959 + $0x80] sm:$0xff]
  %v1977 = vld [vmem:[%s1959 + $0x88] sm:$0xff]
  %v1978 = vld [vmem:[%s1959 + $0x90] sm:$0xff]
  %v1979 = vld [vmem:[%s1959 + $0x98] sm:$0xff]
  %v1980 = vld [vmem:[%s1959 + $0xa0] sm:$0xff]
  %v1981 = vld [vmem:[%s1959 + $0xa8] sm:$0xff]
  %v1982 = vld [vmem:[%s1959 + $0xb0] sm:$0xff]
  %v1983 = vld [vmem:[%s1959 + $0xb8] sm:$0xff]
  %v1984 = vld [vmem:[%s1959 + $0xc0] sm:$0xff]
  %v1985 = vld [vmem:[%s1959 + $0xc8] sm:$0xff]
  %v1986 = vld [vmem:[%s1959 + $0xd0] sm:$0xff]
  %v1987 = vld [vmem:[%s1959 + $0xd8] sm:$0xff]
  %v1988 = vld [vmem:[%s1959 + $0xe0] sm:$0xff]
  %v1989 = vld [vmem:[%s1959 + $0xe8] sm:$0xff]
  %v1998 = vunpack.c.l.b16 %v1887
  %v1999 = vunpack.c.h.b16 %v1887
  %v2000 = vunpack.c.l.b16 %v1888
  %v2001 = vunpack.c.h.b16 %v1888
  %v2002 = vunpack.c.l.b16 %v1889
  %v2003 = vunpack.c.h.b16 %v1889
  %v2004 = vunpack.c.l.b16 %v1890
  %v2005 = vunpack.c.h.b16 %v1890
  %v2006 = vunpack.c.l.b16 %v1891
  %v2007 = vunpack.c.h.b16 %v1891
  %v2008 = vunpack.c.l.b16 %v1892
  %v2009 = vunpack.c.h.b16 %v1892
  %v2010 = vunpack.c.l.b16 %v1893
  %v2011 = vunpack.c.h.b16 %v1893
  %v2012 = vunpack.c.l.b16 %v1894
  %v2013 = vunpack.c.h.b16 %v1894
  %v2014 = vpack.c.b16 %v2000, %v1998
  %v2015 = vpack.c.b16 %v2001, %v1999
  %v2016 = vpack.c.b16 %v2004, %v2002
  %v2017 = vpack.c.b16 %v2005, %v2003
  %v2018 = vpack.c.b16 %v2008, %v2006
  %v2019 = vpack.c.b16 %v2009, %v2007
  %v2020 = vpack.c.b16 %v2012, %v2010
  %v2021 = vpack.c.b16 %v2013, %v2011
  %v2056 = vunpack.c.l.b16 %v1960
  %v2057 = vunpack.c.h.b16 %v1960
  %v2058 = vunpack.c.l.b16 %v1961
  %v2059 = vunpack.c.h.b16 %v1961
  %v2060 = vunpack.c.l.b16 %v1962
  %v2061 = vunpack.c.h.b16 %v1962
  %v2062 = vunpack.c.l.b16 %v1963
  %v2063 = vunpack.c.h.b16 %v1963
  %v2064 = vunpack.c.l.b16 %v1964
  %v2065 = vunpack.c.h.b16 %v1964
  %v2066 = vunpack.c.l.b16 %v1965
  %v2067 = vunpack.c.h.b16 %v1965
  %v2068 = vunpack.c.l.b16 %v1966
  %v2069 = vunpack.c.h.b16 %v1966
  %v2070 = vunpack.c.l.b16 %v1967
  %v2071 = vunpack.c.h.b16 %v1967
  %v2072 = vunpack.c.l.b16 %v1968
  %v2073 = vunpack.c.h.b16 %v1968
  %v2074 = vunpack.c.l.b16 %v1969
  %v2075 = vunpack.c.h.b16 %v1969
  %v2076 = vunpack.c.l.b16 %v1970
  %v2077 = vunpack.c.h.b16 %v1970
  %v2078 = vunpack.c.l.b16 %v1971
  %v2079 = vunpack.c.h.b16 %v1971
  %v2080 = vunpack.c.l.b16 %v1972
  %v2081 = vunpack.c.h.b16 %v1972
  %v2082 = vunpack.c.l.b16 %v1973
  %v2083 = vunpack.c.h.b16 %v1973
  %v2084 = vunpack.c.l.b16 %v1974
  %v2085 = vunpack.c.h.b16 %v1974
  %v2086 = vunpack.c.l.b16 %v1975
  %v2087 = vunpack.c.h.b16 %v1975
  %v2088 = vunpack.c.l.b16 %v1976
  %v2089 = vunpack.c.h.b16 %v1976
  %v2090 = vunpack.c.l.b16 %v1977
  %v2091 = vunpack.c.h.b16 %v1977
  %v2092 = vunpack.c.l.b16 %v1978
  %v2093 = vunpack.c.h.b16 %v1978
  %v2094 = vunpack.c.l.b16 %v1979
  %v2095 = vunpack.c.h.b16 %v1979
  %v2096 = vunpack.c.l.b16 %v1980
  %v2097 = vunpack.c.h.b16 %v1980
  %v2098 = vunpack.c.l.b16 %v1981
  %v2099 = vunpack.c.h.b16 %v1981
  %v2100 = vunpack.c.l.b16 %v1982
  %v2101 = vunpack.c.h.b16 %v1982
  %v2102 = vunpack.c.l.b16 %v1983
  %v2103 = vunpack.c.h.b16 %v1983
  %v2104 = vunpack.c.l.b16 %v1984
  %v2105 = vunpack.c.h.b16 %v1984
  %v2106 = vunpack.c.l.b16 %v1985
  %v2107 = vunpack.c.h.b16 %v1985
  %v2108 = vunpack.c.l.b16 %v1986
  %v2109 = vunpack.c.h.b16 %v1986
  %v2110 = vunpack.c.l.b16 %v1987
  %v2111 = vunpack.c.h.b16 %v1987
  %v2112 = vunpack.c.l.b16 %v1988
  %v2113 = vunpack.c.h.b16 %v1988
  %v2114 = vunpack.c.l.b16 %v1989
  %v2115 = vunpack.c.h.b16 %v1989
  %v2116 = vpack.c.b16 %v2058, %v2056
  %v2117 = vpack.c.b16 %v2059, %v2057
  %v2118 = vpack.c.b16 %v2062, %v2060
  %v2119 = vpack.c.b16 %v2063, %v2061
  %v2120 = vpack.c.b16 %v2066, %v2064
  %v2121 = vpack.c.b16 %v2067, %v2065
  %v2122 = vpack.c.b16 %v2070, %v2068
  %v2123 = vpack.c.b16 %v2071, %v2069
  %v2124 = vpack.c.b16 %v2074, %v2072
  %v2125 = vpack.c.b16 %v2075, %v2073
  %v2126 = vpack.c.b16 %v2078, %v2076
  %v2127 = vpack.c.b16 %v2079, %v2077
  %v2128 = vpack.c.b16 %v2082, %v2080
  %v2129 = vpack.c.b16 %v2083, %v2081
  %v2130 = vpack.c.b16 %v2086, %v2084
  %v2131 = vpack.c.b16 %v2087, %v2085
  %v2132 = vpack.c.b16 %v2090, %v2088
  %v2133 = vpack.c.b16 %v2091, %v2089
  %v2134 = vpack.c.b16 %v2094, %v2092
  %v2135 = vpack.c.b16 %v2095, %v2093
  %v2136 = vpack.c.b16 %v2098, %v2096
  %v2137 = vpack.c.b16 %v2099, %v2097
  %v2138 = vpack.c.b16 %v2102, %v2100
  %v2139 = vpack.c.b16 %v2103, %v2101
  %v2140 = vpack.c.b16 %v2106, %v2104
  %v2141 = vpack.c.b16 %v2107, %v2105
  %v2142 = vpack.c.b16 %v2110, %v2108
  %v2143 = vpack.c.b16 %v2111, %v2109
  %v2144 = vpack.c.b16 %v2114, %v2112
  %v2145 = vpack.c.b16 %v2115, %v2113
  %v2177 = vsel %vm848, %v2015, 0
  %v2180 = vsel %vm848, %v2017, 0
  %v2183 = vsel %vm848, %v2019, 0
  %v2186 = vsel %vm848, %v2021, 0
  %2188 = vmatpush.bf16.msra.mxu0 %v2130
  %2189 = vmatpush.bf16.msra.mxu0 %v2128
  %2190 = vmatpush.bf16.msra.mxu0 %v2126
  %2191 = vmatpush.bf16.msra.mxu0 %v2124
  %2192 = vmatpush.bf16.msra.mxu0 %v2122
  %2193 = vmatpush.bf16.msra.mxu0 %v2120
  %2194 = vmatpush.bf16.msra.mxu0 %v2118
  %2195 = vmatpush.bf16.msra.mxu0 %v2116
  %2196 = vmatmul.bf16.gmra.mxu0 %v2014
  %v2197 = vpop.f32.mrf.mxu0
  %v2198 = vadd.f32 0.0, %v2197
  %v2199 = vpop.f32.mrf.mxu0
  %v2200 = vadd.f32 0.0, %v2199
  %2201 = vmatmul.bf16.gmra.mxu0 %v2016
  %v2202 = vpop.f32.mrf.mxu0
  %v2203 = vadd.f32 0.0, %v2202
  %v2204 = vpop.f32.mrf.mxu0
  %v2205 = vadd.f32 0.0, %v2204
  %2206 = vmatmul.bf16.gmra.mxu0 %v2018
  %v2207 = vpop.f32.mrf.mxu0
  %v2208 = vadd.f32 0.0, %v2207
  %v2209 = vpop.f32.mrf.mxu0
  %v2210 = vadd.f32 0.0, %v2209
  %2211 = vmatmul.bf16.gmra.mxu0 %v2020
  %v2212 = vpop.f32.mrf.mxu0
  %v2213 = vadd.f32 0.0, %v2212
  %v2214 = vpop.f32.mrf.mxu0
  %v2215 = vadd.f32 0.0, %v2214
  %2216 = vdwg.mxu0
  %2217 = vmatpush.bf16.msra.mxu0 0
  %2218 = vmatpush.bf16.msra.mxu0 %v2144
  %2219 = vmatpush.bf16.msra.mxu0 %v2142
  %2220 = vmatpush.bf16.msra.mxu0 %v2140
  %2221 = vmatpush.bf16.msra.mxu0 %v2138
  %2222 = vmatpush.bf16.msra.mxu0 %v2136
  %2223 = vmatpush.bf16.msra.mxu0 %v2134
  %2224 = vmatpush.bf16.msra.mxu0 %v2132
  %2225 = vmatmul.bf16.gmra.mxu0 %v2177
  %v2226 = vpop.f32.mrf.mxu0
  %v2227 = vadd.f32 %v2198, %v2226
  %v2228 = vpop.f32.mrf.mxu0
  %v2229 = vadd.f32 %v2200, %v2228
  %2230 = vmatmul.bf16.gmra.mxu0 %v2180
  %v2231 = vpop.f32.mrf.mxu0
  %v2232 = vadd.f32 %v2203, %v2231
  %v2233 = vpop.f32.mrf.mxu0
  %v2234 = vadd.f32 %v2205, %v2233
  %2235 = vmatmul.bf16.gmra.mxu0 %v2183
  %v2236 = vpop.f32.mrf.mxu0
  %v2237 = vadd.f32 %v2208, %v2236
  %v2238 = vpop.f32.mrf.mxu0
  %v2239 = vadd.f32 %v2210, %v2238
  %2240 = vmatmul.bf16.gmra.mxu0 %v2186
  %v2241 = vpop.f32.mrf.mxu0
  %v2242 = vadd.f32 %v2213, %v2241
  %v2243 = vpop.f32.mrf.mxu0
  %v2244 = vadd.f32 %v2215, %v2243
  %2245 = vdwg.mxu0
  %2246 = vmatpush.bf16.msra.mxu0 %v2131
  %2247 = vmatpush.bf16.msra.mxu0 %v2129
  %2248 = vmatpush.bf16.msra.mxu0 %v2127
  %2249 = vmatpush.bf16.msra.mxu0 %v2125
  %2250 = vmatpush.bf16.msra.mxu0 %v2123
  %2251 = vmatpush.bf16.msra.mxu0 %v2121
  %2252 = vmatpush.bf16.msra.mxu0 %v2119
  %2253 = vmatpush.bf16.msra.mxu0 %v2117
  %2254 = vmatmul.bf16.gmra.mxu0 %v2014
  %v2255 = vpop.f32.mrf.mxu0
  %v2256 = vadd.f32 0.0, %v2255
  %v2257 = vpop.f32.mrf.mxu0
  %v2258 = vadd.f32 0.0, %v2257
  %2259 = vmatmul.bf16.gmra.mxu0 %v2016
  %v2260 = vpop.f32.mrf.mxu0
  %v2261 = vadd.f32 0.0, %v2260
  %v2262 = vpop.f32.mrf.mxu0
  %v2263 = vadd.f32 0.0, %v2262
  %2264 = vmatmul.bf16.gmra.mxu0 %v2018
  %v2265 = vpop.f32.mrf.mxu0
  %v2266 = vadd.f32 0.0, %v2265
  %v2267 = vpop.f32.mrf.mxu0
  %v2268 = vadd.f32 0.0, %v2267
  %2269 = vmatmul.bf16.gmra.mxu0 %v2020
  %v2270 = vpop.f32.mrf.mxu0
  %v2271 = vadd.f32 0.0, %v2270
  %v2272 = vpop.f32.mrf.mxu0
  %v2273 = vadd.f32 0.0, %v2272
  %2274 = vdwg.mxu0
  %2275 = vmatpush.bf16.msra.mxu0 0
  %2276 = vmatpush.bf16.msra.mxu0 %v2145
  %2277 = vmatpush.bf16.msra.mxu0 %v2143
  %2278 = vmatpush.bf16.msra.mxu0 %v2141
  %2279 = vmatpush.bf16.msra.mxu0 %v2139
  %2280 = vmatpush.bf16.msra.mxu0 %v2137
  %2281 = vmatpush.bf16.msra.mxu0 %v2135
  %2282 = vmatpush.bf16.msra.mxu0 %v2133
  %2283 = vmatmul.bf16.gmra.mxu0 %v2177
  %v2284 = vpop.f32.mrf.mxu0
  %v2285 = vadd.f32 %v2256, %v2284
  %v2286 = vpop.f32.mrf.mxu0
  %v2287 = vadd.f32 %v2258, %v2286
  %2288 = vmatmul.bf16.gmra.mxu0 %v2180
  %v2289 = vpop.f32.mrf.mxu0
  %v2290 = vadd.f32 %v2261, %v2289
  %v2291 = vpop.f32.mrf.mxu0
  %v2292 = vadd.f32 %v2263, %v2291
  %2293 = vmatmul.bf16.gmra.mxu0 %v2183
  %v2294 = vpop.f32.mrf.mxu0
  %v2295 = vadd.f32 %v2266, %v2294
  %v2296 = vpop.f32.mrf.mxu0
  %v2297 = vadd.f32 %v2268, %v2296
  %2298 = vmatmul.bf16.gmra.mxu0 %v2186
  %v2299 = vpop.f32.mrf.mxu0
  %v2300 = vadd.f32 %v2271, %v2299
  %v2301 = vpop.f32.mrf.mxu0
  %v2302 = vadd.f32 %v2273, %v2301
  %2303 = vdwg.mxu0
  %s2304 = scalar_lea.vmem %s3, 1440
  %v2305 = vld [vmem:[%s2304] sm:$0xff]
  %v2306 = vld [vmem:[%s2304 + $0x8] sm:$0xff]
  %v2307 = vld [vmem:[%s2304 + $0x10] sm:$0xff]
  %v2308 = vld [vmem:[%s2304 + $0x18] sm:$0xff]
  %v2309 = vld [vmem:[%s2304 + $0x20] sm:$0xff]
  %v2310 = vld [vmem:[%s2304 + $0x28] sm:$0xff]
  %v2311 = vld [vmem:[%s2304 + $0x30] sm:$0xff]
  %v2312 = vld [vmem:[%s2304 + $0x38] sm:$0xff]
  %v2313 = vld [vmem:[%s2304 + $0x40] sm:$0xff]
  %v2314 = vld [vmem:[%s2304 + $0x48] sm:$0xff]
  %v2315 = vld [vmem:[%s2304 + $0x50] sm:$0xff]
  %v2316 = vld [vmem:[%s2304 + $0x58] sm:$0xff]
  %v2317 = vld [vmem:[%s2304 + $0x60] sm:$0xff]
  %v2318 = vld [vmem:[%s2304 + $0x68] sm:$0xff]
  %v2319 = vld [vmem:[%s2304 + $0x70] sm:$0xff]
  %v2320 = vld [vmem:[%s2304 + $0x78] sm:$0xff]
  %v2321 = vld [vmem:[%s2304 + $0x80] sm:$0xff]
  %v2322 = vld [vmem:[%s2304 + $0x88] sm:$0xff]
  %v2323 = vld [vmem:[%s2304 + $0x90] sm:$0xff]
  %v2324 = vld [vmem:[%s2304 + $0x98] sm:$0xff]
  %v2325 = vld [vmem:[%s2304 + $0xa0] sm:$0xff]
  %v2326 = vld [vmem:[%s2304 + $0xa8] sm:$0xff]
  %v2327 = vld [vmem:[%s2304 + $0xb0] sm:$0xff]
  %v2328 = vld [vmem:[%s2304 + $0xb8] sm:$0xff]
  %v2329 = vld [vmem:[%s2304 + $0xc0] sm:$0xff]
  %v2330 = vld [vmem:[%s2304 + $0xc8] sm:$0xff]
  %v2331 = vld [vmem:[%s2304 + $0xd0] sm:$0xff]
  %v2332 = vld [vmem:[%s2304 + $0xd8] sm:$0xff]
  %v2333 = vld [vmem:[%s2304 + $0xe0] sm:$0xff]
  %v2334 = vld [vmem:[%s2304 + $0xe8] sm:$0xff]
  %v2365 = vunpack.c.l.b16 %v2305
  %v2366 = vunpack.c.h.b16 %v2305
  %v2367 = vunpack.c.l.b16 %v2306
  %v2368 = vunpack.c.h.b16 %v2306
  %v2369 = vunpack.c.l.b16 %v2307
  %v2370 = vunpack.c.h.b16 %v2307
  %v2371 = vunpack.c.l.b16 %v2308
  %v2372 = vunpack.c.h.b16 %v2308
  %v2373 = vunpack.c.l.b16 %v2309
  %v2374 = vunpack.c.h.b16 %v2309
  %v2375 = vunpack.c.l.b16 %v2310
  %v2376 = vunpack.c.h.b16 %v2310
  %v2377 = vunpack.c.l.b16 %v2311
  %v2378 = vunpack.c.h.b16 %v2311
  %v2379 = vunpack.c.l.b16 %v2312
  %v2380 = vunpack.c.h.b16 %v2312
  %v2381 = vunpack.c.l.b16 %v2313
  %v2382 = vunpack.c.h.b16 %v2313
  %v2383 = vunpack.c.l.b16 %v2314
  %v2384 = vunpack.c.h.b16 %v2314
  %v2385 = vunpack.c.l.b16 %v2315
  %v2386 = vunpack.c.h.b16 %v2315
  %v2387 = vunpack.c.l.b16 %v2316
  %v2388 = vunpack.c.h.b16 %v2316
  %v2389 = vunpack.c.l.b16 %v2317
  %v2390 = vunpack.c.h.b16 %v2317
  %v2391 = vunpack.c.l.b16 %v2318
  %v2392 = vunpack.c.h.b16 %v2318
  %v2393 = vunpack.c.l.b16 %v2319
  %v2394 = vunpack.c.h.b16 %v2319
  %v2395 = vunpack.c.l.b16 %v2320
  %v2396 = vunpack.c.h.b16 %v2320
  %v2397 = vunpack.c.l.b16 %v2321
  %v2398 = vunpack.c.h.b16 %v2321
  %v2399 = vunpack.c.l.b16 %v2322
  %v2400 = vunpack.c.h.b16 %v2322
  %v2401 = vunpack.c.l.b16 %v2323
  %v2402 = vunpack.c.h.b16 %v2323
  %v2403 = vunpack.c.l.b16 %v2324
  %v2404 = vunpack.c.h.b16 %v2324
  %v2405 = vunpack.c.l.b16 %v2325
  %v2406 = vunpack.c.h.b16 %v2325
  %v2407 = vunpack.c.l.b16 %v2326
  %v2408 = vunpack.c.h.b16 %v2326
  %v2409 = vunpack.c.l.b16 %v2327
  %v2410 = vunpack.c.h.b16 %v2327
  %v2411 = vunpack.c.l.b16 %v2328
  %v2412 = vunpack.c.h.b16 %v2328
  %v2413 = vunpack.c.l.b16 %v2329
  %v2414 = vunpack.c.h.b16 %v2329
  %v2415 = vunpack.c.l.b16 %v2330
  %v2416 = vunpack.c.h.b16 %v2330
  %v2417 = vunpack.c.l.b16 %v2331
  %v2418 = vunpack.c.h.b16 %v2331
  %v2419 = vunpack.c.l.b16 %v2332
  %v2420 = vunpack.c.h.b16 %v2332
  %v2421 = vunpack.c.l.b16 %v2333
  %v2422 = vunpack.c.h.b16 %v2333
  %v2423 = vunpack.c.l.b16 %v2334
  %v2424 = vunpack.c.h.b16 %v2334
  %v2425 = vpack.c.b16 %v2367, %v2365
  %v2426 = vpack.c.b16 %v2368, %v2366
  %v2427 = vpack.c.b16 %v2371, %v2369
  %v2428 = vpack.c.b16 %v2372, %v2370
  %v2429 = vpack.c.b16 %v2375, %v2373
  %v2430 = vpack.c.b16 %v2376, %v2374
  %v2431 = vpack.c.b16 %v2379, %v2377
  %v2432 = vpack.c.b16 %v2380, %v2378
  %v2433 = vpack.c.b16 %v2383, %v2381
  %v2434 = vpack.c.b16 %v2384, %v2382
  %v2435 = vpack.c.b16 %v2387, %v2385
  %v2436 = vpack.c.b16 %v2388, %v2386
  %v2437 = vpack.c.b16 %v2391, %v2389
  %v2438 = vpack.c.b16 %v2392, %v2390
  %v2439 = vpack.c.b16 %v2395, %v2393
  %v2440 = vpack.c.b16 %v2396, %v2394
  %v2441 = vpack.c.b16 %v2399, %v2397
  %v2442 = vpack.c.b16 %v2400, %v2398
  %v2443 = vpack.c.b16 %v2403, %v2401
  %v2444 = vpack.c.b16 %v2404, %v2402
  %v2445 = vpack.c.b16 %v2407, %v2405
  %v2446 = vpack.c.b16 %v2408, %v2406
  %v2447 = vpack.c.b16 %v2411, %v2409
  %v2448 = vpack.c.b16 %v2412, %v2410
  %v2449 = vpack.c.b16 %v2415, %v2413
  %v2450 = vpack.c.b16 %v2416, %v2414
  %v2451 = vpack.c.b16 %v2419, %v2417
  %v2452 = vpack.c.b16 %v2420, %v2418
  %v2453 = vpack.c.b16 %v2423, %v2421
  %v2454 = vpack.c.b16 %v2424, %v2422
  %2485 = vmatpush.bf16.msra.mxu0 %v2439
  %2486 = vmatpush.bf16.msra.mxu0 %v2437
  %2487 = vmatpush.bf16.msra.mxu0 %v2435
  %2488 = vmatpush.bf16.msra.mxu0 %v2433
  %2489 = vmatpush.bf16.msra.mxu0 %v2431
  %2490 = vmatpush.bf16.msra.mxu0 %v2429
  %2491 = vmatpush.bf16.msra.mxu0 %v2427
  %2492 = vmatpush.bf16.msra.mxu0 %v2425
  %2493 = vmatmul.bf16.gmra.mxu0 %v2014
  %v2494 = vpop.f32.mrf.mxu0
  %v2495 = vadd.f32 0.0, %v2494
  %v2496 = vpop.f32.mrf.mxu0
  %v2497 = vadd.f32 0.0, %v2496
  %2498 = vmatmul.bf16.gmra.mxu0 %v2016
  %v2499 = vpop.f32.mrf.mxu0
  %v2500 = vadd.f32 0.0, %v2499
  %v2501 = vpop.f32.mrf.mxu0
  %v2502 = vadd.f32 0.0, %v2501
  %2503 = vmatmul.bf16.gmra.mxu0 %v2018
  %v2504 = vpop.f32.mrf.mxu0
  %v2505 = vadd.f32 0.0, %v2504
  %v2506 = vpop.f32.mrf.mxu0
  %v2507 = vadd.f32 0.0, %v2506
  %2508 = vmatmul.bf16.gmra.mxu0 %v2020
  %v2509 = vpop.f32.mrf.mxu0
  %v2510 = vadd.f32 0.0, %v2509
  %v2511 = vpop.f32.mrf.mxu0
  %v2512 = vadd.f32 0.0, %v2511
  %2513 = vdwg.mxu0
  %2514 = vmatpush.bf16.msra.mxu0 0
  %2515 = vmatpush.bf16.msra.mxu0 %v2453
  %2516 = vmatpush.bf16.msra.mxu0 %v2451
  %2517 = vmatpush.bf16.msra.mxu0 %v2449
  %2518 = vmatpush.bf16.msra.mxu0 %v2447
  %2519 = vmatpush.bf16.msra.mxu0 %v2445
  %2520 = vmatpush.bf16.msra.mxu0 %v2443
  %2521 = vmatpush.bf16.msra.mxu0 %v2441
  %2522 = vmatmul.bf16.gmra.mxu0 %v2177
  %v2523 = vpop.f32.mrf.mxu0
  %v2524 = vadd.f32 %v2495, %v2523
  %v2525 = vpop.f32.mrf.mxu0
  %v2526 = vadd.f32 %v2497, %v2525
  %2527 = vmatmul.bf16.gmra.mxu0 %v2180
  %v2528 = vpop.f32.mrf.mxu0
  %v2529 = vadd.f32 %v2500, %v2528
  %v2530 = vpop.f32.mrf.mxu0
  %v2531 = vadd.f32 %v2502, %v2530
  %2532 = vmatmul.bf16.gmra.mxu0 %v2183
  %v2533 = vpop.f32.mrf.mxu0
  %v2534 = vadd.f32 %v2505, %v2533
  %v2535 = vpop.f32.mrf.mxu0
  %v2536 = vadd.f32 %v2507, %v2535
  %2537 = vmatmul.bf16.gmra.mxu0 %v2186
  %v2538 = vpop.f32.mrf.mxu0
  %v2539 = vadd.f32 %v2510, %v2538
  %v2540 = vpop.f32.mrf.mxu0
  %v2541 = vadd.f32 %v2512, %v2540
  %2542 = vdwg.mxu0
  %2543 = vmatpush.bf16.msra.mxu0 %v2440
  %2544 = vmatpush.bf16.msra.mxu0 %v2438
  %2545 = vmatpush.bf16.msra.mxu0 %v2436
  %2546 = vmatpush.bf16.msra.mxu0 %v2434
  %2547 = vmatpush.bf16.msra.mxu0 %v2432
  %2548 = vmatpush.bf16.msra.mxu0 %v2430
  %2549 = vmatpush.bf16.msra.mxu0 %v2428
  %2550 = vmatpush.bf16.msra.mxu0 %v2426
  %2551 = vmatmul.bf16.gmra.mxu0 %v2014
  %v2552 = vpop.f32.mrf.mxu0
  %v2553 = vadd.f32 0.0, %v2552
  %v2554 = vpop.f32.mrf.mxu0
  %v2555 = vadd.f32 0.0, %v2554
  %2556 = vmatmul.bf16.gmra.mxu0 %v2016
  %v2557 = vpop.f32.mrf.mxu0
  %v2558 = vadd.f32 0.0, %v2557
  %v2559 = vpop.f32.mrf.mxu0
  %v2560 = vadd.f32 0.0, %v2559
  %2561 = vmatmul.bf16.gmra.mxu0 %v2018
  %v2562 = vpop.f32.mrf.mxu0
  %v2563 = vadd.f32 0.0, %v2562
  %v2564 = vpop.f32.mrf.mxu0
  %v2565 = vadd.f32 0.0, %v2564
  %2566 = vmatmul.bf16.gmra.mxu0 %v2020
  %v2567 = vpop.f32.mrf.mxu0
  %v2568 = vadd.f32 0.0, %v2567
  %v2569 = vpop.f32.mrf.mxu0
  %v2570 = vadd.f32 0.0, %v2569
  %2571 = vdwg.mxu0
  %2572 = vmatpush.bf16.msra.mxu0 0
  %2573 = vmatpush.bf16.msra.mxu0 %v2454
  %2574 = vmatpush.bf16.msra.mxu0 %v2452
  %2575 = vmatpush.bf16.msra.mxu0 %v2450
  %2576 = vmatpush.bf16.msra.mxu0 %v2448
  %2577 = vmatpush.bf16.msra.mxu0 %v2446
  %2578 = vmatpush.bf16.msra.mxu0 %v2444
  %2579 = vmatpush.bf16.msra.mxu0 %v2442
  %2580 = vmatmul.bf16.gmra.mxu0 %v2177
  %v2581 = vpop.f32.mrf.mxu0
  %v2582 = vadd.f32 %v2553, %v2581
  %v2583 = vpop.f32.mrf.mxu0
  %v2584 = vadd.f32 %v2555, %v2583
  %2585 = vmatmul.bf16.gmra.mxu0 %v2180
  %v2586 = vpop.f32.mrf.mxu0
  %v2587 = vadd.f32 %v2558, %v2586
  %v2588 = vpop.f32.mrf.mxu0
  %v2589 = vadd.f32 %v2560, %v2588
  %2590 = vmatmul.bf16.gmra.mxu0 %v2183
  %v2591 = vpop.f32.mrf.mxu0
  %v2592 = vadd.f32 %v2563, %v2591
  %v2593 = vpop.f32.mrf.mxu0
  %v2594 = vadd.f32 %v2565, %v2593
  %2595 = vmatmul.bf16.gmra.mxu0 %v2186
  %v2596 = vpop.f32.mrf.mxu0
  %v2597 = vadd.f32 %v2568, %v2596
  %v2598 = vpop.f32.mrf.mxu0
  %v2599 = vadd.f32 %v2570, %v2598
  %2600 = vdwg.mxu0
  %v2602 = vunpack.c.l.b16 %v1886
  %v2603 = vunpack.c.h.b16 %v1886
  %v2604 = vpack.c.b16 %v1998, %v2602
  %v2605 = vpack.c.b16 %v1999, %v2603
  %v2606 = vpack.c.b16 %v2002, %v2000
  %v2607 = vpack.c.b16 %v2003, %v2001
  %v2608 = vpack.c.b16 %v2006, %v2004
  %v2609 = vpack.c.b16 %v2007, %v2005
  %v2610 = vpack.c.b16 %v2010, %v2008
  %v2611 = vpack.c.b16 %v2011, %v2009
  %v2646 = vunpack.c.l.b16 %v1898
  %v2647 = vunpack.c.h.b16 %v1898
  %v2648 = vunpack.c.l.b16 %v1899
  %v2649 = vunpack.c.h.b16 %v1899
  %v2650 = vunpack.c.l.b16 %v1900
  %v2651 = vunpack.c.h.b16 %v1900
  %v2652 = vunpack.c.l.b16 %v1901
  %v2653 = vunpack.c.h.b16 %v1901
  %v2654 = vunpack.c.l.b16 %v1902
  %v2655 = vunpack.c.h.b16 %v1902
  %v2656 = vunpack.c.l.b16 %v1903
  %v2657 = vunpack.c.h.b16 %v1903
  %v2658 = vunpack.c.l.b16 %v1904
  %v2659 = vunpack.c.h.b16 %v1904
  %v2660 = vunpack.c.l.b16 %v1905
  %v2661 = vunpack.c.h.b16 %v1905
  %v2662 = vunpack.c.l.b16 %v1906
  %v2663 = vunpack.c.h.b16 %v1906
  %v2664 = vunpack.c.l.b16 %v1907
  %v2665 = vunpack.c.h.b16 %v1907
  %v2666 = vunpack.c.l.b16 %v1908
  %v2667 = vunpack.c.h.b16 %v1908
  %v2668 = vunpack.c.l.b16 %v1909
  %v2669 = vunpack.c.h.b16 %v1909
  %v2670 = vunpack.c.l.b16 %v1910
  %v2671 = vunpack.c.h.b16 %v1910
  %v2672 = vunpack.c.l.b16 %v1911
  %v2673 = vunpack.c.h.b16 %v1911
  %v2674 = vunpack.c.l.b16 %v1912
  %v2675 = vunpack.c.h.b16 %v1912
  %v2676 = vunpack.c.l.b16 %v1913
  %v2677 = vunpack.c.h.b16 %v1913
  %v2678 = vunpack.c.l.b16 %v1914
  %v2679 = vunpack.c.h.b16 %v1914
  %v2680 = vunpack.c.l.b16 %v1915
  %v2681 = vunpack.c.h.b16 %v1915
  %v2682 = vunpack.c.l.b16 %v1916
  %v2683 = vunpack.c.h.b16 %v1916
  %v2684 = vunpack.c.l.b16 %v1917
  %v2685 = vunpack.c.h.b16 %v1917
  %v2686 = vunpack.c.l.b16 %v1918
  %v2687 = vunpack.c.h.b16 %v1918
  %v2688 = vunpack.c.l.b16 %v1919
  %v2689 = vunpack.c.h.b16 %v1919
  %v2690 = vunpack.c.l.b16 %v1920
  %v2691 = vunpack.c.h.b16 %v1920
  %v2692 = vunpack.c.l.b16 %v1921
  %v2693 = vunpack.c.h.b16 %v1921
  %v2694 = vunpack.c.l.b16 %v1922
  %v2695 = vunpack.c.h.b16 %v1922
  %v2696 = vunpack.c.l.b16 %v1923
  %v2697 = vunpack.c.h.b16 %v1923
  %v2698 = vunpack.c.l.b16 %v1924
  %v2699 = vunpack.c.h.b16 %v1924
  %v2700 = vunpack.c.l.b16 %v1925
  %v2701 = vunpack.c.h.b16 %v1925
  %v2702 = vunpack.c.l.b16 %v1926
  %v2703 = vunpack.c.h.b16 %v1926
  %v2704 = vunpack.c.l.b16 %v1927
  %v2705 = vunpack.c.h.b16 %v1927
  %v2706 = vpack.c.b16 %v2648, %v2646
  %v2707 = vpack.c.b16 %v2649, %v2647
  %v2708 = vpack.c.b16 %v2652, %v2650
  %v2709 = vpack.c.b16 %v2653, %v2651
  %v2710 = vpack.c.b16 %v2656, %v2654
  %v2711 = vpack.c.b16 %v2657, %v2655
  %v2712 = vpack.c.b16 %v2660, %v2658
  %v2713 = vpack.c.b16 %v2661, %v2659
  %v2714 = vpack.c.b16 %v2664, %v2662
  %v2715 = vpack.c.b16 %v2665, %v2663
  %v2716 = vpack.c.b16 %v2668, %v2666
  %v2717 = vpack.c.b16 %v2669, %v2667
  %v2718 = vpack.c.b16 %v2672, %v2670
  %v2719 = vpack.c.b16 %v2673, %v2671
  %v2720 = vpack.c.b16 %v2676, %v2674
  %v2721 = vpack.c.b16 %v2677, %v2675
  %v2722 = vpack.c.b16 %v2680, %v2678
  %v2723 = vpack.c.b16 %v2681, %v2679
  %v2724 = vpack.c.b16 %v2684, %v2682
  %v2725 = vpack.c.b16 %v2685, %v2683
  %v2726 = vpack.c.b16 %v2688, %v2686
  %v2727 = vpack.c.b16 %v2689, %v2687
  %v2728 = vpack.c.b16 %v2692, %v2690
  %v2729 = vpack.c.b16 %v2693, %v2691
  %v2730 = vpack.c.b16 %v2696, %v2694
  %v2731 = vpack.c.b16 %v2697, %v2695
  %v2732 = vpack.c.b16 %v2700, %v2698
  %v2733 = vpack.c.b16 %v2701, %v2699
  %v2734 = vpack.c.b16 %v2704, %v2702
  %v2735 = vpack.c.b16 %v2705, %v2703
  %v2767 = vsel %vm848, %v2605, 0
  %v2770 = vsel %vm848, %v2607, 0
  %v2773 = vsel %vm848, %v2609, 0
  %v2776 = vsel %vm848, %v2611, 0
  %2778 = vmatpush.bf16.msra.mxu0 %v2720
  %2779 = vmatpush.bf16.msra.mxu0 %v2718
  %2780 = vmatpush.bf16.msra.mxu0 %v2716
  %2781 = vmatpush.bf16.msra.mxu0 %v2714
  %2782 = vmatpush.bf16.msra.mxu0 %v2712
  %2783 = vmatpush.bf16.msra.mxu0 %v2710
  %2784 = vmatpush.bf16.msra.mxu0 %v2708
  %2785 = vmatpush.bf16.msra.mxu0 %v2706
  %2786 = vmatmul.bf16.gmra.mxu0 %v2604
  %v2787 = vpop.f32.mrf.mxu0
  %v2788 = vadd.f32 %v2227, %v2787
  %v2789 = vpop.f32.mrf.mxu0
  %v2790 = vadd.f32 %v2229, %v2789
  %2791 = vmatmul.bf16.gmra.mxu0 %v2606
  %v2792 = vpop.f32.mrf.mxu0
  %v2793 = vadd.f32 %v2232, %v2792
  %v2794 = vpop.f32.mrf.mxu0
  %v2795 = vadd.f32 %v2234, %v2794
  %2796 = vmatmul.bf16.gmra.mxu0 %v2608
  %v2797 = vpop.f32.mrf.mxu0
  %v2798 = vadd.f32 %v2237, %v2797
  %v2799 = vpop.f32.mrf.mxu0
  %v2800 = vadd.f32 %v2239, %v2799
  %2801 = vmatmul.bf16.gmra.mxu0 %v2610
  %v2802 = vpop.f32.mrf.mxu0
  %v2803 = vadd.f32 %v2242, %v2802
  %v2804 = vpop.f32.mrf.mxu0
  %v2805 = vadd.f32 %v2244, %v2804
  %2806 = vdwg.mxu0
  %2807 = vmatpush.bf16.msra.mxu0 0
  %2808 = vmatpush.bf16.msra.mxu0 %v2734
  %2809 = vmatpush.bf16.msra.mxu0 %v2732
  %2810 = vmatpush.bf16.msra.mxu0 %v2730
  %2811 = vmatpush.bf16.msra.mxu0 %v2728
  %2812 = vmatpush.bf16.msra.mxu0 %v2726
  %2813 = vmatpush.bf16.msra.mxu0 %v2724
  %2814 = vmatpush.bf16.msra.mxu0 %v2722
  %2815 = vmatmul.bf16.gmra.mxu0 %v2767
  %v2816 = vpop.f32.mrf.mxu0
  %v2817 = vadd.f32 %v2788, %v2816
  %v2818 = vpop.f32.mrf.mxu0
  %v2819 = vadd.f32 %v2790, %v2818
  %2820 = vmatmul.bf16.gmra.mxu0 %v2770
  %v2821 = vpop.f32.mrf.mxu0
  %v2822 = vadd.f32 %v2793, %v2821
  %v2823 = vpop.f32.mrf.mxu0
  %v2824 = vadd.f32 %v2795, %v2823
  %2825 = vmatmul.bf16.gmra.mxu0 %v2773
  %v2826 = vpop.f32.mrf.mxu0
  %v2827 = vadd.f32 %v2798, %v2826
  %v2828 = vpop.f32.mrf.mxu0
  %v2829 = vadd.f32 %v2800, %v2828
  %2830 = vmatmul.bf16.gmra.mxu0 %v2776
  %v2831 = vpop.f32.mrf.mxu0
  %v2832 = vadd.f32 %v2803, %v2831
  %v2833 = vpop.f32.mrf.mxu0
  %v2834 = vadd.f32 %v2805, %v2833
  %2835 = vdwg.mxu0
  %2836 = vmatpush.bf16.msra.mxu0 %v2721
  %2837 = vmatpush.bf16.msra.mxu0 %v2719
  %2838 = vmatpush.bf16.msra.mxu0 %v2717
  %2839 = vmatpush.bf16.msra.mxu0 %v2715
  %2840 = vmatpush.bf16.msra.mxu0 %v2713
  %2841 = vmatpush.bf16.msra.mxu0 %v2711
  %2842 = vmatpush.bf16.msra.mxu0 %v2709
  %2843 = vmatpush.bf16.msra.mxu0 %v2707
  %2844 = vmatmul.bf16.gmra.mxu0 %v2604
  %v2845 = vpop.f32.mrf.mxu0
  %v2846 = vadd.f32 %v2285, %v2845
  %v2847 = vpop.f32.mrf.mxu0
  %v2848 = vadd.f32 %v2287, %v2847
  %2849 = vmatmul.bf16.gmra.mxu0 %v2606
  %v2850 = vpop.f32.mrf.mxu0
  %v2851 = vadd.f32 %v2290, %v2850
  %v2852 = vpop.f32.mrf.mxu0
  %v2853 = vadd.f32 %v2292, %v2852
  %2854 = vmatmul.bf16.gmra.mxu0 %v2608
  %v2855 = vpop.f32.mrf.mxu0
  %v2856 = vadd.f32 %v2295, %v2855
  %v2857 = vpop.f32.mrf.mxu0
  %v2858 = vadd.f32 %v2297, %v2857
  %2859 = vmatmul.bf16.gmra.mxu0 %v2610
  %v2860 = vpop.f32.mrf.mxu0
  %v2861 = vadd.f32 %v2300, %v2860
  %v2862 = vpop.f32.mrf.mxu0
  %v2863 = vadd.f32 %v2302, %v2862
  %2864 = vdwg.mxu0
  %2865 = vmatpush.bf16.msra.mxu0 0
  %2866 = vmatpush.bf16.msra.mxu0 %v2735
  %2867 = vmatpush.bf16.msra.mxu0 %v2733
  %2868 = vmatpush.bf16.msra.mxu0 %v2731
  %2869 = vmatpush.bf16.msra.mxu0 %v2729
  %2870 = vmatpush.bf16.msra.mxu0 %v2727
  %2871 = vmatpush.bf16.msra.mxu0 %v2725
  %2872 = vmatpush.bf16.msra.mxu0 %v2723
  %2873 = vmatmul.bf16.gmra.mxu0 %v2767
  %v2874 = vpop.f32.mrf.mxu0
  %v2875 = vadd.f32 %v2846, %v2874
  %v2876 = vpop.f32.mrf.mxu0
  %v2877 = vadd.f32 %v2848, %v2876
  %2878 = vmatmul.bf16.gmra.mxu0 %v2770
  %v2879 = vpop.f32.mrf.mxu0
  %v2880 = vadd.f32 %v2851, %v2879
  %v2881 = vpop.f32.mrf.mxu0
  %v2882 = vadd.f32 %v2853, %v2881
  %2883 = vmatmul.bf16.gmra.mxu0 %v2773
  %v2884 = vpop.f32.mrf.mxu0
  %v2885 = vadd.f32 %v2856, %v2884
  %v2886 = vpop.f32.mrf.mxu0
  %v2887 = vadd.f32 %v2858, %v2886
  %2888 = vmatmul.bf16.gmra.mxu0 %v2776
  %v2889 = vpop.f32.mrf.mxu0
  %v2890 = vadd.f32 %v2861, %v2889
  %v2891 = vpop.f32.mrf.mxu0
  %v2892 = vadd.f32 %v2863, %v2891
  %2893 = vdwg.mxu0
  %v2924 = vunpack.c.l.b16 %v1929
  %v2925 = vunpack.c.h.b16 %v1929
  %v2926 = vunpack.c.l.b16 %v1930
  %v2927 = vunpack.c.h.b16 %v1930
  %v2928 = vunpack.c.l.b16 %v1931
  %v2929 = vunpack.c.h.b16 %v1931
  %v2930 = vunpack.c.l.b16 %v1932
  %v2931 = vunpack.c.h.b16 %v1932
  %v2932 = vunpack.c.l.b16 %v1933
  %v2933 = vunpack.c.h.b16 %v1933
  %v2934 = vunpack.c.l.b16 %v1934
  %v2935 = vunpack.c.h.b16 %v1934
  %v2936 = vunpack.c.l.b16 %v1935
  %v2937 = vunpack.c.h.b16 %v1935
  %v2938 = vunpack.c.l.b16 %v1936
  %v2939 = vunpack.c.h.b16 %v1936
  %v2940 = vunpack.c.l.b16 %v1937
  %v2941 = vunpack.c.h.b16 %v1937
  %v2942 = vunpack.c.l.b16 %v1938
  %v2943 = vunpack.c.h.b16 %v1938
  %v2944 = vunpack.c.l.b16 %v1939
  %v2945 = vunpack.c.h.b16 %v1939
  %v2946 = vunpack.c.l.b16 %v1940
  %v2947 = vunpack.c.h.b16 %v1940
  %v2948 = vunpack.c.l.b16 %v1941
  %v2949 = vunpack.c.h.b16 %v1941
  %v2950 = vunpack.c.l.b16 %v1942
  %v2951 = vunpack.c.h.b16 %v1942
  %v2952 = vunpack.c.l.b16 %v1943
  %v2953 = vunpack.c.h.b16 %v1943
  %v2954 = vunpack.c.l.b16 %v1944
  %v2955 = vunpack.c.h.b16 %v1944
  %v2956 = vunpack.c.l.b16 %v1945
  %v2957 = vunpack.c.h.b16 %v1945
  %v2958 = vunpack.c.l.b16 %v1946
  %v2959 = vunpack.c.h.b16 %v1946
  %v2960 = vunpack.c.l.b16 %v1947
  %v2961 = vunpack.c.h.b16 %v1947
  %v2962 = vunpack.c.l.b16 %v1948
  %v2963 = vunpack.c.h.b16 %v1948
  %v2964 = vunpack.c.l.b16 %v1949
  %v2965 = vunpack.c.h.b16 %v1949
  %v2966 = vunpack.c.l.b16 %v1950
  %v2967 = vunpack.c.h.b16 %v1950
  %v2968 = vunpack.c.l.b16 %v1951
  %v2969 = vunpack.c.h.b16 %v1951
  %v2970 = vunpack.c.l.b16 %v1952
  %v2971 = vunpack.c.h.b16 %v1952
  %v2972 = vunpack.c.l.b16 %v1953
  %v2973 = vunpack.c.h.b16 %v1953
  %v2974 = vunpack.c.l.b16 %v1954
  %v2975 = vunpack.c.h.b16 %v1954
  %v2976 = vunpack.c.l.b16 %v1955
  %v2977 = vunpack.c.h.b16 %v1955
  %v2978 = vunpack.c.l.b16 %v1956
  %v2979 = vunpack.c.h.b16 %v1956
  %v2980 = vunpack.c.l.b16 %v1957
  %v2981 = vunpack.c.h.b16 %v1957
  %v2982 = vunpack.c.l.b16 %v1958
  %v2983 = vunpack.c.h.b16 %v1958
  %v2984 = vpack.c.b16 %v2926, %v2924
  %v2985 = vpack.c.b16 %v2927, %v2925
  %v2986 = vpack.c.b16 %v2930, %v2928
  %v2987 = vpack.c.b16 %v2931, %v2929
  %v2988 = vpack.c.b16 %v2934, %v2932
  %v2989 = vpack.c.b16 %v2935, %v2933
  %v2990 = vpack.c.b16 %v2938, %v2936
  %v2991 = vpack.c.b16 %v2939, %v2937
  %v2992 = vpack.c.b16 %v2942, %v2940
  %v2993 = vpack.c.b16 %v2943, %v2941
  %v2994 = vpack.c.b16 %v2946, %v2944
  %v2995 = vpack.c.b16 %v2947, %v2945
  %v2996 = vpack.c.b16 %v2950, %v2948
  %v2997 = vpack.c.b16 %v2951, %v2949
  %v2998 = vpack.c.b16 %v2954, %v2952
  %v2999 = vpack.c.b16 %v2955, %v2953
  %v3000 = vpack.c.b16 %v2958, %v2956
  %v3001 = vpack.c.b16 %v2959, %v2957
  %v3002 = vpack.c.b16 %v2962, %v2960
  %v3003 = vpack.c.b16 %v2963, %v2961
  %v3004 = vpack.c.b16 %v2966, %v2964
  %v3005 = vpack.c.b16 %v2967, %v2965
  %v3006 = vpack.c.b16 %v2970, %v2968
  %v3007 = vpack.c.b16 %v2971, %v2969
  %v3008 = vpack.c.b16 %v2974, %v2972
  %v3009 = vpack.c.b16 %v2975, %v2973
  %v3010 = vpack.c.b16 %v2978, %v2976
  %v3011 = vpack.c.b16 %v2979, %v2977
  %v3012 = vpack.c.b16 %v2982, %v2980
  %v3013 = vpack.c.b16 %v2983, %v2981
  %3044 = vmatpush.bf16.msra.mxu0 %v2998
  %3045 = vmatpush.bf16.msra.mxu0 %v2996
  %3046 = vmatpush.bf16.msra.mxu0 %v2994
  %3047 = vmatpush.bf16.msra.mxu0 %v2992
  %3048 = vmatpush.bf16.msra.mxu0 %v2990
  %3049 = vmatpush.bf16.msra.mxu0 %v2988
  %3050 = vmatpush.bf16.msra.mxu0 %v2986
  %3051 = vmatpush.bf16.msra.mxu0 %v2984
  %3052 = vmatmul.bf16.gmra.mxu0 %v2604
  %v3053 = vpop.f32.mrf.mxu0
  %v3054 = vadd.f32 %v2524, %v3053
  %v3055 = vpop.f32.mrf.mxu0
  %v3056 = vadd.f32 %v2526, %v3055
  %3057 = vmatmul.bf16.gmra.mxu0 %v2606
  %v3058 = vpop.f32.mrf.mxu0
  %v3059 = vadd.f32 %v2529, %v3058
  %v3060 = vpop.f32.mrf.mxu0
  %v3061 = vadd.f32 %v2531, %v3060
  %3062 = vmatmul.bf16.gmra.mxu0 %v2608
  %v3063 = vpop.f32.mrf.mxu0
  %v3064 = vadd.f32 %v2534, %v3063
  %v3065 = vpop.f32.mrf.mxu0
  %v3066 = vadd.f32 %v2536, %v3065
  %3067 = vmatmul.bf16.gmra.mxu0 %v2610
  %v3068 = vpop.f32.mrf.mxu0
  %v3069 = vadd.f32 %v2539, %v3068
  %v3070 = vpop.f32.mrf.mxu0
  %v3071 = vadd.f32 %v2541, %v3070
  %3072 = vdwg.mxu0
  %3073 = vmatpush.bf16.msra.mxu0 0
  %3074 = vmatpush.bf16.msra.mxu0 %v3012
  %3075 = vmatpush.bf16.msra.mxu0 %v3010
  %3076 = vmatpush.bf16.msra.mxu0 %v3008
  %3077 = vmatpush.bf16.msra.mxu0 %v3006
  %3078 = vmatpush.bf16.msra.mxu0 %v3004
  %3079 = vmatpush.bf16.msra.mxu0 %v3002
  %3080 = vmatpush.bf16.msra.mxu0 %v3000
  %3081 = vmatmul.bf16.gmra.mxu0 %v2767
  %v3082 = vpop.f32.mrf.mxu0
  %v3083 = vadd.f32 %v3054, %v3082
  %v3084 = vpop.f32.mrf.mxu0
  %v3085 = vadd.f32 %v3056, %v3084
  %3086 = vmatmul.bf16.gmra.mxu0 %v2770
  %v3087 = vpop.f32.mrf.mxu0
  %v3088 = vadd.f32 %v3059, %v3087
  %v3089 = vpop.f32.mrf.mxu0
  %v3090 = vadd.f32 %v3061, %v3089
  %3091 = vmatmul.bf16.gmra.mxu0 %v2773
  %v3092 = vpop.f32.mrf.mxu0
  %v3093 = vadd.f32 %v3064, %v3092
  %v3094 = vpop.f32.mrf.mxu0
  %v3095 = vadd.f32 %v3066, %v3094
  %3096 = vmatmul.bf16.gmra.mxu0 %v2776
  %v3097 = vpop.f32.mrf.mxu0
  %v3098 = vadd.f32 %v3069, %v3097
  %v3099 = vpop.f32.mrf.mxu0
  %v3100 = vadd.f32 %v3071, %v3099
  %3101 = vdwg.mxu0
  %3102 = vmatpush.bf16.msra.mxu0 %v2999
  %3103 = vmatpush.bf16.msra.mxu0 %v2997
  %3104 = vmatpush.bf16.msra.mxu0 %v2995
  %3105 = vmatpush.bf16.msra.mxu0 %v2993
  %3106 = vmatpush.bf16.msra.mxu0 %v2991
  %3107 = vmatpush.bf16.msra.mxu0 %v2989
  %3108 = vmatpush.bf16.msra.mxu0 %v2987
  %3109 = vmatpush.bf16.msra.mxu0 %v2985
  %3110 = vmatmul.bf16.gmra.mxu0 %v2604
  %v3111 = vpop.f32.mrf.mxu0
  %v3112 = vadd.f32 %v2582, %v3111
  %v3113 = vpop.f32.mrf.mxu0
  %v3114 = vadd.f32 %v2584, %v3113
  %3115 = vmatmul.bf16.gmra.mxu0 %v2606
  %v3116 = vpop.f32.mrf.mxu0
  %v3117 = vadd.f32 %v2587, %v3116
  %v3118 = vpop.f32.mrf.mxu0
  %v3119 = vadd.f32 %v2589, %v3118
  %3120 = vmatmul.bf16.gmra.mxu0 %v2608
  %v3121 = vpop.f32.mrf.mxu0
  %v3122 = vadd.f32 %v2592, %v3121
  %v3123 = vpop.f32.mrf.mxu0
  %v3124 = vadd.f32 %v2594, %v3123
  %3125 = vmatmul.bf16.gmra.mxu0 %v2610
  %v3126 = vpop.f32.mrf.mxu0
  %v3127 = vadd.f32 %v2597, %v3126
  %v3128 = vpop.f32.mrf.mxu0
  %v3129 = vadd.f32 %v2599, %v3128
  %3130 = vdwg.mxu0
  %3131 = vmatpush.bf16.msra.mxu0 0
  %3132 = vmatpush.bf16.msra.mxu0 %v3013
  %3133 = vmatpush.bf16.msra.mxu0 %v3011
  %3134 = vmatpush.bf16.msra.mxu0 %v3009
  %3135 = vmatpush.bf16.msra.mxu0 %v3007
  %3136 = vmatpush.bf16.msra.mxu0 %v3005
  %3137 = vmatpush.bf16.msra.mxu0 %v3003
  %3138 = vmatpush.bf16.msra.mxu0 %v3001
  %3139 = vmatmul.bf16.gmra.mxu0 %v2767
  %v3140 = vpop.f32.mrf.mxu0
  %v3141 = vadd.f32 %v3112, %v3140
  %v3142 = vpop.f32.mrf.mxu0
  %v3143 = vadd.f32 %v3114, %v3142
  %3144 = vmatmul.bf16.gmra.mxu0 %v2770
  %v3145 = vpop.f32.mrf.mxu0
  %v3146 = vadd.f32 %v3117, %v3145
  %v3147 = vpop.f32.mrf.mxu0
  %v3148 = vadd.f32 %v3119, %v3147
  %3149 = vmatmul.bf16.gmra.mxu0 %v2773
  %v3150 = vpop.f32.mrf.mxu0
  %v3151 = vadd.f32 %v3122, %v3150
  %v3152 = vpop.f32.mrf.mxu0
  %v3153 = vadd.f32 %v3124, %v3152
  %3154 = vmatmul.bf16.gmra.mxu0 %v2776
  %v3155 = vpop.f32.mrf.mxu0
  %v3156 = vadd.f32 %v3127, %v3155
  %v3157 = vpop.f32.mrf.mxu0
  %v3158 = vadd.f32 %v3129, %v3157
  %3159 = vdwg.mxu0
  %s3160 = scalar_lea.vmem %s3, 480
  %v3161 = vld [vmem:[%s3160] sm:$0xff]
  %v3162 = vld [vmem:[%s3160 + $0x8] sm:$0xff]
  %v3163 = vld [vmem:[%s3160 + $0x10] sm:$0xff]
  %v3164 = vld [vmem:[%s3160 + $0x18] sm:$0xff]
  %v3165 = vld [vmem:[%s3160 + $0x20] sm:$0xff]
  %v3166 = vld [vmem:[%s3160 + $0x28] sm:$0xff]
  %v3167 = vld [vmem:[%s3160 + $0x30] sm:$0xff]
  %v3168 = vld [vmem:[%s3160 + $0x38] sm:$0xff]
  %v3169 = vld [vmem:[%s3160 + $0x40] sm:$0xff]
  %v3170 = vld [vmem:[%s3160 + $0x48] sm:$0xff]
  %v3171 = vld [vmem:[%s3160 + $0x50] sm:$0xff]
  %v3172 = vld [vmem:[%s3160 + $0x58] sm:$0xff]
  %v3173 = vld [vmem:[%s3160 + $0x60] sm:$0xff]
  %v3174 = vld [vmem:[%s3160 + $0x68] sm:$0xff]
  %v3175 = vld [vmem:[%s3160 + $0x70] sm:$0xff]
  %v3176 = vld [vmem:[%s3160 + $0x78] sm:$0xff]
  %v3177 = vld [vmem:[%s3160 + $0x80] sm:$0xff]
  %v3178 = vld [vmem:[%s3160 + $0x88] sm:$0xff]
  %v3179 = vld [vmem:[%s3160 + $0x90] sm:$0xff]
  %v3180 = vld [vmem:[%s3160 + $0x98] sm:$0xff]
  %v3181 = vld [vmem:[%s3160 + $0xa0] sm:$0xff]
  %v3182 = vld [vmem:[%s3160 + $0xa8] sm:$0xff]
  %v3183 = vld [vmem:[%s3160 + $0xb0] sm:$0xff]
  %v3184 = vld [vmem:[%s3160 + $0xb8] sm:$0xff]
  %v3185 = vld [vmem:[%s3160 + $0xc0] sm:$0xff]
  %v3186 = vld [vmem:[%s3160 + $0xc8] sm:$0xff]
  %v3187 = vld [vmem:[%s3160 + $0xd0] sm:$0xff]
  %v3188 = vld [vmem:[%s3160 + $0xd8] sm:$0xff]
  %v3189 = vld [vmem:[%s3160 + $0xe0] sm:$0xff]
  %v3190 = vld [vmem:[%s3160 + $0xe8] sm:$0xff]
  %v3192 = vunpack.c.l.b16 %v1895
  %v3193 = vunpack.c.h.b16 %v1895
  %v3194 = vpack.c.b16 %v3192, %v2012
  %v3195 = vpack.c.b16 %v3193, %v2013
  %v3227 = vunpack.c.l.b16 %v3161
  %v3228 = vunpack.c.h.b16 %v3161
  %v3229 = vunpack.c.l.b16 %v3162
  %v3230 = vunpack.c.h.b16 %v3162
  %v3231 = vunpack.c.l.b16 %v3163
  %v3232 = vunpack.c.h.b16 %v3163
  %v3233 = vunpack.c.l.b16 %v3164
  %v3234 = vunpack.c.h.b16 %v3164
  %v3235 = vunpack.c.l.b16 %v3165
  %v3236 = vunpack.c.h.b16 %v3165
  %v3237 = vunpack.c.l.b16 %v3166
  %v3238 = vunpack.c.h.b16 %v3166
  %v3239 = vunpack.c.l.b16 %v3167
  %v3240 = vunpack.c.h.b16 %v3167
  %v3241 = vunpack.c.l.b16 %v3168
  %v3242 = vunpack.c.h.b16 %v3168
  %v3243 = vunpack.c.l.b16 %v3169
  %v3244 = vunpack.c.h.b16 %v3169
  %v3245 = vunpack.c.l.b16 %v3170
  %v3246 = vunpack.c.h.b16 %v3170
  %v3247 = vunpack.c.l.b16 %v3171
  %v3248 = vunpack.c.h.b16 %v3171
  %v3249 = vunpack.c.l.b16 %v3172
  %v3250 = vunpack.c.h.b16 %v3172
  %v3251 = vunpack.c.l.b16 %v3173
  %v3252 = vunpack.c.h.b16 %v3173
  %v3253 = vunpack.c.l.b16 %v3174
  %v3254 = vunpack.c.h.b16 %v3174
  %v3255 = vunpack.c.l.b16 %v3175
  %v3256 = vunpack.c.h.b16 %v3175
  %v3257 = vunpack.c.l.b16 %v3176
  %v3258 = vunpack.c.h.b16 %v3176
  %v3259 = vunpack.c.l.b16 %v3177
  %v3260 = vunpack.c.h.b16 %v3177
  %v3261 = vunpack.c.l.b16 %v3178
  %v3262 = vunpack.c.h.b16 %v3178
  %v3263 = vunpack.c.l.b16 %v3179
  %v3264 = vunpack.c.h.b16 %v3179
  %v3265 = vunpack.c.l.b16 %v3180
  %v3266 = vunpack.c.h.b16 %v3180
  %v3267 = vunpack.c.l.b16 %v3181
  %v3268 = vunpack.c.h.b16 %v3181
  %v3269 = vunpack.c.l.b16 %v3182
  %v3270 = vunpack.c.h.b16 %v3182
  %v3271 = vunpack.c.l.b16 %v3183
  %v3272 = vunpack.c.h.b16 %v3183
  %v3273 = vunpack.c.l.b16 %v3184
  %v3274 = vunpack.c.h.b16 %v3184
  %v3275 = vunpack.c.l.b16 %v3185
  %v3276 = vunpack.c.h.b16 %v3185
  %v3277 = vunpack.c.l.b16 %v3186
  %v3278 = vunpack.c.h.b16 %v3186
  %v3279 = vunpack.c.l.b16 %v3187
  %v3280 = vunpack.c.h.b16 %v3187
  %v3281 = vunpack.c.l.b16 %v3188
  %v3282 = vunpack.c.h.b16 %v3188
  %v3283 = vunpack.c.l.b16 %v3189
  %v3284 = vunpack.c.h.b16 %v3189
  %v3285 = vunpack.c.l.b16 %v3190
  %v3286 = vunpack.c.h.b16 %v3190
  %v3287 = vpack.c.b16 %v3229, %v3227
  %v3288 = vpack.c.b16 %v3230, %v3228
  %v3289 = vpack.c.b16 %v3233, %v3231
  %v3290 = vpack.c.b16 %v3234, %v3232
  %v3291 = vpack.c.b16 %v3237, %v3235
  %v3292 = vpack.c.b16 %v3238, %v3236
  %v3293 = vpack.c.b16 %v3241, %v3239
  %v3294 = vpack.c.b16 %v3242, %v3240
  %v3295 = vpack.c.b16 %v3245, %v3243
  %v3296 = vpack.c.b16 %v3246, %v3244
  %v3297 = vpack.c.b16 %v3249, %v3247
  %v3298 = vpack.c.b16 %v3250, %v3248
  %v3299 = vpack.c.b16 %v3253, %v3251
  %v3300 = vpack.c.b16 %v3254, %v3252
  %v3301 = vpack.c.b16 %v3257, %v3255
  %v3302 = vpack.c.b16 %v3258, %v3256
  %v3303 = vpack.c.b16 %v3261, %v3259
  %v3304 = vpack.c.b16 %v3262, %v3260
  %v3305 = vpack.c.b16 %v3265, %v3263
  %v3306 = vpack.c.b16 %v3266, %v3264
  %v3307 = vpack.c.b16 %v3269, %v3267
  %v3308 = vpack.c.b16 %v3270, %v3268
  %v3309 = vpack.c.b16 %v3273, %v3271
  %v3310 = vpack.c.b16 %v3274, %v3272
  %v3311 = vpack.c.b16 %v3277, %v3275
  %v3312 = vpack.c.b16 %v3278, %v3276
  %v3313 = vpack.c.b16 %v3281, %v3279
  %v3314 = vpack.c.b16 %v3282, %v3280
  %v3315 = vpack.c.b16 %v3285, %v3283
  %v3316 = vpack.c.b16 %v3286, %v3284
  %v3348 = vsel %vm848, %v3195, 0
  %3350 = vmatpush.bf16.msra.mxu0 %v3301
  %3351 = vmatpush.bf16.msra.mxu0 %v3299
  %3352 = vmatpush.bf16.msra.mxu0 %v3297
  %3353 = vmatpush.bf16.msra.mxu0 %v3295
  %3354 = vmatpush.bf16.msra.mxu0 %v3293
  %3355 = vmatpush.bf16.msra.mxu0 %v3291
  %3356 = vmatpush.bf16.msra.mxu0 %v3289
  %3357 = vmatpush.bf16.msra.mxu0 %v3287
  %3358 = vmatmul.bf16.gmra.mxu0 %v2606
  %v3359 = vpop.f32.mrf.mxu0
  %v3360 = vadd.f32 0.0, %v3359
  %v3361 = vpop.f32.mrf.mxu0
  %v3362 = vadd.f32 0.0, %v3361
  %3363 = vmatmul.bf16.gmra.mxu0 %v2608
  %v3364 = vpop.f32.mrf.mxu0
  %v3365 = vadd.f32 0.0, %v3364
  %v3366 = vpop.f32.mrf.mxu0
  %v3367 = vadd.f32 0.0, %v3366
  %3368 = vmatmul.bf16.gmra.mxu0 %v2610
  %v3369 = vpop.f32.mrf.mxu0
  %v3370 = vadd.f32 0.0, %v3369
  %v3371 = vpop.f32.mrf.mxu0
  %v3372 = vadd.f32 0.0, %v3371
  %3373 = vmatmul.bf16.gmra.mxu0 %v3194
  %v3374 = vpop.f32.mrf.mxu0
  %v3375 = vadd.f32 0.0, %v3374
  %v3376 = vpop.f32.mrf.mxu0
  %v3377 = vadd.f32 0.0, %v3376
  %3378 = vdwg.mxu0
  %3379 = vmatpush.bf16.msra.mxu0 0
  %3380 = vmatpush.bf16.msra.mxu0 %v3315
  %3381 = vmatpush.bf16.msra.mxu0 %v3313
  %3382 = vmatpush.bf16.msra.mxu0 %v3311
  %3383 = vmatpush.bf16.msra.mxu0 %v3309
  %3384 = vmatpush.bf16.msra.mxu0 %v3307
  %3385 = vmatpush.bf16.msra.mxu0 %v3305
  %3386 = vmatpush.bf16.msra.mxu0 %v3303
  %3387 = vmatmul.bf16.gmra.mxu0 %v2770
  %v3388 = vpop.f32.mrf.mxu0
  %v3389 = vadd.f32 %v3360, %v3388
  %v3390 = vpop.f32.mrf.mxu0
  %v3391 = vadd.f32 %v3362, %v3390
  %3392 = vmatmul.bf16.gmra.mxu0 %v2773
  %v3393 = vpop.f32.mrf.mxu0
  %v3394 = vadd.f32 %v3365, %v3393
  %v3395 = vpop.f32.mrf.mxu0
  %v3396 = vadd.f32 %v3367, %v3395
  %3397 = vmatmul.bf16.gmra.mxu0 %v2776
  %v3398 = vpop.f32.mrf.mxu0
  %v3399 = vadd.f32 %v3370, %v3398
  %v3400 = vpop.f32.mrf.mxu0
  %v3401 = vadd.f32 %v3372, %v3400
  %3402 = vmatmul.bf16.gmra.mxu0 %v3348
  %v3403 = vpop.f32.mrf.mxu0
  %v3404 = vadd.f32 %v3375, %v3403
  %v3405 = vpop.f32.mrf.mxu0
  %v3406 = vadd.f32 %v3377, %v3405
  %3407 = vdwg.mxu0
  %3408 = vmatpush.bf16.msra.mxu0 %v3302
  %3409 = vmatpush.bf16.msra.mxu0 %v3300
  %3410 = vmatpush.bf16.msra.mxu0 %v3298
  %3411 = vmatpush.bf16.msra.mxu0 %v3296
  %3412 = vmatpush.bf16.msra.mxu0 %v3294
  %3413 = vmatpush.bf16.msra.mxu0 %v3292
  %3414 = vmatpush.bf16.msra.mxu0 %v3290
  %3415 = vmatpush.bf16.msra.mxu0 %v3288
  %3416 = vmatmul.bf16.gmra.mxu0 %v2606
  %v3417 = vpop.f32.mrf.mxu0
  %v3418 = vadd.f32 0.0, %v3417
  %v3419 = vpop.f32.mrf.mxu0
  %v3420 = vadd.f32 0.0, %v3419
  %3421 = vmatmul.bf16.gmra.mxu0 %v2608
  %v3422 = vpop.f32.mrf.mxu0
  %v3423 = vadd.f32 0.0, %v3422
  %v3424 = vpop.f32.mrf.mxu0
  %v3425 = vadd.f32 0.0, %v3424
  %3426 = vmatmul.bf16.gmra.mxu0 %v2610
  %v3427 = vpop.f32.mrf.mxu0
  %v3428 = vadd.f32 0.0, %v3427
  %v3429 = vpop.f32.mrf.mxu0
  %v3430 = vadd.f32 0.0, %v3429
  %3431 = vmatmul.bf16.gmra.mxu0 %v3194
  %v3432 = vpop.f32.mrf.mxu0
  %v3433 = vadd.f32 0.0, %v3432
  %v3434 = vpop.f32.mrf.mxu0
  %v3435 = vadd.f32 0.0, %v3434
  %3436 = vdwg.mxu0
  %3437 = vmatpush.bf16.msra.mxu0 0
  %3438 = vmatpush.bf16.msra.mxu0 %v3316
  %3439 = vmatpush.bf16.msra.mxu0 %v3314
  %3440 = vmatpush.bf16.msra.mxu0 %v3312
  %3441 = vmatpush.bf16.msra.mxu0 %v3310
  %3442 = vmatpush.bf16.msra.mxu0 %v3308
  %3443 = vmatpush.bf16.msra.mxu0 %v3306
  %3444 = vmatpush.bf16.msra.mxu0 %v3304
  %3445 = vmatmul.bf16.gmra.mxu0 %v2770
  %v3446 = vpop.f32.mrf.mxu0
  %v3447 = vadd.f32 %v3418, %v3446
  %v3448 = vpop.f32.mrf.mxu0
  %v3449 = vadd.f32 %v3420, %v3448
  %3450 = vmatmul.bf16.gmra.mxu0 %v2773
  %v3451 = vpop.f32.mrf.mxu0
  %v3452 = vadd.f32 %v3423, %v3451
  %v3453 = vpop.f32.mrf.mxu0
  %v3454 = vadd.f32 %v3425, %v3453
  %3455 = vmatmul.bf16.gmra.mxu0 %v2776
  %v3456 = vpop.f32.mrf.mxu0
  %v3457 = vadd.f32 %v3428, %v3456
  %v3458 = vpop.f32.mrf.mxu0
  %v3459 = vadd.f32 %v3430, %v3458
  %3460 = vmatmul.bf16.gmra.mxu0 %v3348
  %v3461 = vpop.f32.mrf.mxu0
  %v3462 = vadd.f32 %v3433, %v3461
  %v3463 = vpop.f32.mrf.mxu0
  %v3464 = vadd.f32 %v3435, %v3463
  %3465 = vdwg.mxu0
  %s3466 = scalar_lea.vmem %s3, 1680
  %v3467 = vld [vmem:[%s3466] sm:$0xff]
  %v3468 = vld [vmem:[%s3466 + $0x8] sm:$0xff]
  %v3469 = vld [vmem:[%s3466 + $0x10] sm:$0xff]
  %v3470 = vld [vmem:[%s3466 + $0x18] sm:$0xff]
  %v3471 = vld [vmem:[%s3466 + $0x20] sm:$0xff]
  %v3472 = vld [vmem:[%s3466 + $0x28] sm:$0xff]
  %v3473 = vld [vmem:[%s3466 + $0x30] sm:$0xff]
  %v3474 = vld [vmem:[%s3466 + $0x38] sm:$0xff]
  %v3475 = vld [vmem:[%s3466 + $0x40] sm:$0xff]
  %v3476 = vld [vmem:[%s3466 + $0x48] sm:$0xff]
  %v3477 = vld [vmem:[%s3466 + $0x50] sm:$0xff]
  %v3478 = vld [vmem:[%s3466 + $0x58] sm:$0xff]
  %v3479 = vld [vmem:[%s3466 + $0x60] sm:$0xff]
  %v3480 = vld [vmem:[%s3466 + $0x68] sm:$0xff]
  %v3481 = vld [vmem:[%s3466 + $0x70] sm:$0xff]
  %v3482 = vld [vmem:[%s3466 + $0x78] sm:$0xff]
  %v3483 = vld [vmem:[%s3466 + $0x80] sm:$0xff]
  %v3484 = vld [vmem:[%s3466 + $0x88] sm:$0xff]
  %v3485 = vld [vmem:[%s3466 + $0x90] sm:$0xff]
  %v3486 = vld [vmem:[%s3466 + $0x98] sm:$0xff]
  %v3487 = vld [vmem:[%s3466 + $0xa0] sm:$0xff]
  %v3488 = vld [vmem:[%s3466 + $0xa8] sm:$0xff]
  %v3489 = vld [vmem:[%s3466 + $0xb0] sm:$0xff]
  %v3490 = vld [vmem:[%s3466 + $0xb8] sm:$0xff]
  %v3491 = vld [vmem:[%s3466 + $0xc0] sm:$0xff]
  %v3492 = vld [vmem:[%s3466 + $0xc8] sm:$0xff]
  %v3493 = vld [vmem:[%s3466 + $0xd0] sm:$0xff]
  %v3494 = vld [vmem:[%s3466 + $0xd8] sm:$0xff]
  %v3495 = vld [vmem:[%s3466 + $0xe0] sm:$0xff]
  %v3496 = vld [vmem:[%s3466 + $0xe8] sm:$0xff]
  %v3527 = vunpack.c.l.b16 %v3467
  %v3528 = vunpack.c.h.b16 %v3467
  %v3529 = vunpack.c.l.b16 %v3468
  %v3530 = vunpack.c.h.b16 %v3468
  %v3531 = vunpack.c.l.b16 %v3469
  %v3532 = vunpack.c.h.b16 %v3469
  %v3533 = vunpack.c.l.b16 %v3470
  %v3534 = vunpack.c.h.b16 %v3470
  %v3535 = vunpack.c.l.b16 %v3471
  %v3536 = vunpack.c.h.b16 %v3471
  %v3537 = vunpack.c.l.b16 %v3472
  %v3538 = vunpack.c.h.b16 %v3472
  %v3539 = vunpack.c.l.b16 %v3473
  %v3540 = vunpack.c.h.b16 %v3473
  %v3541 = vunpack.c.l.b16 %v3474
  %v3542 = vunpack.c.h.b16 %v3474
  %v3543 = vunpack.c.l.b16 %v3475
  %v3544 = vunpack.c.h.b16 %v3475
  %v3545 = vunpack.c.l.b16 %v3476
  %v3546 = vunpack.c.h.b16 %v3476
  %v3547 = vunpack.c.l.b16 %v3477
  %v3548 = vunpack.c.h.b16 %v3477
  %v3549 = vunpack.c.l.b16 %v3478
  %v3550 = vunpack.c.h.b16 %v3478
  %v3551 = vunpack.c.l.b16 %v3479
  %v3552 = vunpack.c.h.b16 %v3479
  %v3553 = vunpack.c.l.b16 %v3480
  %v3554 = vunpack.c.h.b16 %v3480
  %v3555 = vunpack.c.l.b16 %v3481
  %v3556 = vunpack.c.h.b16 %v3481
  %v3557 = vunpack.c.l.b16 %v3482
  %v3558 = vunpack.c.h.b16 %v3482
  %v3559 = vunpack.c.l.b16 %v3483
  %v3560 = vunpack.c.h.b16 %v3483
  %v3561 = vunpack.c.l.b16 %v3484
  %v3562 = vunpack.c.h.b16 %v3484
  %v3563 = vunpack.c.l.b16 %v3485
  %v3564 = vunpack.c.h.b16 %v3485
  %v3565 = vunpack.c.l.b16 %v3486
  %v3566 = vunpack.c.h.b16 %v3486
  %v3567 = vunpack.c.l.b16 %v3487
  %v3568 = vunpack.c.h.b16 %v3487
  %v3569 = vunpack.c.l.b16 %v3488
  %v3570 = vunpack.c.h.b16 %v3488
  %v3571 = vunpack.c.l.b16 %v3489
  %v3572 = vunpack.c.h.b16 %v3489
  %v3573 = vunpack.c.l.b16 %v3490
  %v3574 = vunpack.c.h.b16 %v3490
  %v3575 = vunpack.c.l.b16 %v3491
  %v3576 = vunpack.c.h.b16 %v3491
  %v3577 = vunpack.c.l.b16 %v3492
  %v3578 = vunpack.c.h.b16 %v3492
  %v3579 = vunpack.c.l.b16 %v3493
  %v3580 = vunpack.c.h.b16 %v3493
  %v3581 = vunpack.c.l.b16 %v3494
  %v3582 = vunpack.c.h.b16 %v3494
  %v3583 = vunpack.c.l.b16 %v3495
  %v3584 = vunpack.c.h.b16 %v3495
  %v3585 = vunpack.c.l.b16 %v3496
  %v3586 = vunpack.c.h.b16 %v3496
  %v3587 = vpack.c.b16 %v3529, %v3527
  %v3588 = vpack.c.b16 %v3530, %v3528
  %v3589 = vpack.c.b16 %v3533, %v3531
  %v3590 = vpack.c.b16 %v3534, %v3532
  %v3591 = vpack.c.b16 %v3537, %v3535
  %v3592 = vpack.c.b16 %v3538, %v3536
  %v3593 = vpack.c.b16 %v3541, %v3539
  %v3594 = vpack.c.b16 %v3542, %v3540
  %v3595 = vpack.c.b16 %v3545, %v3543
  %v3596 = vpack.c.b16 %v3546, %v3544
  %v3597 = vpack.c.b16 %v3549, %v3547
  %v3598 = vpack.c.b16 %v3550, %v3548
  %v3599 = vpack.c.b16 %v3553, %v3551
  %v3600 = vpack.c.b16 %v3554, %v3552
  %v3601 = vpack.c.b16 %v3557, %v3555
  %v3602 = vpack.c.b16 %v3558, %v3556
  %v3603 = vpack.c.b16 %v3561, %v3559
  %v3604 = vpack.c.b16 %v3562, %v3560
  %v3605 = vpack.c.b16 %v3565, %v3563
  %v3606 = vpack.c.b16 %v3566, %v3564
  %v3607 = vpack.c.b16 %v3569, %v3567
  %v3608 = vpack.c.b16 %v3570, %v3568
  %v3609 = vpack.c.b16 %v3573, %v3571
  %v3610 = vpack.c.b16 %v3574, %v3572
  %v3611 = vpack.c.b16 %v3577, %v3575
  %v3612 = vpack.c.b16 %v3578, %v3576
  %v3613 = vpack.c.b16 %v3581, %v3579
  %v3614 = vpack.c.b16 %v3582, %v3580
  %v3615 = vpack.c.b16 %v3585, %v3583
  %v3616 = vpack.c.b16 %v3586, %v3584
  %3647 = vmatpush.bf16.msra.mxu0 %v3601
  %3648 = vmatpush.bf16.msra.mxu0 %v3599
  %3649 = vmatpush.bf16.msra.mxu0 %v3597
  %3650 = vmatpush.bf16.msra.mxu0 %v3595
  %3651 = vmatpush.bf16.msra.mxu0 %v3593
  %3652 = vmatpush.bf16.msra.mxu0 %v3591
  %3653 = vmatpush.bf16.msra.mxu0 %v3589
  %3654 = vmatpush.bf16.msra.mxu0 %v3587
  %3655 = vmatmul.bf16.gmra.mxu0 %v2606
  %v3656 = vpop.f32.mrf.mxu0
  %v3657 = vadd.f32 0.0, %v3656
  %v3658 = vpop.f32.mrf.mxu0
  %v3659 = vadd.f32 0.0, %v3658
  %3660 = vmatmul.bf16.gmra.mxu0 %v2608
  %v3661 = vpop.f32.mrf.mxu0
  %v3662 = vadd.f32 0.0, %v3661
  %v3663 = vpop.f32.mrf.mxu0
  %v3664 = vadd.f32 0.0, %v3663
  %3665 = vmatmul.bf16.gmra.mxu0 %v2610
  %v3666 = vpop.f32.mrf.mxu0
  %v3667 = vadd.f32 0.0, %v3666
  %v3668 = vpop.f32.mrf.mxu0
  %v3669 = vadd.f32 0.0, %v3668
  %3670 = vmatmul.bf16.gmra.mxu0 %v3194
  %v3671 = vpop.f32.mrf.mxu0
  %v3672 = vadd.f32 0.0, %v3671
  %v3673 = vpop.f32.mrf.mxu0
  %v3674 = vadd.f32 0.0, %v3673
  %3675 = vdwg.mxu0
  %3676 = vmatpush.bf16.msra.mxu0 0
  %3677 = vmatpush.bf16.msra.mxu0 %v3615
  %3678 = vmatpush.bf16.msra.mxu0 %v3613
  %3679 = vmatpush.bf16.msra.mxu0 %v3611
  %3680 = vmatpush.bf16.msra.mxu0 %v3609
  %3681 = vmatpush.bf16.msra.mxu0 %v3607
  %3682 = vmatpush.bf16.msra.mxu0 %v3605
  %3683 = vmatpush.bf16.msra.mxu0 %v3603
  %3684 = vmatmul.bf16.gmra.mxu0 %v2770
  %v3685 = vpop.f32.mrf.mxu0
  %v3686 = vadd.f32 %v3657, %v3685
  %v3687 = vpop.f32.mrf.mxu0
  %v3688 = vadd.f32 %v3659, %v3687
  %3689 = vmatmul.bf16.gmra.mxu0 %v2773
  %v3690 = vpop.f32.mrf.mxu0
  %v3691 = vadd.f32 %v3662, %v3690
  %v3692 = vpop.f32.mrf.mxu0
  %v3693 = vadd.f32 %v3664, %v3692
  %3694 = vmatmul.bf16.gmra.mxu0 %v2776
  %v3695 = vpop.f32.mrf.mxu0
  %v3696 = vadd.f32 %v3667, %v3695
  %v3697 = vpop.f32.mrf.mxu0
  %v3698 = vadd.f32 %v3669, %v3697
  %3699 = vmatmul.bf16.gmra.mxu0 %v3348
  %v3700 = vpop.f32.mrf.mxu0
  %v3701 = vadd.f32 %v3672, %v3700
  %v3702 = vpop.f32.mrf.mxu0
  %v3703 = vadd.f32 %v3674, %v3702
  %3704 = vdwg.mxu0
  %3705 = vmatpush.bf16.msra.mxu0 %v3602
  %3706 = vmatpush.bf16.msra.mxu0 %v3600
  %3707 = vmatpush.bf16.msra.mxu0 %v3598
  %3708 = vmatpush.bf16.msra.mxu0 %v3596
  %3709 = vmatpush.bf16.msra.mxu0 %v3594
  %3710 = vmatpush.bf16.msra.mxu0 %v3592
  %3711 = vmatpush.bf16.msra.mxu0 %v3590
  %3712 = vmatpush.bf16.msra.mxu0 %v3588
  %3713 = vmatmul.bf16.gmra.mxu0 %v2606
  %v3714 = vpop.f32.mrf.mxu0
  %v3715 = vadd.f32 0.0, %v3714
  %v3716 = vpop.f32.mrf.mxu0
  %v3717 = vadd.f32 0.0, %v3716
  %3718 = vmatmul.bf16.gmra.mxu0 %v2608
  %v3719 = vpop.f32.mrf.mxu0
  %v3720 = vadd.f32 0.0, %v3719
  %v3721 = vpop.f32.mrf.mxu0
  %v3722 = vadd.f32 0.0, %v3721
  %3723 = vmatmul.bf16.gmra.mxu0 %v2610
  %v3724 = vpop.f32.mrf.mxu0
  %v3725 = vadd.f32 0.0, %v3724
  %v3726 = vpop.f32.mrf.mxu0
  %v3727 = vadd.f32 0.0, %v3726
  %3728 = vmatmul.bf16.gmra.mxu0 %v3194
  %v3729 = vpop.f32.mrf.mxu0
  %v3730 = vadd.f32 0.0, %v3729
  %v3731 = vpop.f32.mrf.mxu0
  %v3732 = vadd.f32 0.0, %v3731
  %3733 = vdwg.mxu0
  %3734 = vmatpush.bf16.msra.mxu0 0
  %3735 = vmatpush.bf16.msra.mxu0 %v3616
  %3736 = vmatpush.bf16.msra.mxu0 %v3614
  %3737 = vmatpush.bf16.msra.mxu0 %v3612
  %3738 = vmatpush.bf16.msra.mxu0 %v3610
  %3739 = vmatpush.bf16.msra.mxu0 %v3608
  %3740 = vmatpush.bf16.msra.mxu0 %v3606
  %3741 = vmatpush.bf16.msra.mxu0 %v3604
  %3742 = vmatmul.bf16.gmra.mxu0 %v2770
  %v3743 = vpop.f32.mrf.mxu0
  %v3744 = vadd.f32 %v3715, %v3743
  %v3745 = vpop.f32.mrf.mxu0
  %v3746 = vadd.f32 %v3717, %v3745
  %3747 = vmatmul.bf16.gmra.mxu0 %v2773
  %v3748 = vpop.f32.mrf.mxu0
  %v3749 = vadd.f32 %v3720, %v3748
  %v3750 = vpop.f32.mrf.mxu0
  %v3751 = vadd.f32 %v3722, %v3750
  %3752 = vmatmul.bf16.gmra.mxu0 %v2776
  %v3753 = vpop.f32.mrf.mxu0
  %v3754 = vadd.f32 %v3725, %v3753
  %v3755 = vpop.f32.mrf.mxu0
  %v3756 = vadd.f32 %v3727, %v3755
  %3757 = vmatmul.bf16.gmra.mxu0 %v3348
  %v3758 = vpop.f32.mrf.mxu0
  %v3759 = vadd.f32 %v3730, %v3758
  %v3760 = vpop.f32.mrf.mxu0
  %v3761 = vadd.f32 %v3732, %v3760
  %3762 = vdwg.mxu0
  %v3763 = vadd.f32 %v2817, %v3389
  %v3764 = vadd.f32 %v2875, %v3447
  %v3765 = vadd.f32 %v2819, %v3391
  %v3766 = vadd.f32 %v2877, %v3449
  %v3767 = vadd.f32 %v2822, %v3394
  %v3768 = vadd.f32 %v2880, %v3452
  %v3769 = vadd.f32 %v2824, %v3396
  %v3770 = vadd.f32 %v2882, %v3454
  %v3771 = vadd.f32 %v2827, %v3399
  %v3772 = vadd.f32 %v2885, %v3457
  %v3773 = vadd.f32 %v2829, %v3401
  %v3774 = vadd.f32 %v2887, %v3459
  %v3775 = vadd.f32 %v2832, %v3404
  %v3776 = vadd.f32 %v2890, %v3462
  %v3777 = vadd.f32 %v2834, %v3406
  %v3778 = vadd.f32 %v2892, %v3464
  %v3779 = vadd.f32 %v3083, %v3686
  %v3780 = vadd.f32 %v3141, %v3744
  %v3781 = vadd.f32 %v3085, %v3688
  %v3782 = vadd.f32 %v3143, %v3746
  %v3783 = vadd.f32 %v3088, %v3691
  %v3784 = vadd.f32 %v3146, %v3749
  %v3785 = vadd.f32 %v3090, %v3693
  %v3786 = vadd.f32 %v3148, %v3751
  %v3787 = vadd.f32 %v3093, %v3696
  %v3788 = vadd.f32 %v3151, %v3754
  %v3789 = vadd.f32 %v3095, %v3698
  %v3790 = vadd.f32 %v3153, %v3756
  %v3791 = vadd.f32 %v3098, %v3701
  %v3792 = vadd.f32 %v3156, %v3759
  %v3793 = vadd.f32 %v3100, %v3703
  %v3794 = vadd.f32 %v3158, %v3761
  %s3795 = scalar_lea.vmem %s3, 720
  %v3796 = vld [vmem:[%s3795] sm:$0xff]
  %v3797 = vld [vmem:[%s3795 + $0x8] sm:$0xff]
  %v3798 = vld [vmem:[%s3795 + $0x10] sm:$0xff]
  %v3799 = vld [vmem:[%s3795 + $0x18] sm:$0xff]
  %v3800 = vld [vmem:[%s3795 + $0x20] sm:$0xff]
  %v3801 = vld [vmem:[%s3795 + $0x28] sm:$0xff]
  %v3802 = vld [vmem:[%s3795 + $0x30] sm:$0xff]
  %v3803 = vld [vmem:[%s3795 + $0x38] sm:$0xff]
  %v3804 = vld [vmem:[%s3795 + $0x40] sm:$0xff]
  %v3805 = vld [vmem:[%s3795 + $0x48] sm:$0xff]
  %v3806 = vld [vmem:[%s3795 + $0x50] sm:$0xff]
  %v3807 = vld [vmem:[%s3795 + $0x58] sm:$0xff]
  %v3808 = vld [vmem:[%s3795 + $0x60] sm:$0xff]
  %v3809 = vld [vmem:[%s3795 + $0x68] sm:$0xff]
  %v3810 = vld [vmem:[%s3795 + $0x70] sm:$0xff]
  %v3811 = vld [vmem:[%s3795 + $0x78] sm:$0xff]
  %v3812 = vld [vmem:[%s3795 + $0x80] sm:$0xff]
  %v3813 = vld [vmem:[%s3795 + $0x88] sm:$0xff]
  %v3814 = vld [vmem:[%s3795 + $0x90] sm:$0xff]
  %v3815 = vld [vmem:[%s3795 + $0x98] sm:$0xff]
  %v3816 = vld [vmem:[%s3795 + $0xa0] sm:$0xff]
  %v3817 = vld [vmem:[%s3795 + $0xa8] sm:$0xff]
  %v3818 = vld [vmem:[%s3795 + $0xb0] sm:$0xff]
  %v3819 = vld [vmem:[%s3795 + $0xb8] sm:$0xff]
  %v3820 = vld [vmem:[%s3795 + $0xc0] sm:$0xff]
  %v3821 = vld [vmem:[%s3795 + $0xc8] sm:$0xff]
  %v3822 = vld [vmem:[%s3795 + $0xd0] sm:$0xff]
  %v3823 = vld [vmem:[%s3795 + $0xd8] sm:$0xff]
  %v3824 = vld [vmem:[%s3795 + $0xe0] sm:$0xff]
  %v3825 = vld [vmem:[%s3795 + $0xe8] sm:$0xff]
  %v3827 = vunpack.c.l.b16 %v1896
  %v3828 = vunpack.c.h.b16 %v1896
  %v3829 = vpack.c.b16 %v3827, %v3192
  %v3830 = vpack.c.b16 %v3828, %v3193
  %v3862 = vunpack.c.l.b16 %v3796
  %v3863 = vunpack.c.h.b16 %v3796
  %v3864 = vunpack.c.l.b16 %v3797
  %v3865 = vunpack.c.h.b16 %v3797
  %v3866 = vunpack.c.l.b16 %v3798
  %v3867 = vunpack.c.h.b16 %v3798
  %v3868 = vunpack.c.l.b16 %v3799
  %v3869 = vunpack.c.h.b16 %v3799
  %v3870 = vunpack.c.l.b16 %v3800
  %v3871 = vunpack.c.h.b16 %v3800
  %v3872 = vunpack.c.l.b16 %v3801
  %v3873 = vunpack.c.h.b16 %v3801
  %v3874 = vunpack.c.l.b16 %v3802
  %v3875 = vunpack.c.h.b16 %v3802
  %v3876 = vunpack.c.l.b16 %v3803
  %v3877 = vunpack.c.h.b16 %v3803
  %v3878 = vunpack.c.l.b16 %v3804
  %v3879 = vunpack.c.h.b16 %v3804
  %v3880 = vunpack.c.l.b16 %v3805
  %v3881 = vunpack.c.h.b16 %v3805
  %v3882 = vunpack.c.l.b16 %v3806
  %v3883 = vunpack.c.h.b16 %v3806
  %v3884 = vunpack.c.l.b16 %v3807
  %v3885 = vunpack.c.h.b16 %v3807
  %v3886 = vunpack.c.l.b16 %v3808
  %v3887 = vunpack.c.h.b16 %v3808
  %v3888 = vunpack.c.l.b16 %v3809
  %v3889 = vunpack.c.h.b16 %v3809
  %v3890 = vunpack.c.l.b16 %v3810
  %v3891 = vunpack.c.h.b16 %v3810
  %v3892 = vunpack.c.l.b16 %v3811
  %v3893 = vunpack.c.h.b16 %v3811
  %v3894 = vunpack.c.l.b16 %v3812
  %v3895 = vunpack.c.h.b16 %v3812
  %v3896 = vunpack.c.l.b16 %v3813
  %v3897 = vunpack.c.h.b16 %v3813
  %v3898 = vunpack.c.l.b16 %v3814
  %v3899 = vunpack.c.h.b16 %v3814
  %v3900 = vunpack.c.l.b16 %v3815
  %v3901 = vunpack.c.h.b16 %v3815
  %v3902 = vunpack.c.l.b16 %v3816
  %v3903 = vunpack.c.h.b16 %v3816
  %v3904 = vunpack.c.l.b16 %v3817
  %v3905 = vunpack.c.h.b16 %v3817
  %v3906 = vunpack.c.l.b16 %v3818
  %v3907 = vunpack.c.h.b16 %v3818
  %v3908 = vunpack.c.l.b16 %v3819
  %v3909 = vunpack.c.h.b16 %v3819
  %v3910 = vunpack.c.l.b16 %v3820
  %v3911 = vunpack.c.h.b16 %v3820
  %v3912 = vunpack.c.l.b16 %v3821
  %v3913 = vunpack.c.h.b16 %v3821
  %v3914 = vunpack.c.l.b16 %v3822
  %v3915 = vunpack.c.h.b16 %v3822
  %v3916 = vunpack.c.l.b16 %v3823
  %v3917 = vunpack.c.h.b16 %v3823
  %v3918 = vunpack.c.l.b16 %v3824
  %v3919 = vunpack.c.h.b16 %v3824
  %v3920 = vunpack.c.l.b16 %v3825
  %v3921 = vunpack.c.h.b16 %v3825
  %v3922 = vpack.c.b16 %v3864, %v3862
  %v3923 = vpack.c.b16 %v3865, %v3863
  %v3924 = vpack.c.b16 %v3868, %v3866
  %v3925 = vpack.c.b16 %v3869, %v3867
  %v3926 = vpack.c.b16 %v3872, %v3870
  %v3927 = vpack.c.b16 %v3873, %v3871
  %v3928 = vpack.c.b16 %v3876, %v3874
  %v3929 = vpack.c.b16 %v3877, %v3875
  %v3930 = vpack.c.b16 %v3880, %v3878
  %v3931 = vpack.c.b16 %v3881, %v3879
  %v3932 = vpack.c.b16 %v3884, %v3882
  %v3933 = vpack.c.b16 %v3885, %v3883
  %v3934 = vpack.c.b16 %v3888, %v3886
  %v3935 = vpack.c.b16 %v3889, %v3887
  %v3936 = vpack.c.b16 %v3892, %v3890
  %v3937 = vpack.c.b16 %v3893, %v3891
  %v3938 = vpack.c.b16 %v3896, %v3894
  %v3939 = vpack.c.b16 %v3897, %v3895
  %v3940 = vpack.c.b16 %v3900, %v3898
  %v3941 = vpack.c.b16 %v3901, %v3899
  %v3942 = vpack.c.b16 %v3904, %v3902
  %v3943 = vpack.c.b16 %v3905, %v3903
  %v3944 = vpack.c.b16 %v3908, %v3906
  %v3945 = vpack.c.b16 %v3909, %v3907
  %v3946 = vpack.c.b16 %v3912, %v3910
  %v3947 = vpack.c.b16 %v3913, %v3911
  %v3948 = vpack.c.b16 %v3916, %v3914
  %v3949 = vpack.c.b16 %v3917, %v3915
  %v3950 = vpack.c.b16 %v3920, %v3918
  %v3951 = vpack.c.b16 %v3921, %v3919
  %v3983 = vsel %vm848, %v3830, 0
  %3985 = vmatpush.bf16.msra.mxu0 %v3936
  %3986 = vmatpush.bf16.msra.mxu0 %v3934
  %3987 = vmatpush.bf16.msra.mxu0 %v3932
  %3988 = vmatpush.bf16.msra.mxu0 %v3930
  %3989 = vmatpush.bf16.msra.mxu0 %v3928
  %3990 = vmatpush.bf16.msra.mxu0 %v3926
  %3991 = vmatpush.bf16.msra.mxu0 %v3924
  %3992 = vmatpush.bf16.msra.mxu0 %v3922
  %3993 = vmatmul.bf16.gmra.mxu0 %v2016
  %v3994 = vpop.f32.mrf.mxu0
  %v3995 = vadd.f32 0.0, %v3994
  %v3996 = vpop.f32.mrf.mxu0
  %v3997 = vadd.f32 0.0, %v3996
  %3998 = vmatmul.bf16.gmra.mxu0 %v2018
  %v3999 = vpop.f32.mrf.mxu0
  %v4000 = vadd.f32 0.0, %v3999
  %v4001 = vpop.f32.mrf.mxu0
  %v4002 = vadd.f32 0.0, %v4001
  %4003 = vmatmul.bf16.gmra.mxu0 %v2020
  %v4004 = vpop.f32.mrf.mxu0
  %v4005 = vadd.f32 0.0, %v4004
  %v4006 = vpop.f32.mrf.mxu0
  %v4007 = vadd.f32 0.0, %v4006
  %4008 = vmatmul.bf16.gmra.mxu0 %v3829
  %v4009 = vpop.f32.mrf.mxu0
  %v4010 = vadd.f32 0.0, %v4009
  %v4011 = vpop.f32.mrf.mxu0
  %v4012 = vadd.f32 0.0, %v4011
  %4013 = vdwg.mxu0
  %4014 = vmatpush.bf16.msra.mxu0 0
  %4015 = vmatpush.bf16.msra.mxu0 %v3950
  %4016 = vmatpush.bf16.msra.mxu0 %v3948
  %4017 = vmatpush.bf16.msra.mxu0 %v3946
  %4018 = vmatpush.bf16.msra.mxu0 %v3944
  %4019 = vmatpush.bf16.msra.mxu0 %v3942
  %4020 = vmatpush.bf16.msra.mxu0 %v3940
  %4021 = vmatpush.bf16.msra.mxu0 %v3938
  %4022 = vmatmul.bf16.gmra.mxu0 %v2180
  %v4023 = vpop.f32.mrf.mxu0
  %v4024 = vadd.f32 %v3995, %v4023
  %v4025 = vpop.f32.mrf.mxu0
  %v4026 = vadd.f32 %v3997, %v4025
  %4027 = vmatmul.bf16.gmra.mxu0 %v2183
  %v4028 = vpop.f32.mrf.mxu0
  %v4029 = vadd.f32 %v4000, %v4028
  %v4030 = vpop.f32.mrf.mxu0
  %v4031 = vadd.f32 %v4002, %v4030
  %4032 = vmatmul.bf16.gmra.mxu0 %v2186
  %v4033 = vpop.f32.mrf.mxu0
  %v4034 = vadd.f32 %v4005, %v4033
  %v4035 = vpop.f32.mrf.mxu0
  %v4036 = vadd.f32 %v4007, %v4035
  %4037 = vmatmul.bf16.gmra.mxu0 %v3983
  %v4038 = vpop.f32.mrf.mxu0
  %v4039 = vadd.f32 %v4010, %v4038
  %v4040 = vpop.f32.mrf.mxu0
  %v4041 = vadd.f32 %v4012, %v4040
  %4042 = vdwg.mxu0
  %4043 = vmatpush.bf16.msra.mxu0 %v3937
  %4044 = vmatpush.bf16.msra.mxu0 %v3935
  %4045 = vmatpush.bf16.msra.mxu0 %v3933
  %4046 = vmatpush.bf16.msra.mxu0 %v3931
  %4047 = vmatpush.bf16.msra.mxu0 %v3929
  %4048 = vmatpush.bf16.msra.mxu0 %v3927
  %4049 = vmatpush.bf16.msra.mxu0 %v3925
  %4050 = vmatpush.bf16.msra.mxu0 %v3923
  %4051 = vmatmul.bf16.gmra.mxu0 %v2016
  %v4052 = vpop.f32.mrf.mxu0
  %v4053 = vadd.f32 0.0, %v4052
  %v4054 = vpop.f32.mrf.mxu0
  %v4055 = vadd.f32 0.0, %v4054
  %4056 = vmatmul.bf16.gmra.mxu0 %v2018
  %v4057 = vpop.f32.mrf.mxu0
  %v4058 = vadd.f32 0.0, %v4057
  %v4059 = vpop.f32.mrf.mxu0
  %v4060 = vadd.f32 0.0, %v4059
  %4061 = vmatmul.bf16.gmra.mxu0 %v2020
  %v4062 = vpop.f32.mrf.mxu0
  %v4063 = vadd.f32 0.0, %v4062
  %v4064 = vpop.f32.mrf.mxu0
  %v4065 = vadd.f32 0.0, %v4064
  %4066 = vmatmul.bf16.gmra.mxu0 %v3829
  %v4067 = vpop.f32.mrf.mxu0
  %v4068 = vadd.f32 0.0, %v4067
  %v4069 = vpop.f32.mrf.mxu0
  %v4070 = vadd.f32 0.0, %v4069
  %4071 = vdwg.mxu0
  %4072 = vmatpush.bf16.msra.mxu0 0
  %4073 = vmatpush.bf16.msra.mxu0 %v3951
  %4074 = vmatpush.bf16.msra.mxu0 %v3949
  %4075 = vmatpush.bf16.msra.mxu0 %v3947
  %4076 = vmatpush.bf16.msra.mxu0 %v3945
  %4077 = vmatpush.bf16.msra.mxu0 %v3943
  %4078 = vmatpush.bf16.msra.mxu0 %v3941
  %4079 = vmatpush.bf16.msra.mxu0 %v3939
  %4080 = vmatmul.bf16.gmra.mxu0 %v2180
  %v4081 = vpop.f32.mrf.mxu0
  %v4082 = vadd.f32 %v4053, %v4081
  %v4083 = vpop.f32.mrf.mxu0
  %v4084 = vadd.f32 %v4055, %v4083
  %4085 = vmatmul.bf16.gmra.mxu0 %v2183
  %v4086 = vpop.f32.mrf.mxu0
  %v4087 = vadd.f32 %v4058, %v4086
  %v4088 = vpop.f32.mrf.mxu0
  %v4089 = vadd.f32 %v4060, %v4088
  %4090 = vmatmul.bf16.gmra.mxu0 %v2186
  %v4091 = vpop.f32.mrf.mxu0
  %v4092 = vadd.f32 %v4063, %v4091
  %v4093 = vpop.f32.mrf.mxu0
  %v4094 = vadd.f32 %v4065, %v4093
  %4095 = vmatmul.bf16.gmra.mxu0 %v3983
  %v4096 = vpop.f32.mrf.mxu0
  %v4097 = vadd.f32 %v4068, %v4096
  %v4098 = vpop.f32.mrf.mxu0
  %v4099 = vadd.f32 %v4070, %v4098
  %4100 = vdwg.mxu0
  %s4101 = scalar_lea.vmem %s3, 1920
  %v4102 = vld [vmem:[%s4101] sm:$0xff]
  %v4103 = vld [vmem:[%s4101 + $0x8] sm:$0xff]
  %v4104 = vld [vmem:[%s4101 + $0x10] sm:$0xff]
  %v4105 = vld [vmem:[%s4101 + $0x18] sm:$0xff]
  %v4106 = vld [vmem:[%s4101 + $0x20] sm:$0xff]
  %v4107 = vld [vmem:[%s4101 + $0x28] sm:$0xff]
  %v4108 = vld [vmem:[%s4101 + $0x30] sm:$0xff]
  %v4109 = vld [vmem:[%s4101 + $0x38] sm:$0xff]
  %v4110 = vld [vmem:[%s4101 + $0x40] sm:$0xff]
  %v4111 = vld [vmem:[%s4101 + $0x48] sm:$0xff]
  %v4112 = vld [vmem:[%s4101 + $0x50] sm:$0xff]
  %v4113 = vld [vmem:[%s4101 + $0x58] sm:$0xff]
  %v4114 = vld [vmem:[%s4101 + $0x60] sm:$0xff]
  %v4115 = vld [vmem:[%s4101 + $0x68] sm:$0xff]
  %v4116 = vld [vmem:[%s4101 + $0x70] sm:$0xff]
  %v4117 = vld [vmem:[%s4101 + $0x78] sm:$0xff]
  %v4118 = vld [vmem:[%s4101 + $0x80] sm:$0xff]
  %v4119 = vld [vmem:[%s4101 + $0x88] sm:$0xff]
  %v4120 = vld [vmem:[%s4101 + $0x90] sm:$0xff]
  %v4121 = vld [vmem:[%s4101 + $0x98] sm:$0xff]
  %v4122 = vld [vmem:[%s4101 + $0xa0] sm:$0xff]
  %v4123 = vld [vmem:[%s4101 + $0xa8] sm:$0xff]
  %v4124 = vld [vmem:[%s4101 + $0xb0] sm:$0xff]
  %v4125 = vld [vmem:[%s4101 + $0xb8] sm:$0xff]
  %v4126 = vld [vmem:[%s4101 + $0xc0] sm:$0xff]
  %v4127 = vld [vmem:[%s4101 + $0xc8] sm:$0xff]
  %v4128 = vld [vmem:[%s4101 + $0xd0] sm:$0xff]
  %v4129 = vld [vmem:[%s4101 + $0xd8] sm:$0xff]
  %v4130 = vld [vmem:[%s4101 + $0xe0] sm:$0xff]
  %v4131 = vld [vmem:[%s4101 + $0xe8] sm:$0xff]
  %v4162 = vunpack.c.l.b16 %v4102
  %v4163 = vunpack.c.h.b16 %v4102
  %v4164 = vunpack.c.l.b16 %v4103
  %v4165 = vunpack.c.h.b16 %v4103
  %v4166 = vunpack.c.l.b16 %v4104
  %v4167 = vunpack.c.h.b16 %v4104
  %v4168 = vunpack.c.l.b16 %v4105
  %v4169 = vunpack.c.h.b16 %v4105
  %v4170 = vunpack.c.l.b16 %v4106
  %v4171 = vunpack.c.h.b16 %v4106
  %v4172 = vunpack.c.l.b16 %v4107
  %v4173 = vunpack.c.h.b16 %v4107
  %v4174 = vunpack.c.l.b16 %v4108
  %v4175 = vunpack.c.h.b16 %v4108
  %v4176 = vunpack.c.l.b16 %v4109
  %v4177 = vunpack.c.h.b16 %v4109
  %v4178 = vunpack.c.l.b16 %v4110
  %v4179 = vunpack.c.h.b16 %v4110
  %v4180 = vunpack.c.l.b16 %v4111
  %v4181 = vunpack.c.h.b16 %v4111
  %v4182 = vunpack.c.l.b16 %v4112
  %v4183 = vunpack.c.h.b16 %v4112
  %v4184 = vunpack.c.l.b16 %v4113
  %v4185 = vunpack.c.h.b16 %v4113
  %v4186 = vunpack.c.l.b16 %v4114
  %v4187 = vunpack.c.h.b16 %v4114
  %v4188 = vunpack.c.l.b16 %v4115
  %v4189 = vunpack.c.h.b16 %v4115
  %v4190 = vunpack.c.l.b16 %v4116
  %v4191 = vunpack.c.h.b16 %v4116
  %v4192 = vunpack.c.l.b16 %v4117
  %v4193 = vunpack.c.h.b16 %v4117
  %v4194 = vunpack.c.l.b16 %v4118
  %v4195 = vunpack.c.h.b16 %v4118
  %v4196 = vunpack.c.l.b16 %v4119
  %v4197 = vunpack.c.h.b16 %v4119
  %v4198 = vunpack.c.l.b16 %v4120
  %v4199 = vunpack.c.h.b16 %v4120
  %v4200 = vunpack.c.l.b16 %v4121
  %v4201 = vunpack.c.h.b16 %v4121
  %v4202 = vunpack.c.l.b16 %v4122
  %v4203 = vunpack.c.h.b16 %v4122
  %v4204 = vunpack.c.l.b16 %v4123
  %v4205 = vunpack.c.h.b16 %v4123
  %v4206 = vunpack.c.l.b16 %v4124
  %v4207 = vunpack.c.h.b16 %v4124
  %v4208 = vunpack.c.l.b16 %v4125
  %v4209 = vunpack.c.h.b16 %v4125
  %v4210 = vunpack.c.l.b16 %v4126
  %v4211 = vunpack.c.h.b16 %v4126
  %v4212 = vunpack.c.l.b16 %v4127
  %v4213 = vunpack.c.h.b16 %v4127
  %v4214 = vunpack.c.l.b16 %v4128
  %v4215 = vunpack.c.h.b16 %v4128
  %v4216 = vunpack.c.l.b16 %v4129
  %v4217 = vunpack.c.h.b16 %v4129
  %v4218 = vunpack.c.l.b16 %v4130
  %v4219 = vunpack.c.h.b16 %v4130
  %v4220 = vunpack.c.l.b16 %v4131
  %v4221 = vunpack.c.h.b16 %v4131
  %v4222 = vpack.c.b16 %v4164, %v4162
  %v4223 = vpack.c.b16 %v4165, %v4163
  %v4224 = vpack.c.b16 %v4168, %v4166
  %v4225 = vpack.c.b16 %v4169, %v4167
  %v4226 = vpack.c.b16 %v4172, %v4170
  %v4227 = vpack.c.b16 %v4173, %v4171
  %v4228 = vpack.c.b16 %v4176, %v4174
  %v4229 = vpack.c.b16 %v4177, %v4175
  %v4230 = vpack.c.b16 %v4180, %v4178
  %v4231 = vpack.c.b16 %v4181, %v4179
  %v4232 = vpack.c.b16 %v4184, %v4182
  %v4233 = vpack.c.b16 %v4185, %v4183
  %v4234 = vpack.c.b16 %v4188, %v4186
  %v4235 = vpack.c.b16 %v4189, %v4187
  %v4236 = vpack.c.b16 %v4192, %v4190
  %v4237 = vpack.c.b16 %v4193, %v4191
  %v4238 = vpack.c.b16 %v4196, %v4194
  %v4239 = vpack.c.b16 %v4197, %v4195
  %v4240 = vpack.c.b16 %v4200, %v4198
  %v4241 = vpack.c.b16 %v4201, %v4199
  %v4242 = vpack.c.b16 %v4204, %v4202
  %v4243 = vpack.c.b16 %v4205, %v4203
  %v4244 = vpack.c.b16 %v4208, %v4206
  %v4245 = vpack.c.b16 %v4209, %v4207
  %v4246 = vpack.c.b16 %v4212, %v4210
  %v4247 = vpack.c.b16 %v4213, %v4211
  %v4248 = vpack.c.b16 %v4216, %v4214
  %v4249 = vpack.c.b16 %v4217, %v4215
  %v4250 = vpack.c.b16 %v4220, %v4218
  %v4251 = vpack.c.b16 %v4221, %v4219
  %4282 = vmatpush.bf16.msra.mxu0 %v4236
  %4283 = vmatpush.bf16.msra.mxu0 %v4234
  %4284 = vmatpush.bf16.msra.mxu0 %v4232
  %4285 = vmatpush.bf16.msra.mxu0 %v4230
  %4286 = vmatpush.bf16.msra.mxu0 %v4228
  %4287 = vmatpush.bf16.msra.mxu0 %v4226
  %4288 = vmatpush.bf16.msra.mxu0 %v4224
  %4289 = vmatpush.bf16.msra.mxu0 %v4222
  %4290 = vmatmul.bf16.gmra.mxu0 %v2016
  %v4291 = vpop.f32.mrf.mxu0
  %v4292 = vadd.f32 0.0, %v4291
  %v4293 = vpop.f32.mrf.mxu0
  %v4294 = vadd.f32 0.0, %v4293
  %4295 = vmatmul.bf16.gmra.mxu0 %v2018
  %v4296 = vpop.f32.mrf.mxu0
  %v4297 = vadd.f32 0.0, %v4296
  %v4298 = vpop.f32.mrf.mxu0
  %v4299 = vadd.f32 0.0, %v4298
  %4300 = vmatmul.bf16.gmra.mxu0 %v2020
  %v4301 = vpop.f32.mrf.mxu0
  %v4302 = vadd.f32 0.0, %v4301
  %v4303 = vpop.f32.mrf.mxu0
  %v4304 = vadd.f32 0.0, %v4303
  %4305 = vmatmul.bf16.gmra.mxu0 %v3829
  %v4306 = vpop.f32.mrf.mxu0
  %v4307 = vadd.f32 0.0, %v4306
  %v4308 = vpop.f32.mrf.mxu0
  %v4309 = vadd.f32 0.0, %v4308
  %4310 = vdwg.mxu0
  %4311 = vmatpush.bf16.msra.mxu0 0
  %4312 = vmatpush.bf16.msra.mxu0 %v4250
  %4313 = vmatpush.bf16.msra.mxu0 %v4248
  %4314 = vmatpush.bf16.msra.mxu0 %v4246
  %4315 = vmatpush.bf16.msra.mxu0 %v4244
  %4316 = vmatpush.bf16.msra.mxu0 %v4242
  %4317 = vmatpush.bf16.msra.mxu0 %v4240
  %4318 = vmatpush.bf16.msra.mxu0 %v4238
  %4319 = vmatmul.bf16.gmra.mxu0 %v2180
  %v4320 = vpop.f32.mrf.mxu0
  %v4321 = vadd.f32 %v4292, %v4320
  %v4322 = vpop.f32.mrf.mxu0
  %v4323 = vadd.f32 %v4294, %v4322
  %4324 = vmatmul.bf16.gmra.mxu0 %v2183
  %v4325 = vpop.f32.mrf.mxu0
  %v4326 = vadd.f32 %v4297, %v4325
  %v4327 = vpop.f32.mrf.mxu0
  %v4328 = vadd.f32 %v4299, %v4327
  %4329 = vmatmul.bf16.gmra.mxu0 %v2186
  %v4330 = vpop.f32.mrf.mxu0
  %v4331 = vadd.f32 %v4302, %v4330
  %v4332 = vpop.f32.mrf.mxu0
  %v4333 = vadd.f32 %v4304, %v4332
  %4334 = vmatmul.bf16.gmra.mxu0 %v3983
  %v4335 = vpop.f32.mrf.mxu0
  %v4336 = vadd.f32 %v4307, %v4335
  %v4337 = vpop.f32.mrf.mxu0
  %v4338 = vadd.f32 %v4309, %v4337
  %4339 = vdwg.mxu0
  %4340 = vmatpush.bf16.msra.mxu0 %v4237
  %4341 = vmatpush.bf16.msra.mxu0 %v4235
  %4342 = vmatpush.bf16.msra.mxu0 %v4233
  %4343 = vmatpush.bf16.msra.mxu0 %v4231
  %4344 = vmatpush.bf16.msra.mxu0 %v4229
  %4345 = vmatpush.bf16.msra.mxu0 %v4227
  %4346 = vmatpush.bf16.msra.mxu0 %v4225
  %4347 = vmatpush.bf16.msra.mxu0 %v4223
  %4348 = vmatmul.bf16.gmra.mxu0 %v2016
  %v4349 = vpop.f32.mrf.mxu0
  %v4350 = vadd.f32 0.0, %v4349
  %v4351 = vpop.f32.mrf.mxu0
  %v4352 = vadd.f32 0.0, %v4351
  %4353 = vmatmul.bf16.gmra.mxu0 %v2018
  %v4354 = vpop.f32.mrf.mxu0
  %v4355 = vadd.f32 0.0, %v4354
  %v4356 = vpop.f32.mrf.mxu0
  %v4357 = vadd.f32 0.0, %v4356
  %4358 = vmatmul.bf16.gmra.mxu0 %v2020
  %v4359 = vpop.f32.mrf.mxu0
  %v4360 = vadd.f32 0.0, %v4359
  %v4361 = vpop.f32.mrf.mxu0
  %v4362 = vadd.f32 0.0, %v4361
  %4363 = vmatmul.bf16.gmra.mxu0 %v3829
  %v4364 = vpop.f32.mrf.mxu0
  %v4365 = vadd.f32 0.0, %v4364
  %v4366 = vpop.f32.mrf.mxu0
  %v4367 = vadd.f32 0.0, %v4366
  %4368 = vdwg.mxu0
  %4369 = vmatpush.bf16.msra.mxu0 0
  %4370 = vmatpush.bf16.msra.mxu0 %v4251
  %4371 = vmatpush.bf16.msra.mxu0 %v4249
  %4372 = vmatpush.bf16.msra.mxu0 %v4247
  %4373 = vmatpush.bf16.msra.mxu0 %v4245
  %4374 = vmatpush.bf16.msra.mxu0 %v4243
  %4375 = vmatpush.bf16.msra.mxu0 %v4241
  %4376 = vmatpush.bf16.msra.mxu0 %v4239
  %4377 = vmatmul.bf16.gmra.mxu0 %v2180
  %v4378 = vpop.f32.mrf.mxu0
  %v4379 = vadd.f32 %v4350, %v4378
  %v4380 = vpop.f32.mrf.mxu0
  %v4381 = vadd.f32 %v4352, %v4380
  %4382 = vmatmul.bf16.gmra.mxu0 %v2183
  %v4383 = vpop.f32.mrf.mxu0
  %v4384 = vadd.f32 %v4355, %v4383
  %v4385 = vpop.f32.mrf.mxu0
  %v4386 = vadd.f32 %v4357, %v4385
  %4387 = vmatmul.bf16.gmra.mxu0 %v2186
  %v4388 = vpop.f32.mrf.mxu0
  %v4389 = vadd.f32 %v4360, %v4388
  %v4390 = vpop.f32.mrf.mxu0
  %v4391 = vadd.f32 %v4362, %v4390
  %4392 = vmatmul.bf16.gmra.mxu0 %v3983
  %v4393 = vpop.f32.mrf.mxu0
  %v4394 = vadd.f32 %v4365, %v4393
  %v4395 = vpop.f32.mrf.mxu0
  %v4396 = vadd.f32 %v4367, %v4395
  %4397 = vdwg.mxu0
  %v4398 = vadd.f32 %v3763, %v4024
  %v4399 = vadd.f32 %v3764, %v4082
  %v4400 = vadd.f32 %v3765, %v4026
  %v4401 = vadd.f32 %v3766, %v4084
  %v4402 = vadd.f32 %v3767, %v4029
  %v4403 = vadd.f32 %v3768, %v4087
  %v4404 = vadd.f32 %v3769, %v4031
  %v4405 = vadd.f32 %v3770, %v4089
  %v4406 = vadd.f32 %v3771, %v4034
  %v4407 = vadd.f32 %v3772, %v4092
  %v4408 = vadd.f32 %v3773, %v4036
  %v4409 = vadd.f32 %v3774, %v4094
  %v4410 = vadd.f32 %v3775, %v4039
  %v4411 = vadd.f32 %v3776, %v4097
  %v4412 = vadd.f32 %v3777, %v4041
  %v4413 = vadd.f32 %v3778, %v4099
  %v4414 = vadd.f32 %v3779, %v4321
  %v4415 = vadd.f32 %v3780, %v4379
  %v4416 = vadd.f32 %v3781, %v4323
  %v4417 = vadd.f32 %v3782, %v4381
  %v4418 = vadd.f32 %v3783, %v4326
  %v4419 = vadd.f32 %v3784, %v4384
  %v4420 = vadd.f32 %v3785, %v4328
  %v4421 = vadd.f32 %v3786, %v4386
  %v4422 = vadd.f32 %v3787, %v4331
  %v4423 = vadd.f32 %v3788, %v4389
  %v4424 = vadd.f32 %v3789, %v4333
  %v4425 = vadd.f32 %v3790, %v4391
  %v4426 = vadd.f32 %v3791, %v4336
  %v4427 = vadd.f32 %v3792, %v4394
  %v4428 = vadd.f32 %v3793, %v4338
  %v4429 = vadd.f32 %v3794, %v4396
  %s4430 = scalar_lea.vmem %s3, 960
  %v4431 = vld [vmem:[%s4430] sm:$0xff]
  %v4432 = vld [vmem:[%s4430 + $0x8] sm:$0xff]
  %v4433 = vld [vmem:[%s4430 + $0x10] sm:$0xff]
  %v4434 = vld [vmem:[%s4430 + $0x18] sm:$0xff]
  %v4435 = vld [vmem:[%s4430 + $0x20] sm:$0xff]
  %v4436 = vld [vmem:[%s4430 + $0x28] sm:$0xff]
  %v4437 = vld [vmem:[%s4430 + $0x30] sm:$0xff]
  %v4438 = vld [vmem:[%s4430 + $0x38] sm:$0xff]
  %v4439 = vld [vmem:[%s4430 + $0x40] sm:$0xff]
  %v4440 = vld [vmem:[%s4430 + $0x48] sm:$0xff]
  %v4441 = vld [vmem:[%s4430 + $0x50] sm:$0xff]
  %v4442 = vld [vmem:[%s4430 + $0x58] sm:$0xff]
  %v4443 = vld [vmem:[%s4430 + $0x60] sm:$0xff]
  %v4444 = vld [vmem:[%s4430 + $0x68] sm:$0xff]
  %v4445 = vld [vmem:[%s4430 + $0x70] sm:$0xff]
  %v4446 = vld [vmem:[%s4430 + $0x78] sm:$0xff]
  %v4447 = vld [vmem:[%s4430 + $0x80] sm:$0xff]
  %v4448 = vld [vmem:[%s4430 + $0x88] sm:$0xff]
  %v4449 = vld [vmem:[%s4430 + $0x90] sm:$0xff]
  %v4450 = vld [vmem:[%s4430 + $0x98] sm:$0xff]
  %v4451 = vld [vmem:[%s4430 + $0xa0] sm:$0xff]
  %v4452 = vld [vmem:[%s4430 + $0xa8] sm:$0xff]
  %v4453 = vld [vmem:[%s4430 + $0xb0] sm:$0xff]
  %v4454 = vld [vmem:[%s4430 + $0xb8] sm:$0xff]
  %v4455 = vld [vmem:[%s4430 + $0xc0] sm:$0xff]
  %v4456 = vld [vmem:[%s4430 + $0xc8] sm:$0xff]
  %v4457 = vld [vmem:[%s4430 + $0xd0] sm:$0xff]
  %v4458 = vld [vmem:[%s4430 + $0xd8] sm:$0xff]
  %v4459 = vld [vmem:[%s4430 + $0xe0] sm:$0xff]
  %v4460 = vld [vmem:[%s4430 + $0xe8] sm:$0xff]
  %v4462 = vunpack.c.l.b16 %v1897
  %v4463 = vunpack.c.h.b16 %v1897
  %v4464 = vpack.c.b16 %v4462, %v3827
  %v4465 = vpack.c.b16 %v4463, %v3828
  %v4497 = vunpack.c.l.b16 %v4431
  %v4498 = vunpack.c.h.b16 %v4431
  %v4499 = vunpack.c.l.b16 %v4432
  %v4500 = vunpack.c.h.b16 %v4432
  %v4501 = vunpack.c.l.b16 %v4433
  %v4502 = vunpack.c.h.b16 %v4433
  %v4503 = vunpack.c.l.b16 %v4434
  %v4504 = vunpack.c.h.b16 %v4434
  %v4505 = vunpack.c.l.b16 %v4435
  %v4506 = vunpack.c.h.b16 %v4435
  %v4507 = vunpack.c.l.b16 %v4436
  %v4508 = vunpack.c.h.b16 %v4436
  %v4509 = vunpack.c.l.b16 %v4437
  %v4510 = vunpack.c.h.b16 %v4437
  %v4511 = vunpack.c.l.b16 %v4438
  %v4512 = vunpack.c.h.b16 %v4438
  %v4513 = vunpack.c.l.b16 %v4439
  %v4514 = vunpack.c.h.b16 %v4439
  %v4515 = vunpack.c.l.b16 %v4440
  %v4516 = vunpack.c.h.b16 %v4440
  %v4517 = vunpack.c.l.b16 %v4441
  %v4518 = vunpack.c.h.b16 %v4441
  %v4519 = vunpack.c.l.b16 %v4442
  %v4520 = vunpack.c.h.b16 %v4442
  %v4521 = vunpack.c.l.b16 %v4443
  %v4522 = vunpack.c.h.b16 %v4443
  %v4523 = vunpack.c.l.b16 %v4444
  %v4524 = vunpack.c.h.b16 %v4444
  %v4525 = vunpack.c.l.b16 %v4445
  %v4526 = vunpack.c.h.b16 %v4445
  %v4527 = vunpack.c.l.b16 %v4446
  %v4528 = vunpack.c.h.b16 %v4446
  %v4529 = vunpack.c.l.b16 %v4447
  %v4530 = vunpack.c.h.b16 %v4447
  %v4531 = vunpack.c.l.b16 %v4448
  %v4532 = vunpack.c.h.b16 %v4448
  %v4533 = vunpack.c.l.b16 %v4449
  %v4534 = vunpack.c.h.b16 %v4449
  %v4535 = vunpack.c.l.b16 %v4450
  %v4536 = vunpack.c.h.b16 %v4450
  %v4537 = vunpack.c.l.b16 %v4451
  %v4538 = vunpack.c.h.b16 %v4451
  %v4539 = vunpack.c.l.b16 %v4452
  %v4540 = vunpack.c.h.b16 %v4452
  %v4541 = vunpack.c.l.b16 %v4453
  %v4542 = vunpack.c.h.b16 %v4453
  %v4543 = vunpack.c.l.b16 %v4454
  %v4544 = vunpack.c.h.b16 %v4454
  %v4545 = vunpack.c.l.b16 %v4455
  %v4546 = vunpack.c.h.b16 %v4455
  %v4547 = vunpack.c.l.b16 %v4456
  %v4548 = vunpack.c.h.b16 %v4456
  %v4549 = vunpack.c.l.b16 %v4457
  %v4550 = vunpack.c.h.b16 %v4457
  %v4551 = vunpack.c.l.b16 %v4458
  %v4552 = vunpack.c.h.b16 %v4458
  %v4553 = vunpack.c.l.b16 %v4459
  %v4554 = vunpack.c.h.b16 %v4459
  %v4555 = vunpack.c.l.b16 %v4460
  %v4556 = vunpack.c.h.b16 %v4460
  %v4557 = vpack.c.b16 %v4499, %v4497
  %v4558 = vpack.c.b16 %v4500, %v4498
  %v4559 = vpack.c.b16 %v4503, %v4501
  %v4560 = vpack.c.b16 %v4504, %v4502
  %v4561 = vpack.c.b16 %v4507, %v4505
  %v4562 = vpack.c.b16 %v4508, %v4506
  %v4563 = vpack.c.b16 %v4511, %v4509
  %v4564 = vpack.c.b16 %v4512, %v4510
  %v4565 = vpack.c.b16 %v4515, %v4513
  %v4566 = vpack.c.b16 %v4516, %v4514
  %v4567 = vpack.c.b16 %v4519, %v4517
  %v4568 = vpack.c.b16 %v4520, %v4518
  %v4569 = vpack.c.b16 %v4523, %v4521
  %v4570 = vpack.c.b16 %v4524, %v4522
  %v4571 = vpack.c.b16 %v4527, %v4525
  %v4572 = vpack.c.b16 %v4528, %v4526
  %v4573 = vpack.c.b16 %v4531, %v4529
  %v4574 = vpack.c.b16 %v4532, %v4530
  %v4575 = vpack.c.b16 %v4535, %v4533
  %v4576 = vpack.c.b16 %v4536, %v4534
  %v4577 = vpack.c.b16 %v4539, %v4537
  %v4578 = vpack.c.b16 %v4540, %v4538
  %v4579 = vpack.c.b16 %v4543, %v4541
  %v4580 = vpack.c.b16 %v4544, %v4542
  %v4581 = vpack.c.b16 %v4547, %v4545
  %v4582 = vpack.c.b16 %v4548, %v4546
  %v4583 = vpack.c.b16 %v4551, %v4549
  %v4584 = vpack.c.b16 %v4552, %v4550
  %v4585 = vpack.c.b16 %v4555, %v4553
  %v4586 = vpack.c.b16 %v4556, %v4554
  %v4618 = vsel %vm848, %v4465, 0
  %4620 = vmatpush.bf16.msra.mxu0 %v4571
  %4621 = vmatpush.bf16.msra.mxu0 %v4569
  %4622 = vmatpush.bf16.msra.mxu0 %v4567
  %4623 = vmatpush.bf16.msra.mxu0 %v4565
  %4624 = vmatpush.bf16.msra.mxu0 %v4563
  %4625 = vmatpush.bf16.msra.mxu0 %v4561
  %4626 = vmatpush.bf16.msra.mxu0 %v4559
  %4627 = vmatpush.bf16.msra.mxu0 %v4557
  %4628 = vmatmul.bf16.gmra.mxu0 %v2608
  %v4629 = vpop.f32.mrf.mxu0
  %v4630 = vadd.f32 0.0, %v4629
  %v4631 = vpop.f32.mrf.mxu0
  %v4632 = vadd.f32 0.0, %v4631
  %4633 = vmatmul.bf16.gmra.mxu0 %v2610
  %v4634 = vpop.f32.mrf.mxu0
  %v4635 = vadd.f32 0.0, %v4634
  %v4636 = vpop.f32.mrf.mxu0
  %v4637 = vadd.f32 0.0, %v4636
  %4638 = vmatmul.bf16.gmra.mxu0 %v3194
  %v4639 = vpop.f32.mrf.mxu0
  %v4640 = vadd.f32 0.0, %v4639
  %v4641 = vpop.f32.mrf.mxu0
  %v4642 = vadd.f32 0.0, %v4641
  %4643 = vmatmul.bf16.gmra.mxu0 %v4464
  %v4644 = vpop.f32.mrf.mxu0
  %v4645 = vadd.f32 0.0, %v4644
  %v4646 = vpop.f32.mrf.mxu0
  %v4647 = vadd.f32 0.0, %v4646
  %4648 = vdwg.mxu0
  %4649 = vmatpush.bf16.msra.mxu0 0
  %4650 = vmatpush.bf16.msra.mxu0 %v4585
  %4651 = vmatpush.bf16.msra.mxu0 %v4583
  %4652 = vmatpush.bf16.msra.mxu0 %v4581
  %4653 = vmatpush.bf16.msra.mxu0 %v4579
  %4654 = vmatpush.bf16.msra.mxu0 %v4577
  %4655 = vmatpush.bf16.msra.mxu0 %v4575
  %4656 = vmatpush.bf16.msra.mxu0 %v4573
  %4657 = vmatmul.bf16.gmra.mxu0 %v2773
  %v4658 = vpop.f32.mrf.mxu0
  %v4659 = vadd.f32 %v4630, %v4658
  %v4660 = vpop.f32.mrf.mxu0
  %v4661 = vadd.f32 %v4632, %v4660
  %4662 = vmatmul.bf16.gmra.mxu0 %v2776
  %v4663 = vpop.f32.mrf.mxu0
  %v4664 = vadd.f32 %v4635, %v4663
  %v4665 = vpop.f32.mrf.mxu0
  %v4666 = vadd.f32 %v4637, %v4665
  %4667 = vmatmul.bf16.gmra.mxu0 %v3348
  %v4668 = vpop.f32.mrf.mxu0
  %v4669 = vadd.f32 %v4640, %v4668
  %v4670 = vpop.f32.mrf.mxu0
  %v4671 = vadd.f32 %v4642, %v4670
  %4672 = vmatmul.bf16.gmra.mxu0 %v4618
  %v4673 = vpop.f32.mrf.mxu0
  %v4674 = vadd.f32 %v4645, %v4673
  %v4675 = vpop.f32.mrf.mxu0
  %v4676 = vadd.f32 %v4647, %v4675
  %4677 = vdwg.mxu0
  %4678 = vmatpush.bf16.msra.mxu0 %v4572
  %4679 = vmatpush.bf16.msra.mxu0 %v4570
  %4680 = vmatpush.bf16.msra.mxu0 %v4568
  %4681 = vmatpush.bf16.msra.mxu0 %v4566
  %4682 = vmatpush.bf16.msra.mxu0 %v4564
  %4683 = vmatpush.bf16.msra.mxu0 %v4562
  %4684 = vmatpush.bf16.msra.mxu0 %v4560
  %4685 = vmatpush.bf16.msra.mxu0 %v4558
  %4686 = vmatmul.bf16.gmra.mxu0 %v2608
  %v4687 = vpop.f32.mrf.mxu0
  %v4688 = vadd.f32 0.0, %v4687
  %v4689 = vpop.f32.mrf.mxu0
  %v4690 = vadd.f32 0.0, %v4689
  %4691 = vmatmul.bf16.gmra.mxu0 %v2610
  %v4692 = vpop.f32.mrf.mxu0
  %v4693 = vadd.f32 0.0, %v4692
  %v4694 = vpop.f32.mrf.mxu0
  %v4695 = vadd.f32 0.0, %v4694
  %4696 = vmatmul.bf16.gmra.mxu0 %v3194
  %v4697 = vpop.f32.mrf.mxu0
  %v4698 = vadd.f32 0.0, %v4697
  %v4699 = vpop.f32.mrf.mxu0
  %v4700 = vadd.f32 0.0, %v4699
  %4701 = vmatmul.bf16.gmra.mxu0 %v4464
  %v4702 = vpop.f32.mrf.mxu0
  %v4703 = vadd.f32 0.0, %v4702
  %v4704 = vpop.f32.mrf.mxu0
  %v4705 = vadd.f32 0.0, %v4704
  %4706 = vdwg.mxu0
  %4707 = vmatpush.bf16.msra.mxu0 0
  %4708 = vmatpush.bf16.msra.mxu0 %v4586
  %4709 = vmatpush.bf16.msra.mxu0 %v4584
  %4710 = vmatpush.bf16.msra.mxu0 %v4582
  %4711 = vmatpush.bf16.msra.mxu0 %v4580
  %4712 = vmatpush.bf16.msra.mxu0 %v4578
  %4713 = vmatpush.bf16.msra.mxu0 %v4576
  %4714 = vmatpush.bf16.msra.mxu0 %v4574
  %4715 = vmatmul.bf16.gmra.mxu0 %v2773
  %v4716 = vpop.f32.mrf.mxu0
  %v4717 = vadd.f32 %v4688, %v4716
  %v4718 = vpop.f32.mrf.mxu0
  %v4719 = vadd.f32 %v4690, %v4718
  %4720 = vmatmul.bf16.gmra.mxu0 %v2776
  %v4721 = vpop.f32.mrf.mxu0
  %v4722 = vadd.f32 %v4693, %v4721
  %v4723 = vpop.f32.mrf.mxu0
  %v4724 = vadd.f32 %v4695, %v4723
  %4725 = vmatmul.bf16.gmra.mxu0 %v3348
  %v4726 = vpop.f32.mrf.mxu0
  %v4727 = vadd.f32 %v4698, %v4726
  %v4728 = vpop.f32.mrf.mxu0
  %v4729 = vadd.f32 %v4700, %v4728
  %4730 = vmatmul.bf16.gmra.mxu0 %v4618
  %v4731 = vpop.f32.mrf.mxu0
  %v4732 = vadd.f32 %v4703, %v4731
  %v4733 = vpop.f32.mrf.mxu0
  %v4734 = vadd.f32 %v4705, %v4733
  %4735 = vdwg.mxu0
  %s4736 = scalar_lea.vmem %s3, 2160
  %v4737 = vld [vmem:[%s4736] sm:$0xff]
  %v4738 = vld [vmem:[%s4736 + $0x8] sm:$0xff]
  %v4739 = vld [vmem:[%s4736 + $0x10] sm:$0xff]
  %v4740 = vld [vmem:[%s4736 + $0x18] sm:$0xff]
  %v4741 = vld [vmem:[%s4736 + $0x20] sm:$0xff]
  %v4742 = vld [vmem:[%s4736 + $0x28] sm:$0xff]
  %v4743 = vld [vmem:[%s4736 + $0x30] sm:$0xff]
  %v4744 = vld [vmem:[%s4736 + $0x38] sm:$0xff]
  %v4745 = vld [vmem:[%s4736 + $0x40] sm:$0xff]
  %v4746 = vld [vmem:[%s4736 + $0x48] sm:$0xff]
  %v4747 = vld [vmem:[%s4736 + $0x50] sm:$0xff]
  %v4748 = vld [vmem:[%s4736 + $0x58] sm:$0xff]
  %v4749 = vld [vmem:[%s4736 + $0x60] sm:$0xff]
  %v4750 = vld [vmem:[%s4736 + $0x68] sm:$0xff]
  %v4751 = vld [vmem:[%s4736 + $0x70] sm:$0xff]
  %v4752 = vld [vmem:[%s4736 + $0x78] sm:$0xff]
  %v4753 = vld [vmem:[%s4736 + $0x80] sm:$0xff]
  %v4754 = vld [vmem:[%s4736 + $0x88] sm:$0xff]
  %v4755 = vld [vmem:[%s4736 + $0x90] sm:$0xff]
  %v4756 = vld [vmem:[%s4736 + $0x98] sm:$0xff]
  %v4757 = vld [vmem:[%s4736 + $0xa0] sm:$0xff]
  %v4758 = vld [vmem:[%s4736 + $0xa8] sm:$0xff]
  %v4759 = vld [vmem:[%s4736 + $0xb0] sm:$0xff]
  %v4760 = vld [vmem:[%s4736 + $0xb8] sm:$0xff]
  %v4761 = vld [vmem:[%s4736 + $0xc0] sm:$0xff]
  %v4762 = vld [vmem:[%s4736 + $0xc8] sm:$0xff]
  %v4763 = vld [vmem:[%s4736 + $0xd0] sm:$0xff]
  %v4764 = vld [vmem:[%s4736 + $0xd8] sm:$0xff]
  %v4765 = vld [vmem:[%s4736 + $0xe0] sm:$0xff]
  %v4766 = vld [vmem:[%s4736 + $0xe8] sm:$0xff]
  %v4797 = vunpack.c.l.b16 %v4737
  %v4798 = vunpack.c.h.b16 %v4737
  %v4799 = vunpack.c.l.b16 %v4738
  %v4800 = vunpack.c.h.b16 %v4738
  %v4801 = vunpack.c.l.b16 %v4739
  %v4802 = vunpack.c.h.b16 %v4739
  %v4803 = vunpack.c.l.b16 %v4740
  %v4804 = vunpack.c.h.b16 %v4740
  %v4805 = vunpack.c.l.b16 %v4741
  %v4806 = vunpack.c.h.b16 %v4741
  %v4807 = vunpack.c.l.b16 %v4742
  %v4808 = vunpack.c.h.b16 %v4742
  %v4809 = vunpack.c.l.b16 %v4743
  %v4810 = vunpack.c.h.b16 %v4743
  %v4811 = vunpack.c.l.b16 %v4744
  %v4812 = vunpack.c.h.b16 %v4744
  %v4813 = vunpack.c.l.b16 %v4745
  %v4814 = vunpack.c.h.b16 %v4745
  %v4815 = vunpack.c.l.b16 %v4746
  %v4816 = vunpack.c.h.b16 %v4746
  %v4817 = vunpack.c.l.b16 %v4747
  %v4818 = vunpack.c.h.b16 %v4747
  %v4819 = vunpack.c.l.b16 %v4748
  %v4820 = vunpack.c.h.b16 %v4748
  %v4821 = vunpack.c.l.b16 %v4749
  %v4822 = vunpack.c.h.b16 %v4749
  %v4823 = vunpack.c.l.b16 %v4750
  %v4824 = vunpack.c.h.b16 %v4750
  %v4825 = vunpack.c.l.b16 %v4751
  %v4826 = vunpack.c.h.b16 %v4751
  %v4827 = vunpack.c.l.b16 %v4752
  %v4828 = vunpack.c.h.b16 %v4752
  %v4829 = vunpack.c.l.b16 %v4753
  %v4830 = vunpack.c.h.b16 %v4753
  %v4831 = vunpack.c.l.b16 %v4754
  %v4832 = vunpack.c.h.b16 %v4754
  %v4833 = vunpack.c.l.b16 %v4755
  %v4834 = vunpack.c.h.b16 %v4755
  %v4835 = vunpack.c.l.b16 %v4756
  %v4836 = vunpack.c.h.b16 %v4756
  %v4837 = vunpack.c.l.b16 %v4757
  %v4838 = vunpack.c.h.b16 %v4757
  %v4839 = vunpack.c.l.b16 %v4758
  %v4840 = vunpack.c.h.b16 %v4758
  %v4841 = vunpack.c.l.b16 %v4759
  %v4842 = vunpack.c.h.b16 %v4759
  %v4843 = vunpack.c.l.b16 %v4760
  %v4844 = vunpack.c.h.b16 %v4760
  %v4845 = vunpack.c.l.b16 %v4761
  %v4846 = vunpack.c.h.b16 %v4761
  %v4847 = vunpack.c.l.b16 %v4762
  %v4848 = vunpack.c.h.b16 %v4762
  %v4849 = vunpack.c.l.b16 %v4763
  %v4850 = vunpack.c.h.b16 %v4763
  %v4851 = vunpack.c.l.b16 %v4764
  %v4852 = vunpack.c.h.b16 %v4764
  %v4853 = vunpack.c.l.b16 %v4765
  %v4854 = vunpack.c.h.b16 %v4765
  %v4855 = vunpack.c.l.b16 %v4766
  %v4856 = vunpack.c.h.b16 %v4766
  %v4857 = vpack.c.b16 %v4799, %v4797
  %v4858 = vpack.c.b16 %v4800, %v4798
  %v4859 = vpack.c.b16 %v4803, %v4801
  %v4860 = vpack.c.b16 %v4804, %v4802
  %v4861 = vpack.c.b16 %v4807, %v4805
  %v4862 = vpack.c.b16 %v4808, %v4806
  %v4863 = vpack.c.b16 %v4811, %v4809
  %v4864 = vpack.c.b16 %v4812, %v4810
  %v4865 = vpack.c.b16 %v4815, %v4813
  %v4866 = vpack.c.b16 %v4816, %v4814
  %v4867 = vpack.c.b16 %v4819, %v4817
  %v4868 = vpack.c.b16 %v4820, %v4818
  %v4869 = vpack.c.b16 %v4823, %v4821
  %v4870 = vpack.c.b16 %v4824, %v4822
  %v4871 = vpack.c.b16 %v4827, %v4825
  %v4872 = vpack.c.b16 %v4828, %v4826
  %v4873 = vpack.c.b16 %v4831, %v4829
  %v4874 = vpack.c.b16 %v4832, %v4830
  %v4875 = vpack.c.b16 %v4835, %v4833
  %v4876 = vpack.c.b16 %v4836, %v4834
  %v4877 = vpack.c.b16 %v4839, %v4837
  %v4878 = vpack.c.b16 %v4840, %v4838
  %v4879 = vpack.c.b16 %v4843, %v4841
  %v4880 = vpack.c.b16 %v4844, %v4842
  %v4881 = vpack.c.b16 %v4847, %v4845
  %v4882 = vpack.c.b16 %v4848, %v4846
  %v4883 = vpack.c.b16 %v4851, %v4849
  %v4884 = vpack.c.b16 %v4852, %v4850
  %v4885 = vpack.c.b16 %v4855, %v4853
  %v4886 = vpack.c.b16 %v4856, %v4854
  %4917 = vmatpush.bf16.msra.mxu0 %v4871
  %4918 = vmatpush.bf16.msra.mxu0 %v4869
  %4919 = vmatpush.bf16.msra.mxu0 %v4867
  %4920 = vmatpush.bf16.msra.mxu0 %v4865
  %4921 = vmatpush.bf16.msra.mxu0 %v4863
  %4922 = vmatpush.bf16.msra.mxu0 %v4861
  %4923 = vmatpush.bf16.msra.mxu0 %v4859
  %4924 = vmatpush.bf16.msra.mxu0 %v4857
  %4925 = vmatmul.bf16.gmra.mxu0 %v2608
  %v4926 = vpop.f32.mrf.mxu0
  %v4927 = vadd.f32 0.0, %v4926
  %v4928 = vpop.f32.mrf.mxu0
  %v4929 = vadd.f32 0.0, %v4928
  %4930 = vmatmul.bf16.gmra.mxu0 %v2610
  %v4931 = vpop.f32.mrf.mxu0
  %v4932 = vadd.f32 0.0, %v4931
  %v4933 = vpop.f32.mrf.mxu0
  %v4934 = vadd.f32 0.0, %v4933
  %4935 = vmatmul.bf16.gmra.mxu0 %v3194
  %v4936 = vpop.f32.mrf.mxu0
  %v4937 = vadd.f32 0.0, %v4936
  %v4938 = vpop.f32.mrf.mxu0
  %v4939 = vadd.f32 0.0, %v4938
  %4940 = vmatmul.bf16.gmra.mxu0 %v4464
  %v4941 = vpop.f32.mrf.mxu0
  %v4942 = vadd.f32 0.0, %v4941
  %v4943 = vpop.f32.mrf.mxu0
  %v4944 = vadd.f32 0.0, %v4943
  %4945 = vdwg.mxu0
  %4946 = vmatpush.bf16.msra.mxu0 0
  %4947 = vmatpush.bf16.msra.mxu0 %v4885
  %4948 = vmatpush.bf16.msra.mxu0 %v4883
  %4949 = vmatpush.bf16.msra.mxu0 %v4881
  %4950 = vmatpush.bf16.msra.mxu0 %v4879
  %4951 = vmatpush.bf16.msra.mxu0 %v4877
  %4952 = vmatpush.bf16.msra.mxu0 %v4875
  %4953 = vmatpush.bf16.msra.mxu0 %v4873
  %4954 = vmatmul.bf16.gmra.mxu0 %v2773
  %v4955 = vpop.f32.mrf.mxu0
  %v4956 = vadd.f32 %v4927, %v4955
  %v4957 = vpop.f32.mrf.mxu0
  %v4958 = vadd.f32 %v4929, %v4957
  %4959 = vmatmul.bf16.gmra.mxu0 %v2776
  %v4960 = vpop.f32.mrf.mxu0
  %v4961 = vadd.f32 %v4932, %v4960
  %v4962 = vpop.f32.mrf.mxu0
  %v4963 = vadd.f32 %v4934, %v4962
  %4964 = vmatmul.bf16.gmra.mxu0 %v3348
  %v4965 = vpop.f32.mrf.mxu0
  %v4966 = vadd.f32 %v4937, %v4965
  %v4967 = vpop.f32.mrf.mxu0
  %v4968 = vadd.f32 %v4939, %v4967
  %4969 = vmatmul.bf16.gmra.mxu0 %v4618
  %v4970 = vpop.f32.mrf.mxu0
  %v4971 = vadd.f32 %v4942, %v4970
  %v4972 = vpop.f32.mrf.mxu0
  %v4973 = vadd.f32 %v4944, %v4972
  %4974 = vdwg.mxu0
  %4975 = vmatpush.bf16.msra.mxu0 %v4872
  %4976 = vmatpush.bf16.msra.mxu0 %v4870
  %4977 = vmatpush.bf16.msra.mxu0 %v4868
  %4978 = vmatpush.bf16.msra.mxu0 %v4866
  %4979 = vmatpush.bf16.msra.mxu0 %v4864
  %4980 = vmatpush.bf16.msra.mxu0 %v4862
  %4981 = vmatpush.bf16.msra.mxu0 %v4860
  %4982 = vmatpush.bf16.msra.mxu0 %v4858
  %4983 = vmatmul.bf16.gmra.mxu0 %v2608
  %v4984 = vpop.f32.mrf.mxu0
  %v4985 = vadd.f32 0.0, %v4984
  %v4986 = vpop.f32.mrf.mxu0
  %v4987 = vadd.f32 0.0, %v4986
  %4988 = vmatmul.bf16.gmra.mxu0 %v2610
  %v4989 = vpop.f32.mrf.mxu0
  %v4990 = vadd.f32 0.0, %v4989
  %v4991 = vpop.f32.mrf.mxu0
  %v4992 = vadd.f32 0.0, %v4991
  %4993 = vmatmul.bf16.gmra.mxu0 %v3194
  %v4994 = vpop.f32.mrf.mxu0
  %v4995 = vadd.f32 0.0, %v4994
  %v4996 = vpop.f32.mrf.mxu0
  %v4997 = vadd.f32 0.0, %v4996
  %4998 = vmatmul.bf16.gmra.mxu0 %v4464
  %v4999 = vpop.f32.mrf.mxu0
  %v5000 = vadd.f32 0.0, %v4999
  %v5001 = vpop.f32.mrf.mxu0
  %v5002 = vadd.f32 0.0, %v5001
  %5003 = vdwg.mxu0
  %5004 = vmatpush.bf16.msra.mxu0 0
  %5005 = vmatpush.bf16.msra.mxu0 %v4886
  %5006 = vmatpush.bf16.msra.mxu0 %v4884
  %5007 = vmatpush.bf16.msra.mxu0 %v4882
  %5008 = vmatpush.bf16.msra.mxu0 %v4880
  %5009 = vmatpush.bf16.msra.mxu0 %v4878
  %5010 = vmatpush.bf16.msra.mxu0 %v4876
  %5011 = vmatpush.bf16.msra.mxu0 %v4874
  %5012 = vmatmul.bf16.gmra.mxu0 %v2773
  %v5013 = vpop.f32.mrf.mxu0
  %v5014 = vadd.f32 %v4985, %v5013
  %v5015 = vpop.f32.mrf.mxu0
  %v5016 = vadd.f32 %v4987, %v5015
  %5017 = vmatmul.bf16.gmra.mxu0 %v2776
  %v5018 = vpop.f32.mrf.mxu0
  %v5019 = vadd.f32 %v4990, %v5018
  %v5020 = vpop.f32.mrf.mxu0
  %v5021 = vadd.f32 %v4992, %v5020
  %5022 = vmatmul.bf16.gmra.mxu0 %v3348
  %v5023 = vpop.f32.mrf.mxu0
  %v5024 = vadd.f32 %v4995, %v5023
  %v5025 = vpop.f32.mrf.mxu0
  %v5026 = vadd.f32 %v4997, %v5025
  %5027 = vmatmul.bf16.gmra.mxu0 %v4618
  %v5028 = vpop.f32.mrf.mxu0
  %v5029 = vadd.f32 %v5000, %v5028
  %v5030 = vpop.f32.mrf.mxu0
  %v5031 = vadd.f32 %v5002, %v5030
  %5032 = vdwg.mxu0
  %v5033 = vadd.f32 %v4398, %v4659
  %v5034 = vadd.f32 %v4399, %v4717
  %v5035 = vadd.f32 %v4400, %v4661
  %v5036 = vadd.f32 %v4401, %v4719
  %v5037 = vadd.f32 %v4402, %v4664
  %v5038 = vadd.f32 %v4403, %v4722
  %v5039 = vadd.f32 %v4404, %v4666
  %v5040 = vadd.f32 %v4405, %v4724
  %v5041 = vadd.f32 %v4406, %v4669
  %v5042 = vadd.f32 %v4407, %v4727
  %v5043 = vadd.f32 %v4408, %v4671
  %v5044 = vadd.f32 %v4409, %v4729
  %v5045 = vadd.f32 %v4410, %v4674
  %v5046 = vadd.f32 %v4411, %v4732
  %v5047 = vadd.f32 %v4412, %v4676
  %v5048 = vadd.f32 %v4413, %v4734
  %v5049 = vadd.f32 %v4414, %v4956
  %v5050 = vadd.f32 %v4415, %v5014
  %v5051 = vadd.f32 %v4416, %v4958
  %v5052 = vadd.f32 %v4417, %v5016
  %v5053 = vadd.f32 %v4418, %v4961
  %v5054 = vadd.f32 %v4419, %v5019
  %v5055 = vadd.f32 %v4420, %v4963
  %v5056 = vadd.f32 %v4421, %v5021
  %v5057 = vadd.f32 %v4422, %v4966
  %v5058 = vadd.f32 %v4423, %v5024
  %v5059 = vadd.f32 %v4424, %v4968
  %v5060 = vadd.f32 %v4425, %v5026
  %v5061 = vadd.f32 %v4426, %v4971
  %v5062 = vadd.f32 %v4427, %v5029
  %v5063 = vadd.f32 %v4428, %v4973
  %v5064 = vadd.f32 %v4429, %v5031
  %v5065 = vmax.f32 %v5033, %v5049
  %v5066 = vmax.f32 %v5034, %v5050
  %v5067 = vmax.f32 %v5035, %v5051
  %v5068 = vmax.f32 %v5036, %v5052
  %v5069 = vmax.f32 %v5037, %v5053
  %v5070 = vmax.f32 %v5038, %v5054
  %v5071 = vmax.f32 %v5039, %v5055
  %v5072 = vmax.f32 %v5040, %v5056
  %v5073 = vmax.f32 %v5041, %v5057
  %v5074 = vmax.f32 %v5042, %v5058
  %v5075 = vmax.f32 %v5043, %v5059
  %v5076 = vmax.f32 %v5044, %v5060
  %v5077 = vmax.f32 %v5045, %v5061
  %v5078 = vmax.f32 %v5046, %v5062
  %v5079 = vmax.f32 %v5047, %v5063
  %v5080 = vmax.f32 %v5048, %v5064
  %v5081 = vld [vmem:[%s4] sm:$0x3]
  %v5083 = vperm.slane %v5081, 0
  %v5084 = vperm.slane %v5081, 1
  %v5087 = vadd.f32 %v5065, %v5083
  %v5088 = vadd.f32 %v5066, %v5084
  %v5089 = vadd.f32 %v5067, %v5083
  %v5090 = vadd.f32 %v5068, %v5084
  %v5091 = vadd.f32 %v5069, %v5083
  %v5092 = vadd.f32 %v5070, %v5084
  %v5093 = vadd.f32 %v5071, %v5083
  %v5094 = vadd.f32 %v5072, %v5084
  %v5095 = vadd.f32 %v5073, %v5083
  %v5096 = vadd.f32 %v5074, %v5084
  %v5097 = vadd.f32 %v5075, %v5083
  %v5098 = vadd.f32 %v5076, %v5084
  %v5099 = vadd.f32 %v5077, %v5083
  %v5100 = vadd.f32 %v5078, %v5084
  %v5101 = vadd.f32 %v5079, %v5083
  %v5102 = vadd.f32 %v5080, %v5084
  %v5103 = vmax.f32 %v5087, 0.0
  %v5104 = vmax.f32 %v5088, 0.0
  %v5105 = vmax.f32 %v5089, 0.0
  %v5106 = vmax.f32 %v5090, 0.0
  %v5107 = vmax.f32 %v5091, 0.0
  %v5108 = vmax.f32 %v5092, 0.0
  %v5109 = vmax.f32 %v5093, 0.0
  %v5110 = vmax.f32 %v5094, 0.0
  %v5111 = vmax.f32 %v5095, 0.0
  %v5112 = vmax.f32 %v5096, 0.0
  %v5113 = vmax.f32 %v5097, 0.0
  %v5114 = vmax.f32 %v5098, 0.0
  %v5115 = vmax.f32 %v5099, 0.0
  %v5116 = vmax.f32 %v5100, 0.0
  %v5117 = vmax.f32 %v5101, 0.0
  %v5118 = vmax.f32 %v5102, 0.0
  %v5119 = vmax.f32 %v5103, %v5105
  %v5120 = vmax.f32 %v5104, %v5106
  %v5121 = vmax.f32 %v5107, %v5109
  %v5122 = vmax.f32 %v5108, %v5110
  %v5123 = vmax.f32 %v5111, %v5113
  %v5124 = vmax.f32 %v5112, %v5114
  %v5125 = vmax.f32 %v5115, %v5117
  %v5126 = vmax.f32 %v5116, %v5118
  %v5127 = vpack.c.bf16 %v5120, %v5119
  %v5128 = vpack.c.bf16 %v5122, %v5121
  %v5129 = vpack.c.bf16 %v5124, %v5123
  %v5130 = vpack.c.bf16 %v5126, %v5125
  %v5131 = vld [vmem:[%s5] sm:$0xff]
  %v5132 = vld [vmem:[%s5 + $0x8] sm:$0xff]
  %v5133 = vld [vmem:[%s5 + $0x10] sm:$0xff]
  %v5134 = vld [vmem:[%s5 + $0x18] sm:$0xff]
  %v5135 = vld [vmem:[%s5 + $0x20] sm:$0xff]
  %v5136 = vld [vmem:[%s5 + $0x28] sm:$0xff]
  %v5137 = vld [vmem:[%s5 + $0x30] sm:$0xff]
  %v5138 = vld [vmem:[%s5 + $0x38] sm:$0xff]
  %v5139 = vld [vmem:[%s5 + $0x40] sm:$0xff]
  %v5140 = vld [vmem:[%s5 + $0x48] sm:$0xff]
  %v5141 = vld [vmem:[%s5 + $0x50] sm:$0xff]
  %v5142 = vld [vmem:[%s5 + $0x58] sm:$0xff]
  %v5143 = vld [vmem:[%s5 + $0x60] sm:$0xff]
  %v5144 = vld [vmem:[%s5 + $0x68] sm:$0xff]
  %v5145 = vld [vmem:[%s5 + $0x70] sm:$0xff]
  %v5146 = vld [vmem:[%s5 + $0x78] sm:$0xff]
  %v5147 = vld [vmem:[%s5 + $0x80] sm:$0xff]
  %v5148 = vld [vmem:[%s5 + $0x88] sm:$0xff]
  %v5149 = vld [vmem:[%s5 + $0x90] sm:$0xff]
  %v5150 = vld [vmem:[%s5 + $0x98] sm:$0xff]
  %v5151 = vld [vmem:[%s5 + $0xa0] sm:$0xff]
  %v5152 = vld [vmem:[%s5 + $0xa8] sm:$0xff]
  %v5153 = vld [vmem:[%s5 + $0xb0] sm:$0xff]
  %v5154 = vld [vmem:[%s5 + $0xb8] sm:$0xff]
  %v5155 = vld [vmem:[%s5 + $0xc0] sm:$0xff]
  %v5156 = vld [vmem:[%s5 + $0xc8] sm:$0xff]
  %v5157 = vld [vmem:[%s5 + $0xd0] sm:$0xff]
  %v5158 = vld [vmem:[%s5 + $0xd8] sm:$0xff]
  %v5159 = vld [vmem:[%s5 + $0xe0] sm:$0xff]
  %v5160 = vld [vmem:[%s5 + $0xe8] sm:$0xff]
  %v5161 = vld [vmem:[%s5 + $0xf0] sm:$0xff]
  %v5162 = vld [vmem:[%s5 + $0xf8] sm:$0xff]
  %v5163 = vld [vmem:[%s5 + $0x100] sm:$0xff]
  %v5164 = vld [vmem:[%s5 + $0x108] sm:$0xff]
  %v5165 = vld [vmem:[%s5 + $0x110] sm:$0xff]
  %v5166 = vld [vmem:[%s5 + $0x118] sm:$0xff]
  %v5167 = vld [vmem:[%s5 + $0x120] sm:$0xff]
  %v5168 = vld [vmem:[%s5 + $0x128] sm:$0xff]
  %v5169 = vld [vmem:[%s5 + $0x130] sm:$0xff]
  %v5170 = vld [vmem:[%s5 + $0x138] sm:$0xff]
  %v5171 = vld [vmem:[%s5 + $0x140] sm:$0xff]
  %v5172 = vld [vmem:[%s5 + $0x148] sm:$0xff]
  %v5173 = vld [vmem:[%s5 + $0x150] sm:$0xff]
  %v5174 = vld [vmem:[%s5 + $0x158] sm:$0xff]
  %v5175 = vld [vmem:[%s5 + $0x160] sm:$0xff]
  %v5176 = vld [vmem:[%s5 + $0x168] sm:$0xff]
  %v5177 = vld [vmem:[%s5 + $0x170] sm:$0xff]
  %v5178 = vld [vmem:[%s5 + $0x178] sm:$0xff]
  %v5179 = vld [vmem:[%s5 + $0x180] sm:$0xff]
  %v5180 = vld [vmem:[%s5 + $0x188] sm:$0xff]
  %s5181 = scalar_lea.vmem %s5, 400
  %v5182 = vld [vmem:[%s5181] sm:$0xff]
  %v5183 = vld [vmem:[%s5181 + $0x8] sm:$0xff]
  %v5184 = vld [vmem:[%s5181 + $0x10] sm:$0xff]
  %v5185 = vld [vmem:[%s5181 + $0x18] sm:$0xff]
  %v5186 = vld [vmem:[%s5181 + $0x20] sm:$0xff]
  %v5187 = vld [vmem:[%s5181 + $0x28] sm:$0xff]
  %v5188 = vld [vmem:[%s5181 + $0x30] sm:$0xff]
  %v5189 = vld [vmem:[%s5181 + $0x38] sm:$0xff]
  %v5190 = vld [vmem:[%s5181 + $0x40] sm:$0xff]
  %v5191 = vld [vmem:[%s5181 + $0x48] sm:$0xff]
  %v5192 = vld [vmem:[%s5181 + $0x50] sm:$0xff]
  %v5193 = vld [vmem:[%s5181 + $0x58] sm:$0xff]
  %v5194 = vld [vmem:[%s5181 + $0x60] sm:$0xff]
  %v5195 = vld [vmem:[%s5181 + $0x68] sm:$0xff]
  %v5196 = vld [vmem:[%s5181 + $0x70] sm:$0xff]
  %v5197 = vld [vmem:[%s5181 + $0x78] sm:$0xff]
  %v5198 = vld [vmem:[%s5181 + $0x80] sm:$0xff]
  %v5199 = vld [vmem:[%s5181 + $0x88] sm:$0xff]
  %v5200 = vld [vmem:[%s5181 + $0x90] sm:$0xff]
  %v5201 = vld [vmem:[%s5181 + $0x98] sm:$0xff]
  %v5202 = vld [vmem:[%s5181 + $0xa0] sm:$0xff]
  %v5203 = vld [vmem:[%s5181 + $0xa8] sm:$0xff]
  %v5204 = vld [vmem:[%s5181 + $0xb0] sm:$0xff]
  %v5205 = vld [vmem:[%s5181 + $0xb8] sm:$0xff]
  %v5206 = vld [vmem:[%s5181 + $0xc0] sm:$0xff]
  %v5207 = vld [vmem:[%s5181 + $0xc8] sm:$0xff]
  %v5208 = vld [vmem:[%s5181 + $0xd0] sm:$0xff]
  %v5209 = vld [vmem:[%s5181 + $0xd8] sm:$0xff]
  %v5210 = vld [vmem:[%s5181 + $0xe0] sm:$0xff]
  %v5211 = vld [vmem:[%s5181 + $0xe8] sm:$0xff]
  %v5212 = vld [vmem:[%s5181 + $0xf0] sm:$0xff]
  %v5213 = vld [vmem:[%s5181 + $0xf8] sm:$0xff]
  %v5214 = vld [vmem:[%s5181 + $0x100] sm:$0xff]
  %v5215 = vld [vmem:[%s5181 + $0x108] sm:$0xff]
  %v5216 = vld [vmem:[%s5181 + $0x110] sm:$0xff]
  %v5217 = vld [vmem:[%s5181 + $0x118] sm:$0xff]
  %v5218 = vld [vmem:[%s5181 + $0x120] sm:$0xff]
  %v5219 = vld [vmem:[%s5181 + $0x128] sm:$0xff]
  %v5220 = vld [vmem:[%s5181 + $0x130] sm:$0xff]
  %v5221 = vld [vmem:[%s5181 + $0x138] sm:$0xff]
  %v5222 = vld [vmem:[%s5181 + $0x140] sm:$0xff]
  %v5223 = vld [vmem:[%s5181 + $0x148] sm:$0xff]
  %v5224 = vld [vmem:[%s5181 + $0x150] sm:$0xff]
  %v5225 = vld [vmem:[%s5181 + $0x158] sm:$0xff]
  %v5226 = vld [vmem:[%s5181 + $0x160] sm:$0xff]
  %v5227 = vld [vmem:[%s5181 + $0x168] sm:$0xff]
  %v5228 = vld [vmem:[%s5181 + $0x170] sm:$0xff]
  %v5229 = vld [vmem:[%s5181 + $0x178] sm:$0xff]
  %v5230 = vld [vmem:[%s5181 + $0x180] sm:$0xff]
  %v5231 = vld [vmem:[%s5181 + $0x188] sm:$0xff]
  %v5233 = vunpack.c.l.b16 %v5128
  %v5234 = vunpack.c.h.b16 %v5128
  %v5235 = vpack.c.b16 %v5233, %v5233
  %v5236 = vpack.c.b16 %v5234, %v5234
  %v5288 = vunpack.c.l.b16 %v5182
  %v5289 = vunpack.c.h.b16 %v5182
  %v5290 = vunpack.c.l.b16 %v5183
  %v5291 = vunpack.c.h.b16 %v5183
  %v5292 = vunpack.c.l.b16 %v5184
  %v5293 = vunpack.c.h.b16 %v5184
  %v5294 = vunpack.c.l.b16 %v5185
  %v5295 = vunpack.c.h.b16 %v5185
  %v5296 = vunpack.c.l.b16 %v5186
  %v5297 = vunpack.c.h.b16 %v5186
  %v5298 = vunpack.c.l.b16 %v5187
  %v5299 = vunpack.c.h.b16 %v5187
  %v5300 = vunpack.c.l.b16 %v5188
  %v5301 = vunpack.c.h.b16 %v5188
  %v5302 = vunpack.c.l.b16 %v5189
  %v5303 = vunpack.c.h.b16 %v5189
  %v5304 = vunpack.c.l.b16 %v5190
  %v5305 = vunpack.c.h.b16 %v5190
  %v5306 = vunpack.c.l.b16 %v5191
  %v5307 = vunpack.c.h.b16 %v5191
  %v5308 = vunpack.c.l.b16 %v5192
  %v5309 = vunpack.c.h.b16 %v5192
  %v5310 = vunpack.c.l.b16 %v5193
  %v5311 = vunpack.c.h.b16 %v5193
  %v5312 = vunpack.c.l.b16 %v5194
  %v5313 = vunpack.c.h.b16 %v5194
  %v5314 = vunpack.c.l.b16 %v5195
  %v5315 = vunpack.c.h.b16 %v5195
  %v5316 = vunpack.c.l.b16 %v5196
  %v5317 = vunpack.c.h.b16 %v5196
  %v5318 = vunpack.c.l.b16 %v5197
  %v5319 = vunpack.c.h.b16 %v5197
  %v5320 = vunpack.c.l.b16 %v5198
  %v5321 = vunpack.c.h.b16 %v5198
  %v5322 = vunpack.c.l.b16 %v5199
  %v5323 = vunpack.c.h.b16 %v5199
  %v5324 = vunpack.c.l.b16 %v5200
  %v5325 = vunpack.c.h.b16 %v5200
  %v5326 = vunpack.c.l.b16 %v5201
  %v5327 = vunpack.c.h.b16 %v5201
  %v5328 = vunpack.c.l.b16 %v5202
  %v5329 = vunpack.c.h.b16 %v5202
  %v5330 = vunpack.c.l.b16 %v5203
  %v5331 = vunpack.c.h.b16 %v5203
  %v5332 = vunpack.c.l.b16 %v5204
  %v5333 = vunpack.c.h.b16 %v5204
  %v5334 = vunpack.c.l.b16 %v5205
  %v5335 = vunpack.c.h.b16 %v5205
  %v5336 = vunpack.c.l.b16 %v5206
  %v5337 = vunpack.c.h.b16 %v5206
  %v5338 = vunpack.c.l.b16 %v5207
  %v5339 = vunpack.c.h.b16 %v5207
  %v5340 = vunpack.c.l.b16 %v5208
  %v5341 = vunpack.c.h.b16 %v5208
  %v5342 = vunpack.c.l.b16 %v5209
  %v5343 = vunpack.c.h.b16 %v5209
  %v5344 = vunpack.c.l.b16 %v5210
  %v5345 = vunpack.c.h.b16 %v5210
  %v5346 = vunpack.c.l.b16 %v5211
  %v5347 = vunpack.c.h.b16 %v5211
  %v5348 = vunpack.c.l.b16 %v5212
  %v5349 = vunpack.c.h.b16 %v5212
  %v5350 = vunpack.c.l.b16 %v5213
  %v5351 = vunpack.c.h.b16 %v5213
  %v5352 = vunpack.c.l.b16 %v5214
  %v5353 = vunpack.c.h.b16 %v5214
  %v5354 = vunpack.c.l.b16 %v5215
  %v5355 = vunpack.c.h.b16 %v5215
  %v5356 = vunpack.c.l.b16 %v5216
  %v5357 = vunpack.c.h.b16 %v5216
  %v5358 = vunpack.c.l.b16 %v5217
  %v5359 = vunpack.c.h.b16 %v5217
  %v5360 = vunpack.c.l.b16 %v5218
  %v5361 = vunpack.c.h.b16 %v5218
  %v5362 = vunpack.c.l.b16 %v5219
  %v5363 = vunpack.c.h.b16 %v5219
  %v5364 = vunpack.c.l.b16 %v5220
  %v5365 = vunpack.c.h.b16 %v5220
  %v5366 = vunpack.c.l.b16 %v5221
  %v5367 = vunpack.c.h.b16 %v5221
  %v5368 = vunpack.c.l.b16 %v5222
  %v5369 = vunpack.c.h.b16 %v5222
  %v5370 = vunpack.c.l.b16 %v5223
  %v5371 = vunpack.c.h.b16 %v5223
  %v5372 = vunpack.c.l.b16 %v5224
  %v5373 = vunpack.c.h.b16 %v5224
  %v5374 = vunpack.c.l.b16 %v5225
  %v5375 = vunpack.c.h.b16 %v5225
  %v5376 = vunpack.c.l.b16 %v5226
  %v5377 = vunpack.c.h.b16 %v5226
  %v5378 = vunpack.c.l.b16 %v5227
  %v5379 = vunpack.c.h.b16 %v5227
  %v5380 = vunpack.c.l.b16 %v5228
  %v5381 = vunpack.c.h.b16 %v5228
  %v5382 = vunpack.c.l.b16 %v5229
  %v5383 = vunpack.c.h.b16 %v5229
  %v5384 = vunpack.c.l.b16 %v5230
  %v5385 = vunpack.c.h.b16 %v5230
  %v5386 = vunpack.c.l.b16 %v5231
  %v5387 = vunpack.c.h.b16 %v5231
  %v5388 = vpack.c.b16 %v5292, %v5288
  %v5389 = vpack.c.b16 %v5293, %v5289
  %v5390 = vpack.c.b16 %v5294, %v5290
  %v5391 = vpack.c.b16 %v5295, %v5291
  %v5392 = vpack.c.b16 %v5300, %v5296
  %v5393 = vpack.c.b16 %v5301, %v5297
  %v5394 = vpack.c.b16 %v5302, %v5298
  %v5395 = vpack.c.b16 %v5303, %v5299
  %v5396 = vpack.c.b16 %v5308, %v5304
  %v5397 = vpack.c.b16 %v5309, %v5305
  %v5398 = vpack.c.b16 %v5310, %v5306
  %v5399 = vpack.c.b16 %v5311, %v5307
  %v5400 = vpack.c.b16 %v5316, %v5312
  %v5401 = vpack.c.b16 %v5317, %v5313
  %v5402 = vpack.c.b16 %v5318, %v5314
  %v5403 = vpack.c.b16 %v5319, %v5315
  %v5404 = vpack.c.b16 %v5324, %v5320
  %v5405 = vpack.c.b16 %v5325, %v5321
  %v5406 = vpack.c.b16 %v5326, %v5322
  %v5407 = vpack.c.b16 %v5327, %v5323
  %v5408 = vpack.c.b16 %v5332, %v5328
  %v5409 = vpack.c.b16 %v5333, %v5329
  %v5410 = vpack.c.b16 %v5334, %v5330
  %v5411 = vpack.c.b16 %v5335, %v5331
  %v5412 = vpack.c.b16 %v5340, %v5336
  %v5413 = vpack.c.b16 %v5341, %v5337
  %v5414 = vpack.c.b16 %v5342, %v5338
  %v5415 = vpack.c.b16 %v5343, %v5339
  %v5416 = vpack.c.b16 %v5348, %v5344
  %v5417 = vpack.c.b16 %v5349, %v5345
  %v5418 = vpack.c.b16 %v5350, %v5346
  %v5419 = vpack.c.b16 %v5351, %v5347
  %v5420 = vpack.c.b16 %v5356, %v5352
  %v5421 = vpack.c.b16 %v5357, %v5353
  %v5422 = vpack.c.b16 %v5358, %v5354
  %v5423 = vpack.c.b16 %v5359, %v5355
  %v5424 = vpack.c.b16 %v5364, %v5360
  %v5425 = vpack.c.b16 %v5365, %v5361
  %v5426 = vpack.c.b16 %v5366, %v5362
  %v5427 = vpack.c.b16 %v5367, %v5363
  %v5428 = vpack.c.b16 %v5372, %v5368
  %v5429 = vpack.c.b16 %v5373, %v5369
  %v5430 = vpack.c.b16 %v5374, %v5370
  %v5431 = vpack.c.b16 %v5375, %v5371
  %v5432 = vpack.c.b16 %v5380, %v5376
  %v5433 = vpack.c.b16 %v5381, %v5377
  %v5434 = vpack.c.b16 %v5382, %v5378
  %v5435 = vpack.c.b16 %v5383, %v5379
  %v5436 = vpack.c.b16 %v5384, %v5384
  %v5437 = vpack.c.b16 %v5385, %v5385
  %v5438 = vpack.c.b16 %v5386, %v5386
  %v5439 = vpack.c.b16 %v5387, %v5387
  %vm5488 = vcmask 588800
  %v5490 = vsel %vm5488, %v5236, 0
  %vm5492 = vcmask 1043456
  %v5494 = vsel %vm5492, %v5436, 0
  %v5497 = vsel %vm5492, %v5437, 0
  %v5500 = vsel %vm5492, %v5438, 0
  %v5503 = vsel %vm5492, %v5439, 0
  %5505 = vmatpush.bf16.msra.mxu0 %v5416
  %5506 = vmatpush.bf16.msra.mxu0 %v5412
  %5507 = vmatpush.bf16.msra.mxu0 %v5408
  %5508 = vmatpush.bf16.msra.mxu0 %v5404
  %5509 = vmatpush.bf16.msra.mxu0 %v5400
  %5510 = vmatpush.bf16.msra.mxu0 %v5396
  %5511 = vmatpush.bf16.msra.mxu0 %v5392
  %5512 = vmatpush.bf16.msra.mxu0 %v5388
  %5513 = vmatmul.bf16.gmra.mxu0 %v5235
  %v5514 = vpop.f32.mrf.mxu0
  %v5515 = vadd.f32 0.0, %v5514
  %v5516 = vpop.f32.mrf.mxu0
  %5517 = vdwg.mxu0
  %5518 = vmatpush.bf16.msra.mxu0 0
  %5519 = vmatpush.bf16.msra.mxu0 0
  %5520 = vmatpush.bf16.msra.mxu0 0
  %5521 = vmatpush.bf16.msra.mxu0 %v5494
  %5522 = vmatpush.bf16.msra.mxu0 %v5432
  %5523 = vmatpush.bf16.msra.mxu0 %v5428
  %5524 = vmatpush.bf16.msra.mxu0 %v5424
  %5525 = vmatpush.bf16.msra.mxu0 %v5420
  %5526 = vmatmul.bf16.gmra.mxu0 %v5490
  %v5527 = vpop.f32.mrf.mxu0
  %v5528 = vadd.f32 %v5515, %v5527
  %v5529 = vpop.f32.mrf.mxu0
  %5530 = vdwg.mxu0
  %5531 = vmatpush.bf16.msra.mxu0 %v5417
  %5532 = vmatpush.bf16.msra.mxu0 %v5413
  %5533 = vmatpush.bf16.msra.mxu0 %v5409
  %5534 = vmatpush.bf16.msra.mxu0 %v5405
  %5535 = vmatpush.bf16.msra.mxu0 %v5401
  %5536 = vmatpush.bf16.msra.mxu0 %v5397
  %5537 = vmatpush.bf16.msra.mxu0 %v5393
  %5538 = vmatpush.bf16.msra.mxu0 %v5389
  %5539 = vmatmul.bf16.gmra.mxu0 %v5235
  %v5540 = vpop.f32.mrf.mxu0
  %v5541 = vadd.f32 0.0, %v5540
  %v5542 = vpop.f32.mrf.mxu0
  %5543 = vdwg.mxu0
  %5544 = vmatpush.bf16.msra.mxu0 0
  %5545 = vmatpush.bf16.msra.mxu0 0
  %5546 = vmatpush.bf16.msra.mxu0 0
  %5547 = vmatpush.bf16.msra.mxu0 %v5497
  %5548 = vmatpush.bf16.msra.mxu0 %v5433
  %5549 = vmatpush.bf16.msra.mxu0 %v5429
  %5550 = vmatpush.bf16.msra.mxu0 %v5425
  %5551 = vmatpush.bf16.msra.mxu0 %v5421
  %5552 = vmatmul.bf16.gmra.mxu0 %v5490
  %v5553 = vpop.f32.mrf.mxu0
  %v5554 = vadd.f32 %v5541, %v5553
  %v5555 = vpop.f32.mrf.mxu0
  %5556 = vdwg.mxu0
  %5557 = vmatpush.bf16.msra.mxu0 %v5418
  %5558 = vmatpush.bf16.msra.mxu0 %v5414
  %5559 = vmatpush.bf16.msra.mxu0 %v5410
  %5560 = vmatpush.bf16.msra.mxu0 %v5406
  %5561 = vmatpush.bf16.msra.mxu0 %v5402
  %5562 = vmatpush.bf16.msra.mxu0 %v5398
  %5563 = vmatpush.bf16.msra.mxu0 %v5394
  %5564 = vmatpush.bf16.msra.mxu0 %v5390
  %5565 = vmatmul.bf16.gmra.mxu0 %v5235
  %v5566 = vpop.f32.mrf.mxu0
  %v5567 = vadd.f32 0.0, %v5566
  %v5568 = vpop.f32.mrf.mxu0
  %5569 = vdwg.mxu0
  %5570 = vmatpush.bf16.msra.mxu0 0
  %5571 = vmatpush.bf16.msra.mxu0 0
  %5572 = vmatpush.bf16.msra.mxu0 0
  %5573 = vmatpush.bf16.msra.mxu0 %v5500
  %5574 = vmatpush.bf16.msra.mxu0 %v5434
  %5575 = vmatpush.bf16.msra.mxu0 %v5430
  %5576 = vmatpush.bf16.msra.mxu0 %v5426
  %5577 = vmatpush.bf16.msra.mxu0 %v5422
  %5578 = vmatmul.bf16.gmra.mxu0 %v5490
  %v5579 = vpop.f32.mrf.mxu0
  %v5580 = vadd.f32 %v5567, %v5579
  %v5581 = vpop.f32.mrf.mxu0
  %5582 = vdwg.mxu0
  %5583 = vmatpush.bf16.msra.mxu0 %v5419
  %5584 = vmatpush.bf16.msra.mxu0 %v5415
  %5585 = vmatpush.bf16.msra.mxu0 %v5411
  %5586 = vmatpush.bf16.msra.mxu0 %v5407
  %5587 = vmatpush.bf16.msra.mxu0 %v5403
  %5588 = vmatpush.bf16.msra.mxu0 %v5399
  %5589 = vmatpush.bf16.msra.mxu0 %v5395
  %5590 = vmatpush.bf16.msra.mxu0 %v5391
  %5591 = vmatmul.bf16.gmra.mxu0 %v5235
  %v5592 = vpop.f32.mrf.mxu0
  %v5593 = vadd.f32 0.0, %v5592
  %v5594 = vpop.f32.mrf.mxu0
  %5595 = vdwg.mxu0
  %5596 = vmatpush.bf16.msra.mxu0 0
  %5597 = vmatpush.bf16.msra.mxu0 0
  %5598 = vmatpush.bf16.msra.mxu0 0
  %5599 = vmatpush.bf16.msra.mxu0 %v5503
  %5600 = vmatpush.bf16.msra.mxu0 %v5435
  %5601 = vmatpush.bf16.msra.mxu0 %v5431
  %5602 = vmatpush.bf16.msra.mxu0 %v5427
  %5603 = vmatpush.bf16.msra.mxu0 %v5423
  %5604 = vmatmul.bf16.gmra.mxu0 %v5490
  %v5605 = vpop.f32.mrf.mxu0
  %v5606 = vadd.f32 %v5593, %v5605
  %v5607 = vpop.f32.mrf.mxu0
  %5608 = vdwg.mxu0
  %v5610 = vunpack.c.l.b16 %v5127
  %v5611 = vunpack.c.h.b16 %v5127
  %v5612 = vpack.c.b16 %v5610, %v5610
  %v5613 = vpack.c.b16 %v5611, %v5611
  %v5665 = vunpack.c.l.b16 %v5131
  %v5666 = vunpack.c.h.b16 %v5131
  %v5667 = vunpack.c.l.b16 %v5132
  %v5668 = vunpack.c.h.b16 %v5132
  %v5669 = vunpack.c.l.b16 %v5133
  %v5670 = vunpack.c.h.b16 %v5133
  %v5671 = vunpack.c.l.b16 %v5134
  %v5672 = vunpack.c.h.b16 %v5134
  %v5673 = vunpack.c.l.b16 %v5135
  %v5674 = vunpack.c.h.b16 %v5135
  %v5675 = vunpack.c.l.b16 %v5136
  %v5676 = vunpack.c.h.b16 %v5136
  %v5677 = vunpack.c.l.b16 %v5137
  %v5678 = vunpack.c.h.b16 %v5137
  %v5679 = vunpack.c.l.b16 %v5138
  %v5680 = vunpack.c.h.b16 %v5138
  %v5681 = vunpack.c.l.b16 %v5139
  %v5682 = vunpack.c.h.b16 %v5139
  %v5683 = vunpack.c.l.b16 %v5140
  %v5684 = vunpack.c.h.b16 %v5140
  %v5685 = vunpack.c.l.b16 %v5141
  %v5686 = vunpack.c.h.b16 %v5141
  %v5687 = vunpack.c.l.b16 %v5142
  %v5688 = vunpack.c.h.b16 %v5142
  %v5689 = vunpack.c.l.b16 %v5143
  %v5690 = vunpack.c.h.b16 %v5143
  %v5691 = vunpack.c.l.b16 %v5144
  %v5692 = vunpack.c.h.b16 %v5144
  %v5693 = vunpack.c.l.b16 %v5145
  %v5694 = vunpack.c.h.b16 %v5145
  %v5695 = vunpack.c.l.b16 %v5146
  %v5696 = vunpack.c.h.b16 %v5146
  %v5697 = vunpack.c.l.b16 %v5147
  %v5698 = vunpack.c.h.b16 %v5147
  %v5699 = vunpack.c.l.b16 %v5148
  %v5700 = vunpack.c.h.b16 %v5148
  %v5701 = vunpack.c.l.b16 %v5149
  %v5702 = vunpack.c.h.b16 %v5149
  %v5703 = vunpack.c.l.b16 %v5150
  %v5704 = vunpack.c.h.b16 %v5150
  %v5705 = vunpack.c.l.b16 %v5151
  %v5706 = vunpack.c.h.b16 %v5151
  %v5707 = vunpack.c.l.b16 %v5152
  %v5708 = vunpack.c.h.b16 %v5152
  %v5709 = vunpack.c.l.b16 %v5153
  %v5710 = vunpack.c.h.b16 %v5153
  %v5711 = vunpack.c.l.b16 %v5154
  %v5712 = vunpack.c.h.b16 %v5154
  %v5713 = vunpack.c.l.b16 %v5155
  %v5714 = vunpack.c.h.b16 %v5155
  %v5715 = vunpack.c.l.b16 %v5156
  %v5716 = vunpack.c.h.b16 %v5156
  %v5717 = vunpack.c.l.b16 %v5157
  %v5718 = vunpack.c.h.b16 %v5157
  %v5719 = vunpack.c.l.b16 %v5158
  %v5720 = vunpack.c.h.b16 %v5158
  %v5721 = vunpack.c.l.b16 %v5159
  %v5722 = vunpack.c.h.b16 %v5159
  %v5723 = vunpack.c.l.b16 %v5160
  %v5724 = vunpack.c.h.b16 %v5160
  %v5725 = vunpack.c.l.b16 %v5161
  %v5726 = vunpack.c.h.b16 %v5161
  %v5727 = vunpack.c.l.b16 %v5162
  %v5728 = vunpack.c.h.b16 %v5162
  %v5729 = vunpack.c.l.b16 %v5163
  %v5730 = vunpack.c.h.b16 %v5163
  %v5731 = vunpack.c.l.b16 %v5164
  %v5732 = vunpack.c.h.b16 %v5164
  %v5733 = vunpack.c.l.b16 %v5165
  %v5734 = vunpack.c.h.b16 %v5165
  %v5735 = vunpack.c.l.b16 %v5166
  %v5736 = vunpack.c.h.b16 %v5166
  %v5737 = vunpack.c.l.b16 %v5167
  %v5738 = vunpack.c.h.b16 %v5167
  %v5739 = vunpack.c.l.b16 %v5168
  %v5740 = vunpack.c.h.b16 %v5168
  %v5741 = vunpack.c.l.b16 %v5169
  %v5742 = vunpack.c.h.b16 %v5169
  %v5743 = vunpack.c.l.b16 %v5170
  %v5744 = vunpack.c.h.b16 %v5170
  %v5745 = vunpack.c.l.b16 %v5171
  %v5746 = vunpack.c.h.b16 %v5171
  %v5747 = vunpack.c.l.b16 %v5172
  %v5748 = vunpack.c.h.b16 %v5172
  %v5749 = vunpack.c.l.b16 %v5173
  %v5750 = vunpack.c.h.b16 %v5173
  %v5751 = vunpack.c.l.b16 %v5174
  %v5752 = vunpack.c.h.b16 %v5174
  %v5753 = vunpack.c.l.b16 %v5175
  %v5754 = vunpack.c.h.b16 %v5175
  %v5755 = vunpack.c.l.b16 %v5176
  %v5756 = vunpack.c.h.b16 %v5176
  %v5757 = vunpack.c.l.b16 %v5177
  %v5758 = vunpack.c.h.b16 %v5177
  %v5759 = vunpack.c.l.b16 %v5178
  %v5760 = vunpack.c.h.b16 %v5178
  %v5761 = vunpack.c.l.b16 %v5179
  %v5762 = vunpack.c.h.b16 %v5179
  %v5763 = vunpack.c.l.b16 %v5180
  %v5764 = vunpack.c.h.b16 %v5180
  %v5765 = vpack.c.b16 %v5669, %v5665
  %v5766 = vpack.c.b16 %v5670, %v5666
  %v5767 = vpack.c.b16 %v5671, %v5667
  %v5768 = vpack.c.b16 %v5672, %v5668
  %v5769 = vpack.c.b16 %v5677, %v5673
  %v5770 = vpack.c.b16 %v5678, %v5674
  %v5771 = vpack.c.b16 %v5679, %v5675
  %v5772 = vpack.c.b16 %v5680, %v5676
  %v5773 = vpack.c.b16 %v5685, %v5681
  %v5774 = vpack.c.b16 %v5686, %v5682
  %v5775 = vpack.c.b16 %v5687, %v5683
  %v5776 = vpack.c.b16 %v5688, %v5684
  %v5777 = vpack.c.b16 %v5693, %v5689
  %v5778 = vpack.c.b16 %v5694, %v5690
  %v5779 = vpack.c.b16 %v5695, %v5691
  %v5780 = vpack.c.b16 %v5696, %v5692
  %v5781 = vpack.c.b16 %v5701, %v5697
  %v5782 = vpack.c.b16 %v5702, %v5698
  %v5783 = vpack.c.b16 %v5703, %v5699
  %v5784 = vpack.c.b16 %v5704, %v5700
  %v5785 = vpack.c.b16 %v5709, %v5705
  %v5786 = vpack.c.b16 %v5710, %v5706
  %v5787 = vpack.c.b16 %v5711, %v5707
  %v5788 = vpack.c.b16 %v5712, %v5708
  %v5789 = vpack.c.b16 %v5717, %v5713
  %v5790 = vpack.c.b16 %v5718, %v5714
  %v5791 = vpack.c.b16 %v5719, %v5715
  %v5792 = vpack.c.b16 %v5720, %v5716
  %v5793 = vpack.c.b16 %v5725, %v5721
  %v5794 = vpack.c.b16 %v5726, %v5722
  %v5795 = vpack.c.b16 %v5727, %v5723
  %v5796 = vpack.c.b16 %v5728, %v5724
  %v5797 = vpack.c.b16 %v5733, %v5729
  %v5798 = vpack.c.b16 %v5734, %v5730
  %v5799 = vpack.c.b16 %v5735, %v5731
  %v5800 = vpack.c.b16 %v5736, %v5732
  %v5801 = vpack.c.b16 %v5741, %v5737
  %v5802 = vpack.c.b16 %v5742, %v5738
  %v5803 = vpack.c.b16 %v5743, %v5739
  %v5804 = vpack.c.b16 %v5744, %v5740
  %v5805 = vpack.c.b16 %v5749, %v5745
  %v5806 = vpack.c.b16 %v5750, %v5746
  %v5807 = vpack.c.b16 %v5751, %v5747
  %v5808 = vpack.c.b16 %v5752, %v5748
  %v5809 = vpack.c.b16 %v5757, %v5753
  %v5810 = vpack.c.b16 %v5758, %v5754
  %v5811 = vpack.c.b16 %v5759, %v5755
  %v5812 = vpack.c.b16 %v5760, %v5756
  %v5813 = vpack.c.b16 %v5761, %v5761
  %v5814 = vpack.c.b16 %v5762, %v5762
  %v5815 = vpack.c.b16 %v5763, %v5763
  %v5816 = vpack.c.b16 %v5764, %v5764
  %v5866 = vsel %vm5488, %v5613, 0
  %v5869 = vsel %vm5492, %v5813, 0
  %v5872 = vsel %vm5492, %v5814, 0
  %v5875 = vsel %vm5492, %v5815, 0
  %v5878 = vsel %vm5492, %v5816, 0
  %5880 = vmatpush.bf16.msra.mxu0 %v5793
  %5881 = vmatpush.bf16.msra.mxu0 %v5789
  %5882 = vmatpush.bf16.msra.mxu0 %v5785
  %5883 = vmatpush.bf16.msra.mxu0 %v5781
  %5884 = vmatpush.bf16.msra.mxu0 %v5777
  %5885 = vmatpush.bf16.msra.mxu0 %v5773
  %5886 = vmatpush.bf16.msra.mxu0 %v5769
  %5887 = vmatpush.bf16.msra.mxu0 %v5765
  %5888 = vmatmul.bf16.gmra.mxu0 %v5612
  %v5889 = vpop.f32.mrf.mxu0
  %v5890 = vadd.f32 %v5528, %v5889
  %v5891 = vpop.f32.mrf.mxu0
  %5892 = vdwg.mxu0
  %5893 = vmatpush.bf16.msra.mxu0 0
  %5894 = vmatpush.bf16.msra.mxu0 0
  %5895 = vmatpush.bf16.msra.mxu0 0
  %5896 = vmatpush.bf16.msra.mxu0 %v5869
  %5897 = vmatpush.bf16.msra.mxu0 %v5809
  %5898 = vmatpush.bf16.msra.mxu0 %v5805
  %5899 = vmatpush.bf16.msra.mxu0 %v5801
  %5900 = vmatpush.bf16.msra.mxu0 %v5797
  %5901 = vmatmul.bf16.gmra.mxu0 %v5866
  %v5902 = vpop.f32.mrf.mxu0
  %v5903 = vadd.f32 %v5890, %v5902
  %v5904 = vpop.f32.mrf.mxu0
  %5905 = vdwg.mxu0
  %5906 = vmatpush.bf16.msra.mxu0 %v5794
  %5907 = vmatpush.bf16.msra.mxu0 %v5790
  %5908 = vmatpush.bf16.msra.mxu0 %v5786
  %5909 = vmatpush.bf16.msra.mxu0 %v5782
  %5910 = vmatpush.bf16.msra.mxu0 %v5778
  %5911 = vmatpush.bf16.msra.mxu0 %v5774
  %5912 = vmatpush.bf16.msra.mxu0 %v5770
  %5913 = vmatpush.bf16.msra.mxu0 %v5766
  %5914 = vmatmul.bf16.gmra.mxu0 %v5612
  %v5915 = vpop.f32.mrf.mxu0
  %v5916 = vadd.f32 %v5554, %v5915
  %v5917 = vpop.f32.mrf.mxu0
  %5918 = vdwg.mxu0
  %5919 = vmatpush.bf16.msra.mxu0 0
  %5920 = vmatpush.bf16.msra.mxu0 0
  %5921 = vmatpush.bf16.msra.mxu0 0
  %5922 = vmatpush.bf16.msra.mxu0 %v5872
  %5923 = vmatpush.bf16.msra.mxu0 %v5810
  %5924 = vmatpush.bf16.msra.mxu0 %v5806
  %5925 = vmatpush.bf16.msra.mxu0 %v5802
  %5926 = vmatpush.bf16.msra.mxu0 %v5798
  %5927 = vmatmul.bf16.gmra.mxu0 %v5866
  %v5928 = vpop.f32.mrf.mxu0
  %v5929 = vadd.f32 %v5916, %v5928
  %v5930 = vpop.f32.mrf.mxu0
  %5931 = vdwg.mxu0
  %5932 = vmatpush.bf16.msra.mxu0 %v5795
  %5933 = vmatpush.bf16.msra.mxu0 %v5791
  %5934 = vmatpush.bf16.msra.mxu0 %v5787
  %5935 = vmatpush.bf16.msra.mxu0 %v5783
  %5936 = vmatpush.bf16.msra.mxu0 %v5779
  %5937 = vmatpush.bf16.msra.mxu0 %v5775
  %5938 = vmatpush.bf16.msra.mxu0 %v5771
  %5939 = vmatpush.bf16.msra.mxu0 %v5767
  %5940 = vmatmul.bf16.gmra.mxu0 %v5612
  %v5941 = vpop.f32.mrf.mxu0
  %v5942 = vadd.f32 %v5580, %v5941
  %v5943 = vpop.f32.mrf.mxu0
  %5944 = vdwg.mxu0
  %5945 = vmatpush.bf16.msra.mxu0 0
  %5946 = vmatpush.bf16.msra.mxu0 0
  %5947 = vmatpush.bf16.msra.mxu0 0
  %5948 = vmatpush.bf16.msra.mxu0 %v5875
  %5949 = vmatpush.bf16.msra.mxu0 %v5811
  %5950 = vmatpush.bf16.msra.mxu0 %v5807
  %5951 = vmatpush.bf16.msra.mxu0 %v5803
  %5952 = vmatpush.bf16.msra.mxu0 %v5799
  %5953 = vmatmul.bf16.gmra.mxu0 %v5866
  %v5954 = vpop.f32.mrf.mxu0
  %v5955 = vadd.f32 %v5942, %v5954
  %v5956 = vpop.f32.mrf.mxu0
  %5957 = vdwg.mxu0
  %5958 = vmatpush.bf16.msra.mxu0 %v5796
  %5959 = vmatpush.bf16.msra.mxu0 %v5792
  %5960 = vmatpush.bf16.msra.mxu0 %v5788
  %5961 = vmatpush.bf16.msra.mxu0 %v5784
  %5962 = vmatpush.bf16.msra.mxu0 %v5780
  %5963 = vmatpush.bf16.msra.mxu0 %v5776
  %5964 = vmatpush.bf16.msra.mxu0 %v5772
  %5965 = vmatpush.bf16.msra.mxu0 %v5768
  %5966 = vmatmul.bf16.gmra.mxu0 %v5612
  %v5967 = vpop.f32.mrf.mxu0
  %v5968 = vadd.f32 %v5606, %v5967
  %v5969 = vpop.f32.mrf.mxu0
  %5970 = vdwg.mxu0
  %5971 = vmatpush.bf16.msra.mxu0 0
  %5972 = vmatpush.bf16.msra.mxu0 0
  %5973 = vmatpush.bf16.msra.mxu0 0
  %5974 = vmatpush.bf16.msra.mxu0 %v5878
  %5975 = vmatpush.bf16.msra.mxu0 %v5812
  %5976 = vmatpush.bf16.msra.mxu0 %v5808
  %5977 = vmatpush.bf16.msra.mxu0 %v5804
  %5978 = vmatpush.bf16.msra.mxu0 %v5800
  %5979 = vmatmul.bf16.gmra.mxu0 %v5866
  %v5980 = vpop.f32.mrf.mxu0
  %v5981 = vadd.f32 %v5968, %v5980
  %v5982 = vpop.f32.mrf.mxu0
  %5983 = vdwg.mxu0
  %s5984 = scalar_lea.vmem %s5, 800
  %v5985 = vld [vmem:[%s5984] sm:$0xff]
  %v5986 = vld [vmem:[%s5984 + $0x8] sm:$0xff]
  %v5987 = vld [vmem:[%s5984 + $0x10] sm:$0xff]
  %v5988 = vld [vmem:[%s5984 + $0x18] sm:$0xff]
  %v5989 = vld [vmem:[%s5984 + $0x20] sm:$0xff]
  %v5990 = vld [vmem:[%s5984 + $0x28] sm:$0xff]
  %v5991 = vld [vmem:[%s5984 + $0x30] sm:$0xff]
  %v5992 = vld [vmem:[%s5984 + $0x38] sm:$0xff]
  %v5993 = vld [vmem:[%s5984 + $0x40] sm:$0xff]
  %v5994 = vld [vmem:[%s5984 + $0x48] sm:$0xff]
  %v5995 = vld [vmem:[%s5984 + $0x50] sm:$0xff]
  %v5996 = vld [vmem:[%s5984 + $0x58] sm:$0xff]
  %v5997 = vld [vmem:[%s5984 + $0x60] sm:$0xff]
  %v5998 = vld [vmem:[%s5984 + $0x68] sm:$0xff]
  %v5999 = vld [vmem:[%s5984 + $0x70] sm:$0xff]
  %v6000 = vld [vmem:[%s5984 + $0x78] sm:$0xff]
  %v6001 = vld [vmem:[%s5984 + $0x80] sm:$0xff]
  %v6002 = vld [vmem:[%s5984 + $0x88] sm:$0xff]
  %v6003 = vld [vmem:[%s5984 + $0x90] sm:$0xff]
  %v6004 = vld [vmem:[%s5984 + $0x98] sm:$0xff]
  %v6005 = vld [vmem:[%s5984 + $0xa0] sm:$0xff]
  %v6006 = vld [vmem:[%s5984 + $0xa8] sm:$0xff]
  %v6007 = vld [vmem:[%s5984 + $0xb0] sm:$0xff]
  %v6008 = vld [vmem:[%s5984 + $0xb8] sm:$0xff]
  %v6009 = vld [vmem:[%s5984 + $0xc0] sm:$0xff]
  %v6010 = vld [vmem:[%s5984 + $0xc8] sm:$0xff]
  %v6011 = vld [vmem:[%s5984 + $0xd0] sm:$0xff]
  %v6012 = vld [vmem:[%s5984 + $0xd8] sm:$0xff]
  %v6013 = vld [vmem:[%s5984 + $0xe0] sm:$0xff]
  %v6014 = vld [vmem:[%s5984 + $0xe8] sm:$0xff]
  %v6015 = vld [vmem:[%s5984 + $0xf0] sm:$0xff]
  %v6016 = vld [vmem:[%s5984 + $0xf8] sm:$0xff]
  %v6017 = vld [vmem:[%s5984 + $0x100] sm:$0xff]
  %v6018 = vld [vmem:[%s5984 + $0x108] sm:$0xff]
  %v6019 = vld [vmem:[%s5984 + $0x110] sm:$0xff]
  %v6020 = vld [vmem:[%s5984 + $0x118] sm:$0xff]
  %v6021 = vld [vmem:[%s5984 + $0x120] sm:$0xff]
  %v6022 = vld [vmem:[%s5984 + $0x128] sm:$0xff]
  %v6023 = vld [vmem:[%s5984 + $0x130] sm:$0xff]
  %v6024 = vld [vmem:[%s5984 + $0x138] sm:$0xff]
  %v6025 = vld [vmem:[%s5984 + $0x140] sm:$0xff]
  %v6026 = vld [vmem:[%s5984 + $0x148] sm:$0xff]
  %v6027 = vld [vmem:[%s5984 + $0x150] sm:$0xff]
  %v6028 = vld [vmem:[%s5984 + $0x158] sm:$0xff]
  %v6029 = vld [vmem:[%s5984 + $0x160] sm:$0xff]
  %v6030 = vld [vmem:[%s5984 + $0x168] sm:$0xff]
  %v6031 = vld [vmem:[%s5984 + $0x170] sm:$0xff]
  %v6032 = vld [vmem:[%s5984 + $0x178] sm:$0xff]
  %v6033 = vld [vmem:[%s5984 + $0x180] sm:$0xff]
  %v6034 = vld [vmem:[%s5984 + $0x188] sm:$0xff]
  %v6036 = vunpack.c.l.b16 %v5129
  %v6037 = vunpack.c.h.b16 %v5129
  %v6038 = vpack.c.b16 %v6036, %v6036
  %v6039 = vpack.c.b16 %v6037, %v6037
  %v6091 = vunpack.c.l.b16 %v5985
  %v6092 = vunpack.c.h.b16 %v5985
  %v6093 = vunpack.c.l.b16 %v5986
  %v6094 = vunpack.c.h.b16 %v5986
  %v6095 = vunpack.c.l.b16 %v5987
  %v6096 = vunpack.c.h.b16 %v5987
  %v6097 = vunpack.c.l.b16 %v5988
  %v6098 = vunpack.c.h.b16 %v5988
  %v6099 = vunpack.c.l.b16 %v5989
  %v6100 = vunpack.c.h.b16 %v5989
  %v6101 = vunpack.c.l.b16 %v5990
  %v6102 = vunpack.c.h.b16 %v5990
  %v6103 = vunpack.c.l.b16 %v5991
  %v6104 = vunpack.c.h.b16 %v5991
  %v6105 = vunpack.c.l.b16 %v5992
  %v6106 = vunpack.c.h.b16 %v5992
  %v6107 = vunpack.c.l.b16 %v5993
  %v6108 = vunpack.c.h.b16 %v5993
  %v6109 = vunpack.c.l.b16 %v5994
  %v6110 = vunpack.c.h.b16 %v5994
  %v6111 = vunpack.c.l.b16 %v5995
  %v6112 = vunpack.c.h.b16 %v5995
  %v6113 = vunpack.c.l.b16 %v5996
  %v6114 = vunpack.c.h.b16 %v5996
  %v6115 = vunpack.c.l.b16 %v5997
  %v6116 = vunpack.c.h.b16 %v5997
  %v6117 = vunpack.c.l.b16 %v5998
  %v6118 = vunpack.c.h.b16 %v5998
  %v6119 = vunpack.c.l.b16 %v5999
  %v6120 = vunpack.c.h.b16 %v5999
  %v6121 = vunpack.c.l.b16 %v6000
  %v6122 = vunpack.c.h.b16 %v6000
  %v6123 = vunpack.c.l.b16 %v6001
  %v6124 = vunpack.c.h.b16 %v6001
  %v6125 = vunpack.c.l.b16 %v6002
  %v6126 = vunpack.c.h.b16 %v6002
  %v6127 = vunpack.c.l.b16 %v6003
  %v6128 = vunpack.c.h.b16 %v6003
  %v6129 = vunpack.c.l.b16 %v6004
  %v6130 = vunpack.c.h.b16 %v6004
  %v6131 = vunpack.c.l.b16 %v6005
  %v6132 = vunpack.c.h.b16 %v6005
  %v6133 = vunpack.c.l.b16 %v6006
  %v6134 = vunpack.c.h.b16 %v6006
  %v6135 = vunpack.c.l.b16 %v6007
  %v6136 = vunpack.c.h.b16 %v6007
  %v6137 = vunpack.c.l.b16 %v6008
  %v6138 = vunpack.c.h.b16 %v6008
  %v6139 = vunpack.c.l.b16 %v6009
  %v6140 = vunpack.c.h.b16 %v6009
  %v6141 = vunpack.c.l.b16 %v6010
  %v6142 = vunpack.c.h.b16 %v6010
  %v6143 = vunpack.c.l.b16 %v6011
  %v6144 = vunpack.c.h.b16 %v6011
  %v6145 = vunpack.c.l.b16 %v6012
  %v6146 = vunpack.c.h.b16 %v6012
  %v6147 = vunpack.c.l.b16 %v6013
  %v6148 = vunpack.c.h.b16 %v6013
  %v6149 = vunpack.c.l.b16 %v6014
  %v6150 = vunpack.c.h.b16 %v6014
  %v6151 = vunpack.c.l.b16 %v6015
  %v6152 = vunpack.c.h.b16 %v6015
  %v6153 = vunpack.c.l.b16 %v6016
  %v6154 = vunpack.c.h.b16 %v6016
  %v6155 = vunpack.c.l.b16 %v6017
  %v6156 = vunpack.c.h.b16 %v6017
  %v6157 = vunpack.c.l.b16 %v6018
  %v6158 = vunpack.c.h.b16 %v6018
  %v6159 = vunpack.c.l.b16 %v6019
  %v6160 = vunpack.c.h.b16 %v6019
  %v6161 = vunpack.c.l.b16 %v6020
  %v6162 = vunpack.c.h.b16 %v6020
  %v6163 = vunpack.c.l.b16 %v6021
  %v6164 = vunpack.c.h.b16 %v6021
  %v6165 = vunpack.c.l.b16 %v6022
  %v6166 = vunpack.c.h.b16 %v6022
  %v6167 = vunpack.c.l.b16 %v6023
  %v6168 = vunpack.c.h.b16 %v6023
  %v6169 = vunpack.c.l.b16 %v6024
  %v6170 = vunpack.c.h.b16 %v6024
  %v6171 = vunpack.c.l.b16 %v6025
  %v6172 = vunpack.c.h.b16 %v6025
  %v6173 = vunpack.c.l.b16 %v6026
  %v6174 = vunpack.c.h.b16 %v6026
  %v6175 = vunpack.c.l.b16 %v6027
  %v6176 = vunpack.c.h.b16 %v6027
  %v6177 = vunpack.c.l.b16 %v6028
  %v6178 = vunpack.c.h.b16 %v6028
  %v6179 = vunpack.c.l.b16 %v6029
  %v6180 = vunpack.c.h.b16 %v6029
  %v6181 = vunpack.c.l.b16 %v6030
  %v6182 = vunpack.c.h.b16 %v6030
  %v6183 = vunpack.c.l.b16 %v6031
  %v6184 = vunpack.c.h.b16 %v6031
  %v6185 = vunpack.c.l.b16 %v6032
  %v6186 = vunpack.c.h.b16 %v6032
  %v6187 = vunpack.c.l.b16 %v6033
  %v6188 = vunpack.c.h.b16 %v6033
  %v6189 = vunpack.c.l.b16 %v6034
  %v6190 = vunpack.c.h.b16 %v6034
  %v6191 = vpack.c.b16 %v6095, %v6091
  %v6192 = vpack.c.b16 %v6096, %v6092
  %v6193 = vpack.c.b16 %v6097, %v6093
  %v6194 = vpack.c.b16 %v6098, %v6094
  %v6195 = vpack.c.b16 %v6103, %v6099
  %v6196 = vpack.c.b16 %v6104, %v6100
  %v6197 = vpack.c.b16 %v6105, %v6101
  %v6198 = vpack.c.b16 %v6106, %v6102
  %v6199 = vpack.c.b16 %v6111, %v6107
  %v6200 = vpack.c.b16 %v6112, %v6108
  %v6201 = vpack.c.b16 %v6113, %v6109
  %v6202 = vpack.c.b16 %v6114, %v6110
  %v6203 = vpack.c.b16 %v6119, %v6115
  %v6204 = vpack.c.b16 %v6120, %v6116
  %v6205 = vpack.c.b16 %v6121, %v6117
  %v6206 = vpack.c.b16 %v6122, %v6118
  %v6207 = vpack.c.b16 %v6127, %v6123
  %v6208 = vpack.c.b16 %v6128, %v6124
  %v6209 = vpack.c.b16 %v6129, %v6125
  %v6210 = vpack.c.b16 %v6130, %v6126
  %v6211 = vpack.c.b16 %v6135, %v6131
  %v6212 = vpack.c.b16 %v6136, %v6132
  %v6213 = vpack.c.b16 %v6137, %v6133
  %v6214 = vpack.c.b16 %v6138, %v6134
  %v6215 = vpack.c.b16 %v6143, %v6139
  %v6216 = vpack.c.b16 %v6144, %v6140
  %v6217 = vpack.c.b16 %v6145, %v6141
  %v6218 = vpack.c.b16 %v6146, %v6142
  %v6219 = vpack.c.b16 %v6151, %v6147
  %v6220 = vpack.c.b16 %v6152, %v6148
  %v6221 = vpack.c.b16 %v6153, %v6149
  %v6222 = vpack.c.b16 %v6154, %v6150
  %v6223 = vpack.c.b16 %v6159, %v6155
  %v6224 = vpack.c.b16 %v6160, %v6156
  %v6225 = vpack.c.b16 %v6161, %v6157
  %v6226 = vpack.c.b16 %v6162, %v6158
  %v6227 = vpack.c.b16 %v6167, %v6163
  %v6228 = vpack.c.b16 %v6168, %v6164
  %v6229 = vpack.c.b16 %v6169, %v6165
  %v6230 = vpack.c.b16 %v6170, %v6166
  %v6231 = vpack.c.b16 %v6175, %v6171
  %v6232 = vpack.c.b16 %v6176, %v6172
  %v6233 = vpack.c.b16 %v6177, %v6173
  %v6234 = vpack.c.b16 %v6178, %v6174
  %v6235 = vpack.c.b16 %v6183, %v6179
  %v6236 = vpack.c.b16 %v6184, %v6180
  %v6237 = vpack.c.b16 %v6185, %v6181
  %v6238 = vpack.c.b16 %v6186, %v6182
  %v6239 = vpack.c.b16 %v6187, %v6187
  %v6240 = vpack.c.b16 %v6188, %v6188
  %v6241 = vpack.c.b16 %v6189, %v6189
  %v6242 = vpack.c.b16 %v6190, %v6190
  %v6292 = vsel %vm5488, %v6039, 0
  %v6295 = vsel %vm5492, %v6239, 0
  %v6298 = vsel %vm5492, %v6240, 0
  %v6301 = vsel %vm5492, %v6241, 0
  %v6304 = vsel %vm5492, %v6242, 0
  %6306 = vmatpush.bf16.msra.mxu0 %v6219
  %6307 = vmatpush.bf16.msra.mxu0 %v6215
  %6308 = vmatpush.bf16.msra.mxu0 %v6211
  %6309 = vmatpush.bf16.msra.mxu0 %v6207
  %6310 = vmatpush.bf16.msra.mxu0 %v6203
  %6311 = vmatpush.bf16.msra.mxu0 %v6199
  %6312 = vmatpush.bf16.msra.mxu0 %v6195
  %6313 = vmatpush.bf16.msra.mxu0 %v6191
  %6314 = vmatmul.bf16.gmra.mxu0 %v6038
  %v6315 = vpop.f32.mrf.mxu0
  %v6316 = vadd.f32 0.0, %v6315
  %v6317 = vpop.f32.mrf.mxu0
  %6318 = vdwg.mxu0
  %6319 = vmatpush.bf16.msra.mxu0 0
  %6320 = vmatpush.bf16.msra.mxu0 0
  %6321 = vmatpush.bf16.msra.mxu0 0
  %6322 = vmatpush.bf16.msra.mxu0 %v6295
  %6323 = vmatpush.bf16.msra.mxu0 %v6235
  %6324 = vmatpush.bf16.msra.mxu0 %v6231
  %6325 = vmatpush.bf16.msra.mxu0 %v6227
  %6326 = vmatpush.bf16.msra.mxu0 %v6223
  %6327 = vmatmul.bf16.gmra.mxu0 %v6292
  %v6328 = vpop.f32.mrf.mxu0
  %v6329 = vadd.f32 %v6316, %v6328
  %v6330 = vpop.f32.mrf.mxu0
  %6331 = vdwg.mxu0
  %6332 = vmatpush.bf16.msra.mxu0 %v6220
  %6333 = vmatpush.bf16.msra.mxu0 %v6216
  %6334 = vmatpush.bf16.msra.mxu0 %v6212
  %6335 = vmatpush.bf16.msra.mxu0 %v6208
  %6336 = vmatpush.bf16.msra.mxu0 %v6204
  %6337 = vmatpush.bf16.msra.mxu0 %v6200
  %6338 = vmatpush.bf16.msra.mxu0 %v6196
  %6339 = vmatpush.bf16.msra.mxu0 %v6192
  %6340 = vmatmul.bf16.gmra.mxu0 %v6038
  %v6341 = vpop.f32.mrf.mxu0
  %v6342 = vadd.f32 0.0, %v6341
  %v6343 = vpop.f32.mrf.mxu0
  %6344 = vdwg.mxu0
  %6345 = vmatpush.bf16.msra.mxu0 0
  %6346 = vmatpush.bf16.msra.mxu0 0
  %6347 = vmatpush.bf16.msra.mxu0 0
  %6348 = vmatpush.bf16.msra.mxu0 %v6298
  %6349 = vmatpush.bf16.msra.mxu0 %v6236
  %6350 = vmatpush.bf16.msra.mxu0 %v6232
  %6351 = vmatpush.bf16.msra.mxu0 %v6228
  %6352 = vmatpush.bf16.msra.mxu0 %v6224
  %6353 = vmatmul.bf16.gmra.mxu0 %v6292
  %v6354 = vpop.f32.mrf.mxu0
  %v6355 = vadd.f32 %v6342, %v6354
  %v6356 = vpop.f32.mrf.mxu0
  %6357 = vdwg.mxu0
  %6358 = vmatpush.bf16.msra.mxu0 %v6221
  %6359 = vmatpush.bf16.msra.mxu0 %v6217
  %6360 = vmatpush.bf16.msra.mxu0 %v6213
  %6361 = vmatpush.bf16.msra.mxu0 %v6209
  %6362 = vmatpush.bf16.msra.mxu0 %v6205
  %6363 = vmatpush.bf16.msra.mxu0 %v6201
  %6364 = vmatpush.bf16.msra.mxu0 %v6197
  %6365 = vmatpush.bf16.msra.mxu0 %v6193
  %6366 = vmatmul.bf16.gmra.mxu0 %v6038
  %v6367 = vpop.f32.mrf.mxu0
  %v6368 = vadd.f32 0.0, %v6367
  %v6369 = vpop.f32.mrf.mxu0
  %6370 = vdwg.mxu0
  %6371 = vmatpush.bf16.msra.mxu0 0
  %6372 = vmatpush.bf16.msra.mxu0 0
  %6373 = vmatpush.bf16.msra.mxu0 0
  %6374 = vmatpush.bf16.msra.mxu0 %v6301
  %6375 = vmatpush.bf16.msra.mxu0 %v6237
  %6376 = vmatpush.bf16.msra.mxu0 %v6233
  %6377 = vmatpush.bf16.msra.mxu0 %v6229
  %6378 = vmatpush.bf16.msra.mxu0 %v6225
  %6379 = vmatmul.bf16.gmra.mxu0 %v6292
  %v6380 = vpop.f32.mrf.mxu0
  %v6381 = vadd.f32 %v6368, %v6380
  %v6382 = vpop.f32.mrf.mxu0
  %6383 = vdwg.mxu0
  %6384 = vmatpush.bf16.msra.mxu0 %v6222
  %6385 = vmatpush.bf16.msra.mxu0 %v6218
  %6386 = vmatpush.bf16.msra.mxu0 %v6214
  %6387 = vmatpush.bf16.msra.mxu0 %v6210
  %6388 = vmatpush.bf16.msra.mxu0 %v6206
  %6389 = vmatpush.bf16.msra.mxu0 %v6202
  %6390 = vmatpush.bf16.msra.mxu0 %v6198
  %6391 = vmatpush.bf16.msra.mxu0 %v6194
  %6392 = vmatmul.bf16.gmra.mxu0 %v6038
  %v6393 = vpop.f32.mrf.mxu0
  %v6394 = vadd.f32 0.0, %v6393
  %v6395 = vpop.f32.mrf.mxu0
  %6396 = vdwg.mxu0
  %6397 = vmatpush.bf16.msra.mxu0 0
  %6398 = vmatpush.bf16.msra.mxu0 0
  %6399 = vmatpush.bf16.msra.mxu0 0
  %6400 = vmatpush.bf16.msra.mxu0 %v6304
  %6401 = vmatpush.bf16.msra.mxu0 %v6238
  %6402 = vmatpush.bf16.msra.mxu0 %v6234
  %6403 = vmatpush.bf16.msra.mxu0 %v6230
  %6404 = vmatpush.bf16.msra.mxu0 %v6226
  %6405 = vmatmul.bf16.gmra.mxu0 %v6292
  %v6406 = vpop.f32.mrf.mxu0
  %v6407 = vadd.f32 %v6394, %v6406
  %v6408 = vpop.f32.mrf.mxu0
  %6409 = vdwg.mxu0
  %v6410 = vadd.f32 %v5903, %v6329
  %v6411 = vadd.f32 %v5929, %v6355
  %v6412 = vadd.f32 %v5955, %v6381
  %v6413 = vadd.f32 %v5981, %v6407
  %s6414 = scalar_lea.vmem %s5, 1200
  %v6415 = vld [vmem:[%s6414] sm:$0xff]
  %v6416 = vld [vmem:[%s6414 + $0x8] sm:$0xff]
  %v6417 = vld [vmem:[%s6414 + $0x10] sm:$0xff]
  %v6418 = vld [vmem:[%s6414 + $0x18] sm:$0xff]
  %v6419 = vld [vmem:[%s6414 + $0x20] sm:$0xff]
  %v6420 = vld [vmem:[%s6414 + $0x28] sm:$0xff]
  %v6421 = vld [vmem:[%s6414 + $0x30] sm:$0xff]
  %v6422 = vld [vmem:[%s6414 + $0x38] sm:$0xff]
  %v6423 = vld [vmem:[%s6414 + $0x40] sm:$0xff]
  %v6424 = vld [vmem:[%s6414 + $0x48] sm:$0xff]
  %v6425 = vld [vmem:[%s6414 + $0x50] sm:$0xff]
  %v6426 = vld [vmem:[%s6414 + $0x58] sm:$0xff]
  %v6427 = vld [vmem:[%s6414 + $0x60] sm:$0xff]
  %v6428 = vld [vmem:[%s6414 + $0x68] sm:$0xff]
  %v6429 = vld [vmem:[%s6414 + $0x70] sm:$0xff]
  %v6430 = vld [vmem:[%s6414 + $0x78] sm:$0xff]
  %v6431 = vld [vmem:[%s6414 + $0x80] sm:$0xff]
  %v6432 = vld [vmem:[%s6414 + $0x88] sm:$0xff]
  %v6433 = vld [vmem:[%s6414 + $0x90] sm:$0xff]
  %v6434 = vld [vmem:[%s6414 + $0x98] sm:$0xff]
  %v6435 = vld [vmem:[%s6414 + $0xa0] sm:$0xff]
  %v6436 = vld [vmem:[%s6414 + $0xa8] sm:$0xff]
  %v6437 = vld [vmem:[%s6414 + $0xb0] sm:$0xff]
  %v6438 = vld [vmem:[%s6414 + $0xb8] sm:$0xff]
  %v6439 = vld [vmem:[%s6414 + $0xc0] sm:$0xff]
  %v6440 = vld [vmem:[%s6414 + $0xc8] sm:$0xff]
  %v6441 = vld [vmem:[%s6414 + $0xd0] sm:$0xff]
  %v6442 = vld [vmem:[%s6414 + $0xd8] sm:$0xff]
  %v6443 = vld [vmem:[%s6414 + $0xe0] sm:$0xff]
  %v6444 = vld [vmem:[%s6414 + $0xe8] sm:$0xff]
  %v6445 = vld [vmem:[%s6414 + $0xf0] sm:$0xff]
  %v6446 = vld [vmem:[%s6414 + $0xf8] sm:$0xff]
  %v6447 = vld [vmem:[%s6414 + $0x100] sm:$0xff]
  %v6448 = vld [vmem:[%s6414 + $0x108] sm:$0xff]
  %v6449 = vld [vmem:[%s6414 + $0x110] sm:$0xff]
  %v6450 = vld [vmem:[%s6414 + $0x118] sm:$0xff]
  %v6451 = vld [vmem:[%s6414 + $0x120] sm:$0xff]
  %v6452 = vld [vmem:[%s6414 + $0x128] sm:$0xff]
  %v6453 = vld [vmem:[%s6414 + $0x130] sm:$0xff]
  %v6454 = vld [vmem:[%s6414 + $0x138] sm:$0xff]
  %v6455 = vld [vmem:[%s6414 + $0x140] sm:$0xff]
  %v6456 = vld [vmem:[%s6414 + $0x148] sm:$0xff]
  %v6457 = vld [vmem:[%s6414 + $0x150] sm:$0xff]
  %v6458 = vld [vmem:[%s6414 + $0x158] sm:$0xff]
  %v6459 = vld [vmem:[%s6414 + $0x160] sm:$0xff]
  %v6460 = vld [vmem:[%s6414 + $0x168] sm:$0xff]
  %v6461 = vld [vmem:[%s6414 + $0x170] sm:$0xff]
  %v6462 = vld [vmem:[%s6414 + $0x178] sm:$0xff]
  %v6463 = vld [vmem:[%s6414 + $0x180] sm:$0xff]
  %v6464 = vld [vmem:[%s6414 + $0x188] sm:$0xff]
  %v6466 = vunpack.c.l.b16 %v5130
  %v6467 = vunpack.c.h.b16 %v5130
  %v6468 = vpack.c.b16 %v6466, %v6466
  %v6469 = vpack.c.b16 %v6467, %v6467
  %v6521 = vunpack.c.l.b16 %v6415
  %v6522 = vunpack.c.h.b16 %v6415
  %v6523 = vunpack.c.l.b16 %v6416
  %v6524 = vunpack.c.h.b16 %v6416
  %v6525 = vunpack.c.l.b16 %v6417
  %v6526 = vunpack.c.h.b16 %v6417
  %v6527 = vunpack.c.l.b16 %v6418
  %v6528 = vunpack.c.h.b16 %v6418
  %v6529 = vunpack.c.l.b16 %v6419
  %v6530 = vunpack.c.h.b16 %v6419
  %v6531 = vunpack.c.l.b16 %v6420
  %v6532 = vunpack.c.h.b16 %v6420
  %v6533 = vunpack.c.l.b16 %v6421
  %v6534 = vunpack.c.h.b16 %v6421
  %v6535 = vunpack.c.l.b16 %v6422
  %v6536 = vunpack.c.h.b16 %v6422
  %v6537 = vunpack.c.l.b16 %v6423
  %v6538 = vunpack.c.h.b16 %v6423
  %v6539 = vunpack.c.l.b16 %v6424
  %v6540 = vunpack.c.h.b16 %v6424
  %v6541 = vunpack.c.l.b16 %v6425
  %v6542 = vunpack.c.h.b16 %v6425
  %v6543 = vunpack.c.l.b16 %v6426
  %v6544 = vunpack.c.h.b16 %v6426
  %v6545 = vunpack.c.l.b16 %v6427
  %v6546 = vunpack.c.h.b16 %v6427
  %v6547 = vunpack.c.l.b16 %v6428
  %v6548 = vunpack.c.h.b16 %v6428
  %v6549 = vunpack.c.l.b16 %v6429
  %v6550 = vunpack.c.h.b16 %v6429
  %v6551 = vunpack.c.l.b16 %v6430
  %v6552 = vunpack.c.h.b16 %v6430
  %v6553 = vunpack.c.l.b16 %v6431
  %v6554 = vunpack.c.h.b16 %v6431
  %v6555 = vunpack.c.l.b16 %v6432
  %v6556 = vunpack.c.h.b16 %v6432
  %v6557 = vunpack.c.l.b16 %v6433
  %v6558 = vunpack.c.h.b16 %v6433
  %v6559 = vunpack.c.l.b16 %v6434
  %v6560 = vunpack.c.h.b16 %v6434
  %v6561 = vunpack.c.l.b16 %v6435
  %v6562 = vunpack.c.h.b16 %v6435
  %v6563 = vunpack.c.l.b16 %v6436
  %v6564 = vunpack.c.h.b16 %v6436
  %v6565 = vunpack.c.l.b16 %v6437
  %v6566 = vunpack.c.h.b16 %v6437
  %v6567 = vunpack.c.l.b16 %v6438
  %v6568 = vunpack.c.h.b16 %v6438
  %v6569 = vunpack.c.l.b16 %v6439
  %v6570 = vunpack.c.h.b16 %v6439
  %v6571 = vunpack.c.l.b16 %v6440
  %v6572 = vunpack.c.h.b16 %v6440
  %v6573 = vunpack.c.l.b16 %v6441
  %v6574 = vunpack.c.h.b16 %v6441
  %v6575 = vunpack.c.l.b16 %v6442
  %v6576 = vunpack.c.h.b16 %v6442
  %v6577 = vunpack.c.l.b16 %v6443
  %v6578 = vunpack.c.h.b16 %v6443
  %v6579 = vunpack.c.l.b16 %v6444
  %v6580 = vunpack.c.h.b16 %v6444
  %v6581 = vunpack.c.l.b16 %v6445
  %v6582 = vunpack.c.h.b16 %v6445
  %v6583 = vunpack.c.l.b16 %v6446
  %v6584 = vunpack.c.h.b16 %v6446
  %v6585 = vunpack.c.l.b16 %v6447
  %v6586 = vunpack.c.h.b16 %v6447
  %v6587 = vunpack.c.l.b16 %v6448
  %v6588 = vunpack.c.h.b16 %v6448
  %v6589 = vunpack.c.l.b16 %v6449
  %v6590 = vunpack.c.h.b16 %v6449
  %v6591 = vunpack.c.l.b16 %v6450
  %v6592 = vunpack.c.h.b16 %v6450
  %v6593 = vunpack.c.l.b16 %v6451
  %v6594 = vunpack.c.h.b16 %v6451
  %v6595 = vunpack.c.l.b16 %v6452
  %v6596 = vunpack.c.h.b16 %v6452
  %v6597 = vunpack.c.l.b16 %v6453
  %v6598 = vunpack.c.h.b16 %v6453
  %v6599 = vunpack.c.l.b16 %v6454
  %v6600 = vunpack.c.h.b16 %v6454
  %v6601 = vunpack.c.l.b16 %v6455
  %v6602 = vunpack.c.h.b16 %v6455
  %v6603 = vunpack.c.l.b16 %v6456
  %v6604 = vunpack.c.h.b16 %v6456
  %v6605 = vunpack.c.l.b16 %v6457
  %v6606 = vunpack.c.h.b16 %v6457
  %v6607 = vunpack.c.l.b16 %v6458
  %v6608 = vunpack.c.h.b16 %v6458
  %v6609 = vunpack.c.l.b16 %v6459
  %v6610 = vunpack.c.h.b16 %v6459
  %v6611 = vunpack.c.l.b16 %v6460
  %v6612 = vunpack.c.h.b16 %v6460
  %v6613 = vunpack.c.l.b16 %v6461
  %v6614 = vunpack.c.h.b16 %v6461
  %v6615 = vunpack.c.l.b16 %v6462
  %v6616 = vunpack.c.h.b16 %v6462
  %v6617 = vunpack.c.l.b16 %v6463
  %v6618 = vunpack.c.h.b16 %v6463
  %v6619 = vunpack.c.l.b16 %v6464
  %v6620 = vunpack.c.h.b16 %v6464
  %v6621 = vpack.c.b16 %v6525, %v6521
  %v6622 = vpack.c.b16 %v6526, %v6522
  %v6623 = vpack.c.b16 %v6527, %v6523
  %v6624 = vpack.c.b16 %v6528, %v6524
  %v6625 = vpack.c.b16 %v6533, %v6529
  %v6626 = vpack.c.b16 %v6534, %v6530
  %v6627 = vpack.c.b16 %v6535, %v6531
  %v6628 = vpack.c.b16 %v6536, %v6532
  %v6629 = vpack.c.b16 %v6541, %v6537
  %v6630 = vpack.c.b16 %v6542, %v6538
  %v6631 = vpack.c.b16 %v6543, %v6539
  %v6632 = vpack.c.b16 %v6544, %v6540
  %v6633 = vpack.c.b16 %v6549, %v6545
  %v6634 = vpack.c.b16 %v6550, %v6546
  %v6635 = vpack.c.b16 %v6551, %v6547
  %v6636 = vpack.c.b16 %v6552, %v6548
  %v6637 = vpack.c.b16 %v6557, %v6553
  %v6638 = vpack.c.b16 %v6558, %v6554
  %v6639 = vpack.c.b16 %v6559, %v6555
  %v6640 = vpack.c.b16 %v6560, %v6556
  %v6641 = vpack.c.b16 %v6565, %v6561
  %v6642 = vpack.c.b16 %v6566, %v6562
  %v6643 = vpack.c.b16 %v6567, %v6563
  %v6644 = vpack.c.b16 %v6568, %v6564
  %v6645 = vpack.c.b16 %v6573, %v6569
  %v6646 = vpack.c.b16 %v6574, %v6570
  %v6647 = vpack.c.b16 %v6575, %v6571
  %v6648 = vpack.c.b16 %v6576, %v6572
  %v6649 = vpack.c.b16 %v6581, %v6577
  %v6650 = vpack.c.b16 %v6582, %v6578
  %v6651 = vpack.c.b16 %v6583, %v6579
  %v6652 = vpack.c.b16 %v6584, %v6580
  %v6653 = vpack.c.b16 %v6589, %v6585
  %v6654 = vpack.c.b16 %v6590, %v6586
  %v6655 = vpack.c.b16 %v6591, %v6587
  %v6656 = vpack.c.b16 %v6592, %v6588
  %v6657 = vpack.c.b16 %v6597, %v6593
  %v6658 = vpack.c.b16 %v6598, %v6594
  %v6659 = vpack.c.b16 %v6599, %v6595
  %v6660 = vpack.c.b16 %v6600, %v6596
  %v6661 = vpack.c.b16 %v6605, %v6601
  %v6662 = vpack.c.b16 %v6606, %v6602
  %v6663 = vpack.c.b16 %v6607, %v6603
  %v6664 = vpack.c.b16 %v6608, %v6604
  %v6665 = vpack.c.b16 %v6613, %v6609
  %v6666 = vpack.c.b16 %v6614, %v6610
  %v6667 = vpack.c.b16 %v6615, %v6611
  %v6668 = vpack.c.b16 %v6616, %v6612
  %v6669 = vpack.c.b16 %v6617, %v6617
  %v6670 = vpack.c.b16 %v6618, %v6618
  %v6671 = vpack.c.b16 %v6619, %v6619
  %v6672 = vpack.c.b16 %v6620, %v6620
  %v6722 = vsel %vm5488, %v6469, 0
  %v6725 = vsel %vm5492, %v6669, 0
  %v6728 = vsel %vm5492, %v6670, 0
  %v6731 = vsel %vm5492, %v6671, 0
  %v6734 = vsel %vm5492, %v6672, 0
  %6736 = vmatpush.bf16.msra.mxu0 %v6649
  %6737 = vmatpush.bf16.msra.mxu0 %v6645
  %6738 = vmatpush.bf16.msra.mxu0 %v6641
  %6739 = vmatpush.bf16.msra.mxu0 %v6637
  %6740 = vmatpush.bf16.msra.mxu0 %v6633
  %6741 = vmatpush.bf16.msra.mxu0 %v6629
  %6742 = vmatpush.bf16.msra.mxu0 %v6625
  %6743 = vmatpush.bf16.msra.mxu0 %v6621
  %6744 = vmatmul.bf16.gmra.mxu0 %v6468
  %v6745 = vpop.f32.mrf.mxu0
  %v6746 = vadd.f32 0.0, %v6745
  %v6747 = vpop.f32.mrf.mxu0
  %6748 = vdwg.mxu0
  %6749 = vmatpush.bf16.msra.mxu0 0
  %6750 = vmatpush.bf16.msra.mxu0 0
  %6751 = vmatpush.bf16.msra.mxu0 0
  %6752 = vmatpush.bf16.msra.mxu0 %v6725
  %6753 = vmatpush.bf16.msra.mxu0 %v6665
  %6754 = vmatpush.bf16.msra.mxu0 %v6661
  %6755 = vmatpush.bf16.msra.mxu0 %v6657
  %6756 = vmatpush.bf16.msra.mxu0 %v6653
  %6757 = vmatmul.bf16.gmra.mxu0 %v6722
  %v6758 = vpop.f32.mrf.mxu0
  %v6759 = vadd.f32 %v6746, %v6758
  %v6760 = vpop.f32.mrf.mxu0
  %6761 = vdwg.mxu0
  %6762 = vmatpush.bf16.msra.mxu0 %v6650
  %6763 = vmatpush.bf16.msra.mxu0 %v6646
  %6764 = vmatpush.bf16.msra.mxu0 %v6642
  %6765 = vmatpush.bf16.msra.mxu0 %v6638
  %6766 = vmatpush.bf16.msra.mxu0 %v6634
  %6767 = vmatpush.bf16.msra.mxu0 %v6630
  %6768 = vmatpush.bf16.msra.mxu0 %v6626
  %6769 = vmatpush.bf16.msra.mxu0 %v6622
  %6770 = vmatmul.bf16.gmra.mxu0 %v6468
  %v6771 = vpop.f32.mrf.mxu0
  %v6772 = vadd.f32 0.0, %v6771
  %v6773 = vpop.f32.mrf.mxu0
  %6774 = vdwg.mxu0
  %6775 = vmatpush.bf16.msra.mxu0 0
  %6776 = vmatpush.bf16.msra.mxu0 0
  %6777 = vmatpush.bf16.msra.mxu0 0
  %6778 = vmatpush.bf16.msra.mxu0 %v6728
  %6779 = vmatpush.bf16.msra.mxu0 %v6666
  %6780 = vmatpush.bf16.msra.mxu0 %v6662
  %6781 = vmatpush.bf16.msra.mxu0 %v6658
  %6782 = vmatpush.bf16.msra.mxu0 %v6654
  %6783 = vmatmul.bf16.gmra.mxu0 %v6722
  %v6784 = vpop.f32.mrf.mxu0
  %v6785 = vadd.f32 %v6772, %v6784
  %v6786 = vpop.f32.mrf.mxu0
  %6787 = vdwg.mxu0
  %6788 = vmatpush.bf16.msra.mxu0 %v6651
  %6789 = vmatpush.bf16.msra.mxu0 %v6647
  %6790 = vmatpush.bf16.msra.mxu0 %v6643
  %6791 = vmatpush.bf16.msra.mxu0 %v6639
  %6792 = vmatpush.bf16.msra.mxu0 %v6635
  %6793 = vmatpush.bf16.msra.mxu0 %v6631
  %6794 = vmatpush.bf16.msra.mxu0 %v6627
  %6795 = vmatpush.bf16.msra.mxu0 %v6623
  %6796 = vmatmul.bf16.gmra.mxu0 %v6468
  %v6797 = vpop.f32.mrf.mxu0
  %v6798 = vadd.f32 0.0, %v6797
  %v6799 = vpop.f32.mrf.mxu0
  %6800 = vdwg.mxu0
  %6801 = vmatpush.bf16.msra.mxu0 0
  %6802 = vmatpush.bf16.msra.mxu0 0
  %6803 = vmatpush.bf16.msra.mxu0 0
  %6804 = vmatpush.bf16.msra.mxu0 %v6731
  %6805 = vmatpush.bf16.msra.mxu0 %v6667
  %6806 = vmatpush.bf16.msra.mxu0 %v6663
  %6807 = vmatpush.bf16.msra.mxu0 %v6659
  %6808 = vmatpush.bf16.msra.mxu0 %v6655
  %6809 = vmatmul.bf16.gmra.mxu0 %v6722
  %v6810 = vpop.f32.mrf.mxu0
  %v6811 = vadd.f32 %v6798, %v6810
  %v6812 = vpop.f32.mrf.mxu0
  %6813 = vdwg.mxu0
  %6814 = vmatpush.bf16.msra.mxu0 %v6652
  %6815 = vmatpush.bf16.msra.mxu0 %v6648
  %6816 = vmatpush.bf16.msra.mxu0 %v6644
  %6817 = vmatpush.bf16.msra.mxu0 %v6640
  %6818 = vmatpush.bf16.msra.mxu0 %v6636
  %6819 = vmatpush.bf16.msra.mxu0 %v6632
  %6820 = vmatpush.bf16.msra.mxu0 %v6628
  %6821 = vmatpush.bf16.msra.mxu0 %v6624
  %6822 = vmatmul.bf16.gmra.mxu0 %v6468
  %v6823 = vpop.f32.mrf.mxu0
  %v6824 = vadd.f32 0.0, %v6823
  %v6825 = vpop.f32.mrf.mxu0
  %6826 = vdwg.mxu0
  %6827 = vmatpush.bf16.msra.mxu0 0
  %6828 = vmatpush.bf16.msra.mxu0 0
  %6829 = vmatpush.bf16.msra.mxu0 0
  %6830 = vmatpush.bf16.msra.mxu0 %v6734
  %6831 = vmatpush.bf16.msra.mxu0 %v6668
  %6832 = vmatpush.bf16.msra.mxu0 %v6664
  %6833 = vmatpush.bf16.msra.mxu0 %v6660
  %6834 = vmatpush.bf16.msra.mxu0 %v6656
  %6835 = vmatmul.bf16.gmra.mxu0 %v6722
  %v6836 = vpop.f32.mrf.mxu0
  %v6837 = vadd.f32 %v6824, %v6836
  %v6838 = vpop.f32.mrf.mxu0
  %6839 = vdwg.mxu0
  %v6840 = vadd.f32 %v6410, %v6759
  %v6841 = vadd.f32 %v6411, %v6785
  %v6842 = vadd.f32 %v6412, %v6811
  %v6843 = vadd.f32 %v6413, %v6837
  %v6844 = vld [vmem:[%s6] sm:$0xf]
  %v6846 = vperm.slane %v6844, 0
  %v6847 = vperm.slane %v6844, 1
  %v6848 = vperm.slane %v6844, 2
  %v6849 = vperm.slane %v6844, 3
  %v6854 = vadd.f32 %v6840, %v6846
  %v6855 = vadd.f32 %v6841, %v6847
  %v6856 = vadd.f32 %v6842, %v6848
  %v6857 = vadd.f32 %v6843, %v6849
  %v6858 = vmax.f32 %v6854, 0.0
  %v6859 = vmax.f32 %v6855, 0.0
  %v6860 = vmax.f32 %v6856, 0.0
  %v6861 = vmax.f32 %v6857, 0.0
  %v6862 = vpack.c.bf16 %v6858, %v6858
  %v6863 = vpack.c.bf16 %v6859, %v6859
  %v6864 = vpack.c.bf16 %v6860, %v6860
  %v6865 = vpack.c.bf16 %v6861, %v6861
  %v6866 = vld [vmem:[%s7] sm:$0xf]
  %v6867 = vld [vmem:[%s7 + $0x4] sm:$0xf]
  %v6868 = vld [vmem:[%s7 + $0x8] sm:$0xf]
  %v6869 = vld [vmem:[%s7 + $0xc] sm:$0xf]
  %v6870 = vld [vmem:[%s7 + $0x10] sm:$0xf]
  %v6871 = vld [vmem:[%s7 + $0x14] sm:$0xf]
  %v6872 = vld [vmem:[%s7 + $0x18] sm:$0xf]
  %v6873 = vld [vmem:[%s7 + $0x1c] sm:$0xf]
  %v6874 = vld [vmem:[%s7 + $0x20] sm:$0xf]
  %v6875 = vld [vmem:[%s7 + $0x24] sm:$0xf]
  %v6876 = vld [vmem:[%s7 + $0x28] sm:$0xf]
  %v6877 = vld [vmem:[%s7 + $0x2c] sm:$0xf]
  %v6878 = vld [vmem:[%s7 + $0x30] sm:$0xf]
  %v6879 = vld [vmem:[%s7 + $0x34] sm:$0xf]
  %v6880 = vld [vmem:[%s7 + $0x38] sm:$0xf]
  %v6881 = vld [vmem:[%s7 + $0x3c] sm:$0xf]
  %v6882 = vld [vmem:[%s7 + $0x40] sm:$0xf]
  %v6883 = vld [vmem:[%s7 + $0x44] sm:$0xf]
  %v6884 = vld [vmem:[%s7 + $0x48] sm:$0xf]
  %v6885 = vld [vmem:[%s7 + $0x4c] sm:$0xf]
  %v6886 = vld [vmem:[%s7 + $0x50] sm:$0xf]
  %v6887 = vld [vmem:[%s7 + $0x54] sm:$0xf]
  %v6888 = vld [vmem:[%s7 + $0x58] sm:$0xf]
  %v6889 = vld [vmem:[%s7 + $0x5c] sm:$0xf]
  %v6890 = vld [vmem:[%s7 + $0x60] sm:$0xf]
  %v6891 = vld [vmem:[%s7 + $0x64] sm:$0xf]
  %v6892 = vld [vmem:[%s7 + $0x68] sm:$0xf]
  %v6893 = vld [vmem:[%s7 + $0x6c] sm:$0xf]
  %v6894 = vld [vmem:[%s7 + $0x70] sm:$0xf]
  %v6895 = vld [vmem:[%s7 + $0x74] sm:$0xf]
  %v6896 = vld [vmem:[%s7 + $0x78] sm:$0xf]
  %v6897 = vld [vmem:[%s7 + $0x7c] sm:$0xf]
  %v6898 = vld [vmem:[%s7 + $0x80] sm:$0xf]
  %v6899 = vld [vmem:[%s7 + $0x84] sm:$0xf]
  %v6900 = vld [vmem:[%s7 + $0x88] sm:$0xf]
  %v6901 = vld [vmem:[%s7 + $0x8c] sm:$0xf]
  %v6902 = vld [vmem:[%s7 + $0x90] sm:$0xf]
  %v6903 = vld [vmem:[%s7 + $0x94] sm:$0xf]
  %v6904 = vld [vmem:[%s7 + $0x98] sm:$0xf]
  %v6905 = vld [vmem:[%s7 + $0x9c] sm:$0xf]
  %v6906 = vld [vmem:[%s7 + $0xa0] sm:$0xf]
  %v6907 = vld [vmem:[%s7 + $0xa4] sm:$0xf]
  %v6908 = vld [vmem:[%s7 + $0xa8] sm:$0xf]
  %v6909 = vld [vmem:[%s7 + $0xac] sm:$0xf]
  %v6910 = vld [vmem:[%s7 + $0xb0] sm:$0xf]
  %v6911 = vld [vmem:[%s7 + $0xb4] sm:$0xf]
  %v6912 = vld [vmem:[%s7 + $0xb8] sm:$0xf]
  %v6913 = vld [vmem:[%s7 + $0xbc] sm:$0xf]
  %v6914 = vld [vmem:[%s7 + $0xc0] sm:$0xf]
  %v6915 = vld [vmem:[%s7 + $0xc4] sm:$0xf]
  %v6916 = vld [vmem:[%s7 + $0xc8] sm:$0xf]
  %v6917 = vld [vmem:[%s7 + $0xcc] sm:$0xf]
  %v6918 = vld [vmem:[%s7 + $0xd0] sm:$0xf]
  %v6919 = vld [vmem:[%s7 + $0xd4] sm:$0xf]
  %v6920 = vld [vmem:[%s7 + $0xd8] sm:$0xf]
  %v6921 = vld [vmem:[%s7 + $0xdc] sm:$0xf]
  %v6922 = vld [vmem:[%s7 + $0xe0] sm:$0xf]
  %v6923 = vld [vmem:[%s7 + $0xe4] sm:$0xf]
  %v6924 = vld [vmem:[%s7 + $0xe8] sm:$0xf]
  %v6925 = vld [vmem:[%s7 + $0xec] sm:$0xf]
  %v6926 = vld [vmem:[%s7 + $0xf0] sm:$0xf]
  %v6927 = vld [vmem:[%s7 + $0xf4] sm:$0xf]
  %v6928 = vld [vmem:[%s7 + $0xf8] sm:$0xf]
  %v6929 = vld [vmem:[%s7 + $0xfc] sm:$0xf]
  %v6930 = vld [vmem:[%s8] sm:$0x1]
  %v6932 = vperm.slane %v6930, 0
  %v6998 = vunpack.c.l.b16 %v6866
  %v6999 = vunpack.c.l.b16 %v6867
  %v7000 = vunpack.c.l.b16 %v6868
  %v7001 = vunpack.c.l.b16 %v6869
  %v7002 = vunpack.c.l.b16 %v6870
  %v7003 = vunpack.c.l.b16 %v6871
  %v7004 = vunpack.c.l.b16 %v6872
  %v7005 = vunpack.c.l.b16 %v6873
  %v7006 = vunpack.c.l.b16 %v6874
  %v7007 = vunpack.c.l.b16 %v6875
  %v7008 = vunpack.c.l.b16 %v6876
  %v7009 = vunpack.c.l.b16 %v6877
  %v7010 = vunpack.c.l.b16 %v6878
  %v7011 = vunpack.c.l.b16 %v6879
  %v7012 = vunpack.c.l.b16 %v6880
  %v7013 = vunpack.c.l.b16 %v6881
  %v7014 = vunpack.c.l.b16 %v6882
  %v7015 = vunpack.c.l.b16 %v6883
  %v7016 = vunpack.c.l.b16 %v6884
  %v7017 = vunpack.c.l.b16 %v6885
  %v7018 = vunpack.c.l.b16 %v6886
  %v7019 = vunpack.c.l.b16 %v6887
  %v7020 = vunpack.c.l.b16 %v6888
  %v7021 = vunpack.c.l.b16 %v6889
  %v7022 = vunpack.c.l.b16 %v6890
  %v7023 = vunpack.c.l.b16 %v6891
  %v7024 = vunpack.c.l.b16 %v6892
  %v7025 = vunpack.c.l.b16 %v6893
  %v7026 = vunpack.c.l.b16 %v6894
  %v7027 = vunpack.c.l.b16 %v6895
  %v7028 = vunpack.c.l.b16 %v6896
  %v7029 = vunpack.c.l.b16 %v6897
  %v7030 = vunpack.c.l.b16 %v6898
  %v7031 = vunpack.c.l.b16 %v6899
  %v7032 = vunpack.c.l.b16 %v6900
  %v7033 = vunpack.c.l.b16 %v6901
  %v7034 = vunpack.c.l.b16 %v6902
  %v7035 = vunpack.c.l.b16 %v6903
  %v7036 = vunpack.c.l.b16 %v6904
  %v7037 = vunpack.c.l.b16 %v6905
  %v7038 = vunpack.c.l.b16 %v6906
  %v7039 = vunpack.c.l.b16 %v6907
  %v7040 = vunpack.c.l.b16 %v6908
  %v7041 = vunpack.c.l.b16 %v6909
  %v7042 = vunpack.c.l.b16 %v6910
  %v7043 = vunpack.c.l.b16 %v6911
  %v7044 = vunpack.c.l.b16 %v6912
  %v7045 = vunpack.c.l.b16 %v6913
  %v7046 = vunpack.c.l.b16 %v6914
  %v7047 = vunpack.c.l.b16 %v6915
  %v7048 = vunpack.c.l.b16 %v6916
  %v7049 = vunpack.c.l.b16 %v6917
  %v7050 = vunpack.c.l.b16 %v6918
  %v7051 = vunpack.c.l.b16 %v6919
  %v7052 = vunpack.c.l.b16 %v6920
  %v7053 = vunpack.c.l.b16 %v6921
  %v7054 = vunpack.c.l.b16 %v6922
  %v7055 = vunpack.c.l.b16 %v6923
  %v7056 = vunpack.c.l.b16 %v6924
  %v7057 = vunpack.c.l.b16 %v6925
  %v7058 = vunpack.c.l.b16 %v6926
  %v7059 = vunpack.c.l.b16 %v6927
  %v7060 = vunpack.c.l.b16 %v6928
  %v7061 = vunpack.c.l.b16 %v6929
  %v7062 = vpack.c.b16 %v6999, %v6998
  %v7063 = vpack.c.b16 %v7001, %v7000
  %v7064 = vpack.c.b16 %v7003, %v7002
  %v7065 = vpack.c.b16 %v7005, %v7004
  %v7066 = vpack.c.b16 %v7007, %v7006
  %v7067 = vpack.c.b16 %v7009, %v7008
  %v7068 = vpack.c.b16 %v7011, %v7010
  %v7069 = vpack.c.b16 %v7013, %v7012
  %v7070 = vpack.c.b16 %v7015, %v7014
  %v7071 = vpack.c.b16 %v7017, %v7016
  %v7072 = vpack.c.b16 %v7019, %v7018
  %v7073 = vpack.c.b16 %v7021, %v7020
  %v7074 = vpack.c.b16 %v7023, %v7022
  %v7075 = vpack.c.b16 %v7025, %v7024
  %v7076 = vpack.c.b16 %v7027, %v7026
  %v7077 = vpack.c.b16 %v7029, %v7028
  %v7078 = vpack.c.b16 %v7031, %v7030
  %v7079 = vpack.c.b16 %v7033, %v7032
  %v7080 = vpack.c.b16 %v7035, %v7034
  %v7081 = vpack.c.b16 %v7037, %v7036
  %v7082 = vpack.c.b16 %v7039, %v7038
  %v7083 = vpack.c.b16 %v7041, %v7040
  %v7084 = vpack.c.b16 %v7043, %v7042
  %v7085 = vpack.c.b16 %v7045, %v7044
  %v7086 = vpack.c.b16 %v7047, %v7046
  %v7087 = vpack.c.b16 %v7049, %v7048
  %v7088 = vpack.c.b16 %v7051, %v7050
  %v7089 = vpack.c.b16 %v7053, %v7052
  %v7090 = vpack.c.b16 %v7055, %v7054
  %v7091 = vpack.c.b16 %v7057, %v7056
  %v7092 = vpack.c.b16 %v7059, %v7058
  %v7093 = vpack.c.b16 %v7061, %v7060
  %7126 = vmatpush.bf16.msra.mxu0 %v7069
  %7127 = vmatpush.bf16.msra.mxu0 %v7068
  %7128 = vmatpush.bf16.msra.mxu0 %v7067
  %7129 = vmatpush.bf16.msra.mxu0 %v7066
  %7130 = vmatpush.bf16.msra.mxu0 %v7065
  %7131 = vmatpush.bf16.msra.mxu0 %v7064
  %7132 = vmatpush.bf16.msra.mxu0 %v7063
  %7133 = vmatpush.bf16.msra.mxu0 %v7062
  %7134 = vmatmul.bf16.gmra.mxu0 %v6862
  %v7135 = vpop.f32.mrf.mxu0
  %v7136 = vadd.f32 %v6932, %v7135
  %v7137 = vpop.f32.mrf.mxu0
  %7138 = vdwg.mxu0
  %7139 = vmatpush.bf16.msra.mxu0 %v7077
  %7140 = vmatpush.bf16.msra.mxu0 %v7076
  %7141 = vmatpush.bf16.msra.mxu0 %v7075
  %7142 = vmatpush.bf16.msra.mxu0 %v7074
  %7143 = vmatpush.bf16.msra.mxu0 %v7073
  %7144 = vmatpush.bf16.msra.mxu0 %v7072
  %7145 = vmatpush.bf16.msra.mxu0 %v7071
  %7146 = vmatpush.bf16.msra.mxu0 %v7070
  %7147 = vmatmul.bf16.gmra.mxu0 %v6863
  %v7148 = vpop.f32.mrf.mxu0
  %v7149 = vadd.f32 %v7136, %v7148
  %v7150 = vpop.f32.mrf.mxu0
  %7151 = vdwg.mxu0
  %7152 = vmatpush.bf16.msra.mxu0 %v7085
  %7153 = vmatpush.bf16.msra.mxu0 %v7084
  %7154 = vmatpush.bf16.msra.mxu0 %v7083
  %7155 = vmatpush.bf16.msra.mxu0 %v7082
  %7156 = vmatpush.bf16.msra.mxu0 %v7081
  %7157 = vmatpush.bf16.msra.mxu0 %v7080
  %7158 = vmatpush.bf16.msra.mxu0 %v7079
  %7159 = vmatpush.bf16.msra.mxu0 %v7078
  %7160 = vmatmul.bf16.gmra.mxu0 %v6864
  %v7161 = vpop.f32.mrf.mxu0
  %v7162 = vadd.f32 %v7149, %v7161
  %v7163 = vpop.f32.mrf.mxu0
  %7164 = vdwg.mxu0
  %7165 = vmatpush.bf16.msra.mxu0 %v7093
  %7166 = vmatpush.bf16.msra.mxu0 %v7092
  %7167 = vmatpush.bf16.msra.mxu0 %v7091
  %7168 = vmatpush.bf16.msra.mxu0 %v7090
  %7169 = vmatpush.bf16.msra.mxu0 %v7089
  %7170 = vmatpush.bf16.msra.mxu0 %v7088
  %7171 = vmatpush.bf16.msra.mxu0 %v7087
  %7172 = vmatpush.bf16.msra.mxu0 %v7086
  %7173 = vmatmul.bf16.gmra.mxu0 %v6865
  %v7174 = vpop.f32.mrf.mxu0
  %v7175 = vadd.f32 %v7162, %v7174
  %v7176 = vpop.f32.mrf.mxu0
  %7177 = vdwg.mxu0
  %7178 = vst [vmem:[%s9] sm:$0xff] %v7175
  // Predicated region
  $region38: #{lenet_forward.1} parent=0 // pred_check
    _
  $region39: #{lenet_forward.1} parent=0 // pred_check_branch
    %7180 = sbr.rel (0) target = $region41
  $region40: #{lenet_forward.1} parent=0 // pred_region
    _
  $region41: #{lenet_forward.1} parent=0 // pred_fallthru
    _
  // Predicated region
  $region42: #{lenet_forward.1} parent=0 // pred_check
    _
  $region43: #{lenet_forward.1} parent=0 // pred_check_branch
    %7182 = sbr.rel (0) target = $region45
  $region44: #{lenet_forward.1} parent=0 // pred_region
    _
  $region45: #{lenet_forward.1} parent=0 // pred_fallthru
    _

</llo_original>
